<compile_context>
chip_gen: v7x
topology: tpu7x:2x2x1
jax: 0.10.0
libtpu: 0.0.40
codegen_flags: <defaults>
</compile_context>

<pallas_src>
import functools
import math

import jax
import jax.numpy as jnp
from jax.experimental import pallas as pl
from jax.experimental.pallas import tpu as pltpu


# ----------------------------------------------------------------------------
# Fused (split-concat Linear -> ReLU -> Linear -> ReLU -> Linear -> LayerNorm
#        -> +residual) kernel, one row-tile per grid step.
# ----------------------------------------------------------------------------
def _make_block_kernel(num_chunks: int, residual_idx: int):
    def kernel(*refs):
        chunk_refs = refs[:num_chunks]
        w1_refs = refs[num_chunks:2 * num_chunks]
        (b1_ref, w2_ref, b2_ref, w3_ref, b3_ref,
         gamma_ref, beta_ref, o_ref) = refs[2 * num_chunks:]

        # First Linear over the (virtual) concatenation: sum of per-chunk dots.
        h = jnp.dot(chunk_refs[0][...], w1_refs[0][...],
                    preferred_element_type=jnp.float32)
        for c in range(1, num_chunks):
            h = h + jnp.dot(chunk_refs[c][...], w1_refs[c][...],
                            preferred_element_type=jnp.float32)
        h = jnp.maximum(h + b1_ref[...], 0.0)

        # Hidden Linear + ReLU (num_layers=2 -> one hidden layer).
        h = jnp.dot(h, w2_ref[...], preferred_element_type=jnp.float32) + b2_ref[...]
        h = jnp.maximum(h, 0.0)

        # Final Linear.
        h = jnp.dot(h, w3_ref[...], preferred_element_type=jnp.float32) + b3_ref[...]

        # LayerNorm (biased variance, eps=1e-5, elementwise affine) + residual.
        mean = jnp.mean(h, axis=-1, keepdims=True)
        var = jnp.mean((h - mean) * (h - mean), axis=-1, keepdims=True)
        h = (h - mean) * jax.lax.rsqrt(var + 1e-5)
        o_ref[...] = h * gamma_ref[...] + beta_ref[...] + chunk_refs[residual_idx][...]

    return kernel


def _round_up(x: int, m: int) -> int:
    return ((x + m - 1) // m) * m


def _choose_tile(n_rows: int, tile_rows: int) -> int:
    # Big tiles amortize per-grid-step overhead (kernel is HBM-bound), but keep
    # at least 2 grid steps when possible so v7x's two TensorCores and the
    # double-buffered input prefetch stay busy.
    tile = min(tile_rows, _round_up(max(1, (n_rows + 1) // 2), 8))
    return max(8, _round_up(tile, 8))


def _mlp_block(chunks, params, *, residual_idx: int, tile_rows: int):
    """chunks: list of (N, D_c) f32 arrays; returns (N, H) f32."""
    w1_parts, b1, w2, b2, w3, b3, gamma, beta = params
    n_rows = chunks[0].shape[0]
    hidden = w2.shape[1]

    tile = _choose_tile(n_rows, tile_rows)
    pad = (-n_rows) % tile
    if pad:
        chunks = [jnp.pad(c, ((0, pad), (0, 0))) for c in chunks]
    padded_rows = n_rows + pad
    grid = (padded_rows // tile,)

    def row_spec(d):
        return pl.BlockSpec((tile, d), lambda i: (i, 0))

    def full_spec(a):
        return pl.BlockSpec(a.shape, lambda i: (0, 0))

    kernel = _make_block_kernel(len(chunks), residual_idx)
    out = pl.pallas_call(
        kernel,
        out_shape=jax.ShapeDtypeStruct((padded_rows, hidden), jnp.float32),
        grid_spec=pltpu.PrefetchScalarGridSpec(
            num_scalar_prefetch=0,
            grid=grid,
            in_specs=(
                [row_spec(c.shape[1]) for c in chunks]
                + [full_spec(w) for w in w1_parts]
                + [full_spec(p) for p in (b1, w2, b2, w3, b3, gamma, beta)]
            ),
            out_specs=pl.BlockSpec((tile, hidden), lambda i: (i, 0)),
        ),
        compiler_params=pltpu.CompilerParams(
            dimension_semantics=("parallel",)),
    )(*chunks, *w1_parts, b1, w2, b2, w3, b3, gamma, beta)

    return out[:n_rows] if pad else out


# ----------------------------------------------------------------------------
# _GraphProcessor forward
# ----------------------------------------------------------------------------
@functools.partial(jax.jit, static_argnames=("tile_rows",))
def graph_processor_forward(src_idx, dst_idx, node_features, edge_features,
                            edge_block_params, node_block_params, *,
                            tile_rows=512):
    num_nodes = node_features.shape[0]
    for e_params, n_params in zip(edge_block_params, node_block_params):
        # --- _EdgeBlock ----------------------------------------------------
        # TODO(synk): data-dependent gather done in XLA (no clean Pallas path).
        src_f = jnp.take(node_features, src_idx, axis=0)
        dst_f = jnp.take(node_features, dst_idx, axis=0)
        edge_features = _mlp_block(
            [src_f, dst_f, edge_features], e_params,
            residual_idx=2, tile_rows=tile_rows)

        # --- _NodeBlock ----------------------------------------------------
        # TODO(synk): scatter-add aggregation (copy_e + sum) done in XLA.
        agg = jnp.zeros((num_nodes, edge_features.shape[1]),
                        edge_features.dtype).at[dst_idx].add(edge_features)
        node_features = _mlp_block(
            [agg, node_features], n_params,
            residual_idx=1, tile_rows=tile_rows)
    return node_features


# ----------------------------------------------------------------------------
# Parameters & pure-JAX reference
# ----------------------------------------------------------------------------
def init_block_params(key, in_dims, hidden):
    """Synthetic params for one MLP block.  Weights stored (in, out)."""
    k = jax.random.split(key, 6)
    total_in = sum(in_dims)
    w1 = jax.random.normal(k[0], (total_in, hidden), jnp.float32) / math.sqrt(total_in)
    b1 = jax.random.normal(k[1], (1, hidden), jnp.float32) * 0.01
    w2 = jax.random.normal(k[2], (hidden, hidden), jnp.float32) / math.sqrt(hidden)
    b2 = jax.random.normal(k[3], (1, hidden), jnp.float32) * 0.01
    w3 = jax.random.normal(k[4], (hidden, hidden), jnp.float32) / math.sqrt(hidden)
    b3 = jax.random.normal(k[5], (1, hidden), jnp.float32) * 0.01
    gamma = jnp.ones((1, hidden), jnp.float32)   # LayerNorm weight
    beta = jnp.zeros((1, hidden), jnp.float32)   # LayerNorm bias
    # Split the first Linear's weight into per-chunk blocks (matches concat order).
    w1_parts, off = [], 0
    for d in in_dims:
        w1_parts.append(w1[off:off + d])
        off += d
    return (tuple(w1_parts), b1, w2, b2, w3, b3, gamma, beta)


def _mlp_block_ref(chunks, params, residual_idx):
    w1_parts, b1, w2, b2, w3, b3, gamma, beta = params
    x = jnp.concatenate(chunks, axis=-1)
    w1 = jnp.concatenate(w1_parts, axis=0)
    h = jnp.maximum(x @ w1 + b1, 0.0)
    h = jnp.maximum(h @ w2 + b2, 0.0)
    h = h @ w3 + b3
    mean = jnp.mean(h, axis=-1, keepdims=True)
    var = jnp.mean((h - mean) ** 2, axis=-1, keepdims=True)
    return (h - mean) / jnp.sqrt(var + 1e-5) * gamma + beta + chunks[residual_idx]


def graph_processor_reference(src_idx, dst_idx, node_features, edge_features,
                              edge_block_params, node_block_params):
    num_nodes = node_features.shape[0]
    for e_params, n_params in zip(edge_block_params, node_block_params):
        src_f = node_features[src_idx]
        dst_f = node_features[dst_idx]
        edge_features = _mlp_block_ref([src_f, dst_f, edge_features], e_params, 2)
        agg = jnp.zeros((num_nodes, edge_features.shape[1]),
                        edge_features.dtype).at[dst_idx].add(edge_features)
        node_features = _mlp_block_ref([agg, node_features], n_params, 1)
    return node_features


# ----------------------------------------------------------------------------
if __name__ == "__main__":
    # Module defaults: input_dim_node = input_dim_edge = 128, num_layers = 2.
    # processor_size kept small (module default is 15) for a quick demo graph.
    PROCESSOR_SIZE = 4
    DIM_NODE = 128
    DIM_EDGE = 128
    N_NODES, N_EDGES = 256, 1024

    key = jax.random.PRNGKey(0)
    k_node, k_edge, k_src, k_dst, k_params = jax.random.split(key, 5)

    node_feat = jax.random.normal(k_node, (N_NODES, DIM_NODE), jnp.float32)
    edge_feat = jax.random.normal(k_edge, (N_EDGES, DIM_EDGE), jnp.float32)
    src_idx = jax.random.randint(k_src, (N_EDGES,), 0, N_NODES, dtype=jnp.int32)
    dst_idx = jax.random.randint(k_dst, (N_EDGES,), 0, N_NODES, dtype=jnp.int32)

    pk = jax.random.split(k_params, 2 * PROCESSOR_SIZE)
    edge_params = tuple(
        init_block_params(pk[2 * i], (DIM_NODE, DIM_NODE, DIM_EDGE), DIM_EDGE)
        for i in range(PROCESSOR_SIZE))
    node_params = tuple(
        init_block_params(pk[2 * i + 1], (DIM_EDGE, DIM_NODE), DIM_NODE)
        for i in range(PROCESSOR_SIZE))

    out = graph_processor_forward(src_idx, dst_idx, node_feat, edge_feat,
                                  edge_params, node_params, tile_rows=512)
    out = jax.block_until_ready(out)

    ref = graph_processor_reference(src_idx, dst_idx, node_feat, edge_feat,
                                    edge_params, node_params)
    assert out.shape == (N_NODES, DIM_NODE)
    max_err = float(jnp.max(jnp.abs(out - ref)))
    assert jnp.allclose(out, ref, atol=3e-3, rtol=3e-3), \
        f"mismatch vs reference, max abs err {max_err}"

    print("KERNEL_OK")
</pallas_src>

<mosaic_0001>
module attributes {stable_mosaic.version = 11 : i64} {
  func.func @kernel(%arg0: i32, %arg1: memref<512x128xf32, #tpu.memory_space<vmem>>, %arg2: memref<512x128xf32, #tpu.memory_space<vmem>>, %arg3: memref<512x128xf32, #tpu.memory_space<vmem>>, %arg4: memref<128x128xf32, #tpu.memory_space<vmem>>, %arg5: memref<128x128xf32, #tpu.memory_space<vmem>>, %arg6: memref<128x128xf32, #tpu.memory_space<vmem>>, %arg7: memref<1x128xf32, #tpu.memory_space<vmem>>, %arg8: memref<128x128xf32, #tpu.memory_space<vmem>>, %arg9: memref<1x128xf32, #tpu.memory_space<vmem>>, %arg10: memref<128x128xf32, #tpu.memory_space<vmem>>, %arg11: memref<1x128xf32, #tpu.memory_space<vmem>>, %arg12: memref<1x128xf32, #tpu.memory_space<vmem>>, %arg13: memref<1x128xf32, #tpu.memory_space<vmem>>, %arg14: memref<512x128xf32, #tpu.memory_space<vmem>>) attributes {dimension_semantics = [#tpu.dimension_semantics<parallel>], iteration_bounds = array<i64: 2>, scalar_prefetch = 0 : i64, scratch_operands = 0 : i64, tpu.core_type = #tpu.core_type<tc>, window_params = [{transform_indices = @transform_0, window_bounds = array<i64: 512, 128>}, {transform_indices = @transform_1, window_bounds = array<i64: 512, 128>}, {transform_indices = @transform_2, window_bounds = array<i64: 512, 128>}, {pipeline_mode = #tpu.pipeline_mode<synchronous>, transform_indices = @transform_3, window_bounds = array<i64: 128, 128>}, {pipeline_mode = #tpu.pipeline_mode<synchronous>, transform_indices = @transform_4, window_bounds = array<i64: 128, 128>}, {pipeline_mode = #tpu.pipeline_mode<synchronous>, transform_indices = @transform_5, window_bounds = array<i64: 128, 128>}, {pipeline_mode = #tpu.pipeline_mode<synchronous>, transform_indices = @transform_6, window_bounds = array<i64: 1, 128>}, {pipeline_mode = #tpu.pipeline_mode<synchronous>, transform_indices = @transform_7, window_bounds = array<i64: 128, 128>}, {pipeline_mode = #tpu.pipeline_mode<synchronous>, transform_indices = @transform_8, window_bounds = array<i64: 1, 128>}, {pipeline_mode = #tpu.pipeline_mode<synchronous>, transform_indices = @transform_9, window_bounds = array<i64: 128, 128>}, {pipeline_mode = #tpu.pipeline_mode<synchronous>, transform_indices = @transform_10, window_bounds = array<i64: 1, 128>}, {pipeline_mode = #tpu.pipeline_mode<synchronous>, transform_indices = @transform_11, window_bounds = array<i64: 1, 128>}, {pipeline_mode = #tpu.pipeline_mode<synchronous>, transform_indices = @transform_12, window_bounds = array<i64: 1, 128>}, {transform_indices = @transform_13, window_bounds = array<i64: 512, 128>}]} {
    %c0 = arith.constant 0 : index
    %c0_0 = arith.constant 0 : index
    %0 = vector.load %arg1[%c0, %c0_0] : memref<512x128xf32, #tpu.memory_space<vmem>>, vector<512x128xf32>
    %c0_1 = arith.constant 0 : index
    %c0_2 = arith.constant 0 : index
    %1 = vector.load %arg4[%c0_1, %c0_2] : memref<128x128xf32, #tpu.memory_space<vmem>>, vector<128x128xf32>
    %cst = arith.constant dense<0.000000e+00> : vector<512x128xf32>
    %2 = tpu.matmul %0, %1, %cst {dimension_numbers = #tpu.dot_dimension_numbers<[1], [0], [0], [1], [0, 0, 1, 1], [], []>} : vector<512x128xf32>, vector<128x128xf32>, vector<512x128xf32> -> vector<512x128xf32>
    %c0_3 = arith.constant 0 : index
    %c0_4 = arith.constant 0 : index
    %3 = vector.load %arg2[%c0_3, %c0_4] : memref<512x128xf32, #tpu.memory_space<vmem>>, vector<512x128xf32>
    %c0_5 = arith.constant 0 : index
    %c0_6 = arith.constant 0 : index
    %4 = vector.load %arg5[%c0_5, %c0_6] : memref<128x128xf32, #tpu.memory_space<vmem>>, vector<128x128xf32>
    %cst_7 = arith.constant dense<0.000000e+00> : vector<512x128xf32>
    %5 = tpu.matmul %3, %4, %cst_7 {dimension_numbers = #tpu.dot_dimension_numbers<[1], [0], [0], [1], [0, 0, 1, 1], [], []>} : vector<512x128xf32>, vector<128x128xf32>, vector<512x128xf32> -> vector<512x128xf32>
    %6 = arith.addf %2, %5 : vector<512x128xf32>
    %c0_8 = arith.constant 0 : index
    %c0_9 = arith.constant 0 : index
    %7 = vector.load %arg3[%c0_8, %c0_9] : memref<512x128xf32, #tpu.memory_space<vmem>>, vector<512x128xf32>
    %c0_10 = arith.constant 0 : index
    %c0_11 = arith.constant 0 : index
    %8 = vector.load %arg6[%c0_10, %c0_11] : memref<128x128xf32, #tpu.memory_space<vmem>>, vector<128x128xf32>
    %cst_12 = arith.constant dense<0.000000e+00> : vector<512x128xf32>
    %9 = tpu.matmul %7, %8, %cst_12 {dimension_numbers = #tpu.dot_dimension_numbers<[1], [0], [0], [1], [0, 0, 1, 1], [], []>} : vector<512x128xf32>, vector<128x128xf32>, vector<512x128xf32> -> vector<512x128xf32>
    %10 = arith.addf %6, %9 : vector<512x128xf32>
    %c0_13 = arith.constant 0 : index
    %c0_14 = arith.constant 0 : index
    %11 = vector.load %arg7[%c0_13, %c0_14] : memref<1x128xf32, #tpu.memory_space<vmem>>, vector<1x128xf32>
    %12 = vector.broadcast %11 : vector<1x128xf32> to vector<512x128xf32>
    %13 = arith.addf %10, %12 : vector<512x128xf32>
    %cst_15 = arith.constant 0.000000e+00 : f32
    %14 = vector.broadcast %cst_15 : f32 to vector<512x128xf32>
    %15 = arith.maximumf %13, %14 : vector<512x128xf32>
    %c0_16 = arith.constant 0 : index
    %c0_17 = arith.constant 0 : index
    %16 = vector.load %arg8[%c0_16, %c0_17] : memref<128x128xf32, #tpu.memory_space<vmem>>, vector<128x128xf32>
    %cst_18 = arith.constant dense<0.000000e+00> : vector<512x128xf32>
    %17 = tpu.matmul %15, %16, %cst_18 {dimension_numbers = #tpu.dot_dimension_numbers<[1], [0], [0], [1], [0, 0, 1, 1], [], []>} : vector<512x128xf32>, vector<128x128xf32>, vector<512x128xf32> -> vector<512x128xf32>
    %c0_19 = arith.constant 0 : index
    %c0_20 = arith.constant 0 : index
    %18 = vector.load %arg9[%c0_19, %c0_20] : memref<1x128xf32, #tpu.memory_space<vmem>>, vector<1x128xf32>
    %19 = vector.broadcast %18 : vector<1x128xf32> to vector<512x128xf32>
    %20 = arith.addf %17, %19 : vector<512x128xf32>
    %cst_21 = arith.constant 0.000000e+00 : f32
    %21 = vector.broadcast %cst_21 : f32 to vector<512x128xf32>
    %22 = arith.maximumf %20, %21 : vector<512x128xf32>
    %c0_22 = arith.constant 0 : index
    %c0_23 = arith.constant 0 : index
    %23 = vector.load %arg10[%c0_22, %c0_23] : memref<128x128xf32, #tpu.memory_space<vmem>>, vector<128x128xf32>
    %cst_24 = arith.constant dense<0.000000e+00> : vector<512x128xf32>
    %24 = tpu.matmul %22, %23, %cst_24 {dimension_numbers = #tpu.dot_dimension_numbers<[1], [0], [0], [1], [0, 0, 1, 1], [], []>} : vector<512x128xf32>, vector<128x128xf32>, vector<512x128xf32> -> vector<512x128xf32>
    %c0_25 = arith.constant 0 : index
    %c0_26 = arith.constant 0 : index
    %25 = vector.load %arg11[%c0_25, %c0_26] : memref<1x128xf32, #tpu.memory_space<vmem>>, vector<1x128xf32>
    %26 = vector.broadcast %25 : vector<1x128xf32> to vector<512x128xf32>
    %27 = arith.addf %24, %26 : vector<512x128xf32>
    %cst_27 = arith.constant dense<0.000000e+00> : vector<512xf32>
    %28 = vector.multi_reduction <add>, %27, %cst_27 [1] : vector<512x128xf32> to vector<512xf32>
    %29 = vector.shape_cast %28 : vector<512xf32> to vector<512x1xf32>
    %cst_28 = arith.constant 1.280000e+02 : f32
    %30 = vector.broadcast %cst_28 : f32 to vector<512x1xf32>
    %31 = arith.divf %29, %30 : vector<512x1xf32>
    %32 = vector.broadcast %31 : vector<512x1xf32> to vector<512x128xf32>
    %33 = arith.subf %27, %32 : vector<512x128xf32>
    %34 = vector.broadcast %31 : vector<512x1xf32> to vector<512x128xf32>
    %35 = arith.subf %27, %34 : vector<512x128xf32>
    %36 = arith.mulf %33, %35 : vector<512x128xf32>
    %cst_29 = arith.constant dense<0.000000e+00> : vector<512xf32>
    %37 = vector.multi_reduction <add>, %36, %cst_29 [1] : vector<512x128xf32> to vector<512xf32>
    %38 = vector.shape_cast %37 : vector<512xf32> to vector<512x1xf32>
    %cst_30 = arith.constant 1.280000e+02 : f32
    %39 = vector.broadcast %cst_30 : f32 to vector<512x1xf32>
    %40 = arith.divf %38, %39 : vector<512x1xf32>
    %41 = vector.broadcast %31 : vector<512x1xf32> to vector<512x128xf32>
    %42 = arith.subf %27, %41 : vector<512x128xf32>
    %cst_31 = arith.constant 9.99999974E-6 : f32
    %43 = vector.broadcast %cst_31 : f32 to vector<512x1xf32>
    %44 = arith.addf %40, %43 : vector<512x1xf32>
    %45 = math.rsqrt %44 : vector<512x1xf32>
    %46 = vector.broadcast %45 : vector<512x1xf32> to vector<512x128xf32>
    %47 = arith.mulf %42, %46 : vector<512x128xf32>
    %c0_32 = arith.constant 0 : index
    %c0_33 = arith.constant 0 : index
    %48 = vector.load %arg12[%c0_32, %c0_33] : memref<1x128xf32, #tpu.memory_space<vmem>>, vector<1x128xf32>
    %49 = vector.broadcast %48 : vector<1x128xf32> to vector<512x128xf32>
    %50 = arith.mulf %47, %49 : vector<512x128xf32>
    %c0_34 = arith.constant 0 : index
    %c0_35 = arith.constant 0 : index
    %51 = vector.load %arg13[%c0_34, %c0_35] : memref<1x128xf32, #tpu.memory_space<vmem>>, vector<1x128xf32>
    %52 = vector.broadcast %51 : vector<1x128xf32> to vector<512x128xf32>
    %53 = arith.addf %50, %52 : vector<512x128xf32>
    %c0_36 = arith.constant 0 : index
    %c0_37 = arith.constant 0 : index
    %54 = vector.load %arg3[%c0_36, %c0_37] : memref<512x128xf32, #tpu.memory_space<vmem>>, vector<512x128xf32>
    %55 = arith.addf %53, %54 : vector<512x128xf32>
    %c0_38 = arith.constant 0 : index
    %c0_39 = arith.constant 0 : index
    %56 = vector.load %arg14[%c0_38, %c0_39] : memref<512x128xf32, #tpu.memory_space<vmem>>, vector<512x128xf32>
    tpu.vector_store %arg14[%c0_38, %c0_39], %55 {strides = array<i32>} : memref<512x128xf32, #tpu.memory_space<vmem>>, vector<512x128xf32>,
    return
  }
  func.func @transform_0(%arg0: i32) -> (i32, i32) {
    %c0_i32 = arith.constant 0 : i32
    %c0_i32_0 = arith.constant 0 : i32
    return %arg0, %c0_i32 : i32, i32
  }
  func.func @transform_1(%arg0: i32) -> (i32, i32) {
    %c0_i32 = arith.constant 0 : i32
    %c0_i32_0 = arith.constant 0 : i32
    return %arg0, %c0_i32 : i32, i32
  }
  func.func @transform_2(%arg0: i32) -> (i32, i32) {
    %c0_i32 = arith.constant 0 : i32
    %c0_i32_0 = arith.constant 0 : i32
    return %arg0, %c0_i32 : i32, i32
  }
  func.func @transform_3(%arg0: i32) -> (i32, i32) {
    %c0_i32 = arith.constant 0 : i32
    %c0_i32_0 = arith.constant 0 : i32
    %c0_i32_1 = arith.constant 0 : i32
    return %c0_i32, %c0_i32_0 : i32, i32
  }
  func.func @transform_4(%arg0: i32) -> (i32, i32) {
    %c0_i32 = arith.constant 0 : i32
    %c0_i32_0 = arith.constant 0 : i32
    %c0_i32_1 = arith.constant 0 : i32
    return %c0_i32, %c0_i32_0 : i32, i32
  }
  func.func @transform_5(%arg0: i32) -> (i32, i32) {
    %c0_i32 = arith.constant 0 : i32
    %c0_i32_0 = arith.constant 0 : i32
    %c0_i32_1 = arith.constant 0 : i32
    return %c0_i32, %c0_i32_0 : i32, i32
  }
  func.func @transform_6(%arg0: i32) -> (i32, i32) {
    %c0_i32 = arith.constant 0 : i32
    %c0_i32_0 = arith.constant 0 : i32
    %c0_i32_1 = arith.constant 0 : i32
    return %c0_i32, %c0_i32_0 : i32, i32
  }
  func.func @transform_7(%arg0: i32) -> (i32, i32) {
    %c0_i32 = arith.constant 0 : i32
    %c0_i32_0 = arith.constant 0 : i32
    %c0_i32_1 = arith.constant 0 : i32
    return %c0_i32, %c0_i32_0 : i32, i32
  }
  func.func @transform_8(%arg0: i32) -> (i32, i32) {
    %c0_i32 = arith.constant 0 : i32
    %c0_i32_0 = arith.constant 0 : i32
    %c0_i32_1 = arith.constant 0 : i32
    return %c0_i32, %c0_i32_0 : i32, i32
  }
  func.func @transform_9(%arg0: i32) -> (i32, i32) {
    %c0_i32 = arith.constant 0 : i32
    %c0_i32_0 = arith.constant 0 : i32
    %c0_i32_1 = arith.constant 0 : i32
    return %c0_i32, %c0_i32_0 : i32, i32
  }
  func.func @transform_10(%arg0: i32) -> (i32, i32) {
    %c0_i32 = arith.constant 0 : i32
    %c0_i32_0 = arith.constant 0 : i32
    %c0_i32_1 = arith.constant 0 : i32
    return %c0_i32, %c0_i32_0 : i32, i32
  }
  func.func @transform_11(%arg0: i32) -> (i32, i32) {
    %c0_i32 = arith.constant 0 : i32
    %c0_i32_0 = arith.constant 0 : i32
    %c0_i32_1 = arith.constant 0 : i32
    return %c0_i32, %c0_i32_0 : i32, i32
  }
  func.func @transform_12(%arg0: i32) -> (i32, i32) {
    %c0_i32 = arith.constant 0 : i32
    %c0_i32_0 = arith.constant 0 : i32
    %c0_i32_1 = arith.constant 0 : i32
    return %c0_i32, %c0_i32_0 : i32, i32
  }
  func.func @transform_13(%arg0: i32) -> (i32, i32) {
    %c0_i32 = arith.constant 0 : i32
    %c0_i32_0 = arith.constant 0 : i32
    return %arg0, %c0_i32 : i32, i32
  }
}

module attributes {stable_mosaic.version = 11 : i64} {
  func.func @kernel(%arg0: i32, %arg1: memref<128x128xf32, #tpu.memory_space<vmem>>, %arg2: memref<128x128xf32, #tpu.memory_space<vmem>>, %arg3: memref<128x128xf32, #tpu.memory_space<vmem>>, %arg4: memref<128x128xf32, #tpu.memory_space<vmem>>, %arg5: memref<1x128xf32, #tpu.memory_space<vmem>>, %arg6: memref<128x128xf32, #tpu.memory_space<vmem>>, %arg7: memref<1x128xf32, #tpu.memory_space<vmem>>, %arg8: memref<128x128xf32, #tpu.memory_space<vmem>>, %arg9: memref<1x128xf32, #tpu.memory_space<vmem>>, %arg10: memref<1x128xf32, #tpu.memory_space<vmem>>, %arg11: memref<1x128xf32, #tpu.memory_space<vmem>>, %arg12: memref<128x128xf32, #tpu.memory_space<vmem>>) attributes {dimension_semantics = [#tpu.dimension_semantics<parallel>], iteration_bounds = array<i64: 2>, scalar_prefetch = 0 : i64, scratch_operands = 0 : i64, tpu.core_type = #tpu.core_type<tc>, window_params = [{transform_indices = @transform_0, window_bounds = array<i64: 128, 128>}, {transform_indices = @transform_1, window_bounds = array<i64: 128, 128>}, {pipeline_mode = #tpu.pipeline_mode<synchronous>, transform_indices = @transform_2, window_bounds = array<i64: 128, 128>}, {pipeline_mode = #tpu.pipeline_mode<synchronous>, transform_indices = @transform_3, window_bounds = array<i64: 128, 128>}, {pipeline_mode = #tpu.pipeline_mode<synchronous>, transform_indices = @transform_4, window_bounds = array<i64: 1, 128>}, {pipeline_mode = #tpu.pipeline_mode<synchronous>, transform_indices = @transform_5, window_bounds = array<i64: 128, 128>}, {pipeline_mode = #tpu.pipeline_mode<synchronous>, transform_indices = @transform_6, window_bounds = array<i64: 1, 128>}, {pipeline_mode = #tpu.pipeline_mode<synchronous>, transform_indices = @transform_7, window_bounds = array<i64: 128, 128>}, {pipeline_mode = #tpu.pipeline_mode<synchronous>, transform_indices = @transform_8, window_bounds = array<i64: 1, 128>}, {pipeline_mode = #tpu.pipeline_mode<synchronous>, transform_indices = @transform_9, window_bounds = array<i64: 1, 128>}, {pipeline_mode = #tpu.pipeline_mode<synchronous>, transform_indices = @transform_10, window_bounds = array<i64: 1, 128>}, {transform_indices = @transform_11, window_bounds = array<i64: 128, 128>}]} {
    %c0 = arith.constant 0 : index
    %c0_0 = arith.constant 0 : index
    %0 = vector.load %arg1[%c0, %c0_0] : memref<128x128xf32, #tpu.memory_space<vmem>>, vector<128x128xf32>
    %c0_1 = arith.constant 0 : index
    %c0_2 = arith.constant 0 : index
    %1 = vector.load %arg3[%c0_1, %c0_2] : memref<128x128xf32, #tpu.memory_space<vmem>>, vector<128x128xf32>
    %cst = arith.constant dense<0.000000e+00> : vector<128x128xf32>
    %2 = tpu.matmul %0, %1, %cst {dimension_numbers = #tpu.dot_dimension_numbers<[1], [0], [0], [1], [0, 0, 1, 1], [], []>} : vector<128x128xf32>, vector<128x128xf32>, vector<128x128xf32> -> vector<128x128xf32>
    %c0_3 = arith.constant 0 : index
    %c0_4 = arith.constant 0 : index
    %3 = vector.load %arg2[%c0_3, %c0_4] : memref<128x128xf32, #tpu.memory_space<vmem>>, vector<128x128xf32>
    %c0_5 = arith.constant 0 : index
    %c0_6 = arith.constant 0 : index
    %4 = vector.load %arg4[%c0_5, %c0_6] : memref<128x128xf32, #tpu.memory_space<vmem>>, vector<128x128xf32>
    %cst_7 = arith.constant dense<0.000000e+00> : vector<128x128xf32>
    %5 = tpu.matmul %3, %4, %cst_7 {dimension_numbers = #tpu.dot_dimension_numbers<[1], [0], [0], [1], [0, 0, 1, 1], [], []>} : vector<128x128xf32>, vector<128x128xf32>, vector<128x128xf32> -> vector<128x128xf32>
    %6 = arith.addf %2, %5 : vector<128x128xf32>
    %c0_8 = arith.constant 0 : index
    %c0_9 = arith.constant 0 : index
    %7 = vector.load %arg5[%c0_8, %c0_9] : memref<1x128xf32, #tpu.memory_space<vmem>>, vector<1x128xf32>
    %8 = vector.broadcast %7 : vector<1x128xf32> to vector<128x128xf32>
    %9 = arith.addf %6, %8 : vector<128x128xf32>
    %cst_10 = arith.constant 0.000000e+00 : f32
    %10 = vector.broadcast %cst_10 : f32 to vector<128x128xf32>
    %11 = arith.maximumf %9, %10 : vector<128x128xf32>
    %c0_11 = arith.constant 0 : index
    %c0_12 = arith.constant 0 : index
    %12 = vector.load %arg6[%c0_11, %c0_12] : memref<128x128xf32, #tpu.memory_space<vmem>>, vector<128x128xf32>
    %cst_13 = arith.constant dense<0.000000e+00> : vector<128x128xf32>
    %13 = tpu.matmul %11, %12, %cst_13 {dimension_numbers = #tpu.dot_dimension_numbers<[1], [0], [0], [1], [0, 0, 1, 1], [], []>} : vector<128x128xf32>, vector<128x128xf32>, vector<128x128xf32> -> vector<128x128xf32>
    %c0_14 = arith.constant 0 : index
    %c0_15 = arith.constant 0 : index
    %14 = vector.load %arg7[%c0_14, %c0_15] : memref<1x128xf32, #tpu.memory_space<vmem>>, vector<1x128xf32>
    %15 = vector.broadcast %14 : vector<1x128xf32> to vector<128x128xf32>
    %16 = arith.addf %13, %15 : vector<128x128xf32>
    %cst_16 = arith.constant 0.000000e+00 : f32
    %17 = vector.broadcast %cst_16 : f32 to vector<128x128xf32>
    %18 = arith.maximumf %16, %17 : vector<128x128xf32>
    %c0_17 = arith.constant 0 : index
    %c0_18 = arith.constant 0 : index
    %19 = vector.load %arg8[%c0_17, %c0_18] : memref<128x128xf32, #tpu.memory_space<vmem>>, vector<128x128xf32>
    %cst_19 = arith.constant dense<0.000000e+00> : vector<128x128xf32>
    %20 = tpu.matmul %18, %19, %cst_19 {dimension_numbers = #tpu.dot_dimension_numbers<[1], [0], [0], [1], [0, 0, 1, 1], [], []>} : vector<128x128xf32>, vector<128x128xf32>, vector<128x128xf32> -> vector<128x128xf32>
    %c0_20 = arith.constant 0 : index
    %c0_21 = arith.constant 0 : index
    %21 = vector.load %arg9[%c0_20, %c0_21] : memref<1x128xf32, #tpu.memory_space<vmem>>, vector<1x128xf32>
    %22 = vector.broadcast %21 : vector<1x128xf32> to vector<128x128xf32>
    %23 = arith.addf %20, %22 : vector<128x128xf32>
    %cst_22 = arith.constant dense<0.000000e+00> : vector<128xf32>
    %24 = vector.multi_reduction <add>, %23, %cst_22 [1] : vector<128x128xf32> to vector<128xf32>
    %25 = vector.shape_cast %24 : vector<128xf32> to vector<128x1xf32>
    %cst_23 = arith.constant 1.280000e+02 : f32
    %26 = vector.broadcast %cst_23 : f32 to vector<128x1xf32>
    %27 = arith.divf %25, %26 : vector<128x1xf32>
    %28 = vector.broadcast %27 : vector<128x1xf32> to vector<128x128xf32>
    %29 = arith.subf %23, %28 : vector<128x128xf32>
    %30 = vector.broadcast %27 : vector<128x1xf32> to vector<128x128xf32>
    %31 = arith.subf %23, %30 : vector<128x128xf32>
    %32 = arith.mulf %29, %31 : vector<128x128xf32>
    %cst_24 = arith.constant dense<0.000000e+00> : vector<128xf32>
    %33 = vector.multi_reduction <add>, %32, %cst_24 [1] : vector<128x128xf32> to vector<128xf32>
    %34 = vector.shape_cast %33 : vector<128xf32> to vector<128x1xf32>
    %cst_25 = arith.constant 1.280000e+02 : f32
    %35 = vector.broadcast %cst_25 : f32 to vector<128x1xf32>
    %36 = arith.divf %34, %35 : vector<128x1xf32>
    %37 = vector.broadcast %27 : vector<128x1xf32> to vector<128x128xf32>
    %38 = arith.subf %23, %37 : vector<128x128xf32>
    %cst_26 = arith.constant 9.99999974E-6 : f32
    %39 = vector.broadcast %cst_26 : f32 to vector<128x1xf32>
    %40 = arith.addf %36, %39 : vector<128x1xf32>
    %41 = math.rsqrt %40 : vector<128x1xf32>
    %42 = vector.broadcast %41 : vector<128x1xf32> to vector<128x128xf32>
    %43 = arith.mulf %38, %42 : vector<128x128xf32>
    %c0_27 = arith.constant 0 : index
    %c0_28 = arith.constant 0 : index
    %44 = vector.load %arg10[%c0_27, %c0_28] : memref<1x128xf32, #tpu.memory_space<vmem>>, vector<1x128xf32>
    %45 = vector.broadcast %44 : vector<1x128xf32> to vector<128x128xf32>
    %46 = arith.mulf %43, %45 : vector<128x128xf32>
    %c0_29 = arith.constant 0 : index
    %c0_30 = arith.constant 0 : index
    %47 = vector.load %arg11[%c0_29, %c0_30] : memref<1x128xf32, #tpu.memory_space<vmem>>, vector<1x128xf32>
    %48 = vector.broadcast %47 : vector<1x128xf32> to vector<128x128xf32>
    %49 = arith.addf %46, %48 : vector<128x128xf32>
    %c0_31 = arith.constant 0 : index
    %c0_32 = arith.constant 0 : index
    %50 = vector.load %arg2[%c0_31, %c0_32] : memref<128x128xf32, #tpu.memory_space<vmem>>, vector<128x128xf32>
    %51 = arith.addf %49, %50 : vector<128x128xf32>
    %c0_33 = arith.constant 0 : index
    %c0_34 = arith.constant 0 : index
    %52 = vector.load %arg12[%c0_33, %c0_34] : memref<128x128xf32, #tpu.memory_space<vmem>>, vector<128x128xf32>
    tpu.vector_store %arg12[%c0_33, %c0_34], %51 {strides = array<i32>} : memref<128x128xf32, #tpu.memory_space<vmem>>, vector<128x128xf32>,
    return
  }
  func.func @transform_0(%arg0: i32) -> (i32, i32) {
    %c0_i32 = arith.constant 0 : i32
    %c0_i32_0 = arith.constant 0 : i32
    return %arg0, %c0_i32 : i32, i32
  }
  func.func @transform_1(%arg0: i32) -> (i32, i32) {
    %c0_i32 = arith.constant 0 : i32
    %c0_i32_0 = arith.constant 0 : i32
    return %arg0, %c0_i32 : i32, i32
  }
  func.func @transform_2(%arg0: i32) -> (i32, i32) {
    %c0_i32 = arith.constant 0 : i32
    %c0_i32_0 = arith.constant 0 : i32
    %c0_i32_1 = arith.constant 0 : i32
    return %c0_i32, %c0_i32_0 : i32, i32
  }
  func.func @transform_3(%arg0: i32) -> (i32, i32) {
    %c0_i32 = arith.constant 0 : i32
    %c0_i32_0 = arith.constant 0 : i32
    %c0_i32_1 = arith.constant 0 : i32
    return %c0_i32, %c0_i32_0 : i32, i32
  }
  func.func @transform_4(%arg0: i32) -> (i32, i32) {
    %c0_i32 = arith.constant 0 : i32
    %c0_i32_0 = arith.constant 0 : i32
    %c0_i32_1 = arith.constant 0 : i32
    return %c0_i32, %c0_i32_0 : i32, i32
  }
  func.func @transform_5(%arg0: i32) -> (i32, i32) {
    %c0_i32 = arith.constant 0 : i32
    %c0_i32_0 = arith.constant 0 : i32
    %c0_i32_1 = arith.constant 0 : i32
    return %c0_i32, %c0_i32_0 : i32, i32
  }
  func.func @transform_6(%arg0: i32) -> (i32, i32) {
    %c0_i32 = arith.constant 0 : i32
    %c0_i32_0 = arith.constant 0 : i32
    %c0_i32_1 = arith.constant 0 : i32
    return %c0_i32, %c0_i32_0 : i32, i32
  }
  func.func @transform_7(%arg0: i32) -> (i32, i32) {
    %c0_i32 = arith.constant 0 : i32
    %c0_i32_0 = arith.constant 0 : i32
    %c0_i32_1 = arith.constant 0 : i32
    return %c0_i32, %c0_i32_0 : i32, i32
  }
  func.func @transform_8(%arg0: i32) -> (i32, i32) {
    %c0_i32 = arith.constant 0 : i32
    %c0_i32_0 = arith.constant 0 : i32
    %c0_i32_1 = arith.constant 0 : i32
    return %c0_i32, %c0_i32_0 : i32, i32
  }
  func.func @transform_9(%arg0: i32) -> (i32, i32) {
    %c0_i32 = arith.constant 0 : i32
    %c0_i32_0 = arith.constant 0 : i32
    %c0_i32_1 = arith.constant 0 : i32
    return %c0_i32, %c0_i32_0 : i32, i32
  }
  func.func @transform_10(%arg0: i32) -> (i32, i32) {
    %c0_i32 = arith.constant 0 : i32
    %c0_i32_0 = arith.constant 0 : i32
    %c0_i32_1 = arith.constant 0 : i32
    return %c0_i32, %c0_i32_0 : i32, i32
  }
  func.func @transform_11(%arg0: i32) -> (i32, i32) {
    %c0_i32 = arith.constant 0 : i32
    %c0_i32_0 = arith.constant 0 : i32
    return %arg0, %c0_i32 : i32, i32
  }
}

module attributes {stable_mosaic.version = 11 : i64} {
  func.func @kernel(%arg0: i32, %arg1: memref<128x128xf32, #tpu.memory_space<vmem>>, %arg2: memref<128x128xf32, #tpu.memory_space<vmem>>, %arg3: memref<128x128xf32, #tpu.memory_space<vmem>>, %arg4: memref<128x128xf32, #tpu.memory_space<vmem>>, %arg5: memref<1x128xf32, #tpu.memory_space<vmem>>, %arg6: memref<128x128xf32, #tpu.memory_space<vmem>>, %arg7: memref<1x128xf32, #tpu.memory_space<vmem>>, %arg8: memref<128x128xf32, #tpu.memory_space<vmem>>, %arg9: memref<1x128xf32, #tpu.memory_space<vmem>>, %arg10: memref<1x128xf32, #tpu.memory_space<vmem>>, %arg11: memref<1x128xf32, #tpu.memory_space<vmem>>, %arg12: memref<128x128xf32, #tpu.memory_space<vmem>>) attributes {dimension_semantics = [#tpu.dimension_semantics<parallel>], iteration_bounds = array<i64: 2>, scalar_prefetch = 0 : i64, scratch_operands = 0 : i64, tpu.core_type = #tpu.core_type<tc>, window_params = [{transform_indices = @transform_0, window_bounds = array<i64: 128, 128>}, {transform_indices = @transform_1, window_bounds = array<i64: 128, 128>}, {pipeline_mode = #tpu.pipeline_mode<synchronous>, transform_indices = @transform_2, window_bounds = array<i64: 128, 128>}, {pipeline_mode = #tpu.pipeline_mode<synchronous>, transform_indices = @transform_3, window_bounds = array<i64: 128, 128>}, {pipeline_mode = #tpu.pipeline_mode<synchronous>, transform_indices = @transform_4, window_bounds = array<i64: 1, 128>}, {pipeline_mode = #tpu.pipeline_mode<synchronous>, transform_indices = @transform_5, window_bounds = array<i64: 128, 128>}, {pipeline_mode = #tpu.pipeline_mode<synchronous>, transform_indices = @transform_6, window_bounds = array<i64: 1, 128>}, {pipeline_mode = #tpu.pipeline_mode<synchronous>, transform_indices = @transform_7, window_bounds = array<i64: 128, 128>}, {pipeline_mode = #tpu.pipeline_mode<synchronous>, transform_indices = @transform_8, window_bounds = array<i64: 1, 128>}, {pipeline_mode = #tpu.pipeline_mode<synchronous>, transform_indices = @transform_9, window_bounds = array<i64: 1, 128>}, {pipeline_mode = #tpu.pipeline_mode<synchronous>, transform_indices = @transform_10, window_bounds = array<i64: 1, 128>}, {transform_indices = @transform_11, window_bounds = array<i64: 128, 128>}]} {
    %c0 = arith.constant 0 : index
    %c0_0 = arith.constant 0 : index
    %0 = vector.load %arg1[%c0, %c0_0] : memref<128x128xf32, #tpu.memory_space<vmem>>, vector<128x128xf32>
    %c0_1 = arith.constant 0 : index
    %c0_2 = arith.constant 0 : index
    %1 = vector.load %arg3[%c0_1, %c0_2] : memref<128x128xf32, #tpu.memory_space<vmem>>, vector<128x128xf32>
    %cst = arith.constant dense<0.000000e+00> : vector<128x128xf32>
    %2 = tpu.matmul %0, %1, %cst {dimension_numbers = #tpu.dot_dimension_numbers<[1], [0], [0], [1], [0, 0, 1, 1], [], []>} : vector<128x128xf32>, vector<128x128xf32>, vector<128x128xf32> -> vector<128x128xf32>
    %c0_3 = arith.constant 0 : index
    %c0_4 = arith.constant 0 : index
    %3 = vector.load %arg2[%c0_3, %c0_4] : memref<128x128xf32, #tpu.memory_space<vmem>>, vector<128x128xf32>
    %c0_5 = arith.constant 0 : index
    %c0_6 = arith.constant 0 : index
    %4 = vector.load %arg4[%c0_5, %c0_6] : memref<128x128xf32, #tpu.memory_space<vmem>>, vector<128x128xf32>
    %cst_7 = arith.constant dense<0.000000e+00> : vector<128x128xf32>
    %5 = tpu.matmul %3, %4, %cst_7 {dimension_numbers = #tpu.dot_dimension_numbers<[1], [0], [0], [1], [0, 0, 1, 1], [], []>} : vector<128x128xf32>, vector<128x128xf32>, vector<128x128xf32> -> vector<128x128xf32>
    %6 = arith.addf %2, %5 : vector<128x128xf32>
    %c0_8 = arith.constant 0 : index
    %c0_9 = arith.constant 0 : index
    %7 = vector.load %arg5[%c0_8, %c0_9] : memref<1x128xf32, #tpu.memory_space<vmem>>, vector<1x128xf32>
    %8 = vector.broadcast %7 : vector<1x128xf32> to vector<128x128xf32>
    %9 = arith.addf %6, %8 : vector<128x128xf32>
    %cst_10 = arith.constant 0.000000e+00 : f32
    %10 = vector.broadcast %cst_10 : f32 to vector<128x128xf32>
    %11 = arith.maximumf %9, %10 : vector<128x128xf32>
    %c0_11 = arith.constant 0 : index
    %c0_12 = arith.constant 0 : index
    %12 = vector.load %arg6[%c0_11, %c0_12] : memref<128x128xf32, #tpu.memory_space<vmem>>, vector<128x128xf32>
    %cst_13 = arith.constant dense<0.000000e+00> : vector<128x128xf32>
    %13 = tpu.matmul %11, %12, %cst_13 {dimension_numbers = #tpu.dot_dimension_numbers<[1], [0], [0], [1], [0, 0, 1, 1], [], []>} : vector<128x128xf32>, vector<128x128xf32>, vector<128x128xf32> -> vector<128x128xf32>
    %c0_14 = arith.constant 0 : index
    %c0_15 = arith.constant 0 : index
    %14 = vector.load %arg7[%c0_14, %c0_15] : memref<1x128xf32, #tpu.memory_space<vmem>>, vector<1x128xf32>
    %15 = vector.broadcast %14 : vector<1x128xf32> to vector<128x128xf32>
    %16 = arith.addf %13, %15 : vector<128x128xf32>
    %cst_16 = arith.constant 0.000000e+00 : f32
    %17 = vector.broadcast %cst_16 : f32 to vector<128x128xf32>
    %18 = arith.maximumf %16, %17 : vector<128x128xf32>
    %c0_17 = arith.constant 0 : index
    %c0_18 = arith.constant 0 : index
    %19 = vector.load %arg8[%c0_17, %c0_18] : memref<128x128xf32, #tpu.memory_space<vmem>>, vector<128x128xf32>
    %cst_19 = arith.constant dense<0.000000e+00> : vector<128x128xf32>
    %20 = tpu.matmul %18, %19, %cst_19 {dimension_numbers = #tpu.dot_dimension_numbers<[1], [0], [0], [1], [0, 0, 1, 1], [], []>} : vector<128x128xf32>, vector<128x128xf32>, vector<128x128xf32> -> vector<128x128xf32>
    %c0_20 = arith.constant 0 : index
    %c0_21 = arith.constant 0 : index
    %21 = vector.load %arg9[%c0_20, %c0_21] : memref<1x128xf32, #tpu.memory_space<vmem>>, vector<1x128xf32>
    %22 = vector.broadcast %21 : vector<1x128xf32> to vector<128x128xf32>
    %23 = arith.addf %20, %22 : vector<128x128xf32>
    %cst_22 = arith.constant dense<0.000000e+00> : vector<128xf32>
    %24 = vector.multi_reduction <add>, %23, %cst_22 [1] : vector<128x128xf32> to vector<128xf32>
    %25 = vector.shape_cast %24 : vector<128xf32> to vector<128x1xf32>
    %cst_23 = arith.constant 1.280000e+02 : f32
    %26 = vector.broadcast %cst_23 : f32 to vector<128x1xf32>
    %27 = arith.divf %25, %26 : vector<128x1xf32>
    %28 = vector.broadcast %27 : vector<128x1xf32> to vector<128x128xf32>
    %29 = arith.subf %23, %28 : vector<128x128xf32>
    %30 = vector.broadcast %27 : vector<128x1xf32> to vector<128x128xf32>
    %31 = arith.subf %23, %30 : vector<128x128xf32>
    %32 = arith.mulf %29, %31 : vector<128x128xf32>
    %cst_24 = arith.constant dense<0.000000e+00> : vector<128xf32>
    %33 = vector.multi_reduction <add>, %32, %cst_24 [1] : vector<128x128xf32> to vector<128xf32>
    %34 = vector.shape_cast %33 : vector<128xf32> to vector<128x1xf32>
    %cst_25 = arith.constant 1.280000e+02 : f32
    %35 = vector.broadcast %cst_25 : f32 to vector<128x1xf32>
    %36 = arith.divf %34, %35 : vector<128x1xf32>
    %37 = vector.broadcast %27 : vector<128x1xf32> to vector<128x128xf32>
    %38 = arith.subf %23, %37 : vector<128x128xf32>
    %cst_26 = arith.constant 9.99999974E-6 : f32
    %39 = vector.broadcast %cst_26 : f32 to vector<128x1xf32>
    %40 = arith.addf %36, %39 : vector<128x1xf32>
    %41 = math.rsqrt %40 : vector<128x1xf32>
    %42 = vector.broadcast %41 : vector<128x1xf32> to vector<128x128xf32>
    %43 = arith.mulf %38, %42 : vector<128x128xf32>
    %c0_27 = arith.constant 0 : index
    %c0_28 = arith.constant 0 : index
    %44 = vector.load %arg10[%c0_27, %c0_28] : memref<1x128xf32, #tpu.memory_space<vmem>>, vector<1x128xf32>
    %45 = vector.broadcast %44 : vector<1x128xf32> to vector<128x128xf32>
    %46 = arith.mulf %43, %45 : vector<128x128xf32>
    %c0_29 = arith.constant 0 : index
    %c0_30 = arith.constant 0 : index
    %47 = vector.load %arg11[%c0_29, %c0_30] : memref<1x128xf32, #tpu.memory_space<vmem>>, vector<1x128xf32>
    %48 = vector.broadcast %47 : vector<1x128xf32> to vector<128x128xf32>
    %49 = arith.addf %46, %48 : vector<128x128xf32>
    %c0_31 = arith.constant 0 : index
    %c0_32 = arith.constant 0 : index
    %50 = vector.load %arg2[%c0_31, %c0_32] : memref<128x128xf32, #tpu.memory_space<vmem>>, vector<128x128xf32>
    %51 = arith.addf %49, %50 : vector<128x128xf32>
    %c0_33 = arith.constant 0 : index
    %c0_34 = arith.constant 0 : index
    %52 = vector.load %arg12[%c0_33, %c0_34] : memref<128x128xf32, #tpu.memory_space<vmem>>, vector<128x128xf32>
    tpu.vector_store %arg12[%c0_33, %c0_34], %51 {strides = array<i32>} : memref<128x128xf32, #tpu.memory_space<vmem>>, vector<128x128xf32>,
    return
  }
  func.func @transform_0(%arg0: i32) -> (i32, i32) {
    %c0_i32 = arith.constant 0 : i32
    %c0_i32_0 = arith.constant 0 : i32
    return %arg0, %c0_i32 : i32, i32
  }
  func.func @transform_1(%arg0: i32) -> (i32, i32) {
    %c0_i32 = arith.constant 0 : i32
    %c0_i32_0 = arith.constant 0 : i32
    return %arg0, %c0_i32 : i32, i32
  }
  func.func @transform_2(%arg0: i32) -> (i32, i32) {
    %c0_i32 = arith.constant 0 : i32
    %c0_i32_0 = arith.constant 0 : i32
    %c0_i32_1 = arith.constant 0 : i32
    return %c0_i32, %c0_i32_0 : i32, i32
  }
  func.func @transform_3(%arg0: i32) -> (i32, i32) {
    %c0_i32 = arith.constant 0 : i32
    %c0_i32_0 = arith.constant 0 : i32
    %c0_i32_1 = arith.constant 0 : i32
    return %c0_i32, %c0_i32_0 : i32, i32
  }
  func.func @transform_4(%arg0: i32) -> (i32, i32) {
    %c0_i32 = arith.constant 0 : i32
    %c0_i32_0 = arith.constant 0 : i32
    %c0_i32_1 = arith.constant 0 : i32
    return %c0_i32, %c0_i32_0 : i32, i32
  }
  func.func @transform_5(%arg0: i32) -> (i32, i32) {
    %c0_i32 = arith.constant 0 : i32
    %c0_i32_0 = arith.constant 0 : i32
    %c0_i32_1 = arith.constant 0 : i32
    return %c0_i32, %c0_i32_0 : i32, i32
  }
  func.func @transform_6(%arg0: i32) -> (i32, i32) {
    %c0_i32 = arith.constant 0 : i32
    %c0_i32_0 = arith.constant 0 : i32
    %c0_i32_1 = arith.constant 0 : i32
    return %c0_i32, %c0_i32_0 : i32, i32
  }
  func.func @transform_7(%arg0: i32) -> (i32, i32) {
    %c0_i32 = arith.constant 0 : i32
    %c0_i32_0 = arith.constant 0 : i32
    %c0_i32_1 = arith.constant 0 : i32
    return %c0_i32, %c0_i32_0 : i32, i32
  }
  func.func @transform_8(%arg0: i32) -> (i32, i32) {
    %c0_i32 = arith.constant 0 : i32
    %c0_i32_0 = arith.constant 0 : i32
    %c0_i32_1 = arith.constant 0 : i32
    return %c0_i32, %c0_i32_0 : i32, i32
  }
  func.func @transform_9(%arg0: i32) -> (i32, i32) {
    %c0_i32 = arith.constant 0 : i32
    %c0_i32_0 = arith.constant 0 : i32
    %c0_i32_1 = arith.constant 0 : i32
    return %c0_i32, %c0_i32_0 : i32, i32
  }
  func.func @transform_10(%arg0: i32) -> (i32, i32) {
    %c0_i32 = arith.constant 0 : i32
    %c0_i32_0 = arith.constant 0 : i32
    %c0_i32_1 = arith.constant 0 : i32
    return %c0_i32, %c0_i32_0 : i32, i32
  }
  func.func @transform_11(%arg0: i32) -> (i32, i32) {
    %c0_i32 = arith.constant 0 : i32
    %c0_i32_0 = arith.constant 0 : i32
    return %arg0, %c0_i32 : i32, i32
  }
}

</mosaic_0001>

<llo_original>
// kernel: graph_processor_forward.9
$region0: #{graph_processor_forward.9}
  #allocation0 [shape = 'u32[]', space=smem, size = 0x4, offset = 0x4, fixed_abs, tag = 'smem constant byte address 0x4 - core index']
  #allocation1 [shape = 'u32[144,128]{1,0:T(1,128)}', space=vmem, size = 0x12000, scoped, tag = 'internal scratch']
  %s0 = inlined_call_operand.vmem [shape: f32[256,128], index: 0, kind: input, shape index: {}]
  %s1 = inlined_call_operand.vmem [shape: f32[256,128], index: 1, kind: input, shape index: {}]
  %s2 = inlined_call_operand.vmem [shape: f32[128,128], index: 2, kind: input, shape index: {}]
  %s3 = inlined_call_operand.vmem [shape: f32[128,128], index: 3, kind: input, shape index: {}]
  %s4 = inlined_call_operand.vmem [shape: f32[1,128], index: 4, kind: input, shape index: {}]
  %s5 = inlined_call_operand.vmem [shape: f32[128,128], index: 5, kind: input, shape index: {}]
  %s6 = inlined_call_operand.vmem [shape: f32[1,128], index: 6, kind: input, shape index: {}]
  %s7 = inlined_call_operand.vmem [shape: f32[128,128], index: 7, kind: input, shape index: {}]
  %s8 = inlined_call_operand.vmem [shape: f32[1,128], index: 8, kind: input, shape index: {}]
  %s9 = inlined_call_operand.vmem [shape: f32[1,128], index: 9, kind: input, shape index: {}]
  %s10 = inlined_call_operand.vmem [shape: f32[1,128], index: 10, kind: input, shape index: {}]
  %s11 = inlined_call_operand.vmem [shape: f32[256,128], index: 11, kind: output, shape index: {}]
  %s12 = sld [smem:[#allocation0]]
  $region77: #{graph_processor_forward.9} parent=0
    _
  %s14 = ssub.s32 1, %s12
  %s15 = scalar_select 0, %s14, %s12
  loop: start=0, step=1, limit=4
  $region2: #{graph_processor_forward.9} parent=0 // loop_pre_header
    _
  $region3: #{graph_processor_forward.9} parent=0 // loop_header
    %s17 = sphi 0, %s21
    %p18 = scmp.ge.s32.totalorder %s17, 4
    %s27 = sphi 0, %s29
    %s30 = sphi 0, %s27
    %s31 = sphi 0, %s30
    %s47 = sphi 0, %s31
    %s53 = sphi 0, %s55
    %s56 = sphi 0, %s53
    %s57 = sphi 0, %s56
    %s73 = sphi 0, %s57
    %s77 = sphi 0, %s77
    %s79 = sphi 0, %s77
    %s80 = sphi 0, %s79
    %s94 = sphi 0, %s80
    %s98 = sphi 0, %s98
    %s100 = sphi 0, %s98
    %s101 = sphi 0, %s100
    %s115 = sphi 0, %s101
    %s119 = sphi 0, %s119
    %s121 = sphi 0, %s119
    %s122 = sphi 0, %s121
    %s136 = sphi 0, %s122
    %s140 = sphi 0, %s140
    %s142 = sphi 0, %s140
    %s143 = sphi 0, %s142
    %s157 = sphi 0, %s143
    %s161 = sphi 0, %s161
    %s163 = sphi 0, %s161
    %s164 = sphi 0, %s163
    %s178 = sphi 0, %s164
    %s182 = sphi 0, %s182
    %s184 = sphi 0, %s182
    %s185 = sphi 0, %s184
    %s199 = sphi 0, %s185
    %s203 = sphi 0, %s203
    %s205 = sphi 0, %s203
    %s206 = sphi 0, %s205
    %s220 = sphi 0, %s206
    %s224 = sphi 0, %s224
    %s226 = sphi 0, %s224
    %s227 = sphi 0, %s226
    %s241 = sphi 0, %s227
    %s245 = sphi 0, %s245
    %s247 = sphi 0, %s245
    %s248 = sphi 0, %s247
    %s262 = sphi 0, %s248
    %s268 = sphi 0, %s270
    %s271 = sphi 0, %s268
    %s272 = sphi 0, %s271
    %s288 = sphi 0, %s272
  $region4: #{graph_processor_forward.9} parent=0 // loop_header_branch
    %20 = sbr.rel (%p18) target = $region8
  $region5: #{graph_processor_forward.9} parent=0 // loop_body
    %s22 = ssub.s32 %s17, 1
    %s23 = ssub.s32 %s17, 2
    %s24 = sadd.s32 %s17, 1
    %s25 = ssub.s32 %s17, %s24
    %p26 = scmp.eq.s32.totalorder %s25, 0
    %s28 = sadd.s32 %s27, 1
    %s29 = scalar_select %p26, %s27, %s28
    %p32 = pneg %p26
    %p33 = scmp.eq.s32.totalorder %s17, 1
    %p34 = por %p32, %p33
    %p35 = scmp.ne.s32.totalorder %s27, %s30
    %p36 = scmp.eq.s32.totalorder %s17, 0
    %p37 = por %p35, %p36
    %p38 = scmp.ne.s32.totalorder %s27, %s30
    %p39 = scmp.eq.s32.totalorder %s22, 1
    %p40 = por %p38, %p39
    %p41 = scmp.ne.s32.totalorder %s30, %s31
    %p42 = scmp.eq.s32.totalorder %s22, 0
    %p43 = por %p41, %p42
    %p44 = scmp.ne.s32.totalorder %s30, %s31
    %p45 = scmp.eq.s32.totalorder %s23, 1
    %p46 = por %p44, %p45
    %p48 = scmp.ne.s32.totalorder %s31, %s47
    %p49 = scmp.eq.s32.totalorder %s23, 0
    %p50 = por %p48, %p49
    %s51 = ssub.s32 %s17, %s24
    %p52 = scmp.eq.s32.totalorder %s51, 0
    %s54 = sadd.s32 %s53, 1
    %s55 = scalar_select %p52, %s53, %s54
    %p58 = pneg %p52
    %p59 = scmp.eq.s32.totalorder %s17, 1
    %p60 = por %p58, %p59
    %p61 = scmp.ne.s32.totalorder %s53, %s56
    %p62 = scmp.eq.s32.totalorder %s17, 0
    %p63 = por %p61, %p62
    %p64 = scmp.ne.s32.totalorder %s53, %s56
    %p65 = scmp.eq.s32.totalorder %s22, 1
    %p66 = por %p64, %p65
    %p67 = scmp.ne.s32.totalorder %s56, %s57
    %p68 = scmp.eq.s32.totalorder %s22, 0
    %p69 = por %p67, %p68
    %p70 = scmp.ne.s32.totalorder %s56, %s57
    %p71 = scmp.eq.s32.totalorder %s23, 1
    %p72 = por %p70, %p71
    %p74 = scmp.ne.s32.totalorder %s57, %s73
    %p75 = scmp.eq.s32.totalorder %s23, 0
    %p76 = por %p74, %p75
    %s78 = sadd.s32 %s77, 1
    %p81 = scmp.eq.s32.totalorder %s17, 1
    %p82 = scmp.ne.s32.totalorder %s77, %s79
    %p83 = scmp.eq.s32.totalorder %s17, 0
    %p84 = por %p82, %p83
    %p85 = scmp.ne.s32.totalorder %s77, %s79
    %p86 = scmp.eq.s32.totalorder %s22, 1
    %p87 = por %p85, %p86
    %p88 = scmp.ne.s32.totalorder %s79, %s80
    %p89 = scmp.eq.s32.totalorder %s22, 0
    %p90 = por %p88, %p89
    %p91 = scmp.ne.s32.totalorder %s79, %s80
    %p92 = scmp.eq.s32.totalorder %s23, 1
    %p93 = por %p91, %p92
    %p95 = scmp.ne.s32.totalorder %s80, %s94
    %p96 = scmp.eq.s32.totalorder %s23, 0
    %p97 = por %p95, %p96
    %s99 = sadd.s32 %s98, 1
    %p102 = scmp.eq.s32.totalorder %s17, 1
    %p103 = scmp.ne.s32.totalorder %s98, %s100
    %p104 = scmp.eq.s32.totalorder %s17, 0
    %p105 = por %p103, %p104
    %p106 = scmp.ne.s32.totalorder %s98, %s100
    %p107 = scmp.eq.s32.totalorder %s22, 1
    %p108 = por %p106, %p107
    %p109 = scmp.ne.s32.totalorder %s100, %s101
    %p110 = scmp.eq.s32.totalorder %s22, 0
    %p111 = por %p109, %p110
    %p112 = scmp.ne.s32.totalorder %s100, %s101
    %p113 = scmp.eq.s32.totalorder %s23, 1
    %p114 = por %p112, %p113
    %p116 = scmp.ne.s32.totalorder %s101, %s115
    %p117 = scmp.eq.s32.totalorder %s23, 0
    %p118 = por %p116, %p117
    %s120 = sadd.s32 %s119, 1
    %p123 = scmp.eq.s32.totalorder %s17, 1
    %p124 = scmp.ne.s32.totalorder %s119, %s121
    %p125 = scmp.eq.s32.totalorder %s17, 0
    %p126 = por %p124, %p125
    %p127 = scmp.ne.s32.totalorder %s119, %s121
    %p128 = scmp.eq.s32.totalorder %s22, 1
    %p129 = por %p127, %p128
    %p130 = scmp.ne.s32.totalorder %s121, %s122
    %p131 = scmp.eq.s32.totalorder %s22, 0
    %p132 = por %p130, %p131
    %p133 = scmp.ne.s32.totalorder %s121, %s122
    %p134 = scmp.eq.s32.totalorder %s23, 1
    %p135 = por %p133, %p134
    %p137 = scmp.ne.s32.totalorder %s122, %s136
    %p138 = scmp.eq.s32.totalorder %s23, 0
    %p139 = por %p137, %p138
    %s141 = sadd.s32 %s140, 1
    %p144 = scmp.eq.s32.totalorder %s17, 1
    %p145 = scmp.ne.s32.totalorder %s140, %s142
    %p146 = scmp.eq.s32.totalorder %s17, 0
    %p147 = por %p145, %p146
    %p148 = scmp.ne.s32.totalorder %s140, %s142
    %p149 = scmp.eq.s32.totalorder %s22, 1
    %p150 = por %p148, %p149
    %p151 = scmp.ne.s32.totalorder %s142, %s143
    %p152 = scmp.eq.s32.totalorder %s22, 0
    %p153 = por %p151, %p152
    %p154 = scmp.ne.s32.totalorder %s142, %s143
    %p155 = scmp.eq.s32.totalorder %s23, 1
    %p156 = por %p154, %p155
    %p158 = scmp.ne.s32.totalorder %s143, %s157
    %p159 = scmp.eq.s32.totalorder %s23, 0
    %p160 = por %p158, %p159
    %s162 = sadd.s32 %s161, 1
    %p165 = scmp.eq.s32.totalorder %s17, 1
    %p166 = scmp.ne.s32.totalorder %s161, %s163
    %p167 = scmp.eq.s32.totalorder %s17, 0
    %p168 = por %p166, %p167
    %p169 = scmp.ne.s32.totalorder %s161, %s163
    %p170 = scmp.eq.s32.totalorder %s22, 1
    %p171 = por %p169, %p170
    %p172 = scmp.ne.s32.totalorder %s163, %s164
    %p173 = scmp.eq.s32.totalorder %s22, 0
    %p174 = por %p172, %p173
    %p175 = scmp.ne.s32.totalorder %s163, %s164
    %p176 = scmp.eq.s32.totalorder %s23, 1
    %p177 = por %p175, %p176
    %p179 = scmp.ne.s32.totalorder %s164, %s178
    %p180 = scmp.eq.s32.totalorder %s23, 0
    %p181 = por %p179, %p180
    %s183 = sadd.s32 %s182, 1
    %p186 = scmp.eq.s32.totalorder %s17, 1
    %p187 = scmp.ne.s32.totalorder %s182, %s184
    %p188 = scmp.eq.s32.totalorder %s17, 0
    %p189 = por %p187, %p188
    %p190 = scmp.ne.s32.totalorder %s182, %s184
    %p191 = scmp.eq.s32.totalorder %s22, 1
    %p192 = por %p190, %p191
    %p193 = scmp.ne.s32.totalorder %s184, %s185
    %p194 = scmp.eq.s32.totalorder %s22, 0
    %p195 = por %p193, %p194
    %p196 = scmp.ne.s32.totalorder %s184, %s185
    %p197 = scmp.eq.s32.totalorder %s23, 1
    %p198 = por %p196, %p197
    %p200 = scmp.ne.s32.totalorder %s185, %s199
    %p201 = scmp.eq.s32.totalorder %s23, 0
    %p202 = por %p200, %p201
    %s204 = sadd.s32 %s203, 1
    %p207 = scmp.eq.s32.totalorder %s17, 1
    %p208 = scmp.ne.s32.totalorder %s203, %s205
    %p209 = scmp.eq.s32.totalorder %s17, 0
    %p210 = por %p208, %p209
    %p211 = scmp.ne.s32.totalorder %s203, %s205
    %p212 = scmp.eq.s32.totalorder %s22, 1
    %p213 = por %p211, %p212
    %p214 = scmp.ne.s32.totalorder %s205, %s206
    %p215 = scmp.eq.s32.totalorder %s22, 0
    %p216 = por %p214, %p215
    %p217 = scmp.ne.s32.totalorder %s205, %s206
    %p218 = scmp.eq.s32.totalorder %s23, 1
    %p219 = por %p217, %p218
    %p221 = scmp.ne.s32.totalorder %s206, %s220
    %p222 = scmp.eq.s32.totalorder %s23, 0
    %p223 = por %p221, %p222
    %s225 = sadd.s32 %s224, 1
    %p228 = scmp.eq.s32.totalorder %s17, 1
    %p229 = scmp.ne.s32.totalorder %s224, %s226
    %p230 = scmp.eq.s32.totalorder %s17, 0
    %p231 = por %p229, %p230
    %p232 = scmp.ne.s32.totalorder %s224, %s226
    %p233 = scmp.eq.s32.totalorder %s22, 1
    %p234 = por %p232, %p233
    %p235 = scmp.ne.s32.totalorder %s226, %s227
    %p236 = scmp.eq.s32.totalorder %s22, 0
    %p237 = por %p235, %p236
    %p238 = scmp.ne.s32.totalorder %s226, %s227
    %p239 = scmp.eq.s32.totalorder %s23, 1
    %p240 = por %p238, %p239
    %p242 = scmp.ne.s32.totalorder %s227, %s241
    %p243 = scmp.eq.s32.totalorder %s23, 0
    %p244 = por %p242, %p243
    %s246 = sadd.s32 %s245, 1
    %p249 = scmp.eq.s32.totalorder %s17, 1
    %p250 = scmp.ne.s32.totalorder %s245, %s247
    %p251 = scmp.eq.s32.totalorder %s17, 0
    %p252 = por %p250, %p251
    %p253 = scmp.ne.s32.totalorder %s245, %s247
    %p254 = scmp.eq.s32.totalorder %s22, 1
    %p255 = por %p253, %p254
    %p256 = scmp.ne.s32.totalorder %s247, %s248
    %p257 = scmp.eq.s32.totalorder %s22, 0
    %p258 = por %p256, %p257
    %p259 = scmp.ne.s32.totalorder %s247, %s248
    %p260 = scmp.eq.s32.totalorder %s23, 1
    %p261 = por %p259, %p260
    %p263 = scmp.ne.s32.totalorder %s248, %s262
    %p264 = scmp.eq.s32.totalorder %s23, 0
    %p265 = por %p263, %p264
    %s266 = ssub.s32 %s17, %s24
    %p267 = scmp.eq.s32.totalorder %s266, 0
    %s269 = sadd.s32 %s268, 1
    %s270 = scalar_select %p267, %s268, %s269
    %p273 = pneg %p267
    %p274 = scmp.eq.s32.totalorder %s17, 1
    %p275 = por %p273, %p274
    %p276 = scmp.ne.s32.totalorder %s268, %s271
    %p277 = scmp.eq.s32.totalorder %s17, 0
    %p278 = por %p276, %p277
    %p279 = scmp.ne.s32.totalorder %s268, %s271
    %p280 = scmp.eq.s32.totalorder %s22, 1
    %p281 = por %p279, %p280
    %p282 = scmp.ne.s32.totalorder %s271, %s272
    %p283 = scmp.eq.s32.totalorder %s22, 0
    %p284 = por %p282, %p283
    %p285 = scmp.ne.s32.totalorder %s271, %s272
    %p286 = scmp.eq.s32.totalorder %s23, 1
    %p287 = por %p285, %p286
    %p289 = scmp.ne.s32.totalorder %s272, %s288
    %p290 = scmp.eq.s32.totalorder %s23, 0
    %p291 = por %p289, %p290
    %p292 = scmp.le.s32.totalorder 1, %s17
    %p293 = scmp.lt.s32.totalorder %s17, 3
    %p294 = pnand %p292, %p293
    %p295 = pneg %p294
    // Predicated region
    $region9: #{graph_processor_forward.9} parent=5 // pred_check
      _
    $region10: #{graph_processor_forward.9} parent=5 // pred_check_branch
      %297 = sbr.rel (%p294) target = $region12
    $region11: #{graph_processor_forward.9} parent=5 // pred_region
      %s298 = ssub.s32 %s17, 1
      // Predicated region
      $region13: #{graph_processor_forward.9} parent=11 // pred_check
        %p299 = pneg %p90
      $region14: #{graph_processor_forward.9} parent=11 // pred_check_branch
        %301 = sbr.rel (%p299) target = $region16
      $region15: #{graph_processor_forward.9} parent=11 // pred_region
        _
      $region16: #{graph_processor_forward.9} parent=11 // pred_fallthru
        _
      // Predicated region
      $region17: #{graph_processor_forward.9} parent=11 // pred_check
        %p302 = pneg %p111
      $region18: #{graph_processor_forward.9} parent=11 // pred_check_branch
        %304 = sbr.rel (%p302) target = $region20
      $region19: #{graph_processor_forward.9} parent=11 // pred_region
        _
      $region20: #{graph_processor_forward.9} parent=11 // pred_fallthru
        _
      // Predicated region
      $region21: #{graph_processor_forward.9} parent=11 // pred_check
        %p305 = pneg %p132
      $region22: #{graph_processor_forward.9} parent=11 // pred_check_branch
        %307 = sbr.rel (%p305) target = $region24
      $region23: #{graph_processor_forward.9} parent=11 // pred_region
        _
      $region24: #{graph_processor_forward.9} parent=11 // pred_fallthru
        _
      // Predicated region
      $region25: #{graph_processor_forward.9} parent=11 // pred_check
        %p308 = pneg %p153
      $region26: #{graph_processor_forward.9} parent=11 // pred_check_branch
        %310 = sbr.rel (%p308) target = $region28
      $region27: #{graph_processor_forward.9} parent=11 // pred_region
        _
      $region28: #{graph_processor_forward.9} parent=11 // pred_fallthru
        _
      // Predicated region
      $region29: #{graph_processor_forward.9} parent=11 // pred_check
        %p311 = pneg %p174
      $region30: #{graph_processor_forward.9} parent=11 // pred_check_branch
        %313 = sbr.rel (%p311) target = $region32
      $region31: #{graph_processor_forward.9} parent=11 // pred_region
        _
      $region32: #{graph_processor_forward.9} parent=11 // pred_fallthru
        _
      // Predicated region
      $region33: #{graph_processor_forward.9} parent=11 // pred_check
        %p314 = pneg %p195
      $region34: #{graph_processor_forward.9} parent=11 // pred_check_branch
        %316 = sbr.rel (%p314) target = $region36
      $region35: #{graph_processor_forward.9} parent=11 // pred_region
        _
      $region36: #{graph_processor_forward.9} parent=11 // pred_fallthru
        _
      // Predicated region
      $region37: #{graph_processor_forward.9} parent=11 // pred_check
        %p317 = pneg %p216
      $region38: #{graph_processor_forward.9} parent=11 // pred_check_branch
        %319 = sbr.rel (%p317) target = $region40
      $region39: #{graph_processor_forward.9} parent=11 // pred_region
        _
      $region40: #{graph_processor_forward.9} parent=11 // pred_fallthru
        _
      // Predicated region
      $region41: #{graph_processor_forward.9} parent=11 // pred_check
        %p320 = pneg %p237
      $region42: #{graph_processor_forward.9} parent=11 // pred_check_branch
        %322 = sbr.rel (%p320) target = $region44
      $region43: #{graph_processor_forward.9} parent=11 // pred_region
        _
      $region44: #{graph_processor_forward.9} parent=11 // pred_fallthru
        _
      // Predicated region
      $region45: #{graph_processor_forward.9} parent=11 // pred_check
        %p323 = pneg %p258
      $region46: #{graph_processor_forward.9} parent=11 // pred_check_branch
        %325 = sbr.rel (%p323) target = $region48
      $region47: #{graph_processor_forward.9} parent=11 // pred_region
        _
      $region48: #{graph_processor_forward.9} parent=11 // pred_fallthru
        _
    $region12: #{graph_processor_forward.9} parent=5 // pred_fallthru
      _
    %p326 = scmp.lt.s32.totalorder %s17, 2
    // Predicated region
    $region49: #{graph_processor_forward.9} parent=5 // pred_check
      %p327 = pneg %p326
    $region50: #{graph_processor_forward.9} parent=5 // pred_check_branch
      %329 = sbr.rel (%p327) target = $region52
    $region51: #{graph_processor_forward.9} parent=5 // pred_region
      // Predicated region
      $region53: #{graph_processor_forward.9} parent=51 // pred_check
        %p330 = pneg %p37
      $region54: #{graph_processor_forward.9} parent=51 // pred_check_branch
        %332 = sbr.rel (%p330) target = $region56
      $region55: #{graph_processor_forward.9} parent=51 // pred_region
        %s333 = smul.u32 16, %s17
        %p334 = scmp.lt.s32.totalorder %s333, 31
        %s335 = scalar_select %p334, %s333, 31
        %s336 = smul.addr %s335, 8
        %s337 = scalar_lea.vmem %s0, %s336
        %s338 = smul.u32 16, %s17
      $region56: #{graph_processor_forward.9} parent=51 // pred_fallthru
        _
      // Predicated region
      $region57: #{graph_processor_forward.9} parent=51 // pred_check
        %p339 = pneg %p63
      $region58: #{graph_processor_forward.9} parent=51 // pred_check_branch
        %341 = sbr.rel (%p339) target = $region60
      $region59: #{graph_processor_forward.9} parent=51 // pred_region
        %s342 = smul.u32 16, %s17
        %p343 = scmp.lt.s32.totalorder %s342, 31
        %s344 = scalar_select %p343, %s342, 31
        %s345 = smul.addr %s344, 8
        %s346 = scalar_lea.vmem %s1, %s345
        %s347 = smul.u32 16, %s17
      $region60: #{graph_processor_forward.9} parent=51 // pred_fallthru
        _
    $region52: #{graph_processor_forward.9} parent=5 // pred_fallthru
      _
    %p348 = scmp.le.s32.totalorder 1, %s17
    %p349 = scmp.lt.s32.totalorder %s17, 3
    %p350 = pnand %p348, %p349
    %p351 = pneg %p350
    // Predicated region
    $region61: #{graph_processor_forward.9} parent=5 // pred_check
      _
    $region62: #{graph_processor_forward.9} parent=5 // pred_check_branch
      %353 = sbr.rel (%p350) target = $region64
    $region63: #{graph_processor_forward.9} parent=5 // pred_region
      %s354 = ssub.s32 %s17, 1
      %s355 = smul.u32 16, %s22
      %p356 = scmp.lt.s32.totalorder %s355, 31
      %s357 = scalar_select %p356, %s355, 31
      %s358 = smul.addr %s357, 8
      %s359 = scalar_lea.vmem %s0, %s358
      %p360 = pneg %p43
      %p361 = pneg %p40
      %s362 = smul.u32 16, %s22
      %p363 = scmp.lt.s32.totalorder %s362, 31
      %s364 = scalar_select %p363, %s362, 31
      %s365 = smul.addr %s364, 8
      %s366 = scalar_lea.vmem %s1, %s365
      %p367 = pneg %p69
      %p368 = pneg %p66
      %p369 = pneg %p90
      %p370 = pneg %p87
      %p371 = pneg %p111
      %p372 = pneg %p108
      %p373 = pneg %p132
      %p374 = pneg %p129
      %p375 = pneg %p153
      %p376 = pneg %p150
      %p377 = pneg %p174
      %p378 = pneg %p171
      %p379 = pneg %p195
      %p380 = pneg %p192
      %p381 = pneg %p216
      %p382 = pneg %p213
      %p383 = pneg %p237
      %p384 = pneg %p234
      %p385 = pneg %p258
      %p386 = pneg %p255
      %p387 = pneg %p284
      %p388 = pneg %p281
      %s389 = smul.u32 16, %s22
      %p390 = scmp.lt.s32.totalorder %s389, 31
      %s391 = scalar_select %p390, %s389, 31
      %s392 = smul.addr %s391, 8
      %s393 = scalar_lea.vmem %s11, %s392
      %s394 = smul.u32 16, %s22
      %p395 = scmp.lt.s32.totalorder %s394, 31
      %s396 = scalar_select %p395, %s394, 31
      %s397 = smul.addr %s396, 8
      %s398 = scalar_lea.vmem %s0, %s397
      %s399 = smul.u32 16, %s22
      %s400 = smul.u32 16, %s22
      %p401 = scmp.lt.s32.totalorder %s400, 31
      %s402 = scalar_select %p401, %s400, 31
      %s403 = smul.addr %s402, 8
      %s404 = scalar_lea.vmem %s1, %s403
      %s405 = smul.u32 16, %s22
      %s406 = smul.u32 16, %s22
      %p407 = scmp.lt.s32.totalorder %s406, 31
      %s408 = scalar_select %p407, %s406, 31
      %s409 = smul.addr %s408, 8
      %s410 = scalar_lea.vmem %s11, %s409
      %s411 = smul.u32 16, %s22
      %v412 = vld [vmem:[%s398] sm:$0xff]
      %v413 = vld [vmem:[%s398 + $0x8] sm:$0xff]
      %v414 = vld [vmem:[%s398 + $0x10] sm:$0xff]
      %v415 = vld [vmem:[%s398 + $0x18] sm:$0xff]
      %v416 = vld [vmem:[%s398 + $0x20] sm:$0xff]
      %v417 = vld [vmem:[%s398 + $0x28] sm:$0xff]
      %v418 = vld [vmem:[%s398 + $0x30] sm:$0xff]
      %v419 = vld [vmem:[%s398 + $0x38] sm:$0xff]
      %v420 = vld [vmem:[%s398 + $0x40] sm:$0xff]
      %v421 = vld [vmem:[%s398 + $0x48] sm:$0xff]
      %v422 = vld [vmem:[%s398 + $0x50] sm:$0xff]
      %v423 = vld [vmem:[%s398 + $0x58] sm:$0xff]
      %v424 = vld [vmem:[%s398 + $0x60] sm:$0xff]
      %v425 = vld [vmem:[%s398 + $0x68] sm:$0xff]
      %v426 = vld [vmem:[%s398 + $0x70] sm:$0xff]
      %v427 = vld [vmem:[%s398 + $0x78] sm:$0xff]
      %v428 = vld [vmem:[%s2] sm:$0xff]
      %v429 = vld [vmem:[%s2 + $0x8] sm:$0xff]
      %v430 = vld [vmem:[%s2 + $0x10] sm:$0xff]
      %v431 = vld [vmem:[%s2 + $0x18] sm:$0xff]
      %v432 = vld [vmem:[%s2 + $0x20] sm:$0xff]
      %v433 = vld [vmem:[%s2 + $0x28] sm:$0xff]
      %v434 = vld [vmem:[%s2 + $0x30] sm:$0xff]
      %v435 = vld [vmem:[%s2 + $0x38] sm:$0xff]
      %v436 = vld [vmem:[%s2 + $0x40] sm:$0xff]
      %v437 = vld [vmem:[%s2 + $0x48] sm:$0xff]
      %v438 = vld [vmem:[%s2 + $0x50] sm:$0xff]
      %v439 = vld [vmem:[%s2 + $0x58] sm:$0xff]
      %v440 = vld [vmem:[%s2 + $0x60] sm:$0xff]
      %v441 = vld [vmem:[%s2 + $0x68] sm:$0xff]
      %v442 = vld [vmem:[%s2 + $0x70] sm:$0xff]
      %v443 = vld [vmem:[%s2 + $0x78] sm:$0xff]
      %v444 = vld [vmem:[%s404] sm:$0xff]
      %v445 = vld [vmem:[%s404 + $0x8] sm:$0xff]
      %v446 = vld [vmem:[%s404 + $0x10] sm:$0xff]
      %v447 = vld [vmem:[%s404 + $0x18] sm:$0xff]
      %v448 = vld [vmem:[%s404 + $0x20] sm:$0xff]
      %v449 = vld [vmem:[%s404 + $0x28] sm:$0xff]
      %v450 = vld [vmem:[%s404 + $0x30] sm:$0xff]
      %v451 = vld [vmem:[%s404 + $0x38] sm:$0xff]
      %v452 = vld [vmem:[%s404 + $0x40] sm:$0xff]
      %v453 = vld [vmem:[%s404 + $0x48] sm:$0xff]
      %v454 = vld [vmem:[%s404 + $0x50] sm:$0xff]
      %v455 = vld [vmem:[%s404 + $0x58] sm:$0xff]
      %v456 = vld [vmem:[%s404 + $0x60] sm:$0xff]
      %v457 = vld [vmem:[%s404 + $0x68] sm:$0xff]
      %v458 = vld [vmem:[%s404 + $0x70] sm:$0xff]
      %v459 = vld [vmem:[%s404 + $0x78] sm:$0xff]
      %v460 = vld [vmem:[%s3] sm:$0xff]
      %v461 = vld [vmem:[%s3 + $0x8] sm:$0xff]
      %v462 = vld [vmem:[%s3 + $0x10] sm:$0xff]
      %v463 = vld [vmem:[%s3 + $0x18] sm:$0xff]
      %v464 = vld [vmem:[%s3 + $0x20] sm:$0xff]
      %v465 = vld [vmem:[%s3 + $0x28] sm:$0xff]
      %v466 = vld [vmem:[%s3 + $0x30] sm:$0xff]
      %v467 = vld [vmem:[%s3 + $0x38] sm:$0xff]
      %v468 = vld [vmem:[%s3 + $0x40] sm:$0xff]
      %v469 = vld [vmem:[%s3 + $0x48] sm:$0xff]
      %v470 = vld [vmem:[%s3 + $0x50] sm:$0xff]
      %v471 = vld [vmem:[%s3 + $0x58] sm:$0xff]
      %v472 = vld [vmem:[%s3 + $0x60] sm:$0xff]
      %v473 = vld [vmem:[%s3 + $0x68] sm:$0xff]
      %v474 = vld [vmem:[%s3 + $0x70] sm:$0xff]
      %v475 = vld [vmem:[%s3 + $0x78] sm:$0xff]
      %476 = vmatprep.subr.mxu0 0.0
      %477 = vmatpush1.msra.mxu0 %v460
      %478 = vmatprep.subr.mxu0 0.0
      %479 = vmatpush1.msra.mxu0 %v461
      %480 = vmatprep.subr.mxu0 0.0
      %481 = vmatpush1.msra.mxu0 %v462
      %482 = vmatprep.subr.mxu0 0.0
      %483 = vmatpush1.msra.mxu0 %v463
      %484 = vmatprep.subr.mxu0 0.0
      %485 = vmatpush1.msra.mxu0 %v464
      %486 = vmatprep.subr.mxu0 0.0
      %487 = vmatpush1.msra.mxu0 %v465
      %488 = vmatprep.subr.mxu0 0.0
      %489 = vmatpush1.msra.mxu0 %v466
      %490 = vmatprep.subr.mxu0 0.0
      %491 = vmatpush1.msra.mxu0 %v467
      %492 = vmatprep.subr.mxu0 0.0
      %493 = vmatpush1.msra.mxu0 %v468
      %494 = vmatprep.subr.mxu0 0.0
      %495 = vmatpush1.msra.mxu0 %v469
      %496 = vmatprep.subr.mxu0 0.0
      %497 = vmatpush1.msra.mxu0 %v470
      %498 = vmatprep.subr.mxu0 0.0
      %499 = vmatpush1.msra.mxu0 %v471
      %500 = vmatprep.subr.mxu0 0.0
      %501 = vmatpush1.msra.mxu0 %v472
      %502 = vmatprep.subr.mxu0 0.0
      %503 = vmatpush1.msra.mxu0 %v473
      %504 = vmatprep.subr.mxu0 0.0
      %505 = vmatpush1.msra.mxu0 %v474
      %506 = vmatprep.subr.mxu0 0.0
      %507 = vmatpush1.msra.mxu0 %v475
      %508 = vmatprep.subr.mxu0 0.0
      %509 = vmatpush1.msra.mxu0 0.0
      %510 = vmatprep.subr.mxu0 0.0
      %511 = vmatpush1.msra.mxu0 0.0
      %512 = vmatprep.subr.mxu0 0.0
      %513 = vmatpush1.msra.mxu0 0.0
      %514 = vmatprep.subr.mxu0 0.0
      %515 = vmatpush1.msra.mxu0 0.0
      %516 = vmatprep.subr.mxu0 0.0
      %517 = vmatpush1.msra.mxu0 0.0
      %518 = vmatprep.subr.mxu0 0.0
      %519 = vmatpush1.msra.mxu0 0.0
      %520 = vmatprep.subr.mxu0 0.0
      %521 = vmatpush1.msra.mxu0 0.0
      %522 = vmatprep.subr.mxu0 0.0
      %523 = vmatpush1.msra.mxu0 0.0
      %524 = vmatprep.subr.mxu0 0.0
      %525 = vmatpush1.msra.mxu0 0.0
      %526 = vmatprep.subr.mxu0 0.0
      %527 = vmatpush1.msra.mxu0 0.0
      %528 = vmatprep.subr.mxu0 0.0
      %529 = vmatpush1.msra.mxu0 0.0
      %530 = vmatprep.subr.mxu0 0.0
      %531 = vmatpush1.msra.mxu0 0.0
      %532 = vmatprep.subr.mxu0 0.0
      %533 = vmatpush1.msra.mxu0 0.0
      %534 = vmatprep.subr.mxu0 0.0
      %535 = vmatpush1.msra.mxu0 0.0
      %536 = vmatprep.subr.mxu0 0.0
      %537 = vmatpush1.msra.mxu0 0.0
      %538 = vmatprep.subr.mxu0 0.0
      %539 = vmatpush1.msra.mxu0 0.0
      %540 = vmatprep.mubr.f32.mxu0 0.0
      %541 = vmatmul.mubr.f32.gmra.mrb[0].mxu0 %v444
      %v542 = vpop.f32.mrb[0].mxu0
      %v543 = vadd.f32 0.0, %v542
      %v544 = vpop.f32.mrb[0].mxu0
      %545 = vmatprep.mubr.f32.mxu0 0.0
      %546 = vmatmul.mubr.f32.gmra.mrb[0].mxu0 %v445
      %v547 = vpop.f32.mrb[0].mxu0
      %v548 = vadd.f32 0.0, %v547
      %v549 = vpop.f32.mrb[0].mxu0
      %550 = vmatprep.mubr.f32.mxu0 0.0
      %551 = vmatmul.mubr.f32.gmra.mrb[0].mxu0 %v446
      %v552 = vpop.f32.mrb[0].mxu0
      %v553 = vadd.f32 0.0, %v552
      %v554 = vpop.f32.mrb[0].mxu0
      %555 = vmatprep.mubr.f32.mxu0 0.0
      %556 = vmatmul.mubr.f32.gmra.mrb[0].mxu0 %v447
      %v557 = vpop.f32.mrb[0].mxu0
      %v558 = vadd.f32 0.0, %v557
      %v559 = vpop.f32.mrb[0].mxu0
      %560 = vmatprep.mubr.f32.mxu0 0.0
      %561 = vmatmul.mubr.f32.gmra.mrb[0].mxu0 %v448
      %v562 = vpop.f32.mrb[0].mxu0
      %v563 = vadd.f32 0.0, %v562
      %v564 = vpop.f32.mrb[0].mxu0
      %565 = vmatprep.mubr.f32.mxu0 0.0
      %566 = vmatmul.mubr.f32.gmra.mrb[0].mxu0 %v449
      %v567 = vpop.f32.mrb[0].mxu0
      %v568 = vadd.f32 0.0, %v567
      %v569 = vpop.f32.mrb[0].mxu0
      %570 = vmatprep.mubr.f32.mxu0 0.0
      %571 = vmatmul.mubr.f32.gmra.mrb[0].mxu0 %v450
      %v572 = vpop.f32.mrb[0].mxu0
      %v573 = vadd.f32 0.0, %v572
      %v574 = vpop.f32.mrb[0].mxu0
      %575 = vmatprep.mubr.f32.mxu0 0.0
      %576 = vmatmul.mubr.f32.gmra.mrb[0].mxu0 %v451
      %v577 = vpop.f32.mrb[0].mxu0
      %v578 = vadd.f32 0.0, %v577
      %v579 = vpop.f32.mrb[0].mxu0
      %580 = vmatprep.mubr.f32.mxu0 0.0
      %581 = vmatmul.mubr.f32.gmra.mrb[0].mxu0 %v452
      %v582 = vpop.f32.mrb[0].mxu0
      %v583 = vadd.f32 0.0, %v582
      %v584 = vpop.f32.mrb[0].mxu0
      %585 = vmatprep.mubr.f32.mxu0 0.0
      %586 = vmatmul.mubr.f32.gmra.mrb[0].mxu0 %v453
      %v587 = vpop.f32.mrb[0].mxu0
      %v588 = vadd.f32 0.0, %v587
      %v589 = vpop.f32.mrb[0].mxu0
      %590 = vmatprep.mubr.f32.mxu0 0.0
      %591 = vmatmul.mubr.f32.gmra.mrb[0].mxu0 %v454
      %v592 = vpop.f32.mrb[0].mxu0
      %v593 = vadd.f32 0.0, %v592
      %v594 = vpop.f32.mrb[0].mxu0
      %595 = vmatprep.mubr.f32.mxu0 0.0
      %596 = vmatmul.mubr.f32.gmra.mrb[0].mxu0 %v455
      %v597 = vpop.f32.mrb[0].mxu0
      %v598 = vadd.f32 0.0, %v597
      %v599 = vpop.f32.mrb[0].mxu0
      %600 = vmatprep.mubr.f32.mxu0 0.0
      %601 = vmatmul.mubr.f32.gmra.mrb[0].mxu0 %v456
      %v602 = vpop.f32.mrb[0].mxu0
      %v603 = vadd.f32 0.0, %v602
      %v604 = vpop.f32.mrb[0].mxu0
      %605 = vmatprep.mubr.f32.mxu0 0.0
      %606 = vmatmul.mubr.f32.gmra.mrb[0].mxu0 %v457
      %v607 = vpop.f32.mrb[0].mxu0
      %v608 = vadd.f32 0.0, %v607
      %v609 = vpop.f32.mrb[0].mxu0
      %610 = vmatprep.mubr.f32.mxu0 0.0
      %611 = vmatmul.mubr.f32.gmra.mrb[0].mxu0 %v458
      %v612 = vpop.f32.mrb[0].mxu0
      %v613 = vadd.f32 0.0, %v612
      %v614 = vpop.f32.mrb[0].mxu0
      %615 = vmatprep.mubr.f32.mxu0 0.0
      %616 = vmatmul.mubr.f32.gmra.mrb[0].mxu0 %v459
      %v617 = vpop.f32.mrb[0].mxu0
      %v618 = vadd.f32 0.0, %v617
      %v619 = vpop.f32.mrb[0].mxu0
      %620 = vdwg.mxu0
      %621 = vmatprep.subr.mxu0 0.0
      %622 = vmatpush1.msra.mxu0 %v428
      %623 = vmatprep.subr.mxu0 0.0
      %624 = vmatpush1.msra.mxu0 %v429
      %625 = vmatprep.subr.mxu0 0.0
      %626 = vmatpush1.msra.mxu0 %v430
      %627 = vmatprep.subr.mxu0 0.0
      %628 = vmatpush1.msra.mxu0 %v431
      %629 = vmatprep.subr.mxu0 0.0
      %630 = vmatpush1.msra.mxu0 %v432
      %631 = vmatprep.subr.mxu0 0.0
      %632 = vmatpush1.msra.mxu0 %v433
      %633 = vmatprep.subr.mxu0 0.0
      %634 = vmatpush1.msra.mxu0 %v434
      %635 = vmatprep.subr.mxu0 0.0
      %636 = vmatpush1.msra.mxu0 %v435
      %637 = vmatprep.subr.mxu0 0.0
      %638 = vmatpush1.msra.mxu0 %v436
      %639 = vmatprep.subr.mxu0 0.0
      %640 = vmatpush1.msra.mxu0 %v437
      %641 = vmatprep.subr.mxu0 0.0
      %642 = vmatpush1.msra.mxu0 %v438
      %643 = vmatprep.subr.mxu0 0.0
      %644 = vmatpush1.msra.mxu0 %v439
      %645 = vmatprep.subr.mxu0 0.0
      %646 = vmatpush1.msra.mxu0 %v440
      %647 = vmatprep.subr.mxu0 0.0
      %648 = vmatpush1.msra.mxu0 %v441
      %649 = vmatprep.subr.mxu0 0.0
      %650 = vmatpush1.msra.mxu0 %v442
      %651 = vmatprep.subr.mxu0 0.0
      %652 = vmatpush1.msra.mxu0 %v443
      %653 = vmatprep.subr.mxu0 0.0
      %654 = vmatpush1.msra.mxu0 0.0
      %655 = vmatprep.subr.mxu0 0.0
      %656 = vmatpush1.msra.mxu0 0.0
      %657 = vmatprep.subr.mxu0 0.0
      %658 = vmatpush1.msra.mxu0 0.0
      %659 = vmatprep.subr.mxu0 0.0
      %660 = vmatpush1.msra.mxu0 0.0
      %661 = vmatprep.subr.mxu0 0.0
      %662 = vmatpush1.msra.mxu0 0.0
      %663 = vmatprep.subr.mxu0 0.0
      %664 = vmatpush1.msra.mxu0 0.0
      %665 = vmatprep.subr.mxu0 0.0
      %666 = vmatpush1.msra.mxu0 0.0
      %667 = vmatprep.subr.mxu0 0.0
      %668 = vmatpush1.msra.mxu0 0.0
      %669 = vmatprep.subr.mxu0 0.0
      %670 = vmatpush1.msra.mxu0 0.0
      %671 = vmatprep.subr.mxu0 0.0
      %672 = vmatpush1.msra.mxu0 0.0
      %673 = vmatprep.subr.mxu0 0.0
      %674 = vmatpush1.msra.mxu0 0.0
      %675 = vmatprep.subr.mxu0 0.0
      %676 = vmatpush1.msra.mxu0 0.0
      %677 = vmatprep.subr.mxu0 0.0
      %678 = vmatpush1.msra.mxu0 0.0
      %679 = vmatprep.subr.mxu0 0.0
      %680 = vmatpush1.msra.mxu0 0.0
      %681 = vmatprep.subr.mxu0 0.0
      %682 = vmatpush1.msra.mxu0 0.0
      %683 = vmatprep.subr.mxu0 0.0
      %684 = vmatpush1.msra.mxu0 0.0
      %685 = vmatprep.mubr.f32.mxu0 0.0
      %686 = vmatmul.mubr.f32.gmra.mrb[0].mxu0 %v412
      %v687 = vpop.f32.mrb[0].mxu0
      %v688 = vadd.f32 %v543, %v687
      %v689 = vpop.f32.mrb[0].mxu0
      %690 = vmatprep.mubr.f32.mxu0 0.0
      %691 = vmatmul.mubr.f32.gmra.mrb[0].mxu0 %v413
      %v692 = vpop.f32.mrb[0].mxu0
      %v693 = vadd.f32 %v548, %v692
      %v694 = vpop.f32.mrb[0].mxu0
      %695 = vmatprep.mubr.f32.mxu0 0.0
      %696 = vmatmul.mubr.f32.gmra.mrb[0].mxu0 %v414
      %v697 = vpop.f32.mrb[0].mxu0
      %v698 = vadd.f32 %v553, %v697
      %v699 = vpop.f32.mrb[0].mxu0
      %700 = vmatprep.mubr.f32.mxu0 0.0
      %701 = vmatmul.mubr.f32.gmra.mrb[0].mxu0 %v415
      %v702 = vpop.f32.mrb[0].mxu0
      %v703 = vadd.f32 %v558, %v702
      %v704 = vpop.f32.mrb[0].mxu0
      %705 = vmatprep.mubr.f32.mxu0 0.0
      %706 = vmatmul.mubr.f32.gmra.mrb[0].mxu0 %v416
      %v707 = vpop.f32.mrb[0].mxu0
      %v708 = vadd.f32 %v563, %v707
      %v709 = vpop.f32.mrb[0].mxu0
      %710 = vmatprep.mubr.f32.mxu0 0.0
      %711 = vmatmul.mubr.f32.gmra.mrb[0].mxu0 %v417
      %v712 = vpop.f32.mrb[0].mxu0
      %v713 = vadd.f32 %v568, %v712
      %v714 = vpop.f32.mrb[0].mxu0
      %715 = vmatprep.mubr.f32.mxu0 0.0
      %716 = vmatmul.mubr.f32.gmra.mrb[0].mxu0 %v418
      %v717 = vpop.f32.mrb[0].mxu0
      %v718 = vadd.f32 %v573, %v717
      %v719 = vpop.f32.mrb[0].mxu0
      %720 = vmatprep.mubr.f32.mxu0 0.0
      %721 = vmatmul.mubr.f32.gmra.mrb[0].mxu0 %v419
      %v722 = vpop.f32.mrb[0].mxu0
      %v723 = vadd.f32 %v578, %v722
      %v724 = vpop.f32.mrb[0].mxu0
      %725 = vmatprep.mubr.f32.mxu0 0.0
      %726 = vmatmul.mubr.f32.gmra.mrb[0].mxu0 %v420
      %v727 = vpop.f32.mrb[0].mxu0
      %v728 = vadd.f32 %v583, %v727
      %v729 = vpop.f32.mrb[0].mxu0
      %730 = vmatprep.mubr.f32.mxu0 0.0
      %731 = vmatmul.mubr.f32.gmra.mrb[0].mxu0 %v421
      %v732 = vpop.f32.mrb[0].mxu0
      %v733 = vadd.f32 %v588, %v732
      %v734 = vpop.f32.mrb[0].mxu0
      %735 = vmatprep.mubr.f32.mxu0 0.0
      %736 = vmatmul.mubr.f32.gmra.mrb[0].mxu0 %v422
      %v737 = vpop.f32.mrb[0].mxu0
      %v738 = vadd.f32 %v593, %v737
      %v739 = vpop.f32.mrb[0].mxu0
      %740 = vmatprep.mubr.f32.mxu0 0.0
      %741 = vmatmul.mubr.f32.gmra.mrb[0].mxu0 %v423
      %v742 = vpop.f32.mrb[0].mxu0
      %v743 = vadd.f32 %v598, %v742
      %v744 = vpop.f32.mrb[0].mxu0
      %745 = vmatprep.mubr.f32.mxu0 0.0
      %746 = vmatmul.mubr.f32.gmra.mrb[0].mxu0 %v424
      %v747 = vpop.f32.mrb[0].mxu0
      %v748 = vadd.f32 %v603, %v747
      %v749 = vpop.f32.mrb[0].mxu0
      %750 = vmatprep.mubr.f32.mxu0 0.0
      %751 = vmatmul.mubr.f32.gmra.mrb[0].mxu0 %v425
      %v752 = vpop.f32.mrb[0].mxu0
      %v753 = vadd.f32 %v608, %v752
      %v754 = vpop.f32.mrb[0].mxu0
      %755 = vmatprep.mubr.f32.mxu0 0.0
      %756 = vmatmul.mubr.f32.gmra.mrb[0].mxu0 %v426
      %v757 = vpop.f32.mrb[0].mxu0
      %v758 = vadd.f32 %v613, %v757
      %v759 = vpop.f32.mrb[0].mxu0
      %760 = vmatprep.mubr.f32.mxu0 0.0
      %761 = vmatmul.mubr.f32.gmra.mrb[0].mxu0 %v427
      %v762 = vpop.f32.mrb[0].mxu0
      %v763 = vadd.f32 %v618, %v762
      %v764 = vpop.f32.mrb[0].mxu0
      %765 = vdwg.mxu0
      %v766 = vld [vmem:[%s4] sm:$0x1]
      %v768 = vlaneseq
      %v769 = vshrl.u32 %v768, 7
      %v770 = vsub.s32 0, %v769
      %v771 = vrot.slane %v766, %v770
      %v773 = vadd.f32 %v688, %v771
      %v774 = vadd.f32 %v693, %v771
      %v775 = vadd.f32 %v698, %v771
      %v776 = vadd.f32 %v703, %v771
      %v777 = vadd.f32 %v708, %v771
      %v778 = vadd.f32 %v713, %v771
      %v779 = vadd.f32 %v718, %v771
      %v780 = vadd.f32 %v723, %v771
      %v781 = vadd.f32 %v728, %v771
      %v782 = vadd.f32 %v733, %v771
      %v783 = vadd.f32 %v738, %v771
      %v784 = vadd.f32 %v743, %v771
      %v785 = vadd.f32 %v748, %v771
      %v786 = vadd.f32 %v753, %v771
      %v787 = vadd.f32 %v758, %v771
      %v788 = vadd.f32 %v763, %v771
      %v789 = vmax.f32 %v773, 0.0
      %v790 = vmax.f32 %v774, 0.0
      %v791 = vmax.f32 %v775, 0.0
      %v792 = vmax.f32 %v776, 0.0
      %v793 = vmax.f32 %v777, 0.0
      %v794 = vmax.f32 %v778, 0.0
      %v795 = vmax.f32 %v779, 0.0
      %v796 = vmax.f32 %v780, 0.0
      %v797 = vmax.f32 %v781, 0.0
      %v798 = vmax.f32 %v782, 0.0
      %v799 = vmax.f32 %v783, 0.0
      %v800 = vmax.f32 %v784, 0.0
      %v801 = vmax.f32 %v785, 0.0
      %v802 = vmax.f32 %v786, 0.0
      %v803 = vmax.f32 %v787, 0.0
      %v804 = vmax.f32 %v788, 0.0
      %v805 = vld [vmem:[%s5] sm:$0xff]
      %v806 = vld [vmem:[%s5 + $0x8] sm:$0xff]
      %v807 = vld [vmem:[%s5 + $0x10] sm:$0xff]
      %v808 = vld [vmem:[%s5 + $0x18] sm:$0xff]
      %v809 = vld [vmem:[%s5 + $0x20] sm:$0xff]
      %v810 = vld [vmem:[%s5 + $0x28] sm:$0xff]
      %v811 = vld [vmem:[%s5 + $0x30] sm:$0xff]
      %v812 = vld [vmem:[%s5 + $0x38] sm:$0xff]
      %v813 = vld [vmem:[%s5 + $0x40] sm:$0xff]
      %v814 = vld [vmem:[%s5 + $0x48] sm:$0xff]
      %v815 = vld [vmem:[%s5 + $0x50] sm:$0xff]
      %v816 = vld [vmem:[%s5 + $0x58] sm:$0xff]
      %v817 = vld [vmem:[%s5 + $0x60] sm:$0xff]
      %v818 = vld [vmem:[%s5 + $0x68] sm:$0xff]
      %v819 = vld [vmem:[%s5 + $0x70] sm:$0xff]
      %v820 = vld [vmem:[%s5 + $0x78] sm:$0xff]
      %v821 = vld [vmem:[%s6] sm:$0x1]
      %v823 = vlaneseq
      %v824 = vshrl.u32 %v823, 7
      %v825 = vsub.s32 0, %v824
      %v826 = vrot.slane %v821, %v825
      %828 = vmatprep.subr.mxu0 0.0
      %829 = vmatpush1.msra.mxu0 %v805
      %830 = vmatprep.subr.mxu0 0.0
      %831 = vmatpush1.msra.mxu0 %v806
      %832 = vmatprep.subr.mxu0 0.0
      %833 = vmatpush1.msra.mxu0 %v807
      %834 = vmatprep.subr.mxu0 0.0
      %835 = vmatpush1.msra.mxu0 %v808
      %836 = vmatprep.subr.mxu0 0.0
      %837 = vmatpush1.msra.mxu0 %v809
      %838 = vmatprep.subr.mxu0 0.0
      %839 = vmatpush1.msra.mxu0 %v810
      %840 = vmatprep.subr.mxu0 0.0
      %841 = vmatpush1.msra.mxu0 %v811
      %842 = vmatprep.subr.mxu0 0.0
      %843 = vmatpush1.msra.mxu0 %v812
      %844 = vmatprep.subr.mxu0 0.0
      %845 = vmatpush1.msra.mxu0 %v813
      %846 = vmatprep.subr.mxu0 0.0
      %847 = vmatpush1.msra.mxu0 %v814
      %848 = vmatprep.subr.mxu0 0.0
      %849 = vmatpush1.msra.mxu0 %v815
      %850 = vmatprep.subr.mxu0 0.0
      %851 = vmatpush1.msra.mxu0 %v816
      %852 = vmatprep.subr.mxu0 0.0
      %853 = vmatpush1.msra.mxu0 %v817
      %854 = vmatprep.subr.mxu0 0.0
      %855 = vmatpush1.msra.mxu0 %v818
      %856 = vmatprep.subr.mxu0 0.0
      %857 = vmatpush1.msra.mxu0 %v819
      %858 = vmatprep.subr.mxu0 0.0
      %859 = vmatpush1.msra.mxu0 %v820
      %860 = vmatprep.subr.mxu0 0.0
      %861 = vmatpush1.msra.mxu0 0.0
      %862 = vmatprep.subr.mxu0 0.0
      %863 = vmatpush1.msra.mxu0 0.0
      %864 = vmatprep.subr.mxu0 0.0
      %865 = vmatpush1.msra.mxu0 0.0
      %866 = vmatprep.subr.mxu0 0.0
      %867 = vmatpush1.msra.mxu0 0.0
      %868 = vmatprep.subr.mxu0 0.0
      %869 = vmatpush1.msra.mxu0 0.0
      %870 = vmatprep.subr.mxu0 0.0
      %871 = vmatpush1.msra.mxu0 0.0
      %872 = vmatprep.subr.mxu0 0.0
      %873 = vmatpush1.msra.mxu0 0.0
      %874 = vmatprep.subr.mxu0 0.0
      %875 = vmatpush1.msra.mxu0 0.0
      %876 = vmatprep.subr.mxu0 0.0
      %877 = vmatpush1.msra.mxu0 0.0
      %878 = vmatprep.subr.mxu0 0.0
      %879 = vmatpush1.msra.mxu0 0.0
      %880 = vmatprep.subr.mxu0 0.0
      %881 = vmatpush1.msra.mxu0 0.0
      %882 = vmatprep.subr.mxu0 0.0
      %883 = vmatpush1.msra.mxu0 0.0
      %884 = vmatprep.subr.mxu0 0.0
      %885 = vmatpush1.msra.mxu0 0.0
      %886 = vmatprep.subr.mxu0 0.0
      %887 = vmatpush1.msra.mxu0 0.0
      %888 = vmatprep.subr.mxu0 0.0
      %889 = vmatpush1.msra.mxu0 0.0
      %890 = vmatprep.subr.mxu0 0.0
      %891 = vmatpush1.msra.mxu0 0.0
      %892 = vmatprep.mubr.f32.mxu0 0.0
      %893 = vmatmul.mubr.f32.gmra.mrb[0].mxu0 %v789
      %v894 = vpop.f32.mrb[0].mxu0
      %v895 = vadd.f32 %v826, %v894
      %v896 = vpop.f32.mrb[0].mxu0
      %897 = vmatprep.mubr.f32.mxu0 0.0
      %898 = vmatmul.mubr.f32.gmra.mrb[0].mxu0 %v790
      %v899 = vpop.f32.mrb[0].mxu0
      %v900 = vadd.f32 %v826, %v899
      %v901 = vpop.f32.mrb[0].mxu0
      %902 = vmatprep.mubr.f32.mxu0 0.0
      %903 = vmatmul.mubr.f32.gmra.mrb[0].mxu0 %v791
      %v904 = vpop.f32.mrb[0].mxu0
      %v905 = vadd.f32 %v826, %v904
      %v906 = vpop.f32.mrb[0].mxu0
      %907 = vmatprep.mubr.f32.mxu0 0.0
      %908 = vmatmul.mubr.f32.gmra.mrb[0].mxu0 %v792
      %v909 = vpop.f32.mrb[0].mxu0
      %v910 = vadd.f32 %v826, %v909
      %v911 = vpop.f32.mrb[0].mxu0
      %912 = vmatprep.mubr.f32.mxu0 0.0
      %913 = vmatmul.mubr.f32.gmra.mrb[0].mxu0 %v793
      %v914 = vpop.f32.mrb[0].mxu0
      %v915 = vadd.f32 %v826, %v914
      %v916 = vpop.f32.mrb[0].mxu0
      %917 = vmatprep.mubr.f32.mxu0 0.0
      %918 = vmatmul.mubr.f32.gmra.mrb[0].mxu0 %v794
      %v919 = vpop.f32.mrb[0].mxu0
      %v920 = vadd.f32 %v826, %v919
      %v921 = vpop.f32.mrb[0].mxu0
      %922 = vmatprep.mubr.f32.mxu0 0.0
      %923 = vmatmul.mubr.f32.gmra.mrb[0].mxu0 %v795
      %v924 = vpop.f32.mrb[0].mxu0
      %v925 = vadd.f32 %v826, %v924
      %v926 = vpop.f32.mrb[0].mxu0
      %927 = vmatprep.mubr.f32.mxu0 0.0
      %928 = vmatmul.mubr.f32.gmra.mrb[0].mxu0 %v796
      %v929 = vpop.f32.mrb[0].mxu0
      %v930 = vadd.f32 %v826, %v929
      %v931 = vpop.f32.mrb[0].mxu0
      %932 = vmatprep.mubr.f32.mxu0 0.0
      %933 = vmatmul.mubr.f32.gmra.mrb[0].mxu0 %v797
      %v934 = vpop.f32.mrb[0].mxu0
      %v935 = vadd.f32 %v826, %v934
      %v936 = vpop.f32.mrb[0].mxu0
      %937 = vmatprep.mubr.f32.mxu0 0.0
      %938 = vmatmul.mubr.f32.gmra.mrb[0].mxu0 %v798
      %v939 = vpop.f32.mrb[0].mxu0
      %v940 = vadd.f32 %v826, %v939
      %v941 = vpop.f32.mrb[0].mxu0
      %942 = vmatprep.mubr.f32.mxu0 0.0
      %943 = vmatmul.mubr.f32.gmra.mrb[0].mxu0 %v799
      %v944 = vpop.f32.mrb[0].mxu0
      %v945 = vadd.f32 %v826, %v944
      %v946 = vpop.f32.mrb[0].mxu0
      %947 = vmatprep.mubr.f32.mxu0 0.0
      %948 = vmatmul.mubr.f32.gmra.mrb[0].mxu0 %v800
      %v949 = vpop.f32.mrb[0].mxu0
      %v950 = vadd.f32 %v826, %v949
      %v951 = vpop.f32.mrb[0].mxu0
      %952 = vmatprep.mubr.f32.mxu0 0.0
      %953 = vmatmul.mubr.f32.gmra.mrb[0].mxu0 %v801
      %v954 = vpop.f32.mrb[0].mxu0
      %v955 = vadd.f32 %v826, %v954
      %v956 = vpop.f32.mrb[0].mxu0
      %957 = vmatprep.mubr.f32.mxu0 0.0
      %958 = vmatmul.mubr.f32.gmra.mrb[0].mxu0 %v802
      %v959 = vpop.f32.mrb[0].mxu0
      %v960 = vadd.f32 %v826, %v959
      %v961 = vpop.f32.mrb[0].mxu0
      %962 = vmatprep.mubr.f32.mxu0 0.0
      %963 = vmatmul.mubr.f32.gmra.mrb[0].mxu0 %v803
      %v964 = vpop.f32.mrb[0].mxu0
      %v965 = vadd.f32 %v826, %v964
      %v966 = vpop.f32.mrb[0].mxu0
      %967 = vmatprep.mubr.f32.mxu0 0.0
      %968 = vmatmul.mubr.f32.gmra.mrb[0].mxu0 %v804
      %v969 = vpop.f32.mrb[0].mxu0
      %v970 = vadd.f32 %v826, %v969
      %v971 = vpop.f32.mrb[0].mxu0
      %972 = vdwg.mxu0
      %v973 = vmax.f32 %v895, 0.0
      %v974 = vmax.f32 %v900, 0.0
      %v975 = vmax.f32 %v905, 0.0
      %v976 = vmax.f32 %v910, 0.0
      %v977 = vmax.f32 %v915, 0.0
      %v978 = vmax.f32 %v920, 0.0
      %v979 = vmax.f32 %v925, 0.0
      %v980 = vmax.f32 %v930, 0.0
      %v981 = vmax.f32 %v935, 0.0
      %v982 = vmax.f32 %v940, 0.0
      %v983 = vmax.f32 %v945, 0.0
      %v984 = vmax.f32 %v950, 0.0
      %v985 = vmax.f32 %v955, 0.0
      %v986 = vmax.f32 %v960, 0.0
      %v987 = vmax.f32 %v965, 0.0
      %v988 = vmax.f32 %v970, 0.0
      %v989 = vld [vmem:[%s7] sm:$0xff]
      %v990 = vld [vmem:[%s7 + $0x8] sm:$0xff]
      %v991 = vld [vmem:[%s7 + $0x10] sm:$0xff]
      %v992 = vld [vmem:[%s7 + $0x18] sm:$0xff]
      %v993 = vld [vmem:[%s7 + $0x20] sm:$0xff]
      %v994 = vld [vmem:[%s7 + $0x28] sm:$0xff]
      %v995 = vld [vmem:[%s7 + $0x30] sm:$0xff]
      %v996 = vld [vmem:[%s7 + $0x38] sm:$0xff]
      %v997 = vld [vmem:[%s7 + $0x40] sm:$0xff]
      %v998 = vld [vmem:[%s7 + $0x48] sm:$0xff]
      %v999 = vld [vmem:[%s7 + $0x50] sm:$0xff]
      %v1000 = vld [vmem:[%s7 + $0x58] sm:$0xff]
      %v1001 = vld [vmem:[%s7 + $0x60] sm:$0xff]
      %v1002 = vld [vmem:[%s7 + $0x68] sm:$0xff]
      %v1003 = vld [vmem:[%s7 + $0x70] sm:$0xff]
      %v1004 = vld [vmem:[%s7 + $0x78] sm:$0xff]
      %v1005 = vld [vmem:[%s8] sm:$0x1]
      %v1007 = vlaneseq
      %v1008 = vshrl.u32 %v1007, 7
      %v1009 = vsub.s32 0, %v1008
      %v1010 = vrot.slane %v1005, %v1009
      %1012 = vmatprep.subr.mxu0 0.0
      %1013 = vmatpush1.msra.mxu0 %v989
      %1014 = vmatprep.subr.mxu0 0.0
      %1015 = vmatpush1.msra.mxu0 %v990
      %1016 = vmatprep.subr.mxu0 0.0
      %1017 = vmatpush1.msra.mxu0 %v991
      %1018 = vmatprep.subr.mxu0 0.0
      %1019 = vmatpush1.msra.mxu0 %v992
      %1020 = vmatprep.subr.mxu0 0.0
      %1021 = vmatpush1.msra.mxu0 %v993
      %1022 = vmatprep.subr.mxu0 0.0
      %1023 = vmatpush1.msra.mxu0 %v994
      %1024 = vmatprep.subr.mxu0 0.0
      %1025 = vmatpush1.msra.mxu0 %v995
      %1026 = vmatprep.subr.mxu0 0.0
      %1027 = vmatpush1.msra.mxu0 %v996
      %1028 = vmatprep.subr.mxu0 0.0
      %1029 = vmatpush1.msra.mxu0 %v997
      %1030 = vmatprep.subr.mxu0 0.0
      %1031 = vmatpush1.msra.mxu0 %v998
      %1032 = vmatprep.subr.mxu0 0.0
      %1033 = vmatpush1.msra.mxu0 %v999
      %1034 = vmatprep.subr.mxu0 0.0
      %1035 = vmatpush1.msra.mxu0 %v1000
      %1036 = vmatprep.subr.mxu0 0.0
      %1037 = vmatpush1.msra.mxu0 %v1001
      %1038 = vmatprep.subr.mxu0 0.0
      %1039 = vmatpush1.msra.mxu0 %v1002
      %1040 = vmatprep.subr.mxu0 0.0
      %1041 = vmatpush1.msra.mxu0 %v1003
      %1042 = vmatprep.subr.mxu0 0.0
      %1043 = vmatpush1.msra.mxu0 %v1004
      %1044 = vmatprep.subr.mxu0 0.0
      %1045 = vmatpush1.msra.mxu0 0.0
      %1046 = vmatprep.subr.mxu0 0.0
      %1047 = vmatpush1.msra.mxu0 0.0
      %1048 = vmatprep.subr.mxu0 0.0
      %1049 = vmatpush1.msra.mxu0 0.0
      %1050 = vmatprep.subr.mxu0 0.0
      %1051 = vmatpush1.msra.mxu0 0.0
      %1052 = vmatprep.subr.mxu0 0.0
      %1053 = vmatpush1.msra.mxu0 0.0
      %1054 = vmatprep.subr.mxu0 0.0
      %1055 = vmatpush1.msra.mxu0 0.0
      %1056 = vmatprep.subr.mxu0 0.0
      %1057 = vmatpush1.msra.mxu0 0.0
      %1058 = vmatprep.subr.mxu0 0.0
      %1059 = vmatpush1.msra.mxu0 0.0
      %1060 = vmatprep.subr.mxu0 0.0
      %1061 = vmatpush1.msra.mxu0 0.0
      %1062 = vmatprep.subr.mxu0 0.0
      %1063 = vmatpush1.msra.mxu0 0.0
      %1064 = vmatprep.subr.mxu0 0.0
      %1065 = vmatpush1.msra.mxu0 0.0
      %1066 = vmatprep.subr.mxu0 0.0
      %1067 = vmatpush1.msra.mxu0 0.0
      %1068 = vmatprep.subr.mxu0 0.0
      %1069 = vmatpush1.msra.mxu0 0.0
      %1070 = vmatprep.subr.mxu0 0.0
      %1071 = vmatpush1.msra.mxu0 0.0
      %1072 = vmatprep.subr.mxu0 0.0
      %1073 = vmatpush1.msra.mxu0 0.0
      %1074 = vmatprep.subr.mxu0 0.0
      %1075 = vmatpush1.msra.mxu0 0.0
      %1076 = vmatprep.mubr.f32.mxu0 0.0
      %1077 = vmatmul.mubr.f32.gmra.mrb[0].mxu0 %v973
      %v1078 = vpop.f32.mrb[0].mxu0
      %v1079 = vadd.f32 %v1010, %v1078
      %v1080 = vpop.f32.mrb[0].mxu0
      %1081 = vmatprep.mubr.f32.mxu0 0.0
      %1082 = vmatmul.mubr.f32.gmra.mrb[0].mxu0 %v974
      %v1083 = vpop.f32.mrb[0].mxu0
      %v1084 = vadd.f32 %v1010, %v1083
      %v1085 = vpop.f32.mrb[0].mxu0
      %1086 = vmatprep.mubr.f32.mxu0 0.0
      %1087 = vmatmul.mubr.f32.gmra.mrb[0].mxu0 %v975
      %v1088 = vpop.f32.mrb[0].mxu0
      %v1089 = vadd.f32 %v1010, %v1088
      %v1090 = vpop.f32.mrb[0].mxu0
      %1091 = vmatprep.mubr.f32.mxu0 0.0
      %1092 = vmatmul.mubr.f32.gmra.mrb[0].mxu0 %v976
      %v1093 = vpop.f32.mrb[0].mxu0
      %v1094 = vadd.f32 %v1010, %v1093
      %v1095 = vpop.f32.mrb[0].mxu0
      %1096 = vmatprep.mubr.f32.mxu0 0.0
      %1097 = vmatmul.mubr.f32.gmra.mrb[0].mxu0 %v977
      %v1098 = vpop.f32.mrb[0].mxu0
      %v1099 = vadd.f32 %v1010, %v1098
      %v1100 = vpop.f32.mrb[0].mxu0
      %1101 = vmatprep.mubr.f32.mxu0 0.0
      %1102 = vmatmul.mubr.f32.gmra.mrb[0].mxu0 %v978
      %v1103 = vpop.f32.mrb[0].mxu0
      %v1104 = vadd.f32 %v1010, %v1103
      %v1105 = vpop.f32.mrb[0].mxu0
      %1106 = vmatprep.mubr.f32.mxu0 0.0
      %1107 = vmatmul.mubr.f32.gmra.mrb[0].mxu0 %v979
      %v1108 = vpop.f32.mrb[0].mxu0
      %v1109 = vadd.f32 %v1010, %v1108
      %v1110 = vpop.f32.mrb[0].mxu0
      %1111 = vmatprep.mubr.f32.mxu0 0.0
      %1112 = vmatmul.mubr.f32.gmra.mrb[0].mxu0 %v980
      %v1113 = vpop.f32.mrb[0].mxu0
      %v1114 = vadd.f32 %v1010, %v1113
      %v1115 = vpop.f32.mrb[0].mxu0
      %1116 = vmatprep.mubr.f32.mxu0 0.0
      %1117 = vmatmul.mubr.f32.gmra.mrb[0].mxu0 %v981
      %v1118 = vpop.f32.mrb[0].mxu0
      %v1119 = vadd.f32 %v1010, %v1118
      %v1120 = vpop.f32.mrb[0].mxu0
      %1121 = vmatprep.mubr.f32.mxu0 0.0
      %1122 = vmatmul.mubr.f32.gmra.mrb[0].mxu0 %v982
      %v1123 = vpop.f32.mrb[0].mxu0
      %v1124 = vadd.f32 %v1010, %v1123
      %v1125 = vpop.f32.mrb[0].mxu0
      %1126 = vmatprep.mubr.f32.mxu0 0.0
      %1127 = vmatmul.mubr.f32.gmra.mrb[0].mxu0 %v983
      %v1128 = vpop.f32.mrb[0].mxu0
      %v1129 = vadd.f32 %v1010, %v1128
      %v1130 = vpop.f32.mrb[0].mxu0
      %1131 = vmatprep.mubr.f32.mxu0 0.0
      %1132 = vmatmul.mubr.f32.gmra.mrb[0].mxu0 %v984
      %v1133 = vpop.f32.mrb[0].mxu0
      %v1134 = vadd.f32 %v1010, %v1133
      %v1135 = vpop.f32.mrb[0].mxu0
      %1136 = vmatprep.mubr.f32.mxu0 0.0
      %1137 = vmatmul.mubr.f32.gmra.mrb[0].mxu0 %v985
      %v1138 = vpop.f32.mrb[0].mxu0
      %v1139 = vadd.f32 %v1010, %v1138
      %v1140 = vpop.f32.mrb[0].mxu0
      %1141 = vmatprep.mubr.f32.mxu0 0.0
      %1142 = vmatmul.mubr.f32.gmra.mrb[0].mxu0 %v986
      %v1143 = vpop.f32.mrb[0].mxu0
      %v1144 = vadd.f32 %v1010, %v1143
      %v1145 = vpop.f32.mrb[0].mxu0
      %1146 = vmatprep.mubr.f32.mxu0 0.0
      %1147 = vmatmul.mubr.f32.gmra.mrb[0].mxu0 %v987
      %v1148 = vpop.f32.mrb[0].mxu0
      %v1149 = vadd.f32 %v1010, %v1148
      %v1150 = vpop.f32.mrb[0].mxu0
      %1151 = vmatprep.mubr.f32.mxu0 0.0
      %1152 = vmatmul.mubr.f32.gmra.mrb[0].mxu0 %v988
      %v1153 = vpop.f32.mrb[0].mxu0
      %v1154 = vadd.f32 %v1010, %v1153
      %v1155 = vpop.f32.mrb[0].mxu0
      %1156 = vdwg.mxu0
      %1157 = vadd.xlane.f32.xlu0 %v1079
      %v1158 = vpop.xlane.xlu0 %1157
      %1159 = vadd.xlane.f32.xlu0 %v1084
      %v1160 = vpop.xlane.xlu0 %1159
      %1161 = vadd.xlane.f32.xlu0 %v1089
      %v1162 = vpop.xlane.xlu0 %1161
      %1163 = vadd.xlane.f32.xlu0 %v1094
      %v1164 = vpop.xlane.xlu0 %1163
      %1165 = vadd.xlane.f32.xlu0 %v1099
      %v1166 = vpop.xlane.xlu0 %1165
      %1167 = vadd.xlane.f32.xlu0 %v1104
      %v1168 = vpop.xlane.xlu0 %1167
      %1169 = vadd.xlane.f32.xlu0 %v1109
      %v1170 = vpop.xlane.xlu0 %1169
      %1171 = vadd.xlane.f32.xlu0 %v1114
      %v1172 = vpop.xlane.xlu0 %1171
      %1173 = vadd.xlane.f32.xlu0 %v1119
      %v1174 = vpop.xlane.xlu0 %1173
      %1175 = vadd.xlane.f32.xlu0 %v1124
      %v1176 = vpop.xlane.xlu0 %1175
      %1177 = vadd.xlane.f32.xlu0 %v1129
      %v1178 = vpop.xlane.xlu0 %1177
      %1179 = vadd.xlane.f32.xlu0 %v1134
      %v1180 = vpop.xlane.xlu0 %1179
      %1181 = vadd.xlane.f32.xlu0 %v1139
      %v1182 = vpop.xlane.xlu0 %1181
      %1183 = vadd.xlane.f32.xlu0 %v1144
      %v1184 = vpop.xlane.xlu0 %1183
      %1185 = vadd.xlane.f32.xlu0 %v1149
      %v1186 = vpop.xlane.xlu0 %1185
      %1187 = vadd.xlane.f32.xlu0 %v1154
      %v1188 = vpop.xlane.xlu0 %1187
      %v1189 = vrcp.pop 128.0
      %v1190 = vmul.f32 %v1158, %v1189
      %v1191 = vmul.f32 %v1160, %v1189
      %v1192 = vmul.f32 %v1162, %v1189
      %v1193 = vmul.f32 %v1164, %v1189
      %v1194 = vmul.f32 %v1166, %v1189
      %v1195 = vmul.f32 %v1168, %v1189
      %v1196 = vmul.f32 %v1170, %v1189
      %v1197 = vmul.f32 %v1172, %v1189
      %v1198 = vmul.f32 %v1174, %v1189
      %v1199 = vmul.f32 %v1176, %v1189
      %v1200 = vmul.f32 %v1178, %v1189
      %v1201 = vmul.f32 %v1180, %v1189
      %v1202 = vmul.f32 %v1182, %v1189
      %v1203 = vmul.f32 %v1184, %v1189
      %v1204 = vmul.f32 %v1186, %v1189
      %v1205 = vmul.f32 %v1188, %v1189
      %v1206 = vsub.f32 %v1079, %v1190
      %v1207 = vsub.f32 %v1084, %v1191
      %v1208 = vsub.f32 %v1089, %v1192
      %v1209 = vsub.f32 %v1094, %v1193
      %v1210 = vsub.f32 %v1099, %v1194
      %v1211 = vsub.f32 %v1104, %v1195
      %v1212 = vsub.f32 %v1109, %v1196
      %v1213 = vsub.f32 %v1114, %v1197
      %v1214 = vsub.f32 %v1119, %v1198
      %v1215 = vsub.f32 %v1124, %v1199
      %v1216 = vsub.f32 %v1129, %v1200
      %v1217 = vsub.f32 %v1134, %v1201
      %v1218 = vsub.f32 %v1139, %v1202
      %v1219 = vsub.f32 %v1144, %v1203
      %v1220 = vsub.f32 %v1149, %v1204
      %v1221 = vsub.f32 %v1154, %v1205
      %v1222 = vmul.f32 %v1206, %v1206
      %v1223 = vmul.f32 %v1207, %v1207
      %v1224 = vmul.f32 %v1208, %v1208
      %v1225 = vmul.f32 %v1209, %v1209
      %v1226 = vmul.f32 %v1210, %v1210
      %v1227 = vmul.f32 %v1211, %v1211
      %v1228 = vmul.f32 %v1212, %v1212
      %v1229 = vmul.f32 %v1213, %v1213
      %v1230 = vmul.f32 %v1214, %v1214
      %v1231 = vmul.f32 %v1215, %v1215
      %v1232 = vmul.f32 %v1216, %v1216
      %v1233 = vmul.f32 %v1217, %v1217
      %v1234 = vmul.f32 %v1218, %v1218
      %v1235 = vmul.f32 %v1219, %v1219
      %v1236 = vmul.f32 %v1220, %v1220
      %v1237 = vmul.f32 %v1221, %v1221
      %1238 = vadd.xlane.f32.xlu0 %v1222
      %v1239 = vpop.xlane.xlu0 %1238
      %1240 = vadd.xlane.f32.xlu0 %v1223
      %v1241 = vpop.xlane.xlu0 %1240
      %1242 = vadd.xlane.f32.xlu0 %v1224
      %v1243 = vpop.xlane.xlu0 %1242
      %1244 = vadd.xlane.f32.xlu0 %v1225
      %v1245 = vpop.xlane.xlu0 %1244
      %1246 = vadd.xlane.f32.xlu0 %v1226
      %v1247 = vpop.xlane.xlu0 %1246
      %1248 = vadd.xlane.f32.xlu0 %v1227
      %v1249 = vpop.xlane.xlu0 %1248
      %1250 = vadd.xlane.f32.xlu0 %v1228
      %v1251 = vpop.xlane.xlu0 %1250
      %1252 = vadd.xlane.f32.xlu0 %v1229
      %v1253 = vpop.xlane.xlu0 %1252
      %1254 = vadd.xlane.f32.xlu0 %v1230
      %v1255 = vpop.xlane.xlu0 %1254
      %1256 = vadd.xlane.f32.xlu0 %v1231
      %v1257 = vpop.xlane.xlu0 %1256
      %1258 = vadd.xlane.f32.xlu0 %v1232
      %v1259 = vpop.xlane.xlu0 %1258
      %1260 = vadd.xlane.f32.xlu0 %v1233
      %v1261 = vpop.xlane.xlu0 %1260
      %1262 = vadd.xlane.f32.xlu0 %v1234
      %v1263 = vpop.xlane.xlu0 %1262
      %1264 = vadd.xlane.f32.xlu0 %v1235
      %v1265 = vpop.xlane.xlu0 %1264
      %1266 = vadd.xlane.f32.xlu0 %v1236
      %v1267 = vpop.xlane.xlu0 %1266
      %1268 = vadd.xlane.f32.xlu0 %v1237
      %v1269 = vpop.xlane.xlu0 %1268
      %v1270 = vmul.f32 %v1239, %v1189
      %v1271 = vmul.f32 %v1241, %v1189
      %v1272 = vmul.f32 %v1243, %v1189
      %v1273 = vmul.f32 %v1245, %v1189
      %v1274 = vmul.f32 %v1247, %v1189
      %v1275 = vmul.f32 %v1249, %v1189
      %v1276 = vmul.f32 %v1251, %v1189
      %v1277 = vmul.f32 %v1253, %v1189
      %v1278 = vmul.f32 %v1255, %v1189
      %v1279 = vmul.f32 %v1257, %v1189
      %v1280 = vmul.f32 %v1259, %v1189
      %v1281 = vmul.f32 %v1261, %v1189
      %v1282 = vmul.f32 %v1263, %v1189
      %v1283 = vmul.f32 %v1265, %v1189
      %v1284 = vmul.f32 %v1267, %v1189
      %v1285 = vmul.f32 %v1269, %v1189
      %v1286 = vadd.f32 %v1270, 1e-05
      %v1287 = vadd.f32 %v1271, 1e-05
      %v1288 = vadd.f32 %v1272, 1e-05
      %v1289 = vadd.f32 %v1273, 1e-05
      %v1290 = vadd.f32 %v1274, 1e-05
      %v1291 = vadd.f32 %v1275, 1e-05
      %v1292 = vadd.f32 %v1276, 1e-05
      %v1293 = vadd.f32 %v1277, 1e-05
      %v1294 = vadd.f32 %v1278, 1e-05
      %v1295 = vadd.f32 %v1279, 1e-05
      %v1296 = vadd.f32 %v1280, 1e-05
      %v1297 = vadd.f32 %v1281, 1e-05
      %v1298 = vadd.f32 %v1282, 1e-05
      %v1299 = vadd.f32 %v1283, 1e-05
      %v1300 = vadd.f32 %v1284, 1e-05
      %v1301 = vadd.f32 %v1285, 1e-05
      %v1302 = vrsqrt.pop %v1286
      %v1303 = vrsqrt.pop %v1287
      %v1304 = vrsqrt.pop %v1288
      %v1305 = vrsqrt.pop %v1289
      %v1306 = vrsqrt.pop %v1290
      %v1307 = vrsqrt.pop %v1291
      %v1308 = vrsqrt.pop %v1292
      %v1309 = vrsqrt.pop %v1293
      %v1310 = vrsqrt.pop %v1294
      %v1311 = vrsqrt.pop %v1295
      %v1312 = vrsqrt.pop %v1296
      %v1313 = vrsqrt.pop %v1297
      %v1314 = vrsqrt.pop %v1298
      %v1315 = vrsqrt.pop %v1299
      %v1316 = vrsqrt.pop %v1300
      %v1317 = vrsqrt.pop %v1301
      %v1318 = vmul.f32 %v1206, %v1302
      %v1319 = vmul.f32 %v1207, %v1303
      %v1320 = vmul.f32 %v1208, %v1304
      %v1321 = vmul.f32 %v1209, %v1305
      %v1322 = vmul.f32 %v1210, %v1306
      %v1323 = vmul.f32 %v1211, %v1307
      %v1324 = vmul.f32 %v1212, %v1308
      %v1325 = vmul.f32 %v1213, %v1309
      %v1326 = vmul.f32 %v1214, %v1310
      %v1327 = vmul.f32 %v1215, %v1311
      %v1328 = vmul.f32 %v1216, %v1312
      %v1329 = vmul.f32 %v1217, %v1313
      %v1330 = vmul.f32 %v1218, %v1314
      %v1331 = vmul.f32 %v1219, %v1315
      %v1332 = vmul.f32 %v1220, %v1316
      %v1333 = vmul.f32 %v1221, %v1317
      %v1334 = vld [vmem:[%s9] sm:$0x1]
      %v1336 = vlaneseq
      %v1337 = vshrl.u32 %v1336, 7
      %v1338 = vsub.s32 0, %v1337
      %v1339 = vrot.slane %v1334, %v1338
      %v1341 = vmul.f32 %v1318, %v1339
      %v1342 = vmul.f32 %v1319, %v1339
      %v1343 = vmul.f32 %v1320, %v1339
      %v1344 = vmul.f32 %v1321, %v1339
      %v1345 = vmul.f32 %v1322, %v1339
      %v1346 = vmul.f32 %v1323, %v1339
      %v1347 = vmul.f32 %v1324, %v1339
      %v1348 = vmul.f32 %v1325, %v1339
      %v1349 = vmul.f32 %v1326, %v1339
      %v1350 = vmul.f32 %v1327, %v1339
      %v1351 = vmul.f32 %v1328, %v1339
      %v1352 = vmul.f32 %v1329, %v1339
      %v1353 = vmul.f32 %v1330, %v1339
      %v1354 = vmul.f32 %v1331, %v1339
      %v1355 = vmul.f32 %v1332, %v1339
      %v1356 = vmul.f32 %v1333, %v1339
      %v1357 = vld [vmem:[%s10] sm:$0x1]
      %v1359 = vlaneseq
      %v1360 = vshrl.u32 %v1359, 7
      %v1361 = vsub.s32 0, %v1360
      %v1362 = vrot.slane %v1357, %v1361
      %v1364 = vadd.f32 %v1341, %v1362
      %v1365 = vadd.f32 %v1342, %v1362
      %v1366 = vadd.f32 %v1343, %v1362
      %v1367 = vadd.f32 %v1344, %v1362
      %v1368 = vadd.f32 %v1345, %v1362
      %v1369 = vadd.f32 %v1346, %v1362
      %v1370 = vadd.f32 %v1347, %v1362
      %v1371 = vadd.f32 %v1348, %v1362
      %v1372 = vadd.f32 %v1349, %v1362
      %v1373 = vadd.f32 %v1350, %v1362
      %v1374 = vadd.f32 %v1351, %v1362
      %v1375 = vadd.f32 %v1352, %v1362
      %v1376 = vadd.f32 %v1353, %v1362
      %v1377 = vadd.f32 %v1354, %v1362
      %v1378 = vadd.f32 %v1355, %v1362
      %v1379 = vadd.f32 %v1356, %v1362
      %v1380 = vadd.f32 %v1364, %v444
      %v1381 = vadd.f32 %v1365, %v445
      %v1382 = vadd.f32 %v1366, %v446
      %v1383 = vadd.f32 %v1367, %v447
      %v1384 = vadd.f32 %v1368, %v448
      %v1385 = vadd.f32 %v1369, %v449
      %v1386 = vadd.f32 %v1370, %v450
      %v1387 = vadd.f32 %v1371, %v451
      %v1388 = vadd.f32 %v1372, %v452
      %v1389 = vadd.f32 %v1373, %v453
      %v1390 = vadd.f32 %v1374, %v454
      %v1391 = vadd.f32 %v1375, %v455
      %v1392 = vadd.f32 %v1376, %v456
      %v1393 = vadd.f32 %v1377, %v457
      %v1394 = vadd.f32 %v1378, %v458
      %v1395 = vadd.f32 %v1379, %v459
      %1396 = vst [vmem:[%s410] sm:$0xff] %v1380
      %1397 = vst [vmem:[%s410 + $0x8] sm:$0xff] %v1381
      %1398 = vst [vmem:[%s410 + $0x10] sm:$0xff] %v1382
      %1399 = vst [vmem:[%s410 + $0x18] sm:$0xff] %v1383
      %1400 = vst [vmem:[%s410 + $0x20] sm:$0xff] %v1384
      %1401 = vst [vmem:[%s410 + $0x28] sm:$0xff] %v1385
      %1402 = vst [vmem:[%s410 + $0x30] sm:$0xff] %v1386
      %1403 = vst [vmem:[%s410 + $0x38] sm:$0xff] %v1387
      %1404 = vst [vmem:[%s410 + $0x40] sm:$0xff] %v1388
      %1405 = vst [vmem:[%s410 + $0x48] sm:$0xff] %v1389
      %1406 = vst [vmem:[%s410 + $0x50] sm:$0xff] %v1390
      %1407 = vst [vmem:[%s410 + $0x58] sm:$0xff] %v1391
      %1408 = vst [vmem:[%s410 + $0x60] sm:$0xff] %v1392
      %1409 = vst [vmem:[%s410 + $0x68] sm:$0xff] %v1393
      %1410 = vst [vmem:[%s410 + $0x70] sm:$0xff] %v1394
      %1411 = vst [vmem:[%s410 + $0x78] sm:$0xff] %v1395
      %s1412 = smul.u32 16, %s22
      %p1413 = scmp.lt.s32.totalorder %s1412, 31
      %s1414 = scalar_select %p1413, %s1412, 31
      %s1415 = smul.addr %s1414, 8
      %s1416 = scalar_lea.vmem %s11, %s1415
      // Predicated region
      $region65: #{graph_processor_forward.9} parent=63 // pred_check
        %p1417 = pneg %p281
      $region66: #{graph_processor_forward.9} parent=63 // pred_check_branch
        %1419 = sbr.rel (%p1417) target = $region68
      $region67: #{graph_processor_forward.9} parent=63 // pred_region
        %s1420 = smul.u32 16, %s22
      $region68: #{graph_processor_forward.9} parent=63 // pred_fallthru
        _
    $region64: #{graph_processor_forward.9} parent=5 // pred_fallthru
      _
    %p1421 = scmp.le.s32.totalorder 2, %s17
    // Predicated region
    $region69: #{graph_processor_forward.9} parent=5 // pred_check
      %p1422 = pneg %p1421
    $region70: #{graph_processor_forward.9} parent=5 // pred_check_branch
      %1424 = sbr.rel (%p1422) target = $region72
    $region71: #{graph_processor_forward.9} parent=5 // pred_region
      %s1425 = ssub.s32 %s17, 2
      // Predicated region
      $region73: #{graph_processor_forward.9} parent=71 // pred_check
        %p1426 = pneg %p287
      $region74: #{graph_processor_forward.9} parent=71 // pred_check_branch
        %1428 = sbr.rel (%p1426) target = $region76
      $region75: #{graph_processor_forward.9} parent=71 // pred_region
        %s1429 = smul.u32 16, %s23
        %p1430 = scmp.lt.s32.totalorder %s1429, 31
        %s1431 = scalar_select %p1430, %s1429, 31
        %s1432 = smul.addr %s1431, 8
        %s1433 = scalar_lea.vmem %s11, %s1432
      $region76: #{graph_processor_forward.9} parent=71 // pred_fallthru
        _
    $region72: #{graph_processor_forward.9} parent=5 // pred_fallthru
      _
  $region6: #{graph_processor_forward.9} parent=0 // loop_footer
    %s21 = sadd.s32 1, %s17
  $region7: #{graph_processor_forward.9} parent=0 // loop_footer_branch
    %16 = sbr.rel target = $region3
  $region8: #{graph_processor_forward.9} parent=0 // loop_exit
    _

// kernel: graph_processor_forward.8
$region0: #{graph_processor_forward.8}
  #allocation0 [shape = 'u32[]', space=smem, size = 0x4, offset = 0x4, fixed_abs, tag = 'smem constant byte address 0x4 - core index']
  #allocation1 [shape = 'u32[144,128]{1,0:T(1,128)}', space=vmem, size = 0x12000, scoped, tag = 'internal scratch']
  %s0 = inlined_call_operand.vmem [shape: f32[1024,128], index: 0, kind: input, shape index: {}]
  %s1 = inlined_call_operand.vmem [shape: f32[1024,128], index: 1, kind: input, shape index: {}]
  %s2 = inlined_call_operand.vmem [shape: f32[1024,128], index: 2, kind: input, shape index: {}]
  %s3 = inlined_call_operand.vmem [shape: f32[128,128], index: 3, kind: input, shape index: {}]
  %s4 = inlined_call_operand.vmem [shape: f32[128,128], index: 4, kind: input, shape index: {}]
  %s5 = inlined_call_operand.vmem [shape: f32[128,128], index: 5, kind: input, shape index: {}]
  %s6 = inlined_call_operand.vmem [shape: f32[1,128], index: 6, kind: input, shape index: {}]
  %s7 = inlined_call_operand.vmem [shape: f32[128,128], index: 7, kind: input, shape index: {}]
  %s8 = inlined_call_operand.vmem [shape: f32[1,128], index: 8, kind: input, shape index: {}]
  %s9 = inlined_call_operand.vmem [shape: f32[128,128], index: 9, kind: input, shape index: {}]
  %s10 = inlined_call_operand.vmem [shape: f32[1,128], index: 10, kind: input, shape index: {}]
  %s11 = inlined_call_operand.vmem [shape: f32[1,128], index: 11, kind: input, shape index: {}]
  %s12 = inlined_call_operand.vmem [shape: f32[1,128], index: 12, kind: input, shape index: {}]
  %s13 = inlined_call_operand.vmem [shape: f32[1024,128], index: 13, kind: output, shape index: {}]
  %s14 = sld [smem:[#allocation0]]
  $region85: #{graph_processor_forward.8} parent=0
    _
  %s16 = ssub.s32 1, %s14
  %s17 = scalar_select 0, %s16, %s14
  loop: start=0, step=1, limit=4
  $region2: #{graph_processor_forward.8} parent=0 // loop_pre_header
    _
  $region3: #{graph_processor_forward.8} parent=0 // loop_header
    %s19 = sphi 0, %s23
    %p20 = scmp.ge.s32.totalorder %s19, 4
    %s29 = sphi 0, %s31
    %s32 = sphi 0, %s29
    %s33 = sphi 0, %s32
    %s49 = sphi 0, %s33
    %s55 = sphi 0, %s57
    %s58 = sphi 0, %s55
    %s59 = sphi 0, %s58
    %s75 = sphi 0, %s59
    %s81 = sphi 0, %s83
    %s84 = sphi 0, %s81
    %s85 = sphi 0, %s84
    %s101 = sphi 0, %s85
    %s105 = sphi 0, %s105
    %s107 = sphi 0, %s105
    %s108 = sphi 0, %s107
    %s122 = sphi 0, %s108
    %s126 = sphi 0, %s126
    %s128 = sphi 0, %s126
    %s129 = sphi 0, %s128
    %s143 = sphi 0, %s129
    %s147 = sphi 0, %s147
    %s149 = sphi 0, %s147
    %s150 = sphi 0, %s149
    %s164 = sphi 0, %s150
    %s168 = sphi 0, %s168
    %s170 = sphi 0, %s168
    %s171 = sphi 0, %s170
    %s185 = sphi 0, %s171
    %s189 = sphi 0, %s189
    %s191 = sphi 0, %s189
    %s192 = sphi 0, %s191
    %s206 = sphi 0, %s192
    %s210 = sphi 0, %s210
    %s212 = sphi 0, %s210
    %s213 = sphi 0, %s212
    %s227 = sphi 0, %s213
    %s231 = sphi 0, %s231
    %s233 = sphi 0, %s231
    %s234 = sphi 0, %s233
    %s248 = sphi 0, %s234
    %s252 = sphi 0, %s252
    %s254 = sphi 0, %s252
    %s255 = sphi 0, %s254
    %s269 = sphi 0, %s255
    %s273 = sphi 0, %s273
    %s275 = sphi 0, %s273
    %s276 = sphi 0, %s275
    %s290 = sphi 0, %s276
    %s294 = sphi 0, %s294
    %s296 = sphi 0, %s294
    %s297 = sphi 0, %s296
    %s311 = sphi 0, %s297
    %s317 = sphi 0, %s319
    %s320 = sphi 0, %s317
    %s321 = sphi 0, %s320
    %s337 = sphi 0, %s321
  $region4: #{graph_processor_forward.8} parent=0 // loop_header_branch
    %22 = sbr.rel (%p20) target = $region8
  $region5: #{graph_processor_forward.8} parent=0 // loop_body
    %s24 = ssub.s32 %s19, 1
    %s25 = ssub.s32 %s19, 2
    %s26 = sadd.s32 %s19, 1
    %s27 = ssub.s32 %s19, %s26
    %p28 = scmp.eq.s32.totalorder %s27, 0
    %s30 = sadd.s32 %s29, 1
    %s31 = scalar_select %p28, %s29, %s30
    %p34 = pneg %p28
    %p35 = scmp.eq.s32.totalorder %s19, 1
    %p36 = por %p34, %p35
    %p37 = scmp.ne.s32.totalorder %s29, %s32
    %p38 = scmp.eq.s32.totalorder %s19, 0
    %p39 = por %p37, %p38
    %p40 = scmp.ne.s32.totalorder %s29, %s32
    %p41 = scmp.eq.s32.totalorder %s24, 1
    %p42 = por %p40, %p41
    %p43 = scmp.ne.s32.totalorder %s32, %s33
    %p44 = scmp.eq.s32.totalorder %s24, 0
    %p45 = por %p43, %p44
    %p46 = scmp.ne.s32.totalorder %s32, %s33
    %p47 = scmp.eq.s32.totalorder %s25, 1
    %p48 = por %p46, %p47
    %p50 = scmp.ne.s32.totalorder %s33, %s49
    %p51 = scmp.eq.s32.totalorder %s25, 0
    %p52 = por %p50, %p51
    %s53 = ssub.s32 %s19, %s26
    %p54 = scmp.eq.s32.totalorder %s53, 0
    %s56 = sadd.s32 %s55, 1
    %s57 = scalar_select %p54, %s55, %s56
    %p60 = pneg %p54
    %p61 = scmp.eq.s32.totalorder %s19, 1
    %p62 = por %p60, %p61
    %p63 = scmp.ne.s32.totalorder %s55, %s58
    %p64 = scmp.eq.s32.totalorder %s19, 0
    %p65 = por %p63, %p64
    %p66 = scmp.ne.s32.totalorder %s55, %s58
    %p67 = scmp.eq.s32.totalorder %s24, 1
    %p68 = por %p66, %p67
    %p69 = scmp.ne.s32.totalorder %s58, %s59
    %p70 = scmp.eq.s32.totalorder %s24, 0
    %p71 = por %p69, %p70
    %p72 = scmp.ne.s32.totalorder %s58, %s59
    %p73 = scmp.eq.s32.totalorder %s25, 1
    %p74 = por %p72, %p73
    %p76 = scmp.ne.s32.totalorder %s59, %s75
    %p77 = scmp.eq.s32.totalorder %s25, 0
    %p78 = por %p76, %p77
    %s79 = ssub.s32 %s19, %s26
    %p80 = scmp.eq.s32.totalorder %s79, 0
    %s82 = sadd.s32 %s81, 1
    %s83 = scalar_select %p80, %s81, %s82
    %p86 = pneg %p80
    %p87 = scmp.eq.s32.totalorder %s19, 1
    %p88 = por %p86, %p87
    %p89 = scmp.ne.s32.totalorder %s81, %s84
    %p90 = scmp.eq.s32.totalorder %s19, 0
    %p91 = por %p89, %p90
    %p92 = scmp.ne.s32.totalorder %s81, %s84
    %p93 = scmp.eq.s32.totalorder %s24, 1
    %p94 = por %p92, %p93
    %p95 = scmp.ne.s32.totalorder %s84, %s85
    %p96 = scmp.eq.s32.totalorder %s24, 0
    %p97 = por %p95, %p96
    %p98 = scmp.ne.s32.totalorder %s84, %s85
    %p99 = scmp.eq.s32.totalorder %s25, 1
    %p100 = por %p98, %p99
    %p102 = scmp.ne.s32.totalorder %s85, %s101
    %p103 = scmp.eq.s32.totalorder %s25, 0
    %p104 = por %p102, %p103
    %s106 = sadd.s32 %s105, 1
    %p109 = scmp.eq.s32.totalorder %s19, 1
    %p110 = scmp.ne.s32.totalorder %s105, %s107
    %p111 = scmp.eq.s32.totalorder %s19, 0
    %p112 = por %p110, %p111
    %p113 = scmp.ne.s32.totalorder %s105, %s107
    %p114 = scmp.eq.s32.totalorder %s24, 1
    %p115 = por %p113, %p114
    %p116 = scmp.ne.s32.totalorder %s107, %s108
    %p117 = scmp.eq.s32.totalorder %s24, 0
    %p118 = por %p116, %p117
    %p119 = scmp.ne.s32.totalorder %s107, %s108
    %p120 = scmp.eq.s32.totalorder %s25, 1
    %p121 = por %p119, %p120
    %p123 = scmp.ne.s32.totalorder %s108, %s122
    %p124 = scmp.eq.s32.totalorder %s25, 0
    %p125 = por %p123, %p124
    %s127 = sadd.s32 %s126, 1
    %p130 = scmp.eq.s32.totalorder %s19, 1
    %p131 = scmp.ne.s32.totalorder %s126, %s128
    %p132 = scmp.eq.s32.totalorder %s19, 0
    %p133 = por %p131, %p132
    %p134 = scmp.ne.s32.totalorder %s126, %s128
    %p135 = scmp.eq.s32.totalorder %s24, 1
    %p136 = por %p134, %p135
    %p137 = scmp.ne.s32.totalorder %s128, %s129
    %p138 = scmp.eq.s32.totalorder %s24, 0
    %p139 = por %p137, %p138
    %p140 = scmp.ne.s32.totalorder %s128, %s129
    %p141 = scmp.eq.s32.totalorder %s25, 1
    %p142 = por %p140, %p141
    %p144 = scmp.ne.s32.totalorder %s129, %s143
    %p145 = scmp.eq.s32.totalorder %s25, 0
    %p146 = por %p144, %p145
    %s148 = sadd.s32 %s147, 1
    %p151 = scmp.eq.s32.totalorder %s19, 1
    %p152 = scmp.ne.s32.totalorder %s147, %s149
    %p153 = scmp.eq.s32.totalorder %s19, 0
    %p154 = por %p152, %p153
    %p155 = scmp.ne.s32.totalorder %s147, %s149
    %p156 = scmp.eq.s32.totalorder %s24, 1
    %p157 = por %p155, %p156
    %p158 = scmp.ne.s32.totalorder %s149, %s150
    %p159 = scmp.eq.s32.totalorder %s24, 0
    %p160 = por %p158, %p159
    %p161 = scmp.ne.s32.totalorder %s149, %s150
    %p162 = scmp.eq.s32.totalorder %s25, 1
    %p163 = por %p161, %p162
    %p165 = scmp.ne.s32.totalorder %s150, %s164
    %p166 = scmp.eq.s32.totalorder %s25, 0
    %p167 = por %p165, %p166
    %s169 = sadd.s32 %s168, 1
    %p172 = scmp.eq.s32.totalorder %s19, 1
    %p173 = scmp.ne.s32.totalorder %s168, %s170
    %p174 = scmp.eq.s32.totalorder %s19, 0
    %p175 = por %p173, %p174
    %p176 = scmp.ne.s32.totalorder %s168, %s170
    %p177 = scmp.eq.s32.totalorder %s24, 1
    %p178 = por %p176, %p177
    %p179 = scmp.ne.s32.totalorder %s170, %s171
    %p180 = scmp.eq.s32.totalorder %s24, 0
    %p181 = por %p179, %p180
    %p182 = scmp.ne.s32.totalorder %s170, %s171
    %p183 = scmp.eq.s32.totalorder %s25, 1
    %p184 = por %p182, %p183
    %p186 = scmp.ne.s32.totalorder %s171, %s185
    %p187 = scmp.eq.s32.totalorder %s25, 0
    %p188 = por %p186, %p187
    %s190 = sadd.s32 %s189, 1
    %p193 = scmp.eq.s32.totalorder %s19, 1
    %p194 = scmp.ne.s32.totalorder %s189, %s191
    %p195 = scmp.eq.s32.totalorder %s19, 0
    %p196 = por %p194, %p195
    %p197 = scmp.ne.s32.totalorder %s189, %s191
    %p198 = scmp.eq.s32.totalorder %s24, 1
    %p199 = por %p197, %p198
    %p200 = scmp.ne.s32.totalorder %s191, %s192
    %p201 = scmp.eq.s32.totalorder %s24, 0
    %p202 = por %p200, %p201
    %p203 = scmp.ne.s32.totalorder %s191, %s192
    %p204 = scmp.eq.s32.totalorder %s25, 1
    %p205 = por %p203, %p204
    %p207 = scmp.ne.s32.totalorder %s192, %s206
    %p208 = scmp.eq.s32.totalorder %s25, 0
    %p209 = por %p207, %p208
    %s211 = sadd.s32 %s210, 1
    %p214 = scmp.eq.s32.totalorder %s19, 1
    %p215 = scmp.ne.s32.totalorder %s210, %s212
    %p216 = scmp.eq.s32.totalorder %s19, 0
    %p217 = por %p215, %p216
    %p218 = scmp.ne.s32.totalorder %s210, %s212
    %p219 = scmp.eq.s32.totalorder %s24, 1
    %p220 = por %p218, %p219
    %p221 = scmp.ne.s32.totalorder %s212, %s213
    %p222 = scmp.eq.s32.totalorder %s24, 0
    %p223 = por %p221, %p222
    %p224 = scmp.ne.s32.totalorder %s212, %s213
    %p225 = scmp.eq.s32.totalorder %s25, 1
    %p226 = por %p224, %p225
    %p228 = scmp.ne.s32.totalorder %s213, %s227
    %p229 = scmp.eq.s32.totalorder %s25, 0
    %p230 = por %p228, %p229
    %s232 = sadd.s32 %s231, 1
    %p235 = scmp.eq.s32.totalorder %s19, 1
    %p236 = scmp.ne.s32.totalorder %s231, %s233
    %p237 = scmp.eq.s32.totalorder %s19, 0
    %p238 = por %p236, %p237
    %p239 = scmp.ne.s32.totalorder %s231, %s233
    %p240 = scmp.eq.s32.totalorder %s24, 1
    %p241 = por %p239, %p240
    %p242 = scmp.ne.s32.totalorder %s233, %s234
    %p243 = scmp.eq.s32.totalorder %s24, 0
    %p244 = por %p242, %p243
    %p245 = scmp.ne.s32.totalorder %s233, %s234
    %p246 = scmp.eq.s32.totalorder %s25, 1
    %p247 = por %p245, %p246
    %p249 = scmp.ne.s32.totalorder %s234, %s248
    %p250 = scmp.eq.s32.totalorder %s25, 0
    %p251 = por %p249, %p250
    %s253 = sadd.s32 %s252, 1
    %p256 = scmp.eq.s32.totalorder %s19, 1
    %p257 = scmp.ne.s32.totalorder %s252, %s254
    %p258 = scmp.eq.s32.totalorder %s19, 0
    %p259 = por %p257, %p258
    %p260 = scmp.ne.s32.totalorder %s252, %s254
    %p261 = scmp.eq.s32.totalorder %s24, 1
    %p262 = por %p260, %p261
    %p263 = scmp.ne.s32.totalorder %s254, %s255
    %p264 = scmp.eq.s32.totalorder %s24, 0
    %p265 = por %p263, %p264
    %p266 = scmp.ne.s32.totalorder %s254, %s255
    %p267 = scmp.eq.s32.totalorder %s25, 1
    %p268 = por %p266, %p267
    %p270 = scmp.ne.s32.totalorder %s255, %s269
    %p271 = scmp.eq.s32.totalorder %s25, 0
    %p272 = por %p270, %p271
    %s274 = sadd.s32 %s273, 1
    %p277 = scmp.eq.s32.totalorder %s19, 1
    %p278 = scmp.ne.s32.totalorder %s273, %s275
    %p279 = scmp.eq.s32.totalorder %s19, 0
    %p280 = por %p278, %p279
    %p281 = scmp.ne.s32.totalorder %s273, %s275
    %p282 = scmp.eq.s32.totalorder %s24, 1
    %p283 = por %p281, %p282
    %p284 = scmp.ne.s32.totalorder %s275, %s276
    %p285 = scmp.eq.s32.totalorder %s24, 0
    %p286 = por %p284, %p285
    %p287 = scmp.ne.s32.totalorder %s275, %s276
    %p288 = scmp.eq.s32.totalorder %s25, 1
    %p289 = por %p287, %p288
    %p291 = scmp.ne.s32.totalorder %s276, %s290
    %p292 = scmp.eq.s32.totalorder %s25, 0
    %p293 = por %p291, %p292
    %s295 = sadd.s32 %s294, 1
    %p298 = scmp.eq.s32.totalorder %s19, 1
    %p299 = scmp.ne.s32.totalorder %s294, %s296
    %p300 = scmp.eq.s32.totalorder %s19, 0
    %p301 = por %p299, %p300
    %p302 = scmp.ne.s32.totalorder %s294, %s296
    %p303 = scmp.eq.s32.totalorder %s24, 1
    %p304 = por %p302, %p303
    %p305 = scmp.ne.s32.totalorder %s296, %s297
    %p306 = scmp.eq.s32.totalorder %s24, 0
    %p307 = por %p305, %p306
    %p308 = scmp.ne.s32.totalorder %s296, %s297
    %p309 = scmp.eq.s32.totalorder %s25, 1
    %p310 = por %p308, %p309
    %p312 = scmp.ne.s32.totalorder %s297, %s311
    %p313 = scmp.eq.s32.totalorder %s25, 0
    %p314 = por %p312, %p313
    %s315 = ssub.s32 %s19, %s26
    %p316 = scmp.eq.s32.totalorder %s315, 0
    %s318 = sadd.s32 %s317, 1
    %s319 = scalar_select %p316, %s317, %s318
    %p322 = pneg %p316
    %p323 = scmp.eq.s32.totalorder %s19, 1
    %p324 = por %p322, %p323
    %p325 = scmp.ne.s32.totalorder %s317, %s320
    %p326 = scmp.eq.s32.totalorder %s19, 0
    %p327 = por %p325, %p326
    %p328 = scmp.ne.s32.totalorder %s317, %s320
    %p329 = scmp.eq.s32.totalorder %s24, 1
    %p330 = por %p328, %p329
    %p331 = scmp.ne.s32.totalorder %s320, %s321
    %p332 = scmp.eq.s32.totalorder %s24, 0
    %p333 = por %p331, %p332
    %p334 = scmp.ne.s32.totalorder %s320, %s321
    %p335 = scmp.eq.s32.totalorder %s25, 1
    %p336 = por %p334, %p335
    %p338 = scmp.ne.s32.totalorder %s321, %s337
    %p339 = scmp.eq.s32.totalorder %s25, 0
    %p340 = por %p338, %p339
    %p341 = scmp.le.s32.totalorder 1, %s19
    %p342 = scmp.lt.s32.totalorder %s19, 3
    %p343 = pnand %p341, %p342
    %p344 = pneg %p343
    // Predicated region
    $region9: #{graph_processor_forward.8} parent=5 // pred_check
      _
    $region10: #{graph_processor_forward.8} parent=5 // pred_check_branch
      %346 = sbr.rel (%p343) target = $region12
    $region11: #{graph_processor_forward.8} parent=5 // pred_region
      %s347 = ssub.s32 %s19, 1
      // Predicated region
      $region13: #{graph_processor_forward.8} parent=11 // pred_check
        %p348 = pneg %p118
      $region14: #{graph_processor_forward.8} parent=11 // pred_check_branch
        %350 = sbr.rel (%p348) target = $region16
      $region15: #{graph_processor_forward.8} parent=11 // pred_region
        _
      $region16: #{graph_processor_forward.8} parent=11 // pred_fallthru
        _
      // Predicated region
      $region17: #{graph_processor_forward.8} parent=11 // pred_check
        %p351 = pneg %p139
      $region18: #{graph_processor_forward.8} parent=11 // pred_check_branch
        %353 = sbr.rel (%p351) target = $region20
      $region19: #{graph_processor_forward.8} parent=11 // pred_region
        _
      $region20: #{graph_processor_forward.8} parent=11 // pred_fallthru
        _
      // Predicated region
      $region21: #{graph_processor_forward.8} parent=11 // pred_check
        %p354 = pneg %p160
      $region22: #{graph_processor_forward.8} parent=11 // pred_check_branch
        %356 = sbr.rel (%p354) target = $region24
      $region23: #{graph_processor_forward.8} parent=11 // pred_region
        _
      $region24: #{graph_processor_forward.8} parent=11 // pred_fallthru
        _
      // Predicated region
      $region25: #{graph_processor_forward.8} parent=11 // pred_check
        %p357 = pneg %p181
      $region26: #{graph_processor_forward.8} parent=11 // pred_check_branch
        %359 = sbr.rel (%p357) target = $region28
      $region27: #{graph_processor_forward.8} parent=11 // pred_region
        _
      $region28: #{graph_processor_forward.8} parent=11 // pred_fallthru
        _
      // Predicated region
      $region29: #{graph_processor_forward.8} parent=11 // pred_check
        %p360 = pneg %p202
      $region30: #{graph_processor_forward.8} parent=11 // pred_check_branch
        %362 = sbr.rel (%p360) target = $region32
      $region31: #{graph_processor_forward.8} parent=11 // pred_region
        _
      $region32: #{graph_processor_forward.8} parent=11 // pred_fallthru
        _
      // Predicated region
      $region33: #{graph_processor_forward.8} parent=11 // pred_check
        %p363 = pneg %p223
      $region34: #{graph_processor_forward.8} parent=11 // pred_check_branch
        %365 = sbr.rel (%p363) target = $region36
      $region35: #{graph_processor_forward.8} parent=11 // pred_region
        _
      $region36: #{graph_processor_forward.8} parent=11 // pred_fallthru
        _
      // Predicated region
      $region37: #{graph_processor_forward.8} parent=11 // pred_check
        %p366 = pneg %p244
      $region38: #{graph_processor_forward.8} parent=11 // pred_check_branch
        %368 = sbr.rel (%p366) target = $region40
      $region39: #{graph_processor_forward.8} parent=11 // pred_region
        _
      $region40: #{graph_processor_forward.8} parent=11 // pred_fallthru
        _
      // Predicated region
      $region41: #{graph_processor_forward.8} parent=11 // pred_check
        %p369 = pneg %p265
      $region42: #{graph_processor_forward.8} parent=11 // pred_check_branch
        %371 = sbr.rel (%p369) target = $region44
      $region43: #{graph_processor_forward.8} parent=11 // pred_region
        _
      $region44: #{graph_processor_forward.8} parent=11 // pred_fallthru
        _
      // Predicated region
      $region45: #{graph_processor_forward.8} parent=11 // pred_check
        %p372 = pneg %p286
      $region46: #{graph_processor_forward.8} parent=11 // pred_check_branch
        %374 = sbr.rel (%p372) target = $region48
      $region47: #{graph_processor_forward.8} parent=11 // pred_region
        _
      $region48: #{graph_processor_forward.8} parent=11 // pred_fallthru
        _
      // Predicated region
      $region49: #{graph_processor_forward.8} parent=11 // pred_check
        %p375 = pneg %p307
      $region50: #{graph_processor_forward.8} parent=11 // pred_check_branch
        %377 = sbr.rel (%p375) target = $region52
      $region51: #{graph_processor_forward.8} parent=11 // pred_region
        _
      $region52: #{graph_processor_forward.8} parent=11 // pred_fallthru
        _
    $region12: #{graph_processor_forward.8} parent=5 // pred_fallthru
      _
    %p378 = scmp.lt.s32.totalorder %s19, 2
    // Predicated region
    $region53: #{graph_processor_forward.8} parent=5 // pred_check
      %p379 = pneg %p378
    $region54: #{graph_processor_forward.8} parent=5 // pred_check_branch
      %381 = sbr.rel (%p379) target = $region56
    $region55: #{graph_processor_forward.8} parent=5 // pred_region
      // Predicated region
      $region57: #{graph_processor_forward.8} parent=55 // pred_check
        %p382 = pneg %p39
      $region58: #{graph_processor_forward.8} parent=55 // pred_check_branch
        %384 = sbr.rel (%p382) target = $region60
      $region59: #{graph_processor_forward.8} parent=55 // pred_region
        %s385 = smul.u32 64, %s19
        %p386 = scmp.lt.s32.totalorder %s385, 127
        %s387 = scalar_select %p386, %s385, 127
        %s388 = smul.addr %s387, 8
        %s389 = scalar_lea.vmem %s0, %s388
        %s390 = smul.u32 64, %s19
      $region60: #{graph_processor_forward.8} parent=55 // pred_fallthru
        _
      // Predicated region
      $region61: #{graph_processor_forward.8} parent=55 // pred_check
        %p391 = pneg %p65
      $region62: #{graph_processor_forward.8} parent=55 // pred_check_branch
        %393 = sbr.rel (%p391) target = $region64
      $region63: #{graph_processor_forward.8} parent=55 // pred_region
        %s394 = smul.u32 64, %s19
        %p395 = scmp.lt.s32.totalorder %s394, 127
        %s396 = scalar_select %p395, %s394, 127
        %s397 = smul.addr %s396, 8
        %s398 = scalar_lea.vmem %s1, %s397
        %s399 = smul.u32 64, %s19
      $region64: #{graph_processor_forward.8} parent=55 // pred_fallthru
        _
      // Predicated region
      $region65: #{graph_processor_forward.8} parent=55 // pred_check
        %p400 = pneg %p91
      $region66: #{graph_processor_forward.8} parent=55 // pred_check_branch
        %402 = sbr.rel (%p400) target = $region68
      $region67: #{graph_processor_forward.8} parent=55 // pred_region
        %s403 = smul.u32 64, %s19
        %p404 = scmp.lt.s32.totalorder %s403, 127
        %s405 = scalar_select %p404, %s403, 127
        %s406 = smul.addr %s405, 8
        %s407 = scalar_lea.vmem %s2, %s406
        %s408 = smul.u32 64, %s19
      $region68: #{graph_processor_forward.8} parent=55 // pred_fallthru
        _
    $region56: #{graph_processor_forward.8} parent=5 // pred_fallthru
      _
    %p409 = scmp.le.s32.totalorder 1, %s19
    %p410 = scmp.lt.s32.totalorder %s19, 3
    %p411 = pnand %p409, %p410
    %p412 = pneg %p411
    // Predicated region
    $region69: #{graph_processor_forward.8} parent=5 // pred_check
      _
    $region70: #{graph_processor_forward.8} parent=5 // pred_check_branch
      %414 = sbr.rel (%p411) target = $region72
    $region71: #{graph_processor_forward.8} parent=5 // pred_region
      %s415 = ssub.s32 %s19, 1
      %s416 = smul.u32 64, %s24
      %p417 = scmp.lt.s32.totalorder %s416, 127
      %s418 = scalar_select %p417, %s416, 127
      %s419 = smul.addr %s418, 8
      %s420 = scalar_lea.vmem %s0, %s419
      %p421 = pneg %p45
      %p422 = pneg %p42
      %s423 = smul.u32 64, %s24
      %p424 = scmp.lt.s32.totalorder %s423, 127
      %s425 = scalar_select %p424, %s423, 127
      %s426 = smul.addr %s425, 8
      %s427 = scalar_lea.vmem %s1, %s426
      %p428 = pneg %p71
      %p429 = pneg %p68
      %s430 = smul.u32 64, %s24
      %p431 = scmp.lt.s32.totalorder %s430, 127
      %s432 = scalar_select %p431, %s430, 127
      %s433 = smul.addr %s432, 8
      %s434 = scalar_lea.vmem %s2, %s433
      %p435 = pneg %p97
      %p436 = pneg %p94
      %p437 = pneg %p118
      %p438 = pneg %p115
      %p439 = pneg %p139
      %p440 = pneg %p136
      %p441 = pneg %p160
      %p442 = pneg %p157
      %p443 = pneg %p181
      %p444 = pneg %p178
      %p445 = pneg %p202
      %p446 = pneg %p199
      %p447 = pneg %p223
      %p448 = pneg %p220
      %p449 = pneg %p244
      %p450 = pneg %p241
      %p451 = pneg %p265
      %p452 = pneg %p262
      %p453 = pneg %p286
      %p454 = pneg %p283
      %p455 = pneg %p307
      %p456 = pneg %p304
      %p457 = pneg %p333
      %p458 = pneg %p330
      %s459 = smul.u32 64, %s24
      %p460 = scmp.lt.s32.totalorder %s459, 127
      %s461 = scalar_select %p460, %s459, 127
      %s462 = smul.addr %s461, 8
      %s463 = scalar_lea.vmem %s13, %s462
      %s464 = smul.u32 64, %s24
      %p465 = scmp.lt.s32.totalorder %s464, 127
      %s466 = scalar_select %p465, %s464, 127
      %s467 = smul.addr %s466, 8
      %s468 = scalar_lea.vmem %s0, %s467
      %s469 = smul.u32 64, %s24
      %s470 = smul.u32 64, %s24
      %p471 = scmp.lt.s32.totalorder %s470, 127
      %s472 = scalar_select %p471, %s470, 127
      %s473 = smul.addr %s472, 8
      %s474 = scalar_lea.vmem %s1, %s473
      %s475 = smul.u32 64, %s24
      %s476 = smul.u32 64, %s24
      %p477 = scmp.lt.s32.totalorder %s476, 127
      %s478 = scalar_select %p477, %s476, 127
      %s479 = smul.addr %s478, 8
      %s480 = scalar_lea.vmem %s2, %s479
      %s481 = smul.u32 64, %s24
      %s482 = smul.u32 64, %s24
      %p483 = scmp.lt.s32.totalorder %s482, 127
      %s484 = scalar_select %p483, %s482, 127
      %s485 = smul.addr %s484, 8
      %s486 = scalar_lea.vmem %s13, %s485
      %s487 = smul.u32 64, %s24
      %v488 = vld [vmem:[%s468] sm:$0xff]
      %v489 = vld [vmem:[%s468 + $0x8] sm:$0xff]
      %v490 = vld [vmem:[%s468 + $0x10] sm:$0xff]
      %v491 = vld [vmem:[%s468 + $0x18] sm:$0xff]
      %v492 = vld [vmem:[%s468 + $0x20] sm:$0xff]
      %v493 = vld [vmem:[%s468 + $0x28] sm:$0xff]
      %v494 = vld [vmem:[%s468 + $0x30] sm:$0xff]
      %v495 = vld [vmem:[%s468 + $0x38] sm:$0xff]
      %v496 = vld [vmem:[%s468 + $0x40] sm:$0xff]
      %v497 = vld [vmem:[%s468 + $0x48] sm:$0xff]
      %v498 = vld [vmem:[%s468 + $0x50] sm:$0xff]
      %v499 = vld [vmem:[%s468 + $0x58] sm:$0xff]
      %v500 = vld [vmem:[%s468 + $0x60] sm:$0xff]
      %v501 = vld [vmem:[%s468 + $0x68] sm:$0xff]
      %v502 = vld [vmem:[%s468 + $0x70] sm:$0xff]
      %v503 = vld [vmem:[%s468 + $0x78] sm:$0xff]
      %v504 = vld [vmem:[%s468 + $0x80] sm:$0xff]
      %v505 = vld [vmem:[%s468 + $0x88] sm:$0xff]
      %v506 = vld [vmem:[%s468 + $0x90] sm:$0xff]
      %v507 = vld [vmem:[%s468 + $0x98] sm:$0xff]
      %v508 = vld [vmem:[%s468 + $0xa0] sm:$0xff]
      %v509 = vld [vmem:[%s468 + $0xa8] sm:$0xff]
      %v510 = vld [vmem:[%s468 + $0xb0] sm:$0xff]
      %v511 = vld [vmem:[%s468 + $0xb8] sm:$0xff]
      %v512 = vld [vmem:[%s468 + $0xc0] sm:$0xff]
      %v513 = vld [vmem:[%s468 + $0xc8] sm:$0xff]
      %v514 = vld [vmem:[%s468 + $0xd0] sm:$0xff]
      %v515 = vld [vmem:[%s468 + $0xd8] sm:$0xff]
      %v516 = vld [vmem:[%s468 + $0xe0] sm:$0xff]
      %v517 = vld [vmem:[%s468 + $0xe8] sm:$0xff]
      %v518 = vld [vmem:[%s468 + $0xf0] sm:$0xff]
      %v519 = vld [vmem:[%s468 + $0xf8] sm:$0xff]
      %v520 = vld [vmem:[%s468 + $0x100] sm:$0xff]
      %v521 = vld [vmem:[%s468 + $0x108] sm:$0xff]
      %v522 = vld [vmem:[%s468 + $0x110] sm:$0xff]
      %v523 = vld [vmem:[%s468 + $0x118] sm:$0xff]
      %v524 = vld [vmem:[%s468 + $0x120] sm:$0xff]
      %v525 = vld [vmem:[%s468 + $0x128] sm:$0xff]
      %v526 = vld [vmem:[%s468 + $0x130] sm:$0xff]
      %v527 = vld [vmem:[%s468 + $0x138] sm:$0xff]
      %v528 = vld [vmem:[%s468 + $0x140] sm:$0xff]
      %v529 = vld [vmem:[%s468 + $0x148] sm:$0xff]
      %v530 = vld [vmem:[%s468 + $0x150] sm:$0xff]
      %v531 = vld [vmem:[%s468 + $0x158] sm:$0xff]
      %v532 = vld [vmem:[%s468 + $0x160] sm:$0xff]
      %v533 = vld [vmem:[%s468 + $0x168] sm:$0xff]
      %v534 = vld [vmem:[%s468 + $0x170] sm:$0xff]
      %v535 = vld [vmem:[%s468 + $0x178] sm:$0xff]
      %v536 = vld [vmem:[%s468 + $0x180] sm:$0xff]
      %v537 = vld [vmem:[%s468 + $0x188] sm:$0xff]
      %v538 = vld [vmem:[%s468 + $0x190] sm:$0xff]
      %v539 = vld [vmem:[%s468 + $0x198] sm:$0xff]
      %v540 = vld [vmem:[%s468 + $0x1a0] sm:$0xff]
      %v541 = vld [vmem:[%s468 + $0x1a8] sm:$0xff]
      %v542 = vld [vmem:[%s468 + $0x1b0] sm:$0xff]
      %v543 = vld [vmem:[%s468 + $0x1b8] sm:$0xff]
      %v544 = vld [vmem:[%s468 + $0x1c0] sm:$0xff]
      %v545 = vld [vmem:[%s468 + $0x1c8] sm:$0xff]
      %v546 = vld [vmem:[%s468 + $0x1d0] sm:$0xff]
      %v547 = vld [vmem:[%s468 + $0x1d8] sm:$0xff]
      %v548 = vld [vmem:[%s468 + $0x1e0] sm:$0xff]
      %v549 = vld [vmem:[%s468 + $0x1e8] sm:$0xff]
      %v550 = vld [vmem:[%s468 + $0x1f0] sm:$0xff]
      %v551 = vld [vmem:[%s468 + $0x1f8] sm:$0xff]
      %v552 = vld [vmem:[%s3] sm:$0xff]
      %v553 = vld [vmem:[%s3 + $0x8] sm:$0xff]
      %v554 = vld [vmem:[%s3 + $0x10] sm:$0xff]
      %v555 = vld [vmem:[%s3 + $0x18] sm:$0xff]
      %v556 = vld [vmem:[%s3 + $0x20] sm:$0xff]
      %v557 = vld [vmem:[%s3 + $0x28] sm:$0xff]
      %v558 = vld [vmem:[%s3 + $0x30] sm:$0xff]
      %v559 = vld [vmem:[%s3 + $0x38] sm:$0xff]
      %v560 = vld [vmem:[%s3 + $0x40] sm:$0xff]
      %v561 = vld [vmem:[%s3 + $0x48] sm:$0xff]
      %v562 = vld [vmem:[%s3 + $0x50] sm:$0xff]
      %v563 = vld [vmem:[%s3 + $0x58] sm:$0xff]
      %v564 = vld [vmem:[%s3 + $0x60] sm:$0xff]
      %v565 = vld [vmem:[%s3 + $0x68] sm:$0xff]
      %v566 = vld [vmem:[%s3 + $0x70] sm:$0xff]
      %v567 = vld [vmem:[%s3 + $0x78] sm:$0xff]
      %v568 = vld [vmem:[%s474] sm:$0xff]
      %v569 = vld [vmem:[%s474 + $0x8] sm:$0xff]
      %v570 = vld [vmem:[%s474 + $0x10] sm:$0xff]
      %v571 = vld [vmem:[%s474 + $0x18] sm:$0xff]
      %v572 = vld [vmem:[%s474 + $0x20] sm:$0xff]
      %v573 = vld [vmem:[%s474 + $0x28] sm:$0xff]
      %v574 = vld [vmem:[%s474 + $0x30] sm:$0xff]
      %v575 = vld [vmem:[%s474 + $0x38] sm:$0xff]
      %v576 = vld [vmem:[%s474 + $0x40] sm:$0xff]
      %v577 = vld [vmem:[%s474 + $0x48] sm:$0xff]
      %v578 = vld [vmem:[%s474 + $0x50] sm:$0xff]
      %v579 = vld [vmem:[%s474 + $0x58] sm:$0xff]
      %v580 = vld [vmem:[%s474 + $0x60] sm:$0xff]
      %v581 = vld [vmem:[%s474 + $0x68] sm:$0xff]
      %v582 = vld [vmem:[%s474 + $0x70] sm:$0xff]
      %v583 = vld [vmem:[%s474 + $0x78] sm:$0xff]
      %v584 = vld [vmem:[%s474 + $0x80] sm:$0xff]
      %v585 = vld [vmem:[%s474 + $0x88] sm:$0xff]
      %v586 = vld [vmem:[%s474 + $0x90] sm:$0xff]
      %v587 = vld [vmem:[%s474 + $0x98] sm:$0xff]
      %v588 = vld [vmem:[%s474 + $0xa0] sm:$0xff]
      %v589 = vld [vmem:[%s474 + $0xa8] sm:$0xff]
      %v590 = vld [vmem:[%s474 + $0xb0] sm:$0xff]
      %v591 = vld [vmem:[%s474 + $0xb8] sm:$0xff]
      %v592 = vld [vmem:[%s474 + $0xc0] sm:$0xff]
      %v593 = vld [vmem:[%s474 + $0xc8] sm:$0xff]
      %v594 = vld [vmem:[%s474 + $0xd0] sm:$0xff]
      %v595 = vld [vmem:[%s474 + $0xd8] sm:$0xff]
      %v596 = vld [vmem:[%s474 + $0xe0] sm:$0xff]
      %v597 = vld [vmem:[%s474 + $0xe8] sm:$0xff]
      %v598 = vld [vmem:[%s474 + $0xf0] sm:$0xff]
      %v599 = vld [vmem:[%s474 + $0xf8] sm:$0xff]
      %v600 = vld [vmem:[%s474 + $0x100] sm:$0xff]
      %v601 = vld [vmem:[%s474 + $0x108] sm:$0xff]
      %v602 = vld [vmem:[%s474 + $0x110] sm:$0xff]
      %v603 = vld [vmem:[%s474 + $0x118] sm:$0xff]
      %v604 = vld [vmem:[%s474 + $0x120] sm:$0xff]
      %v605 = vld [vmem:[%s474 + $0x128] sm:$0xff]
      %v606 = vld [vmem:[%s474 + $0x130] sm:$0xff]
      %v607 = vld [vmem:[%s474 + $0x138] sm:$0xff]
      %v608 = vld [vmem:[%s474 + $0x140] sm:$0xff]
      %v609 = vld [vmem:[%s474 + $0x148] sm:$0xff]
      %v610 = vld [vmem:[%s474 + $0x150] sm:$0xff]
      %v611 = vld [vmem:[%s474 + $0x158] sm:$0xff]
      %v612 = vld [vmem:[%s474 + $0x160] sm:$0xff]
      %v613 = vld [vmem:[%s474 + $0x168] sm:$0xff]
      %v614 = vld [vmem:[%s474 + $0x170] sm:$0xff]
      %v615 = vld [vmem:[%s474 + $0x178] sm:$0xff]
      %v616 = vld [vmem:[%s474 + $0x180] sm:$0xff]
      %v617 = vld [vmem:[%s474 + $0x188] sm:$0xff]
      %v618 = vld [vmem:[%s474 + $0x190] sm:$0xff]
      %v619 = vld [vmem:[%s474 + $0x198] sm:$0xff]
      %v620 = vld [vmem:[%s474 + $0x1a0] sm:$0xff]
      %v621 = vld [vmem:[%s474 + $0x1a8] sm:$0xff]
      %v622 = vld [vmem:[%s474 + $0x1b0] sm:$0xff]
      %v623 = vld [vmem:[%s474 + $0x1b8] sm:$0xff]
      %v624 = vld [vmem:[%s474 + $0x1c0] sm:$0xff]
      %v625 = vld [vmem:[%s474 + $0x1c8] sm:$0xff]
      %v626 = vld [vmem:[%s474 + $0x1d0] sm:$0xff]
      %v627 = vld [vmem:[%s474 + $0x1d8] sm:$0xff]
      %v628 = vld [vmem:[%s474 + $0x1e0] sm:$0xff]
      %v629 = vld [vmem:[%s474 + $0x1e8] sm:$0xff]
      %v630 = vld [vmem:[%s474 + $0x1f0] sm:$0xff]
      %v631 = vld [vmem:[%s474 + $0x1f8] sm:$0xff]
      %v632 = vld [vmem:[%s4] sm:$0xff]
      %v633 = vld [vmem:[%s4 + $0x8] sm:$0xff]
      %v634 = vld [vmem:[%s4 + $0x10] sm:$0xff]
      %v635 = vld [vmem:[%s4 + $0x18] sm:$0xff]
      %v636 = vld [vmem:[%s4 + $0x20] sm:$0xff]
      %v637 = vld [vmem:[%s4 + $0x28] sm:$0xff]
      %v638 = vld [vmem:[%s4 + $0x30] sm:$0xff]
      %v639 = vld [vmem:[%s4 + $0x38] sm:$0xff]
      %v640 = vld [vmem:[%s4 + $0x40] sm:$0xff]
      %v641 = vld [vmem:[%s4 + $0x48] sm:$0xff]
      %v642 = vld [vmem:[%s4 + $0x50] sm:$0xff]
      %v643 = vld [vmem:[%s4 + $0x58] sm:$0xff]
      %v644 = vld [vmem:[%s4 + $0x60] sm:$0xff]
      %v645 = vld [vmem:[%s4 + $0x68] sm:$0xff]
      %v646 = vld [vmem:[%s4 + $0x70] sm:$0xff]
      %v647 = vld [vmem:[%s4 + $0x78] sm:$0xff]
      %648 = vmatprep.subr.mxu0 0.0
      %649 = vmatpush1.msra.mxu0 %v632
      %650 = vmatprep.subr.mxu0 0.0
      %651 = vmatpush1.msra.mxu0 %v633
      %652 = vmatprep.subr.mxu0 0.0
      %653 = vmatpush1.msra.mxu0 %v634
      %654 = vmatprep.subr.mxu0 0.0
      %655 = vmatpush1.msra.mxu0 %v635
      %656 = vmatprep.subr.mxu0 0.0
      %657 = vmatpush1.msra.mxu0 %v636
      %658 = vmatprep.subr.mxu0 0.0
      %659 = vmatpush1.msra.mxu0 %v637
      %660 = vmatprep.subr.mxu0 0.0
      %661 = vmatpush1.msra.mxu0 %v638
      %662 = vmatprep.subr.mxu0 0.0
      %663 = vmatpush1.msra.mxu0 %v639
      %664 = vmatprep.subr.mxu0 0.0
      %665 = vmatpush1.msra.mxu0 %v640
      %666 = vmatprep.subr.mxu0 0.0
      %667 = vmatpush1.msra.mxu0 %v641
      %668 = vmatprep.subr.mxu0 0.0
      %669 = vmatpush1.msra.mxu0 %v642
      %670 = vmatprep.subr.mxu0 0.0
      %671 = vmatpush1.msra.mxu0 %v643
      %672 = vmatprep.subr.mxu0 0.0
      %673 = vmatpush1.msra.mxu0 %v644
      %674 = vmatprep.subr.mxu0 0.0
      %675 = vmatpush1.msra.mxu0 %v645
      %676 = vmatprep.subr.mxu0 0.0
      %677 = vmatpush1.msra.mxu0 %v646
      %678 = vmatprep.subr.mxu0 0.0
      %679 = vmatpush1.msra.mxu0 %v647
      %680 = vmatprep.subr.mxu0 0.0
      %681 = vmatpush1.msra.mxu0 0.0
      %682 = vmatprep.subr.mxu0 0.0
      %683 = vmatpush1.msra.mxu0 0.0
      %684 = vmatprep.subr.mxu0 0.0
      %685 = vmatpush1.msra.mxu0 0.0
      %686 = vmatprep.subr.mxu0 0.0
      %687 = vmatpush1.msra.mxu0 0.0
      %688 = vmatprep.subr.mxu0 0.0
      %689 = vmatpush1.msra.mxu0 0.0
      %690 = vmatprep.subr.mxu0 0.0
      %691 = vmatpush1.msra.mxu0 0.0
      %692 = vmatprep.subr.mxu0 0.0
      %693 = vmatpush1.msra.mxu0 0.0
      %694 = vmatprep.subr.mxu0 0.0
      %695 = vmatpush1.msra.mxu0 0.0
      %696 = vmatprep.subr.mxu0 0.0
      %697 = vmatpush1.msra.mxu0 0.0
      %698 = vmatprep.subr.mxu0 0.0
      %699 = vmatpush1.msra.mxu0 0.0
      %700 = vmatprep.subr.mxu0 0.0
      %701 = vmatpush1.msra.mxu0 0.0
      %702 = vmatprep.subr.mxu0 0.0
      %703 = vmatpush1.msra.mxu0 0.0
      %704 = vmatprep.subr.mxu0 0.0
      %705 = vmatpush1.msra.mxu0 0.0
      %706 = vmatprep.subr.mxu0 0.0
      %707 = vmatpush1.msra.mxu0 0.0
      %708 = vmatprep.subr.mxu0 0.0
      %709 = vmatpush1.msra.mxu0 0.0
      %710 = vmatprep.subr.mxu0 0.0
      %711 = vmatpush1.msra.mxu0 0.0
      %712 = vmatprep.mubr.f32.mxu0 0.0
      %713 = vmatmul.mubr.f32.gmra.mrb[0].mxu0 %v568
      %v714 = vpop.f32.mrb[0].mxu0
      %v715 = vadd.f32 0.0, %v714
      %v716 = vpop.f32.mrb[0].mxu0
      %717 = vmatprep.mubr.f32.mxu0 0.0
      %718 = vmatmul.mubr.f32.gmra.mrb[0].mxu0 %v569
      %v719 = vpop.f32.mrb[0].mxu0
      %v720 = vadd.f32 0.0, %v719
      %v721 = vpop.f32.mrb[0].mxu0
      %722 = vmatprep.mubr.f32.mxu0 0.0
      %723 = vmatmul.mubr.f32.gmra.mrb[0].mxu0 %v570
      %v724 = vpop.f32.mrb[0].mxu0
      %v725 = vadd.f32 0.0, %v724
      %v726 = vpop.f32.mrb[0].mxu0
      %727 = vmatprep.mubr.f32.mxu0 0.0
      %728 = vmatmul.mubr.f32.gmra.mrb[0].mxu0 %v571
      %v729 = vpop.f32.mrb[0].mxu0
      %v730 = vadd.f32 0.0, %v729
      %v731 = vpop.f32.mrb[0].mxu0
      %732 = vmatprep.mubr.f32.mxu0 0.0
      %733 = vmatmul.mubr.f32.gmra.mrb[0].mxu0 %v572
      %v734 = vpop.f32.mrb[0].mxu0
      %v735 = vadd.f32 0.0, %v734
      %v736 = vpop.f32.mrb[0].mxu0
      %737 = vmatprep.mubr.f32.mxu0 0.0
      %738 = vmatmul.mubr.f32.gmra.mrb[0].mxu0 %v573
      %v739 = vpop.f32.mrb[0].mxu0
      %v740 = vadd.f32 0.0, %v739
      %v741 = vpop.f32.mrb[0].mxu0
      %742 = vmatprep.mubr.f32.mxu0 0.0
      %743 = vmatmul.mubr.f32.gmra.mrb[0].mxu0 %v574
      %v744 = vpop.f32.mrb[0].mxu0
      %v745 = vadd.f32 0.0, %v744
      %v746 = vpop.f32.mrb[0].mxu0
      %747 = vmatprep.mubr.f32.mxu0 0.0
      %748 = vmatmul.mubr.f32.gmra.mrb[0].mxu0 %v575
      %v749 = vpop.f32.mrb[0].mxu0
      %v750 = vadd.f32 0.0, %v749
      %v751 = vpop.f32.mrb[0].mxu0
      %752 = vmatprep.mubr.f32.mxu0 0.0
      %753 = vmatmul.mubr.f32.gmra.mrb[0].mxu0 %v576
      %v754 = vpop.f32.mrb[0].mxu0
      %v755 = vadd.f32 0.0, %v754
      %v756 = vpop.f32.mrb[0].mxu0
      %757 = vmatprep.mubr.f32.mxu0 0.0
      %758 = vmatmul.mubr.f32.gmra.mrb[0].mxu0 %v577
      %v759 = vpop.f32.mrb[0].mxu0
      %v760 = vadd.f32 0.0, %v759
      %v761 = vpop.f32.mrb[0].mxu0
      %762 = vmatprep.mubr.f32.mxu0 0.0
      %763 = vmatmul.mubr.f32.gmra.mrb[0].mxu0 %v578
      %v764 = vpop.f32.mrb[0].mxu0
      %v765 = vadd.f32 0.0, %v764
      %v766 = vpop.f32.mrb[0].mxu0
      %767 = vmatprep.mubr.f32.mxu0 0.0
      %768 = vmatmul.mubr.f32.gmra.mrb[0].mxu0 %v579
      %v769 = vpop.f32.mrb[0].mxu0
      %v770 = vadd.f32 0.0, %v769
      %v771 = vpop.f32.mrb[0].mxu0
      %772 = vmatprep.mubr.f32.mxu0 0.0
      %773 = vmatmul.mubr.f32.gmra.mrb[0].mxu0 %v580
      %v774 = vpop.f32.mrb[0].mxu0
      %v775 = vadd.f32 0.0, %v774
      %v776 = vpop.f32.mrb[0].mxu0
      %777 = vmatprep.mubr.f32.mxu0 0.0
      %778 = vmatmul.mubr.f32.gmra.mrb[0].mxu0 %v581
      %v779 = vpop.f32.mrb[0].mxu0
      %v780 = vadd.f32 0.0, %v779
      %v781 = vpop.f32.mrb[0].mxu0
      %782 = vmatprep.mubr.f32.mxu0 0.0
      %783 = vmatmul.mubr.f32.gmra.mrb[0].mxu0 %v582
      %v784 = vpop.f32.mrb[0].mxu0
      %v785 = vadd.f32 0.0, %v784
      %v786 = vpop.f32.mrb[0].mxu0
      %787 = vmatprep.mubr.f32.mxu0 0.0
      %788 = vmatmul.mubr.f32.gmra.mrb[0].mxu0 %v583
      %v789 = vpop.f32.mrb[0].mxu0
      %v790 = vadd.f32 0.0, %v789
      %v791 = vpop.f32.mrb[0].mxu0
      %792 = vmatprep.mubr.f32.mxu0 0.0
      %793 = vmatmul.mubr.f32.gmra.mrb[0].mxu0 %v584
      %v794 = vpop.f32.mrb[0].mxu0
      %v795 = vadd.f32 0.0, %v794
      %v796 = vpop.f32.mrb[0].mxu0
      %797 = vmatprep.mubr.f32.mxu0 0.0
      %798 = vmatmul.mubr.f32.gmra.mrb[0].mxu0 %v585
      %v799 = vpop.f32.mrb[0].mxu0
      %v800 = vadd.f32 0.0, %v799
      %v801 = vpop.f32.mrb[0].mxu0
      %802 = vmatprep.mubr.f32.mxu0 0.0
      %803 = vmatmul.mubr.f32.gmra.mrb[0].mxu0 %v586
      %v804 = vpop.f32.mrb[0].mxu0
      %v805 = vadd.f32 0.0, %v804
      %v806 = vpop.f32.mrb[0].mxu0
      %807 = vmatprep.mubr.f32.mxu0 0.0
      %808 = vmatmul.mubr.f32.gmra.mrb[0].mxu0 %v587
      %v809 = vpop.f32.mrb[0].mxu0
      %v810 = vadd.f32 0.0, %v809
      %v811 = vpop.f32.mrb[0].mxu0
      %812 = vmatprep.mubr.f32.mxu0 0.0
      %813 = vmatmul.mubr.f32.gmra.mrb[0].mxu0 %v588
      %v814 = vpop.f32.mrb[0].mxu0
      %v815 = vadd.f32 0.0, %v814
      %v816 = vpop.f32.mrb[0].mxu0
      %817 = vmatprep.mubr.f32.mxu0 0.0
      %818 = vmatmul.mubr.f32.gmra.mrb[0].mxu0 %v589
      %v819 = vpop.f32.mrb[0].mxu0
      %v820 = vadd.f32 0.0, %v819
      %v821 = vpop.f32.mrb[0].mxu0
      %822 = vmatprep.mubr.f32.mxu0 0.0
      %823 = vmatmul.mubr.f32.gmra.mrb[0].mxu0 %v590
      %v824 = vpop.f32.mrb[0].mxu0
      %v825 = vadd.f32 0.0, %v824
      %v826 = vpop.f32.mrb[0].mxu0
      %827 = vmatprep.mubr.f32.mxu0 0.0
      %828 = vmatmul.mubr.f32.gmra.mrb[0].mxu0 %v591
      %v829 = vpop.f32.mrb[0].mxu0
      %v830 = vadd.f32 0.0, %v829
      %v831 = vpop.f32.mrb[0].mxu0
      %832 = vmatprep.mubr.f32.mxu0 0.0
      %833 = vmatmul.mubr.f32.gmra.mrb[0].mxu0 %v592
      %v834 = vpop.f32.mrb[0].mxu0
      %v835 = vadd.f32 0.0, %v834
      %v836 = vpop.f32.mrb[0].mxu0
      %837 = vmatprep.mubr.f32.mxu0 0.0
      %838 = vmatmul.mubr.f32.gmra.mrb[0].mxu0 %v593
      %v839 = vpop.f32.mrb[0].mxu0
      %v840 = vadd.f32 0.0, %v839
      %v841 = vpop.f32.mrb[0].mxu0
      %842 = vmatprep.mubr.f32.mxu0 0.0
      %843 = vmatmul.mubr.f32.gmra.mrb[0].mxu0 %v594
      %v844 = vpop.f32.mrb[0].mxu0
      %v845 = vadd.f32 0.0, %v844
      %v846 = vpop.f32.mrb[0].mxu0
      %847 = vmatprep.mubr.f32.mxu0 0.0
      %848 = vmatmul.mubr.f32.gmra.mrb[0].mxu0 %v595
      %v849 = vpop.f32.mrb[0].mxu0
      %v850 = vadd.f32 0.0, %v849
      %v851 = vpop.f32.mrb[0].mxu0
      %852 = vmatprep.mubr.f32.mxu0 0.0
      %853 = vmatmul.mubr.f32.gmra.mrb[0].mxu0 %v596
      %v854 = vpop.f32.mrb[0].mxu0
      %v855 = vadd.f32 0.0, %v854
      %v856 = vpop.f32.mrb[0].mxu0
      %857 = vmatprep.mubr.f32.mxu0 0.0
      %858 = vmatmul.mubr.f32.gmra.mrb[0].mxu0 %v597
      %v859 = vpop.f32.mrb[0].mxu0
      %v860 = vadd.f32 0.0, %v859
      %v861 = vpop.f32.mrb[0].mxu0
      %862 = vmatprep.mubr.f32.mxu0 0.0
      %863 = vmatmul.mubr.f32.gmra.mrb[0].mxu0 %v598
      %v864 = vpop.f32.mrb[0].mxu0
      %v865 = vadd.f32 0.0, %v864
      %v866 = vpop.f32.mrb[0].mxu0
      %867 = vmatprep.mubr.f32.mxu0 0.0
      %868 = vmatmul.mubr.f32.gmra.mrb[0].mxu0 %v599
      %v869 = vpop.f32.mrb[0].mxu0
      %v870 = vadd.f32 0.0, %v869
      %v871 = vpop.f32.mrb[0].mxu0
      %872 = vmatprep.mubr.f32.mxu0 0.0
      %873 = vmatmul.mubr.f32.gmra.mrb[0].mxu0 %v600
      %v874 = vpop.f32.mrb[0].mxu0
      %v875 = vadd.f32 0.0, %v874
      %v876 = vpop.f32.mrb[0].mxu0
      %877 = vmatprep.mubr.f32.mxu0 0.0
      %878 = vmatmul.mubr.f32.gmra.mrb[0].mxu0 %v601
      %v879 = vpop.f32.mrb[0].mxu0
      %v880 = vadd.f32 0.0, %v879
      %v881 = vpop.f32.mrb[0].mxu0
      %882 = vmatprep.mubr.f32.mxu0 0.0
      %883 = vmatmul.mubr.f32.gmra.mrb[0].mxu0 %v602
      %v884 = vpop.f32.mrb[0].mxu0
      %v885 = vadd.f32 0.0, %v884
      %v886 = vpop.f32.mrb[0].mxu0
      %887 = vmatprep.mubr.f32.mxu0 0.0
      %888 = vmatmul.mubr.f32.gmra.mrb[0].mxu0 %v603
      %v889 = vpop.f32.mrb[0].mxu0
      %v890 = vadd.f32 0.0, %v889
      %v891 = vpop.f32.mrb[0].mxu0
      %892 = vmatprep.mubr.f32.mxu0 0.0
      %893 = vmatmul.mubr.f32.gmra.mrb[0].mxu0 %v604
      %v894 = vpop.f32.mrb[0].mxu0
      %v895 = vadd.f32 0.0, %v894
      %v896 = vpop.f32.mrb[0].mxu0
      %897 = vmatprep.mubr.f32.mxu0 0.0
      %898 = vmatmul.mubr.f32.gmra.mrb[0].mxu0 %v605
      %v899 = vpop.f32.mrb[0].mxu0
      %v900 = vadd.f32 0.0, %v899
      %v901 = vpop.f32.mrb[0].mxu0
      %902 = vmatprep.mubr.f32.mxu0 0.0
      %903 = vmatmul.mubr.f32.gmra.mrb[0].mxu0 %v606
      %v904 = vpop.f32.mrb[0].mxu0
      %v905 = vadd.f32 0.0, %v904
      %v906 = vpop.f32.mrb[0].mxu0
      %907 = vmatprep.mubr.f32.mxu0 0.0
      %908 = vmatmul.mubr.f32.gmra.mrb[0].mxu0 %v607
      %v909 = vpop.f32.mrb[0].mxu0
      %v910 = vadd.f32 0.0, %v909
      %v911 = vpop.f32.mrb[0].mxu0
      %912 = vmatprep.mubr.f32.mxu0 0.0
      %913 = vmatmul.mubr.f32.gmra.mrb[0].mxu0 %v608
      %v914 = vpop.f32.mrb[0].mxu0
      %v915 = vadd.f32 0.0, %v914
      %v916 = vpop.f32.mrb[0].mxu0
      %917 = vmatprep.mubr.f32.mxu0 0.0
      %918 = vmatmul.mubr.f32.gmra.mrb[0].mxu0 %v609
      %v919 = vpop.f32.mrb[0].mxu0
      %v920 = vadd.f32 0.0, %v919
      %v921 = vpop.f32.mrb[0].mxu0
      %922 = vmatprep.mubr.f32.mxu0 0.0
      %923 = vmatmul.mubr.f32.gmra.mrb[0].mxu0 %v610
      %v924 = vpop.f32.mrb[0].mxu0
      %v925 = vadd.f32 0.0, %v924
      %v926 = vpop.f32.mrb[0].mxu0
      %927 = vmatprep.mubr.f32.mxu0 0.0
      %928 = vmatmul.mubr.f32.gmra.mrb[0].mxu0 %v611
      %v929 = vpop.f32.mrb[0].mxu0
      %v930 = vadd.f32 0.0, %v929
      %v931 = vpop.f32.mrb[0].mxu0
      %932 = vmatprep.mubr.f32.mxu0 0.0
      %933 = vmatmul.mubr.f32.gmra.mrb[0].mxu0 %v612
      %v934 = vpop.f32.mrb[0].mxu0
      %v935 = vadd.f32 0.0, %v934
      %v936 = vpop.f32.mrb[0].mxu0
      %937 = vmatprep.mubr.f32.mxu0 0.0
      %938 = vmatmul.mubr.f32.gmra.mrb[0].mxu0 %v613
      %v939 = vpop.f32.mrb[0].mxu0
      %v940 = vadd.f32 0.0, %v939
      %v941 = vpop.f32.mrb[0].mxu0
      %942 = vmatprep.mubr.f32.mxu0 0.0
      %943 = vmatmul.mubr.f32.gmra.mrb[0].mxu0 %v614
      %v944 = vpop.f32.mrb[0].mxu0
      %v945 = vadd.f32 0.0, %v944
      %v946 = vpop.f32.mrb[0].mxu0
      %947 = vmatprep.mubr.f32.mxu0 0.0
      %948 = vmatmul.mubr.f32.gmra.mrb[0].mxu0 %v615
      %v949 = vpop.f32.mrb[0].mxu0
      %v950 = vadd.f32 0.0, %v949
      %v951 = vpop.f32.mrb[0].mxu0
      %952 = vmatprep.mubr.f32.mxu0 0.0
      %953 = vmatmul.mubr.f32.gmra.mrb[0].mxu0 %v616
      %v954 = vpop.f32.mrb[0].mxu0
      %v955 = vadd.f32 0.0, %v954
      %v956 = vpop.f32.mrb[0].mxu0
      %957 = vmatprep.mubr.f32.mxu0 0.0
      %958 = vmatmul.mubr.f32.gmra.mrb[0].mxu0 %v617
      %v959 = vpop.f32.mrb[0].mxu0
      %v960 = vadd.f32 0.0, %v959
      %v961 = vpop.f32.mrb[0].mxu0
      %962 = vmatprep.mubr.f32.mxu0 0.0
      %963 = vmatmul.mubr.f32.gmra.mrb[0].mxu0 %v618
      %v964 = vpop.f32.mrb[0].mxu0
      %v965 = vadd.f32 0.0, %v964
      %v966 = vpop.f32.mrb[0].mxu0
      %967 = vmatprep.mubr.f32.mxu0 0.0
      %968 = vmatmul.mubr.f32.gmra.mrb[0].mxu0 %v619
      %v969 = vpop.f32.mrb[0].mxu0
      %v970 = vadd.f32 0.0, %v969
      %v971 = vpop.f32.mrb[0].mxu0
      %972 = vmatprep.mubr.f32.mxu0 0.0
      %973 = vmatmul.mubr.f32.gmra.mrb[0].mxu0 %v620
      %v974 = vpop.f32.mrb[0].mxu0
      %v975 = vadd.f32 0.0, %v974
      %v976 = vpop.f32.mrb[0].mxu0
      %977 = vmatprep.mubr.f32.mxu0 0.0
      %978 = vmatmul.mubr.f32.gmra.mrb[0].mxu0 %v621
      %v979 = vpop.f32.mrb[0].mxu0
      %v980 = vadd.f32 0.0, %v979
      %v981 = vpop.f32.mrb[0].mxu0
      %982 = vmatprep.mubr.f32.mxu0 0.0
      %983 = vmatmul.mubr.f32.gmra.mrb[0].mxu0 %v622
      %v984 = vpop.f32.mrb[0].mxu0
      %v985 = vadd.f32 0.0, %v984
      %v986 = vpop.f32.mrb[0].mxu0
      %987 = vmatprep.mubr.f32.mxu0 0.0
      %988 = vmatmul.mubr.f32.gmra.mrb[0].mxu0 %v623
      %v989 = vpop.f32.mrb[0].mxu0
      %v990 = vadd.f32 0.0, %v989
      %v991 = vpop.f32.mrb[0].mxu0
      %992 = vmatprep.mubr.f32.mxu0 0.0
      %993 = vmatmul.mubr.f32.gmra.mrb[0].mxu0 %v624
      %v994 = vpop.f32.mrb[0].mxu0
      %v995 = vadd.f32 0.0, %v994
      %v996 = vpop.f32.mrb[0].mxu0
      %997 = vmatprep.mubr.f32.mxu0 0.0
      %998 = vmatmul.mubr.f32.gmra.mrb[0].mxu0 %v625
      %v999 = vpop.f32.mrb[0].mxu0
      %v1000 = vadd.f32 0.0, %v999
      %v1001 = vpop.f32.mrb[0].mxu0
      %1002 = vmatprep.mubr.f32.mxu0 0.0
      %1003 = vmatmul.mubr.f32.gmra.mrb[0].mxu0 %v626
      %v1004 = vpop.f32.mrb[0].mxu0
      %v1005 = vadd.f32 0.0, %v1004
      %v1006 = vpop.f32.mrb[0].mxu0
      %1007 = vmatprep.mubr.f32.mxu0 0.0
      %1008 = vmatmul.mubr.f32.gmra.mrb[0].mxu0 %v627
      %v1009 = vpop.f32.mrb[0].mxu0
      %v1010 = vadd.f32 0.0, %v1009
      %v1011 = vpop.f32.mrb[0].mxu0
      %1012 = vmatprep.mubr.f32.mxu0 0.0
      %1013 = vmatmul.mubr.f32.gmra.mrb[0].mxu0 %v628
      %v1014 = vpop.f32.mrb[0].mxu0
      %v1015 = vadd.f32 0.0, %v1014
      %v1016 = vpop.f32.mrb[0].mxu0
      %1017 = vmatprep.mubr.f32.mxu0 0.0
      %1018 = vmatmul.mubr.f32.gmra.mrb[0].mxu0 %v629
      %v1019 = vpop.f32.mrb[0].mxu0
      %v1020 = vadd.f32 0.0, %v1019
      %v1021 = vpop.f32.mrb[0].mxu0
      %1022 = vmatprep.mubr.f32.mxu0 0.0
      %1023 = vmatmul.mubr.f32.gmra.mrb[0].mxu0 %v630
      %v1024 = vpop.f32.mrb[0].mxu0
      %v1025 = vadd.f32 0.0, %v1024
      %v1026 = vpop.f32.mrb[0].mxu0
      %1027 = vmatprep.mubr.f32.mxu0 0.0
      %1028 = vmatmul.mubr.f32.gmra.mrb[0].mxu0 %v631
      %v1029 = vpop.f32.mrb[0].mxu0
      %v1030 = vadd.f32 0.0, %v1029
      %v1031 = vpop.f32.mrb[0].mxu0
      %1032 = vdwg.mxu0
      %1033 = vmatprep.subr.mxu0 0.0
      %1034 = vmatpush1.msra.mxu0 %v552
      %1035 = vmatprep.subr.mxu0 0.0
      %1036 = vmatpush1.msra.mxu0 %v553
      %1037 = vmatprep.subr.mxu0 0.0
      %1038 = vmatpush1.msra.mxu0 %v554
      %1039 = vmatprep.subr.mxu0 0.0
      %1040 = vmatpush1.msra.mxu0 %v555
      %1041 = vmatprep.subr.mxu0 0.0
      %1042 = vmatpush1.msra.mxu0 %v556
      %1043 = vmatprep.subr.mxu0 0.0
      %1044 = vmatpush1.msra.mxu0 %v557
      %1045 = vmatprep.subr.mxu0 0.0
      %1046 = vmatpush1.msra.mxu0 %v558
      %1047 = vmatprep.subr.mxu0 0.0
      %1048 = vmatpush1.msra.mxu0 %v559
      %1049 = vmatprep.subr.mxu0 0.0
      %1050 = vmatpush1.msra.mxu0 %v560
      %1051 = vmatprep.subr.mxu0 0.0
      %1052 = vmatpush1.msra.mxu0 %v561
      %1053 = vmatprep.subr.mxu0 0.0
      %1054 = vmatpush1.msra.mxu0 %v562
      %1055 = vmatprep.subr.mxu0 0.0
      %1056 = vmatpush1.msra.mxu0 %v563
      %1057 = vmatprep.subr.mxu0 0.0
      %1058 = vmatpush1.msra.mxu0 %v564
      %1059 = vmatprep.subr.mxu0 0.0
      %1060 = vmatpush1.msra.mxu0 %v565
      %1061 = vmatprep.subr.mxu0 0.0
      %1062 = vmatpush1.msra.mxu0 %v566
      %1063 = vmatprep.subr.mxu0 0.0
      %1064 = vmatpush1.msra.mxu0 %v567
      %1065 = vmatprep.subr.mxu0 0.0
      %1066 = vmatpush1.msra.mxu0 0.0
      %1067 = vmatprep.subr.mxu0 0.0
      %1068 = vmatpush1.msra.mxu0 0.0
      %1069 = vmatprep.subr.mxu0 0.0
      %1070 = vmatpush1.msra.mxu0 0.0
      %1071 = vmatprep.subr.mxu0 0.0
      %1072 = vmatpush1.msra.mxu0 0.0
      %1073 = vmatprep.subr.mxu0 0.0
      %1074 = vmatpush1.msra.mxu0 0.0
      %1075 = vmatprep.subr.mxu0 0.0
      %1076 = vmatpush1.msra.mxu0 0.0
      %1077 = vmatprep.subr.mxu0 0.0
      %1078 = vmatpush1.msra.mxu0 0.0
      %1079 = vmatprep.subr.mxu0 0.0
      %1080 = vmatpush1.msra.mxu0 0.0
      %1081 = vmatprep.subr.mxu0 0.0
      %1082 = vmatpush1.msra.mxu0 0.0
      %1083 = vmatprep.subr.mxu0 0.0
      %1084 = vmatpush1.msra.mxu0 0.0
      %1085 = vmatprep.subr.mxu0 0.0
      %1086 = vmatpush1.msra.mxu0 0.0
      %1087 = vmatprep.subr.mxu0 0.0
      %1088 = vmatpush1.msra.mxu0 0.0
      %1089 = vmatprep.subr.mxu0 0.0
      %1090 = vmatpush1.msra.mxu0 0.0
      %1091 = vmatprep.subr.mxu0 0.0
      %1092 = vmatpush1.msra.mxu0 0.0
      %1093 = vmatprep.subr.mxu0 0.0
      %1094 = vmatpush1.msra.mxu0 0.0
      %1095 = vmatprep.subr.mxu0 0.0
      %1096 = vmatpush1.msra.mxu0 0.0
      %1097 = vmatprep.mubr.f32.mxu0 0.0
      %1098 = vmatmul.mubr.f32.gmra.mrb[0].mxu0 %v488
      %v1099 = vpop.f32.mrb[0].mxu0
      %v1100 = vadd.f32 %v715, %v1099
      %v1101 = vpop.f32.mrb[0].mxu0
      %1102 = vmatprep.mubr.f32.mxu0 0.0
      %1103 = vmatmul.mubr.f32.gmra.mrb[0].mxu0 %v489
      %v1104 = vpop.f32.mrb[0].mxu0
      %v1105 = vadd.f32 %v720, %v1104
      %v1106 = vpop.f32.mrb[0].mxu0
      %1107 = vmatprep.mubr.f32.mxu0 0.0
      %1108 = vmatmul.mubr.f32.gmra.mrb[0].mxu0 %v490
      %v1109 = vpop.f32.mrb[0].mxu0
      %v1110 = vadd.f32 %v725, %v1109
      %v1111 = vpop.f32.mrb[0].mxu0
      %1112 = vmatprep.mubr.f32.mxu0 0.0
      %1113 = vmatmul.mubr.f32.gmra.mrb[0].mxu0 %v491
      %v1114 = vpop.f32.mrb[0].mxu0
      %v1115 = vadd.f32 %v730, %v1114
      %v1116 = vpop.f32.mrb[0].mxu0
      %1117 = vmatprep.mubr.f32.mxu0 0.0
      %1118 = vmatmul.mubr.f32.gmra.mrb[0].mxu0 %v492
      %v1119 = vpop.f32.mrb[0].mxu0
      %v1120 = vadd.f32 %v735, %v1119
      %v1121 = vpop.f32.mrb[0].mxu0
      %1122 = vmatprep.mubr.f32.mxu0 0.0
      %1123 = vmatmul.mubr.f32.gmra.mrb[0].mxu0 %v493
      %v1124 = vpop.f32.mrb[0].mxu0
      %v1125 = vadd.f32 %v740, %v1124
      %v1126 = vpop.f32.mrb[0].mxu0
      %1127 = vmatprep.mubr.f32.mxu0 0.0
      %1128 = vmatmul.mubr.f32.gmra.mrb[0].mxu0 %v494
      %v1129 = vpop.f32.mrb[0].mxu0
      %v1130 = vadd.f32 %v745, %v1129
      %v1131 = vpop.f32.mrb[0].mxu0
      %1132 = vmatprep.mubr.f32.mxu0 0.0
      %1133 = vmatmul.mubr.f32.gmra.mrb[0].mxu0 %v495
      %v1134 = vpop.f32.mrb[0].mxu0
      %v1135 = vadd.f32 %v750, %v1134
      %v1136 = vpop.f32.mrb[0].mxu0
      %1137 = vmatprep.mubr.f32.mxu0 0.0
      %1138 = vmatmul.mubr.f32.gmra.mrb[0].mxu0 %v496
      %v1139 = vpop.f32.mrb[0].mxu0
      %v1140 = vadd.f32 %v755, %v1139
      %v1141 = vpop.f32.mrb[0].mxu0
      %1142 = vmatprep.mubr.f32.mxu0 0.0
      %1143 = vmatmul.mubr.f32.gmra.mrb[0].mxu0 %v497
      %v1144 = vpop.f32.mrb[0].mxu0
      %v1145 = vadd.f32 %v760, %v1144
      %v1146 = vpop.f32.mrb[0].mxu0
      %1147 = vmatprep.mubr.f32.mxu0 0.0
      %1148 = vmatmul.mubr.f32.gmra.mrb[0].mxu0 %v498
      %v1149 = vpop.f32.mrb[0].mxu0
      %v1150 = vadd.f32 %v765, %v1149
      %v1151 = vpop.f32.mrb[0].mxu0
      %1152 = vmatprep.mubr.f32.mxu0 0.0
      %1153 = vmatmul.mubr.f32.gmra.mrb[0].mxu0 %v499
      %v1154 = vpop.f32.mrb[0].mxu0
      %v1155 = vadd.f32 %v770, %v1154
      %v1156 = vpop.f32.mrb[0].mxu0
      %1157 = vmatprep.mubr.f32.mxu0 0.0
      %1158 = vmatmul.mubr.f32.gmra.mrb[0].mxu0 %v500
      %v1159 = vpop.f32.mrb[0].mxu0
      %v1160 = vadd.f32 %v775, %v1159
      %v1161 = vpop.f32.mrb[0].mxu0
      %1162 = vmatprep.mubr.f32.mxu0 0.0
      %1163 = vmatmul.mubr.f32.gmra.mrb[0].mxu0 %v501
      %v1164 = vpop.f32.mrb[0].mxu0
      %v1165 = vadd.f32 %v780, %v1164
      %v1166 = vpop.f32.mrb[0].mxu0
      %1167 = vmatprep.mubr.f32.mxu0 0.0
      %1168 = vmatmul.mubr.f32.gmra.mrb[0].mxu0 %v502
      %v1169 = vpop.f32.mrb[0].mxu0
      %v1170 = vadd.f32 %v785, %v1169
      %v1171 = vpop.f32.mrb[0].mxu0
      %1172 = vmatprep.mubr.f32.mxu0 0.0
      %1173 = vmatmul.mubr.f32.gmra.mrb[0].mxu0 %v503
      %v1174 = vpop.f32.mrb[0].mxu0
      %v1175 = vadd.f32 %v790, %v1174
      %v1176 = vpop.f32.mrb[0].mxu0
      %1177 = vmatprep.mubr.f32.mxu0 0.0
      %1178 = vmatmul.mubr.f32.gmra.mrb[0].mxu0 %v504
      %v1179 = vpop.f32.mrb[0].mxu0
      %v1180 = vadd.f32 %v795, %v1179
      %v1181 = vpop.f32.mrb[0].mxu0
      %1182 = vmatprep.mubr.f32.mxu0 0.0
      %1183 = vmatmul.mubr.f32.gmra.mrb[0].mxu0 %v505
      %v1184 = vpop.f32.mrb[0].mxu0
      %v1185 = vadd.f32 %v800, %v1184
      %v1186 = vpop.f32.mrb[0].mxu0
      %1187 = vmatprep.mubr.f32.mxu0 0.0
      %1188 = vmatmul.mubr.f32.gmra.mrb[0].mxu0 %v506
      %v1189 = vpop.f32.mrb[0].mxu0
      %v1190 = vadd.f32 %v805, %v1189
      %v1191 = vpop.f32.mrb[0].mxu0
      %1192 = vmatprep.mubr.f32.mxu0 0.0
      %1193 = vmatmul.mubr.f32.gmra.mrb[0].mxu0 %v507
      %v1194 = vpop.f32.mrb[0].mxu0
      %v1195 = vadd.f32 %v810, %v1194
      %v1196 = vpop.f32.mrb[0].mxu0
      %1197 = vmatprep.mubr.f32.mxu0 0.0
      %1198 = vmatmul.mubr.f32.gmra.mrb[0].mxu0 %v508
      %v1199 = vpop.f32.mrb[0].mxu0
      %v1200 = vadd.f32 %v815, %v1199
      %v1201 = vpop.f32.mrb[0].mxu0
      %1202 = vmatprep.mubr.f32.mxu0 0.0
      %1203 = vmatmul.mubr.f32.gmra.mrb[0].mxu0 %v509
      %v1204 = vpop.f32.mrb[0].mxu0
      %v1205 = vadd.f32 %v820, %v1204
      %v1206 = vpop.f32.mrb[0].mxu0
      %1207 = vmatprep.mubr.f32.mxu0 0.0
      %1208 = vmatmul.mubr.f32.gmra.mrb[0].mxu0 %v510
      %v1209 = vpop.f32.mrb[0].mxu0
      %v1210 = vadd.f32 %v825, %v1209
      %v1211 = vpop.f32.mrb[0].mxu0
      %1212 = vmatprep.mubr.f32.mxu0 0.0
      %1213 = vmatmul.mubr.f32.gmra.mrb[0].mxu0 %v511
      %v1214 = vpop.f32.mrb[0].mxu0
      %v1215 = vadd.f32 %v830, %v1214
      %v1216 = vpop.f32.mrb[0].mxu0
      %1217 = vmatprep.mubr.f32.mxu0 0.0
      %1218 = vmatmul.mubr.f32.gmra.mrb[0].mxu0 %v512
      %v1219 = vpop.f32.mrb[0].mxu0
      %v1220 = vadd.f32 %v835, %v1219
      %v1221 = vpop.f32.mrb[0].mxu0
      %1222 = vmatprep.mubr.f32.mxu0 0.0
      %1223 = vmatmul.mubr.f32.gmra.mrb[0].mxu0 %v513
      %v1224 = vpop.f32.mrb[0].mxu0
      %v1225 = vadd.f32 %v840, %v1224
      %v1226 = vpop.f32.mrb[0].mxu0
      %1227 = vmatprep.mubr.f32.mxu0 0.0
      %1228 = vmatmul.mubr.f32.gmra.mrb[0].mxu0 %v514
      %v1229 = vpop.f32.mrb[0].mxu0
      %v1230 = vadd.f32 %v845, %v1229
      %v1231 = vpop.f32.mrb[0].mxu0
      %1232 = vmatprep.mubr.f32.mxu0 0.0
      %1233 = vmatmul.mubr.f32.gmra.mrb[0].mxu0 %v515
      %v1234 = vpop.f32.mrb[0].mxu0
      %v1235 = vadd.f32 %v850, %v1234
      %v1236 = vpop.f32.mrb[0].mxu0
      %1237 = vmatprep.mubr.f32.mxu0 0.0
      %1238 = vmatmul.mubr.f32.gmra.mrb[0].mxu0 %v516
      %v1239 = vpop.f32.mrb[0].mxu0
      %v1240 = vadd.f32 %v855, %v1239
      %v1241 = vpop.f32.mrb[0].mxu0
      %1242 = vmatprep.mubr.f32.mxu0 0.0
      %1243 = vmatmul.mubr.f32.gmra.mrb[0].mxu0 %v517
      %v1244 = vpop.f32.mrb[0].mxu0
      %v1245 = vadd.f32 %v860, %v1244
      %v1246 = vpop.f32.mrb[0].mxu0
      %1247 = vmatprep.mubr.f32.mxu0 0.0
      %1248 = vmatmul.mubr.f32.gmra.mrb[0].mxu0 %v518
      %v1249 = vpop.f32.mrb[0].mxu0
      %v1250 = vadd.f32 %v865, %v1249
      %v1251 = vpop.f32.mrb[0].mxu0
      %1252 = vmatprep.mubr.f32.mxu0 0.0
      %1253 = vmatmul.mubr.f32.gmra.mrb[0].mxu0 %v519
      %v1254 = vpop.f32.mrb[0].mxu0
      %v1255 = vadd.f32 %v870, %v1254
      %v1256 = vpop.f32.mrb[0].mxu0
      %1257 = vmatprep.mubr.f32.mxu0 0.0
      %1258 = vmatmul.mubr.f32.gmra.mrb[0].mxu0 %v520
      %v1259 = vpop.f32.mrb[0].mxu0
      %v1260 = vadd.f32 %v875, %v1259
      %v1261 = vpop.f32.mrb[0].mxu0
      %1262 = vmatprep.mubr.f32.mxu0 0.0
      %1263 = vmatmul.mubr.f32.gmra.mrb[0].mxu0 %v521
      %v1264 = vpop.f32.mrb[0].mxu0
      %v1265 = vadd.f32 %v880, %v1264
      %v1266 = vpop.f32.mrb[0].mxu0
      %1267 = vmatprep.mubr.f32.mxu0 0.0
      %1268 = vmatmul.mubr.f32.gmra.mrb[0].mxu0 %v522
      %v1269 = vpop.f32.mrb[0].mxu0
      %v1270 = vadd.f32 %v885, %v1269
      %v1271 = vpop.f32.mrb[0].mxu0
      %1272 = vmatprep.mubr.f32.mxu0 0.0
      %1273 = vmatmul.mubr.f32.gmra.mrb[0].mxu0 %v523
      %v1274 = vpop.f32.mrb[0].mxu0
      %v1275 = vadd.f32 %v890, %v1274
      %v1276 = vpop.f32.mrb[0].mxu0
      %1277 = vmatprep.mubr.f32.mxu0 0.0
      %1278 = vmatmul.mubr.f32.gmra.mrb[0].mxu0 %v524
      %v1279 = vpop.f32.mrb[0].mxu0
      %v1280 = vadd.f32 %v895, %v1279
      %v1281 = vpop.f32.mrb[0].mxu0
      %1282 = vmatprep.mubr.f32.mxu0 0.0
      %1283 = vmatmul.mubr.f32.gmra.mrb[0].mxu0 %v525
      %v1284 = vpop.f32.mrb[0].mxu0
      %v1285 = vadd.f32 %v900, %v1284
      %v1286 = vpop.f32.mrb[0].mxu0
      %1287 = vmatprep.mubr.f32.mxu0 0.0
      %1288 = vmatmul.mubr.f32.gmra.mrb[0].mxu0 %v526
      %v1289 = vpop.f32.mrb[0].mxu0
      %v1290 = vadd.f32 %v905, %v1289
      %v1291 = vpop.f32.mrb[0].mxu0
      %1292 = vmatprep.mubr.f32.mxu0 0.0
      %1293 = vmatmul.mubr.f32.gmra.mrb[0].mxu0 %v527
      %v1294 = vpop.f32.mrb[0].mxu0
      %v1295 = vadd.f32 %v910, %v1294
      %v1296 = vpop.f32.mrb[0].mxu0
      %1297 = vmatprep.mubr.f32.mxu0 0.0
      %1298 = vmatmul.mubr.f32.gmra.mrb[0].mxu0 %v528
      %v1299 = vpop.f32.mrb[0].mxu0
      %v1300 = vadd.f32 %v915, %v1299
      %v1301 = vpop.f32.mrb[0].mxu0
      %1302 = vmatprep.mubr.f32.mxu0 0.0
      %1303 = vmatmul.mubr.f32.gmra.mrb[0].mxu0 %v529
      %v1304 = vpop.f32.mrb[0].mxu0
      %v1305 = vadd.f32 %v920, %v1304
      %v1306 = vpop.f32.mrb[0].mxu0
      %1307 = vmatprep.mubr.f32.mxu0 0.0
      %1308 = vmatmul.mubr.f32.gmra.mrb[0].mxu0 %v530
      %v1309 = vpop.f32.mrb[0].mxu0
      %v1310 = vadd.f32 %v925, %v1309
      %v1311 = vpop.f32.mrb[0].mxu0
      %1312 = vmatprep.mubr.f32.mxu0 0.0
      %1313 = vmatmul.mubr.f32.gmra.mrb[0].mxu0 %v531
      %v1314 = vpop.f32.mrb[0].mxu0
      %v1315 = vadd.f32 %v930, %v1314
      %v1316 = vpop.f32.mrb[0].mxu0
      %1317 = vmatprep.mubr.f32.mxu0 0.0
      %1318 = vmatmul.mubr.f32.gmra.mrb[0].mxu0 %v532
      %v1319 = vpop.f32.mrb[0].mxu0
      %v1320 = vadd.f32 %v935, %v1319
      %v1321 = vpop.f32.mrb[0].mxu0
      %1322 = vmatprep.mubr.f32.mxu0 0.0
      %1323 = vmatmul.mubr.f32.gmra.mrb[0].mxu0 %v533
      %v1324 = vpop.f32.mrb[0].mxu0
      %v1325 = vadd.f32 %v940, %v1324
      %v1326 = vpop.f32.mrb[0].mxu0
      %1327 = vmatprep.mubr.f32.mxu0 0.0
      %1328 = vmatmul.mubr.f32.gmra.mrb[0].mxu0 %v534
      %v1329 = vpop.f32.mrb[0].mxu0
      %v1330 = vadd.f32 %v945, %v1329
      %v1331 = vpop.f32.mrb[0].mxu0
      %1332 = vmatprep.mubr.f32.mxu0 0.0
      %1333 = vmatmul.mubr.f32.gmra.mrb[0].mxu0 %v535
      %v1334 = vpop.f32.mrb[0].mxu0
      %v1335 = vadd.f32 %v950, %v1334
      %v1336 = vpop.f32.mrb[0].mxu0
      %1337 = vmatprep.mubr.f32.mxu0 0.0
      %1338 = vmatmul.mubr.f32.gmra.mrb[0].mxu0 %v536
      %v1339 = vpop.f32.mrb[0].mxu0
      %v1340 = vadd.f32 %v955, %v1339
      %v1341 = vpop.f32.mrb[0].mxu0
      %1342 = vmatprep.mubr.f32.mxu0 0.0
      %1343 = vmatmul.mubr.f32.gmra.mrb[0].mxu0 %v537
      %v1344 = vpop.f32.mrb[0].mxu0
      %v1345 = vadd.f32 %v960, %v1344
      %v1346 = vpop.f32.mrb[0].mxu0
      %1347 = vmatprep.mubr.f32.mxu0 0.0
      %1348 = vmatmul.mubr.f32.gmra.mrb[0].mxu0 %v538
      %v1349 = vpop.f32.mrb[0].mxu0
      %v1350 = vadd.f32 %v965, %v1349
      %v1351 = vpop.f32.mrb[0].mxu0
      %1352 = vmatprep.mubr.f32.mxu0 0.0
      %1353 = vmatmul.mubr.f32.gmra.mrb[0].mxu0 %v539
      %v1354 = vpop.f32.mrb[0].mxu0
      %v1355 = vadd.f32 %v970, %v1354
      %v1356 = vpop.f32.mrb[0].mxu0
      %1357 = vmatprep.mubr.f32.mxu0 0.0
      %1358 = vmatmul.mubr.f32.gmra.mrb[0].mxu0 %v540
      %v1359 = vpop.f32.mrb[0].mxu0
      %v1360 = vadd.f32 %v975, %v1359
      %v1361 = vpop.f32.mrb[0].mxu0
      %1362 = vmatprep.mubr.f32.mxu0 0.0
      %1363 = vmatmul.mubr.f32.gmra.mrb[0].mxu0 %v541
      %v1364 = vpop.f32.mrb[0].mxu0
      %v1365 = vadd.f32 %v980, %v1364
      %v1366 = vpop.f32.mrb[0].mxu0
      %1367 = vmatprep.mubr.f32.mxu0 0.0
      %1368 = vmatmul.mubr.f32.gmra.mrb[0].mxu0 %v542
      %v1369 = vpop.f32.mrb[0].mxu0
      %v1370 = vadd.f32 %v985, %v1369
      %v1371 = vpop.f32.mrb[0].mxu0
      %1372 = vmatprep.mubr.f32.mxu0 0.0
      %1373 = vmatmul.mubr.f32.gmra.mrb[0].mxu0 %v543
      %v1374 = vpop.f32.mrb[0].mxu0
      %v1375 = vadd.f32 %v990, %v1374
      %v1376 = vpop.f32.mrb[0].mxu0
      %1377 = vmatprep.mubr.f32.mxu0 0.0
      %1378 = vmatmul.mubr.f32.gmra.mrb[0].mxu0 %v544
      %v1379 = vpop.f32.mrb[0].mxu0
      %v1380 = vadd.f32 %v995, %v1379
      %v1381 = vpop.f32.mrb[0].mxu0
      %1382 = vmatprep.mubr.f32.mxu0 0.0
      %1383 = vmatmul.mubr.f32.gmra.mrb[0].mxu0 %v545
      %v1384 = vpop.f32.mrb[0].mxu0
      %v1385 = vadd.f32 %v1000, %v1384
      %v1386 = vpop.f32.mrb[0].mxu0
      %1387 = vmatprep.mubr.f32.mxu0 0.0
      %1388 = vmatmul.mubr.f32.gmra.mrb[0].mxu0 %v546
      %v1389 = vpop.f32.mrb[0].mxu0
      %v1390 = vadd.f32 %v1005, %v1389
      %v1391 = vpop.f32.mrb[0].mxu0
      %1392 = vmatprep.mubr.f32.mxu0 0.0
      %1393 = vmatmul.mubr.f32.gmra.mrb[0].mxu0 %v547
      %v1394 = vpop.f32.mrb[0].mxu0
      %v1395 = vadd.f32 %v1010, %v1394
      %v1396 = vpop.f32.mrb[0].mxu0
      %1397 = vmatprep.mubr.f32.mxu0 0.0
      %1398 = vmatmul.mubr.f32.gmra.mrb[0].mxu0 %v548
      %v1399 = vpop.f32.mrb[0].mxu0
      %v1400 = vadd.f32 %v1015, %v1399
      %v1401 = vpop.f32.mrb[0].mxu0
      %1402 = vmatprep.mubr.f32.mxu0 0.0
      %1403 = vmatmul.mubr.f32.gmra.mrb[0].mxu0 %v549
      %v1404 = vpop.f32.mrb[0].mxu0
      %v1405 = vadd.f32 %v1020, %v1404
      %v1406 = vpop.f32.mrb[0].mxu0
      %1407 = vmatprep.mubr.f32.mxu0 0.0
      %1408 = vmatmul.mubr.f32.gmra.mrb[0].mxu0 %v550
      %v1409 = vpop.f32.mrb[0].mxu0
      %v1410 = vadd.f32 %v1025, %v1409
      %v1411 = vpop.f32.mrb[0].mxu0
      %1412 = vmatprep.mubr.f32.mxu0 0.0
      %1413 = vmatmul.mubr.f32.gmra.mrb[0].mxu0 %v551
      %v1414 = vpop.f32.mrb[0].mxu0
      %v1415 = vadd.f32 %v1030, %v1414
      %v1416 = vpop.f32.mrb[0].mxu0
      %1417 = vdwg.mxu0
      %v1418 = vld [vmem:[%s480] sm:$0xff]
      %v1419 = vld [vmem:[%s480 + $0x8] sm:$0xff]
      %v1420 = vld [vmem:[%s480 + $0x10] sm:$0xff]
      %v1421 = vld [vmem:[%s480 + $0x18] sm:$0xff]
      %v1422 = vld [vmem:[%s480 + $0x20] sm:$0xff]
      %v1423 = vld [vmem:[%s480 + $0x28] sm:$0xff]
      %v1424 = vld [vmem:[%s480 + $0x30] sm:$0xff]
      %v1425 = vld [vmem:[%s480 + $0x38] sm:$0xff]
      %v1426 = vld [vmem:[%s480 + $0x40] sm:$0xff]
      %v1427 = vld [vmem:[%s480 + $0x48] sm:$0xff]
      %v1428 = vld [vmem:[%s480 + $0x50] sm:$0xff]
      %v1429 = vld [vmem:[%s480 + $0x58] sm:$0xff]
      %v1430 = vld [vmem:[%s480 + $0x60] sm:$0xff]
      %v1431 = vld [vmem:[%s480 + $0x68] sm:$0xff]
      %v1432 = vld [vmem:[%s480 + $0x70] sm:$0xff]
      %v1433 = vld [vmem:[%s480 + $0x78] sm:$0xff]
      %v1434 = vld [vmem:[%s480 + $0x80] sm:$0xff]
      %v1435 = vld [vmem:[%s480 + $0x88] sm:$0xff]
      %v1436 = vld [vmem:[%s480 + $0x90] sm:$0xff]
      %v1437 = vld [vmem:[%s480 + $0x98] sm:$0xff]
      %v1438 = vld [vmem:[%s480 + $0xa0] sm:$0xff]
      %v1439 = vld [vmem:[%s480 + $0xa8] sm:$0xff]
      %v1440 = vld [vmem:[%s480 + $0xb0] sm:$0xff]
      %v1441 = vld [vmem:[%s480 + $0xb8] sm:$0xff]
      %v1442 = vld [vmem:[%s480 + $0xc0] sm:$0xff]
      %v1443 = vld [vmem:[%s480 + $0xc8] sm:$0xff]
      %v1444 = vld [vmem:[%s480 + $0xd0] sm:$0xff]
      %v1445 = vld [vmem:[%s480 + $0xd8] sm:$0xff]
      %v1446 = vld [vmem:[%s480 + $0xe0] sm:$0xff]
      %v1447 = vld [vmem:[%s480 + $0xe8] sm:$0xff]
      %v1448 = vld [vmem:[%s480 + $0xf0] sm:$0xff]
      %v1449 = vld [vmem:[%s480 + $0xf8] sm:$0xff]
      %v1450 = vld [vmem:[%s480 + $0x100] sm:$0xff]
      %v1451 = vld [vmem:[%s480 + $0x108] sm:$0xff]
      %v1452 = vld [vmem:[%s480 + $0x110] sm:$0xff]
      %v1453 = vld [vmem:[%s480 + $0x118] sm:$0xff]
      %v1454 = vld [vmem:[%s480 + $0x120] sm:$0xff]
      %v1455 = vld [vmem:[%s480 + $0x128] sm:$0xff]
      %v1456 = vld [vmem:[%s480 + $0x130] sm:$0xff]
      %v1457 = vld [vmem:[%s480 + $0x138] sm:$0xff]
      %v1458 = vld [vmem:[%s480 + $0x140] sm:$0xff]
      %v1459 = vld [vmem:[%s480 + $0x148] sm:$0xff]
      %v1460 = vld [vmem:[%s480 + $0x150] sm:$0xff]
      %v1461 = vld [vmem:[%s480 + $0x158] sm:$0xff]
      %v1462 = vld [vmem:[%s480 + $0x160] sm:$0xff]
      %v1463 = vld [vmem:[%s480 + $0x168] sm:$0xff]
      %v1464 = vld [vmem:[%s480 + $0x170] sm:$0xff]
      %v1465 = vld [vmem:[%s480 + $0x178] sm:$0xff]
      %v1466 = vld [vmem:[%s480 + $0x180] sm:$0xff]
      %v1467 = vld [vmem:[%s480 + $0x188] sm:$0xff]
      %v1468 = vld [vmem:[%s480 + $0x190] sm:$0xff]
      %v1469 = vld [vmem:[%s480 + $0x198] sm:$0xff]
      %v1470 = vld [vmem:[%s480 + $0x1a0] sm:$0xff]
      %v1471 = vld [vmem:[%s480 + $0x1a8] sm:$0xff]
      %v1472 = vld [vmem:[%s480 + $0x1b0] sm:$0xff]
      %v1473 = vld [vmem:[%s480 + $0x1b8] sm:$0xff]
      %v1474 = vld [vmem:[%s480 + $0x1c0] sm:$0xff]
      %v1475 = vld [vmem:[%s480 + $0x1c8] sm:$0xff]
      %v1476 = vld [vmem:[%s480 + $0x1d0] sm:$0xff]
      %v1477 = vld [vmem:[%s480 + $0x1d8] sm:$0xff]
      %v1478 = vld [vmem:[%s480 + $0x1e0] sm:$0xff]
      %v1479 = vld [vmem:[%s480 + $0x1e8] sm:$0xff]
      %v1480 = vld [vmem:[%s480 + $0x1f0] sm:$0xff]
      %v1481 = vld [vmem:[%s480 + $0x1f8] sm:$0xff]
      %v1482 = vld [vmem:[%s5] sm:$0xff]
      %v1483 = vld [vmem:[%s5 + $0x8] sm:$0xff]
      %v1484 = vld [vmem:[%s5 + $0x10] sm:$0xff]
      %v1485 = vld [vmem:[%s5 + $0x18] sm:$0xff]
      %v1486 = vld [vmem:[%s5 + $0x20] sm:$0xff]
      %v1487 = vld [vmem:[%s5 + $0x28] sm:$0xff]
      %v1488 = vld [vmem:[%s5 + $0x30] sm:$0xff]
      %v1489 = vld [vmem:[%s5 + $0x38] sm:$0xff]
      %v1490 = vld [vmem:[%s5 + $0x40] sm:$0xff]
      %v1491 = vld [vmem:[%s5 + $0x48] sm:$0xff]
      %v1492 = vld [vmem:[%s5 + $0x50] sm:$0xff]
      %v1493 = vld [vmem:[%s5 + $0x58] sm:$0xff]
      %v1494 = vld [vmem:[%s5 + $0x60] sm:$0xff]
      %v1495 = vld [vmem:[%s5 + $0x68] sm:$0xff]
      %v1496 = vld [vmem:[%s5 + $0x70] sm:$0xff]
      %v1497 = vld [vmem:[%s5 + $0x78] sm:$0xff]
      %1498 = vmatprep.subr.mxu0 0.0
      %1499 = vmatpush1.msra.mxu0 %v1482
      %1500 = vmatprep.subr.mxu0 0.0
      %1501 = vmatpush1.msra.mxu0 %v1483
      %1502 = vmatprep.subr.mxu0 0.0
      %1503 = vmatpush1.msra.mxu0 %v1484
      %1504 = vmatprep.subr.mxu0 0.0
      %1505 = vmatpush1.msra.mxu0 %v1485
      %1506 = vmatprep.subr.mxu0 0.0
      %1507 = vmatpush1.msra.mxu0 %v1486
      %1508 = vmatprep.subr.mxu0 0.0
      %1509 = vmatpush1.msra.mxu0 %v1487
      %1510 = vmatprep.subr.mxu0 0.0
      %1511 = vmatpush1.msra.mxu0 %v1488
      %1512 = vmatprep.subr.mxu0 0.0
      %1513 = vmatpush1.msra.mxu0 %v1489
      %1514 = vmatprep.subr.mxu0 0.0
      %1515 = vmatpush1.msra.mxu0 %v1490
      %1516 = vmatprep.subr.mxu0 0.0
      %1517 = vmatpush1.msra.mxu0 %v1491
      %1518 = vmatprep.subr.mxu0 0.0
      %1519 = vmatpush1.msra.mxu0 %v1492
      %1520 = vmatprep.subr.mxu0 0.0
      %1521 = vmatpush1.msra.mxu0 %v1493
      %1522 = vmatprep.subr.mxu0 0.0
      %1523 = vmatpush1.msra.mxu0 %v1494
      %1524 = vmatprep.subr.mxu0 0.0
      %1525 = vmatpush1.msra.mxu0 %v1495
      %1526 = vmatprep.subr.mxu0 0.0
      %1527 = vmatpush1.msra.mxu0 %v1496
      %1528 = vmatprep.subr.mxu0 0.0
      %1529 = vmatpush1.msra.mxu0 %v1497
      %1530 = vmatprep.subr.mxu0 0.0
      %1531 = vmatpush1.msra.mxu0 0.0
      %1532 = vmatprep.subr.mxu0 0.0
      %1533 = vmatpush1.msra.mxu0 0.0
      %1534 = vmatprep.subr.mxu0 0.0
      %1535 = vmatpush1.msra.mxu0 0.0
      %1536 = vmatprep.subr.mxu0 0.0
      %1537 = vmatpush1.msra.mxu0 0.0
      %1538 = vmatprep.subr.mxu0 0.0
      %1539 = vmatpush1.msra.mxu0 0.0
      %1540 = vmatprep.subr.mxu0 0.0
      %1541 = vmatpush1.msra.mxu0 0.0
      %1542 = vmatprep.subr.mxu0 0.0
      %1543 = vmatpush1.msra.mxu0 0.0
      %1544 = vmatprep.subr.mxu0 0.0
      %1545 = vmatpush1.msra.mxu0 0.0
      %1546 = vmatprep.subr.mxu0 0.0
      %1547 = vmatpush1.msra.mxu0 0.0
      %1548 = vmatprep.subr.mxu0 0.0
      %1549 = vmatpush1.msra.mxu0 0.0
      %1550 = vmatprep.subr.mxu0 0.0
      %1551 = vmatpush1.msra.mxu0 0.0
      %1552 = vmatprep.subr.mxu0 0.0
      %1553 = vmatpush1.msra.mxu0 0.0
      %1554 = vmatprep.subr.mxu0 0.0
      %1555 = vmatpush1.msra.mxu0 0.0
      %1556 = vmatprep.subr.mxu0 0.0
      %1557 = vmatpush1.msra.mxu0 0.0
      %1558 = vmatprep.subr.mxu0 0.0
      %1559 = vmatpush1.msra.mxu0 0.0
      %1560 = vmatprep.subr.mxu0 0.0
      %1561 = vmatpush1.msra.mxu0 0.0
      %1562 = vmatprep.mubr.f32.mxu0 0.0
      %1563 = vmatmul.mubr.f32.gmra.mrb[0].mxu0 %v1418
      %v1564 = vpop.f32.mrb[0].mxu0
      %v1565 = vadd.f32 0.0, %v1564
      %v1566 = vpop.f32.mrb[0].mxu0
      %1567 = vmatprep.mubr.f32.mxu0 0.0
      %1568 = vmatmul.mubr.f32.gmra.mrb[0].mxu0 %v1419
      %v1569 = vpop.f32.mrb[0].mxu0
      %v1570 = vadd.f32 0.0, %v1569
      %v1571 = vpop.f32.mrb[0].mxu0
      %1572 = vmatprep.mubr.f32.mxu0 0.0
      %1573 = vmatmul.mubr.f32.gmra.mrb[0].mxu0 %v1420
      %v1574 = vpop.f32.mrb[0].mxu0
      %v1575 = vadd.f32 0.0, %v1574
      %v1576 = vpop.f32.mrb[0].mxu0
      %1577 = vmatprep.mubr.f32.mxu0 0.0
      %1578 = vmatmul.mubr.f32.gmra.mrb[0].mxu0 %v1421
      %v1579 = vpop.f32.mrb[0].mxu0
      %v1580 = vadd.f32 0.0, %v1579
      %v1581 = vpop.f32.mrb[0].mxu0
      %1582 = vmatprep.mubr.f32.mxu0 0.0
      %1583 = vmatmul.mubr.f32.gmra.mrb[0].mxu0 %v1422
      %v1584 = vpop.f32.mrb[0].mxu0
      %v1585 = vadd.f32 0.0, %v1584
      %v1586 = vpop.f32.mrb[0].mxu0
      %1587 = vmatprep.mubr.f32.mxu0 0.0
      %1588 = vmatmul.mubr.f32.gmra.mrb[0].mxu0 %v1423
      %v1589 = vpop.f32.mrb[0].mxu0
      %v1590 = vadd.f32 0.0, %v1589
      %v1591 = vpop.f32.mrb[0].mxu0
      %1592 = vmatprep.mubr.f32.mxu0 0.0
      %1593 = vmatmul.mubr.f32.gmra.mrb[0].mxu0 %v1424
      %v1594 = vpop.f32.mrb[0].mxu0
      %v1595 = vadd.f32 0.0, %v1594
      %v1596 = vpop.f32.mrb[0].mxu0
      %1597 = vmatprep.mubr.f32.mxu0 0.0
      %1598 = vmatmul.mubr.f32.gmra.mrb[0].mxu0 %v1425
      %v1599 = vpop.f32.mrb[0].mxu0
      %v1600 = vadd.f32 0.0, %v1599
      %v1601 = vpop.f32.mrb[0].mxu0
      %1602 = vmatprep.mubr.f32.mxu0 0.0
      %1603 = vmatmul.mubr.f32.gmra.mrb[0].mxu0 %v1426
      %v1604 = vpop.f32.mrb[0].mxu0
      %v1605 = vadd.f32 0.0, %v1604
      %v1606 = vpop.f32.mrb[0].mxu0
      %1607 = vmatprep.mubr.f32.mxu0 0.0
      %1608 = vmatmul.mubr.f32.gmra.mrb[0].mxu0 %v1427
      %v1609 = vpop.f32.mrb[0].mxu0
      %v1610 = vadd.f32 0.0, %v1609
      %v1611 = vpop.f32.mrb[0].mxu0
      %1612 = vmatprep.mubr.f32.mxu0 0.0
      %1613 = vmatmul.mubr.f32.gmra.mrb[0].mxu0 %v1428
      %v1614 = vpop.f32.mrb[0].mxu0
      %v1615 = vadd.f32 0.0, %v1614
      %v1616 = vpop.f32.mrb[0].mxu0
      %1617 = vmatprep.mubr.f32.mxu0 0.0
      %1618 = vmatmul.mubr.f32.gmra.mrb[0].mxu0 %v1429
      %v1619 = vpop.f32.mrb[0].mxu0
      %v1620 = vadd.f32 0.0, %v1619
      %v1621 = vpop.f32.mrb[0].mxu0
      %1622 = vmatprep.mubr.f32.mxu0 0.0
      %1623 = vmatmul.mubr.f32.gmra.mrb[0].mxu0 %v1430
      %v1624 = vpop.f32.mrb[0].mxu0
      %v1625 = vadd.f32 0.0, %v1624
      %v1626 = vpop.f32.mrb[0].mxu0
      %1627 = vmatprep.mubr.f32.mxu0 0.0
      %1628 = vmatmul.mubr.f32.gmra.mrb[0].mxu0 %v1431
      %v1629 = vpop.f32.mrb[0].mxu0
      %v1630 = vadd.f32 0.0, %v1629
      %v1631 = vpop.f32.mrb[0].mxu0
      %1632 = vmatprep.mubr.f32.mxu0 0.0
      %1633 = vmatmul.mubr.f32.gmra.mrb[0].mxu0 %v1432
      %v1634 = vpop.f32.mrb[0].mxu0
      %v1635 = vadd.f32 0.0, %v1634
      %v1636 = vpop.f32.mrb[0].mxu0
      %1637 = vmatprep.mubr.f32.mxu0 0.0
      %1638 = vmatmul.mubr.f32.gmra.mrb[0].mxu0 %v1433
      %v1639 = vpop.f32.mrb[0].mxu0
      %v1640 = vadd.f32 0.0, %v1639
      %v1641 = vpop.f32.mrb[0].mxu0
      %1642 = vmatprep.mubr.f32.mxu0 0.0
      %1643 = vmatmul.mubr.f32.gmra.mrb[0].mxu0 %v1434
      %v1644 = vpop.f32.mrb[0].mxu0
      %v1645 = vadd.f32 0.0, %v1644
      %v1646 = vpop.f32.mrb[0].mxu0
      %1647 = vmatprep.mubr.f32.mxu0 0.0
      %1648 = vmatmul.mubr.f32.gmra.mrb[0].mxu0 %v1435
      %v1649 = vpop.f32.mrb[0].mxu0
      %v1650 = vadd.f32 0.0, %v1649
      %v1651 = vpop.f32.mrb[0].mxu0
      %1652 = vmatprep.mubr.f32.mxu0 0.0
      %1653 = vmatmul.mubr.f32.gmra.mrb[0].mxu0 %v1436
      %v1654 = vpop.f32.mrb[0].mxu0
      %v1655 = vadd.f32 0.0, %v1654
      %v1656 = vpop.f32.mrb[0].mxu0
      %1657 = vmatprep.mubr.f32.mxu0 0.0
      %1658 = vmatmul.mubr.f32.gmra.mrb[0].mxu0 %v1437
      %v1659 = vpop.f32.mrb[0].mxu0
      %v1660 = vadd.f32 0.0, %v1659
      %v1661 = vpop.f32.mrb[0].mxu0
      %1662 = vmatprep.mubr.f32.mxu0 0.0
      %1663 = vmatmul.mubr.f32.gmra.mrb[0].mxu0 %v1438
      %v1664 = vpop.f32.mrb[0].mxu0
      %v1665 = vadd.f32 0.0, %v1664
      %v1666 = vpop.f32.mrb[0].mxu0
      %1667 = vmatprep.mubr.f32.mxu0 0.0
      %1668 = vmatmul.mubr.f32.gmra.mrb[0].mxu0 %v1439
      %v1669 = vpop.f32.mrb[0].mxu0
      %v1670 = vadd.f32 0.0, %v1669
      %v1671 = vpop.f32.mrb[0].mxu0
      %1672 = vmatprep.mubr.f32.mxu0 0.0
      %1673 = vmatmul.mubr.f32.gmra.mrb[0].mxu0 %v1440
      %v1674 = vpop.f32.mrb[0].mxu0
      %v1675 = vadd.f32 0.0, %v1674
      %v1676 = vpop.f32.mrb[0].mxu0
      %1677 = vmatprep.mubr.f32.mxu0 0.0
      %1678 = vmatmul.mubr.f32.gmra.mrb[0].mxu0 %v1441
      %v1679 = vpop.f32.mrb[0].mxu0
      %v1680 = vadd.f32 0.0, %v1679
      %v1681 = vpop.f32.mrb[0].mxu0
      %1682 = vmatprep.mubr.f32.mxu0 0.0
      %1683 = vmatmul.mubr.f32.gmra.mrb[0].mxu0 %v1442
      %v1684 = vpop.f32.mrb[0].mxu0
      %v1685 = vadd.f32 0.0, %v1684
      %v1686 = vpop.f32.mrb[0].mxu0
      %1687 = vmatprep.mubr.f32.mxu0 0.0
      %1688 = vmatmul.mubr.f32.gmra.mrb[0].mxu0 %v1443
      %v1689 = vpop.f32.mrb[0].mxu0
      %v1690 = vadd.f32 0.0, %v1689
      %v1691 = vpop.f32.mrb[0].mxu0
      %1692 = vmatprep.mubr.f32.mxu0 0.0
      %1693 = vmatmul.mubr.f32.gmra.mrb[0].mxu0 %v1444
      %v1694 = vpop.f32.mrb[0].mxu0
      %v1695 = vadd.f32 0.0, %v1694
      %v1696 = vpop.f32.mrb[0].mxu0
      %1697 = vmatprep.mubr.f32.mxu0 0.0
      %1698 = vmatmul.mubr.f32.gmra.mrb[0].mxu0 %v1445
      %v1699 = vpop.f32.mrb[0].mxu0
      %v1700 = vadd.f32 0.0, %v1699
      %v1701 = vpop.f32.mrb[0].mxu0
      %1702 = vmatprep.mubr.f32.mxu0 0.0
      %1703 = vmatmul.mubr.f32.gmra.mrb[0].mxu0 %v1446
      %v1704 = vpop.f32.mrb[0].mxu0
      %v1705 = vadd.f32 0.0, %v1704
      %v1706 = vpop.f32.mrb[0].mxu0
      %1707 = vmatprep.mubr.f32.mxu0 0.0
      %1708 = vmatmul.mubr.f32.gmra.mrb[0].mxu0 %v1447
      %v1709 = vpop.f32.mrb[0].mxu0
      %v1710 = vadd.f32 0.0, %v1709
      %v1711 = vpop.f32.mrb[0].mxu0
      %1712 = vmatprep.mubr.f32.mxu0 0.0
      %1713 = vmatmul.mubr.f32.gmra.mrb[0].mxu0 %v1448
      %v1714 = vpop.f32.mrb[0].mxu0
      %v1715 = vadd.f32 0.0, %v1714
      %v1716 = vpop.f32.mrb[0].mxu0
      %1717 = vmatprep.mubr.f32.mxu0 0.0
      %1718 = vmatmul.mubr.f32.gmra.mrb[0].mxu0 %v1449
      %v1719 = vpop.f32.mrb[0].mxu0
      %v1720 = vadd.f32 0.0, %v1719
      %v1721 = vpop.f32.mrb[0].mxu0
      %1722 = vmatprep.mubr.f32.mxu0 0.0
      %1723 = vmatmul.mubr.f32.gmra.mrb[0].mxu0 %v1450
      %v1724 = vpop.f32.mrb[0].mxu0
      %v1725 = vadd.f32 0.0, %v1724
      %v1726 = vpop.f32.mrb[0].mxu0
      %1727 = vmatprep.mubr.f32.mxu0 0.0
      %1728 = vmatmul.mubr.f32.gmra.mrb[0].mxu0 %v1451
      %v1729 = vpop.f32.mrb[0].mxu0
      %v1730 = vadd.f32 0.0, %v1729
      %v1731 = vpop.f32.mrb[0].mxu0
      %1732 = vmatprep.mubr.f32.mxu0 0.0
      %1733 = vmatmul.mubr.f32.gmra.mrb[0].mxu0 %v1452
      %v1734 = vpop.f32.mrb[0].mxu0
      %v1735 = vadd.f32 0.0, %v1734
      %v1736 = vpop.f32.mrb[0].mxu0
      %1737 = vmatprep.mubr.f32.mxu0 0.0
      %1738 = vmatmul.mubr.f32.gmra.mrb[0].mxu0 %v1453
      %v1739 = vpop.f32.mrb[0].mxu0
      %v1740 = vadd.f32 0.0, %v1739
      %v1741 = vpop.f32.mrb[0].mxu0
      %1742 = vmatprep.mubr.f32.mxu0 0.0
      %1743 = vmatmul.mubr.f32.gmra.mrb[0].mxu0 %v1454
      %v1744 = vpop.f32.mrb[0].mxu0
      %v1745 = vadd.f32 0.0, %v1744
      %v1746 = vpop.f32.mrb[0].mxu0
      %1747 = vmatprep.mubr.f32.mxu0 0.0
      %1748 = vmatmul.mubr.f32.gmra.mrb[0].mxu0 %v1455
      %v1749 = vpop.f32.mrb[0].mxu0
      %v1750 = vadd.f32 0.0, %v1749
      %v1751 = vpop.f32.mrb[0].mxu0
      %1752 = vmatprep.mubr.f32.mxu0 0.0
      %1753 = vmatmul.mubr.f32.gmra.mrb[0].mxu0 %v1456
      %v1754 = vpop.f32.mrb[0].mxu0
      %v1755 = vadd.f32 0.0, %v1754
      %v1756 = vpop.f32.mrb[0].mxu0
      %1757 = vmatprep.mubr.f32.mxu0 0.0
      %1758 = vmatmul.mubr.f32.gmra.mrb[0].mxu0 %v1457
      %v1759 = vpop.f32.mrb[0].mxu0
      %v1760 = vadd.f32 0.0, %v1759
      %v1761 = vpop.f32.mrb[0].mxu0
      %1762 = vmatprep.mubr.f32.mxu0 0.0
      %1763 = vmatmul.mubr.f32.gmra.mrb[0].mxu0 %v1458
      %v1764 = vpop.f32.mrb[0].mxu0
      %v1765 = vadd.f32 0.0, %v1764
      %v1766 = vpop.f32.mrb[0].mxu0
      %1767 = vmatprep.mubr.f32.mxu0 0.0
      %1768 = vmatmul.mubr.f32.gmra.mrb[0].mxu0 %v1459
      %v1769 = vpop.f32.mrb[0].mxu0
      %v1770 = vadd.f32 0.0, %v1769
      %v1771 = vpop.f32.mrb[0].mxu0
      %1772 = vmatprep.mubr.f32.mxu0 0.0
      %1773 = vmatmul.mubr.f32.gmra.mrb[0].mxu0 %v1460
      %v1774 = vpop.f32.mrb[0].mxu0
      %v1775 = vadd.f32 0.0, %v1774
      %v1776 = vpop.f32.mrb[0].mxu0
      %1777 = vmatprep.mubr.f32.mxu0 0.0
      %1778 = vmatmul.mubr.f32.gmra.mrb[0].mxu0 %v1461
      %v1779 = vpop.f32.mrb[0].mxu0
      %v1780 = vadd.f32 0.0, %v1779
      %v1781 = vpop.f32.mrb[0].mxu0
      %1782 = vmatprep.mubr.f32.mxu0 0.0
      %1783 = vmatmul.mubr.f32.gmra.mrb[0].mxu0 %v1462
      %v1784 = vpop.f32.mrb[0].mxu0
      %v1785 = vadd.f32 0.0, %v1784
      %v1786 = vpop.f32.mrb[0].mxu0
      %1787 = vmatprep.mubr.f32.mxu0 0.0
      %1788 = vmatmul.mubr.f32.gmra.mrb[0].mxu0 %v1463
      %v1789 = vpop.f32.mrb[0].mxu0
      %v1790 = vadd.f32 0.0, %v1789
      %v1791 = vpop.f32.mrb[0].mxu0
      %1792 = vmatprep.mubr.f32.mxu0 0.0
      %1793 = vmatmul.mubr.f32.gmra.mrb[0].mxu0 %v1464
      %v1794 = vpop.f32.mrb[0].mxu0
      %v1795 = vadd.f32 0.0, %v1794
      %v1796 = vpop.f32.mrb[0].mxu0
      %1797 = vmatprep.mubr.f32.mxu0 0.0
      %1798 = vmatmul.mubr.f32.gmra.mrb[0].mxu0 %v1465
      %v1799 = vpop.f32.mrb[0].mxu0
      %v1800 = vadd.f32 0.0, %v1799
      %v1801 = vpop.f32.mrb[0].mxu0
      %1802 = vmatprep.mubr.f32.mxu0 0.0
      %1803 = vmatmul.mubr.f32.gmra.mrb[0].mxu0 %v1466
      %v1804 = vpop.f32.mrb[0].mxu0
      %v1805 = vadd.f32 0.0, %v1804
      %v1806 = vpop.f32.mrb[0].mxu0
      %1807 = vmatprep.mubr.f32.mxu0 0.0
      %1808 = vmatmul.mubr.f32.gmra.mrb[0].mxu0 %v1467
      %v1809 = vpop.f32.mrb[0].mxu0
      %v1810 = vadd.f32 0.0, %v1809
      %v1811 = vpop.f32.mrb[0].mxu0
      %1812 = vmatprep.mubr.f32.mxu0 0.0
      %1813 = vmatmul.mubr.f32.gmra.mrb[0].mxu0 %v1468
      %v1814 = vpop.f32.mrb[0].mxu0
      %v1815 = vadd.f32 0.0, %v1814
      %v1816 = vpop.f32.mrb[0].mxu0
      %1817 = vmatprep.mubr.f32.mxu0 0.0
      %1818 = vmatmul.mubr.f32.gmra.mrb[0].mxu0 %v1469
      %v1819 = vpop.f32.mrb[0].mxu0
      %v1820 = vadd.f32 0.0, %v1819
      %v1821 = vpop.f32.mrb[0].mxu0
      %1822 = vmatprep.mubr.f32.mxu0 0.0
      %1823 = vmatmul.mubr.f32.gmra.mrb[0].mxu0 %v1470
      %v1824 = vpop.f32.mrb[0].mxu0
      %v1825 = vadd.f32 0.0, %v1824
      %v1826 = vpop.f32.mrb[0].mxu0
      %1827 = vmatprep.mubr.f32.mxu0 0.0
      %1828 = vmatmul.mubr.f32.gmra.mrb[0].mxu0 %v1471
      %v1829 = vpop.f32.mrb[0].mxu0
      %v1830 = vadd.f32 0.0, %v1829
      %v1831 = vpop.f32.mrb[0].mxu0
      %1832 = vmatprep.mubr.f32.mxu0 0.0
      %1833 = vmatmul.mubr.f32.gmra.mrb[0].mxu0 %v1472
      %v1834 = vpop.f32.mrb[0].mxu0
      %v1835 = vadd.f32 0.0, %v1834
      %v1836 = vpop.f32.mrb[0].mxu0
      %1837 = vmatprep.mubr.f32.mxu0 0.0
      %1838 = vmatmul.mubr.f32.gmra.mrb[0].mxu0 %v1473
      %v1839 = vpop.f32.mrb[0].mxu0
      %v1840 = vadd.f32 0.0, %v1839
      %v1841 = vpop.f32.mrb[0].mxu0
      %1842 = vmatprep.mubr.f32.mxu0 0.0
      %1843 = vmatmul.mubr.f32.gmra.mrb[0].mxu0 %v1474
      %v1844 = vpop.f32.mrb[0].mxu0
      %v1845 = vadd.f32 0.0, %v1844
      %v1846 = vpop.f32.mrb[0].mxu0
      %1847 = vmatprep.mubr.f32.mxu0 0.0
      %1848 = vmatmul.mubr.f32.gmra.mrb[0].mxu0 %v1475
      %v1849 = vpop.f32.mrb[0].mxu0
      %v1850 = vadd.f32 0.0, %v1849
      %v1851 = vpop.f32.mrb[0].mxu0
      %1852 = vmatprep.mubr.f32.mxu0 0.0
      %1853 = vmatmul.mubr.f32.gmra.mrb[0].mxu0 %v1476
      %v1854 = vpop.f32.mrb[0].mxu0
      %v1855 = vadd.f32 0.0, %v1854
      %v1856 = vpop.f32.mrb[0].mxu0
      %1857 = vmatprep.mubr.f32.mxu0 0.0
      %1858 = vmatmul.mubr.f32.gmra.mrb[0].mxu0 %v1477
      %v1859 = vpop.f32.mrb[0].mxu0
      %v1860 = vadd.f32 0.0, %v1859
      %v1861 = vpop.f32.mrb[0].mxu0
      %1862 = vmatprep.mubr.f32.mxu0 0.0
      %1863 = vmatmul.mubr.f32.gmra.mrb[0].mxu0 %v1478
      %v1864 = vpop.f32.mrb[0].mxu0
      %v1865 = vadd.f32 0.0, %v1864
      %v1866 = vpop.f32.mrb[0].mxu0
      %1867 = vmatprep.mubr.f32.mxu0 0.0
      %1868 = vmatmul.mubr.f32.gmra.mrb[0].mxu0 %v1479
      %v1869 = vpop.f32.mrb[0].mxu0
      %v1870 = vadd.f32 0.0, %v1869
      %v1871 = vpop.f32.mrb[0].mxu0
      %1872 = vmatprep.mubr.f32.mxu0 0.0
      %1873 = vmatmul.mubr.f32.gmra.mrb[0].mxu0 %v1480
      %v1874 = vpop.f32.mrb[0].mxu0
      %v1875 = vadd.f32 0.0, %v1874
      %v1876 = vpop.f32.mrb[0].mxu0
      %1877 = vmatprep.mubr.f32.mxu0 0.0
      %1878 = vmatmul.mubr.f32.gmra.mrb[0].mxu0 %v1481
      %v1879 = vpop.f32.mrb[0].mxu0
      %v1880 = vadd.f32 0.0, %v1879
      %v1881 = vpop.f32.mrb[0].mxu0
      %1882 = vdwg.mxu0
      %v1883 = vadd.f32 %v1100, %v1565
      %v1884 = vadd.f32 %v1105, %v1570
      %v1885 = vadd.f32 %v1110, %v1575
      %v1886 = vadd.f32 %v1115, %v1580
      %v1887 = vadd.f32 %v1120, %v1585
      %v1888 = vadd.f32 %v1125, %v1590
      %v1889 = vadd.f32 %v1130, %v1595
      %v1890 = vadd.f32 %v1135, %v1600
      %v1891 = vadd.f32 %v1140, %v1605
      %v1892 = vadd.f32 %v1145, %v1610
      %v1893 = vadd.f32 %v1150, %v1615
      %v1894 = vadd.f32 %v1155, %v1620
      %v1895 = vadd.f32 %v1160, %v1625
      %v1896 = vadd.f32 %v1165, %v1630
      %v1897 = vadd.f32 %v1170, %v1635
      %v1898 = vadd.f32 %v1175, %v1640
      %v1899 = vadd.f32 %v1180, %v1645
      %v1900 = vadd.f32 %v1185, %v1650
      %v1901 = vadd.f32 %v1190, %v1655
      %v1902 = vadd.f32 %v1195, %v1660
      %v1903 = vadd.f32 %v1200, %v1665
      %v1904 = vadd.f32 %v1205, %v1670
      %v1905 = vadd.f32 %v1210, %v1675
      %v1906 = vadd.f32 %v1215, %v1680
      %v1907 = vadd.f32 %v1220, %v1685
      %v1908 = vadd.f32 %v1225, %v1690
      %v1909 = vadd.f32 %v1230, %v1695
      %v1910 = vadd.f32 %v1235, %v1700
      %v1911 = vadd.f32 %v1240, %v1705
      %v1912 = vadd.f32 %v1245, %v1710
      %v1913 = vadd.f32 %v1250, %v1715
      %v1914 = vadd.f32 %v1255, %v1720
      %v1915 = vadd.f32 %v1260, %v1725
      %v1916 = vadd.f32 %v1265, %v1730
      %v1917 = vadd.f32 %v1270, %v1735
      %v1918 = vadd.f32 %v1275, %v1740
      %v1919 = vadd.f32 %v1280, %v1745
      %v1920 = vadd.f32 %v1285, %v1750
      %v1921 = vadd.f32 %v1290, %v1755
      %v1922 = vadd.f32 %v1295, %v1760
      %v1923 = vadd.f32 %v1300, %v1765
      %v1924 = vadd.f32 %v1305, %v1770
      %v1925 = vadd.f32 %v1310, %v1775
      %v1926 = vadd.f32 %v1315, %v1780
      %v1927 = vadd.f32 %v1320, %v1785
      %v1928 = vadd.f32 %v1325, %v1790
      %v1929 = vadd.f32 %v1330, %v1795
      %v1930 = vadd.f32 %v1335, %v1800
      %v1931 = vadd.f32 %v1340, %v1805
      %v1932 = vadd.f32 %v1345, %v1810
      %v1933 = vadd.f32 %v1350, %v1815
      %v1934 = vadd.f32 %v1355, %v1820
      %v1935 = vadd.f32 %v1360, %v1825
      %v1936 = vadd.f32 %v1365, %v1830
      %v1937 = vadd.f32 %v1370, %v1835
      %v1938 = vadd.f32 %v1375, %v1840
      %v1939 = vadd.f32 %v1380, %v1845
      %v1940 = vadd.f32 %v1385, %v1850
      %v1941 = vadd.f32 %v1390, %v1855
      %v1942 = vadd.f32 %v1395, %v1860
      %v1943 = vadd.f32 %v1400, %v1865
      %v1944 = vadd.f32 %v1405, %v1870
      %v1945 = vadd.f32 %v1410, %v1875
      %v1946 = vadd.f32 %v1415, %v1880
      %v1947 = vld [vmem:[%s6] sm:$0x1]
      %v1949 = vlaneseq
      %v1950 = vshrl.u32 %v1949, 7
      %v1951 = vsub.s32 0, %v1950
      %v1952 = vrot.slane %v1947, %v1951
      %v1954 = vadd.f32 %v1883, %v1952
      %v1955 = vadd.f32 %v1884, %v1952
      %v1956 = vadd.f32 %v1885, %v1952
      %v1957 = vadd.f32 %v1886, %v1952
      %v1958 = vadd.f32 %v1887, %v1952
      %v1959 = vadd.f32 %v1888, %v1952
      %v1960 = vadd.f32 %v1889, %v1952
      %v1961 = vadd.f32 %v1890, %v1952
      %v1962 = vadd.f32 %v1891, %v1952
      %v1963 = vadd.f32 %v1892, %v1952
      %v1964 = vadd.f32 %v1893, %v1952
      %v1965 = vadd.f32 %v1894, %v1952
      %v1966 = vadd.f32 %v1895, %v1952
      %v1967 = vadd.f32 %v1896, %v1952
      %v1968 = vadd.f32 %v1897, %v1952
      %v1969 = vadd.f32 %v1898, %v1952
      %v1970 = vadd.f32 %v1899, %v1952
      %v1971 = vadd.f32 %v1900, %v1952
      %v1972 = vadd.f32 %v1901, %v1952
      %v1973 = vadd.f32 %v1902, %v1952
      %v1974 = vadd.f32 %v1903, %v1952
      %v1975 = vadd.f32 %v1904, %v1952
      %v1976 = vadd.f32 %v1905, %v1952
      %v1977 = vadd.f32 %v1906, %v1952
      %v1978 = vadd.f32 %v1907, %v1952
      %v1979 = vadd.f32 %v1908, %v1952
      %v1980 = vadd.f32 %v1909, %v1952
      %v1981 = vadd.f32 %v1910, %v1952
      %v1982 = vadd.f32 %v1911, %v1952
      %v1983 = vadd.f32 %v1912, %v1952
      %v1984 = vadd.f32 %v1913, %v1952
      %v1985 = vadd.f32 %v1914, %v1952
      %v1986 = vadd.f32 %v1915, %v1952
      %v1987 = vadd.f32 %v1916, %v1952
      %v1988 = vadd.f32 %v1917, %v1952
      %v1989 = vadd.f32 %v1918, %v1952
      %v1990 = vadd.f32 %v1919, %v1952
      %v1991 = vadd.f32 %v1920, %v1952
      %v1992 = vadd.f32 %v1921, %v1952
      %v1993 = vadd.f32 %v1922, %v1952
      %v1994 = vadd.f32 %v1923, %v1952
      %v1995 = vadd.f32 %v1924, %v1952
      %v1996 = vadd.f32 %v1925, %v1952
      %v1997 = vadd.f32 %v1926, %v1952
      %v1998 = vadd.f32 %v1927, %v1952
      %v1999 = vadd.f32 %v1928, %v1952
      %v2000 = vadd.f32 %v1929, %v1952
      %v2001 = vadd.f32 %v1930, %v1952
      %v2002 = vadd.f32 %v1931, %v1952
      %v2003 = vadd.f32 %v1932, %v1952
      %v2004 = vadd.f32 %v1933, %v1952
      %v2005 = vadd.f32 %v1934, %v1952
      %v2006 = vadd.f32 %v1935, %v1952
      %v2007 = vadd.f32 %v1936, %v1952
      %v2008 = vadd.f32 %v1937, %v1952
      %v2009 = vadd.f32 %v1938, %v1952
      %v2010 = vadd.f32 %v1939, %v1952
      %v2011 = vadd.f32 %v1940, %v1952
      %v2012 = vadd.f32 %v1941, %v1952
      %v2013 = vadd.f32 %v1942, %v1952
      %v2014 = vadd.f32 %v1943, %v1952
      %v2015 = vadd.f32 %v1944, %v1952
      %v2016 = vadd.f32 %v1945, %v1952
      %v2017 = vadd.f32 %v1946, %v1952
      %v2018 = vmax.f32 %v1954, 0.0
      %v2019 = vmax.f32 %v1955, 0.0
      %v2020 = vmax.f32 %v1956, 0.0
      %v2021 = vmax.f32 %v1957, 0.0
      %v2022 = vmax.f32 %v1958, 0.0
      %v2023 = vmax.f32 %v1959, 0.0
      %v2024 = vmax.f32 %v1960, 0.0
      %v2025 = vmax.f32 %v1961, 0.0
      %v2026 = vmax.f32 %v1962, 0.0
      %v2027 = vmax.f32 %v1963, 0.0
      %v2028 = vmax.f32 %v1964, 0.0
      %v2029 = vmax.f32 %v1965, 0.0
      %v2030 = vmax.f32 %v1966, 0.0
      %v2031 = vmax.f32 %v1967, 0.0
      %v2032 = vmax.f32 %v1968, 0.0
      %v2033 = vmax.f32 %v1969, 0.0
      %v2034 = vmax.f32 %v1970, 0.0
      %v2035 = vmax.f32 %v1971, 0.0
      %v2036 = vmax.f32 %v1972, 0.0
      %v2037 = vmax.f32 %v1973, 0.0
      %v2038 = vmax.f32 %v1974, 0.0
      %v2039 = vmax.f32 %v1975, 0.0
      %v2040 = vmax.f32 %v1976, 0.0
      %v2041 = vmax.f32 %v1977, 0.0
      %v2042 = vmax.f32 %v1978, 0.0
      %v2043 = vmax.f32 %v1979, 0.0
      %v2044 = vmax.f32 %v1980, 0.0
      %v2045 = vmax.f32 %v1981, 0.0
      %v2046 = vmax.f32 %v1982, 0.0
      %v2047 = vmax.f32 %v1983, 0.0
      %v2048 = vmax.f32 %v1984, 0.0
      %v2049 = vmax.f32 %v1985, 0.0
      %v2050 = vmax.f32 %v1986, 0.0
      %v2051 = vmax.f32 %v1987, 0.0
      %v2052 = vmax.f32 %v1988, 0.0
      %v2053 = vmax.f32 %v1989, 0.0
      %v2054 = vmax.f32 %v1990, 0.0
      %v2055 = vmax.f32 %v1991, 0.0
      %v2056 = vmax.f32 %v1992, 0.0
      %v2057 = vmax.f32 %v1993, 0.0
      %v2058 = vmax.f32 %v1994, 0.0
      %v2059 = vmax.f32 %v1995, 0.0
      %v2060 = vmax.f32 %v1996, 0.0
      %v2061 = vmax.f32 %v1997, 0.0
      %v2062 = vmax.f32 %v1998, 0.0
      %v2063 = vmax.f32 %v1999, 0.0
      %v2064 = vmax.f32 %v2000, 0.0
      %v2065 = vmax.f32 %v2001, 0.0
      %v2066 = vmax.f32 %v2002, 0.0
      %v2067 = vmax.f32 %v2003, 0.0
      %v2068 = vmax.f32 %v2004, 0.0
      %v2069 = vmax.f32 %v2005, 0.0
      %v2070 = vmax.f32 %v2006, 0.0
      %v2071 = vmax.f32 %v2007, 0.0
      %v2072 = vmax.f32 %v2008, 0.0
      %v2073 = vmax.f32 %v2009, 0.0
      %v2074 = vmax.f32 %v2010, 0.0
      %v2075 = vmax.f32 %v2011, 0.0
      %v2076 = vmax.f32 %v2012, 0.0
      %v2077 = vmax.f32 %v2013, 0.0
      %v2078 = vmax.f32 %v2014, 0.0
      %v2079 = vmax.f32 %v2015, 0.0
      %v2080 = vmax.f32 %v2016, 0.0
      %v2081 = vmax.f32 %v2017, 0.0
      %v2082 = vld [vmem:[%s7] sm:$0xff]
      %v2083 = vld [vmem:[%s7 + $0x8] sm:$0xff]
      %v2084 = vld [vmem:[%s7 + $0x10] sm:$0xff]
      %v2085 = vld [vmem:[%s7 + $0x18] sm:$0xff]
      %v2086 = vld [vmem:[%s7 + $0x20] sm:$0xff]
      %v2087 = vld [vmem:[%s7 + $0x28] sm:$0xff]
      %v2088 = vld [vmem:[%s7 + $0x30] sm:$0xff]
      %v2089 = vld [vmem:[%s7 + $0x38] sm:$0xff]
      %v2090 = vld [vmem:[%s7 + $0x40] sm:$0xff]
      %v2091 = vld [vmem:[%s7 + $0x48] sm:$0xff]
      %v2092 = vld [vmem:[%s7 + $0x50] sm:$0xff]
      %v2093 = vld [vmem:[%s7 + $0x58] sm:$0xff]
      %v2094 = vld [vmem:[%s7 + $0x60] sm:$0xff]
      %v2095 = vld [vmem:[%s7 + $0x68] sm:$0xff]
      %v2096 = vld [vmem:[%s7 + $0x70] sm:$0xff]
      %v2097 = vld [vmem:[%s7 + $0x78] sm:$0xff]
      %v2098 = vld [vmem:[%s8] sm:$0x1]
      %v2100 = vlaneseq
      %v2101 = vshrl.u32 %v2100, 7
      %v2102 = vsub.s32 0, %v2101
      %v2103 = vrot.slane %v2098, %v2102
      %2105 = vmatprep.subr.mxu0 0.0
      %2106 = vmatpush1.msra.mxu0 %v2082
      %2107 = vmatprep.subr.mxu0 0.0
      %2108 = vmatpush1.msra.mxu0 %v2083
      %2109 = vmatprep.subr.mxu0 0.0
      %2110 = vmatpush1.msra.mxu0 %v2084
      %2111 = vmatprep.subr.mxu0 0.0
      %2112 = vmatpush1.msra.mxu0 %v2085
      %2113 = vmatprep.subr.mxu0 0.0
      %2114 = vmatpush1.msra.mxu0 %v2086
      %2115 = vmatprep.subr.mxu0 0.0
      %2116 = vmatpush1.msra.mxu0 %v2087
      %2117 = vmatprep.subr.mxu0 0.0
      %2118 = vmatpush1.msra.mxu0 %v2088
      %2119 = vmatprep.subr.mxu0 0.0
      %2120 = vmatpush1.msra.mxu0 %v2089
      %2121 = vmatprep.subr.mxu0 0.0
      %2122 = vmatpush1.msra.mxu0 %v2090
      %2123 = vmatprep.subr.mxu0 0.0
      %2124 = vmatpush1.msra.mxu0 %v2091
      %2125 = vmatprep.subr.mxu0 0.0
      %2126 = vmatpush1.msra.mxu0 %v2092
      %2127 = vmatprep.subr.mxu0 0.0
      %2128 = vmatpush1.msra.mxu0 %v2093
      %2129 = vmatprep.subr.mxu0 0.0
      %2130 = vmatpush1.msra.mxu0 %v2094
      %2131 = vmatprep.subr.mxu0 0.0
      %2132 = vmatpush1.msra.mxu0 %v2095
      %2133 = vmatprep.subr.mxu0 0.0
      %2134 = vmatpush1.msra.mxu0 %v2096
      %2135 = vmatprep.subr.mxu0 0.0
      %2136 = vmatpush1.msra.mxu0 %v2097
      %2137 = vmatprep.subr.mxu0 0.0
      %2138 = vmatpush1.msra.mxu0 0.0
      %2139 = vmatprep.subr.mxu0 0.0
      %2140 = vmatpush1.msra.mxu0 0.0
      %2141 = vmatprep.subr.mxu0 0.0
      %2142 = vmatpush1.msra.mxu0 0.0
      %2143 = vmatprep.subr.mxu0 0.0
      %2144 = vmatpush1.msra.mxu0 0.0
      %2145 = vmatprep.subr.mxu0 0.0
      %2146 = vmatpush1.msra.mxu0 0.0
      %2147 = vmatprep.subr.mxu0 0.0
      %2148 = vmatpush1.msra.mxu0 0.0
      %2149 = vmatprep.subr.mxu0 0.0
      %2150 = vmatpush1.msra.mxu0 0.0
      %2151 = vmatprep.subr.mxu0 0.0
      %2152 = vmatpush1.msra.mxu0 0.0
      %2153 = vmatprep.subr.mxu0 0.0
      %2154 = vmatpush1.msra.mxu0 0.0
      %2155 = vmatprep.subr.mxu0 0.0
      %2156 = vmatpush1.msra.mxu0 0.0
      %2157 = vmatprep.subr.mxu0 0.0
      %2158 = vmatpush1.msra.mxu0 0.0
      %2159 = vmatprep.subr.mxu0 0.0
      %2160 = vmatpush1.msra.mxu0 0.0
      %2161 = vmatprep.subr.mxu0 0.0
      %2162 = vmatpush1.msra.mxu0 0.0
      %2163 = vmatprep.subr.mxu0 0.0
      %2164 = vmatpush1.msra.mxu0 0.0
      %2165 = vmatprep.subr.mxu0 0.0
      %2166 = vmatpush1.msra.mxu0 0.0
      %2167 = vmatprep.subr.mxu0 0.0
      %2168 = vmatpush1.msra.mxu0 0.0
      %2169 = vmatprep.mubr.f32.mxu0 0.0
      %2170 = vmatmul.mubr.f32.gmra.mrb[0].mxu0 %v2018
      %v2171 = vpop.f32.mrb[0].mxu0
      %v2172 = vadd.f32 %v2103, %v2171
      %v2173 = vpop.f32.mrb[0].mxu0
      %2174 = vmatprep.mubr.f32.mxu0 0.0
      %2175 = vmatmul.mubr.f32.gmra.mrb[0].mxu0 %v2019
      %v2176 = vpop.f32.mrb[0].mxu0
      %v2177 = vadd.f32 %v2103, %v2176
      %v2178 = vpop.f32.mrb[0].mxu0
      %2179 = vmatprep.mubr.f32.mxu0 0.0
      %2180 = vmatmul.mubr.f32.gmra.mrb[0].mxu0 %v2020
      %v2181 = vpop.f32.mrb[0].mxu0
      %v2182 = vadd.f32 %v2103, %v2181
      %v2183 = vpop.f32.mrb[0].mxu0
      %2184 = vmatprep.mubr.f32.mxu0 0.0
      %2185 = vmatmul.mubr.f32.gmra.mrb[0].mxu0 %v2021
      %v2186 = vpop.f32.mrb[0].mxu0
      %v2187 = vadd.f32 %v2103, %v2186
      %v2188 = vpop.f32.mrb[0].mxu0
      %2189 = vmatprep.mubr.f32.mxu0 0.0
      %2190 = vmatmul.mubr.f32.gmra.mrb[0].mxu0 %v2022
      %v2191 = vpop.f32.mrb[0].mxu0
      %v2192 = vadd.f32 %v2103, %v2191
      %v2193 = vpop.f32.mrb[0].mxu0
      %2194 = vmatprep.mubr.f32.mxu0 0.0
      %2195 = vmatmul.mubr.f32.gmra.mrb[0].mxu0 %v2023
      %v2196 = vpop.f32.mrb[0].mxu0
      %v2197 = vadd.f32 %v2103, %v2196
      %v2198 = vpop.f32.mrb[0].mxu0
      %2199 = vmatprep.mubr.f32.mxu0 0.0
      %2200 = vmatmul.mubr.f32.gmra.mrb[0].mxu0 %v2024
      %v2201 = vpop.f32.mrb[0].mxu0
      %v2202 = vadd.f32 %v2103, %v2201
      %v2203 = vpop.f32.mrb[0].mxu0
      %2204 = vmatprep.mubr.f32.mxu0 0.0
      %2205 = vmatmul.mubr.f32.gmra.mrb[0].mxu0 %v2025
      %v2206 = vpop.f32.mrb[0].mxu0
      %v2207 = vadd.f32 %v2103, %v2206
      %v2208 = vpop.f32.mrb[0].mxu0
      %2209 = vmatprep.mubr.f32.mxu0 0.0
      %2210 = vmatmul.mubr.f32.gmra.mrb[0].mxu0 %v2026
      %v2211 = vpop.f32.mrb[0].mxu0
      %v2212 = vadd.f32 %v2103, %v2211
      %v2213 = vpop.f32.mrb[0].mxu0
      %2214 = vmatprep.mubr.f32.mxu0 0.0
      %2215 = vmatmul.mubr.f32.gmra.mrb[0].mxu0 %v2027
      %v2216 = vpop.f32.mrb[0].mxu0
      %v2217 = vadd.f32 %v2103, %v2216
      %v2218 = vpop.f32.mrb[0].mxu0
      %2219 = vmatprep.mubr.f32.mxu0 0.0
      %2220 = vmatmul.mubr.f32.gmra.mrb[0].mxu0 %v2028
      %v2221 = vpop.f32.mrb[0].mxu0
      %v2222 = vadd.f32 %v2103, %v2221
      %v2223 = vpop.f32.mrb[0].mxu0
      %2224 = vmatprep.mubr.f32.mxu0 0.0
      %2225 = vmatmul.mubr.f32.gmra.mrb[0].mxu0 %v2029
      %v2226 = vpop.f32.mrb[0].mxu0
      %v2227 = vadd.f32 %v2103, %v2226
      %v2228 = vpop.f32.mrb[0].mxu0
      %2229 = vmatprep.mubr.f32.mxu0 0.0
      %2230 = vmatmul.mubr.f32.gmra.mrb[0].mxu0 %v2030
      %v2231 = vpop.f32.mrb[0].mxu0
      %v2232 = vadd.f32 %v2103, %v2231
      %v2233 = vpop.f32.mrb[0].mxu0
      %2234 = vmatprep.mubr.f32.mxu0 0.0
      %2235 = vmatmul.mubr.f32.gmra.mrb[0].mxu0 %v2031
      %v2236 = vpop.f32.mrb[0].mxu0
      %v2237 = vadd.f32 %v2103, %v2236
      %v2238 = vpop.f32.mrb[0].mxu0
      %2239 = vmatprep.mubr.f32.mxu0 0.0
      %2240 = vmatmul.mubr.f32.gmra.mrb[0].mxu0 %v2032
      %v2241 = vpop.f32.mrb[0].mxu0
      %v2242 = vadd.f32 %v2103, %v2241
      %v2243 = vpop.f32.mrb[0].mxu0
      %2244 = vmatprep.mubr.f32.mxu0 0.0
      %2245 = vmatmul.mubr.f32.gmra.mrb[0].mxu0 %v2033
      %v2246 = vpop.f32.mrb[0].mxu0
      %v2247 = vadd.f32 %v2103, %v2246
      %v2248 = vpop.f32.mrb[0].mxu0
      %2249 = vmatprep.mubr.f32.mxu0 0.0
      %2250 = vmatmul.mubr.f32.gmra.mrb[0].mxu0 %v2034
      %v2251 = vpop.f32.mrb[0].mxu0
      %v2252 = vadd.f32 %v2103, %v2251
      %v2253 = vpop.f32.mrb[0].mxu0
      %2254 = vmatprep.mubr.f32.mxu0 0.0
      %2255 = vmatmul.mubr.f32.gmra.mrb[0].mxu0 %v2035
      %v2256 = vpop.f32.mrb[0].mxu0
      %v2257 = vadd.f32 %v2103, %v2256
      %v2258 = vpop.f32.mrb[0].mxu0
      %2259 = vmatprep.mubr.f32.mxu0 0.0
      %2260 = vmatmul.mubr.f32.gmra.mrb[0].mxu0 %v2036
      %v2261 = vpop.f32.mrb[0].mxu0
      %v2262 = vadd.f32 %v2103, %v2261
      %v2263 = vpop.f32.mrb[0].mxu0
      %2264 = vmatprep.mubr.f32.mxu0 0.0
      %2265 = vmatmul.mubr.f32.gmra.mrb[0].mxu0 %v2037
      %v2266 = vpop.f32.mrb[0].mxu0
      %v2267 = vadd.f32 %v2103, %v2266
      %v2268 = vpop.f32.mrb[0].mxu0
      %2269 = vmatprep.mubr.f32.mxu0 0.0
      %2270 = vmatmul.mubr.f32.gmra.mrb[0].mxu0 %v2038
      %v2271 = vpop.f32.mrb[0].mxu0
      %v2272 = vadd.f32 %v2103, %v2271
      %v2273 = vpop.f32.mrb[0].mxu0
      %2274 = vmatprep.mubr.f32.mxu0 0.0
      %2275 = vmatmul.mubr.f32.gmra.mrb[0].mxu0 %v2039
      %v2276 = vpop.f32.mrb[0].mxu0
      %v2277 = vadd.f32 %v2103, %v2276
      %v2278 = vpop.f32.mrb[0].mxu0
      %2279 = vmatprep.mubr.f32.mxu0 0.0
      %2280 = vmatmul.mubr.f32.gmra.mrb[0].mxu0 %v2040
      %v2281 = vpop.f32.mrb[0].mxu0
      %v2282 = vadd.f32 %v2103, %v2281
      %v2283 = vpop.f32.mrb[0].mxu0
      %2284 = vmatprep.mubr.f32.mxu0 0.0
      %2285 = vmatmul.mubr.f32.gmra.mrb[0].mxu0 %v2041
      %v2286 = vpop.f32.mrb[0].mxu0
      %v2287 = vadd.f32 %v2103, %v2286
      %v2288 = vpop.f32.mrb[0].mxu0
      %2289 = vmatprep.mubr.f32.mxu0 0.0
      %2290 = vmatmul.mubr.f32.gmra.mrb[0].mxu0 %v2042
      %v2291 = vpop.f32.mrb[0].mxu0
      %v2292 = vadd.f32 %v2103, %v2291
      %v2293 = vpop.f32.mrb[0].mxu0
      %2294 = vmatprep.mubr.f32.mxu0 0.0
      %2295 = vmatmul.mubr.f32.gmra.mrb[0].mxu0 %v2043
      %v2296 = vpop.f32.mrb[0].mxu0
      %v2297 = vadd.f32 %v2103, %v2296
      %v2298 = vpop.f32.mrb[0].mxu0
      %2299 = vmatprep.mubr.f32.mxu0 0.0
      %2300 = vmatmul.mubr.f32.gmra.mrb[0].mxu0 %v2044
      %v2301 = vpop.f32.mrb[0].mxu0
      %v2302 = vadd.f32 %v2103, %v2301
      %v2303 = vpop.f32.mrb[0].mxu0
      %2304 = vmatprep.mubr.f32.mxu0 0.0
      %2305 = vmatmul.mubr.f32.gmra.mrb[0].mxu0 %v2045
      %v2306 = vpop.f32.mrb[0].mxu0
      %v2307 = vadd.f32 %v2103, %v2306
      %v2308 = vpop.f32.mrb[0].mxu0
      %2309 = vmatprep.mubr.f32.mxu0 0.0
      %2310 = vmatmul.mubr.f32.gmra.mrb[0].mxu0 %v2046
      %v2311 = vpop.f32.mrb[0].mxu0
      %v2312 = vadd.f32 %v2103, %v2311
      %v2313 = vpop.f32.mrb[0].mxu0
      %2314 = vmatprep.mubr.f32.mxu0 0.0
      %2315 = vmatmul.mubr.f32.gmra.mrb[0].mxu0 %v2047
      %v2316 = vpop.f32.mrb[0].mxu0
      %v2317 = vadd.f32 %v2103, %v2316
      %v2318 = vpop.f32.mrb[0].mxu0
      %2319 = vmatprep.mubr.f32.mxu0 0.0
      %2320 = vmatmul.mubr.f32.gmra.mrb[0].mxu0 %v2048
      %v2321 = vpop.f32.mrb[0].mxu0
      %v2322 = vadd.f32 %v2103, %v2321
      %v2323 = vpop.f32.mrb[0].mxu0
      %2324 = vmatprep.mubr.f32.mxu0 0.0
      %2325 = vmatmul.mubr.f32.gmra.mrb[0].mxu0 %v2049
      %v2326 = vpop.f32.mrb[0].mxu0
      %v2327 = vadd.f32 %v2103, %v2326
      %v2328 = vpop.f32.mrb[0].mxu0
      %2329 = vmatprep.mubr.f32.mxu0 0.0
      %2330 = vmatmul.mubr.f32.gmra.mrb[0].mxu0 %v2050
      %v2331 = vpop.f32.mrb[0].mxu0
      %v2332 = vadd.f32 %v2103, %v2331
      %v2333 = vpop.f32.mrb[0].mxu0
      %2334 = vmatprep.mubr.f32.mxu0 0.0
      %2335 = vmatmul.mubr.f32.gmra.mrb[0].mxu0 %v2051
      %v2336 = vpop.f32.mrb[0].mxu0
      %v2337 = vadd.f32 %v2103, %v2336
      %v2338 = vpop.f32.mrb[0].mxu0
      %2339 = vmatprep.mubr.f32.mxu0 0.0
      %2340 = vmatmul.mubr.f32.gmra.mrb[0].mxu0 %v2052
      %v2341 = vpop.f32.mrb[0].mxu0
      %v2342 = vadd.f32 %v2103, %v2341
      %v2343 = vpop.f32.mrb[0].mxu0
      %2344 = vmatprep.mubr.f32.mxu0 0.0
      %2345 = vmatmul.mubr.f32.gmra.mrb[0].mxu0 %v2053
      %v2346 = vpop.f32.mrb[0].mxu0
      %v2347 = vadd.f32 %v2103, %v2346
      %v2348 = vpop.f32.mrb[0].mxu0
      %2349 = vmatprep.mubr.f32.mxu0 0.0
      %2350 = vmatmul.mubr.f32.gmra.mrb[0].mxu0 %v2054
      %v2351 = vpop.f32.mrb[0].mxu0
      %v2352 = vadd.f32 %v2103, %v2351
      %v2353 = vpop.f32.mrb[0].mxu0
      %2354 = vmatprep.mubr.f32.mxu0 0.0
      %2355 = vmatmul.mubr.f32.gmra.mrb[0].mxu0 %v2055
      %v2356 = vpop.f32.mrb[0].mxu0
      %v2357 = vadd.f32 %v2103, %v2356
      %v2358 = vpop.f32.mrb[0].mxu0
      %2359 = vmatprep.mubr.f32.mxu0 0.0
      %2360 = vmatmul.mubr.f32.gmra.mrb[0].mxu0 %v2056
      %v2361 = vpop.f32.mrb[0].mxu0
      %v2362 = vadd.f32 %v2103, %v2361
      %v2363 = vpop.f32.mrb[0].mxu0
      %2364 = vmatprep.mubr.f32.mxu0 0.0
      %2365 = vmatmul.mubr.f32.gmra.mrb[0].mxu0 %v2057
      %v2366 = vpop.f32.mrb[0].mxu0
      %v2367 = vadd.f32 %v2103, %v2366
      %v2368 = vpop.f32.mrb[0].mxu0
      %2369 = vmatprep.mubr.f32.mxu0 0.0
      %2370 = vmatmul.mubr.f32.gmra.mrb[0].mxu0 %v2058
      %v2371 = vpop.f32.mrb[0].mxu0
      %v2372 = vadd.f32 %v2103, %v2371
      %v2373 = vpop.f32.mrb[0].mxu0
      %2374 = vmatprep.mubr.f32.mxu0 0.0
      %2375 = vmatmul.mubr.f32.gmra.mrb[0].mxu0 %v2059
      %v2376 = vpop.f32.mrb[0].mxu0
      %v2377 = vadd.f32 %v2103, %v2376
      %v2378 = vpop.f32.mrb[0].mxu0
      %2379 = vmatprep.mubr.f32.mxu0 0.0
      %2380 = vmatmul.mubr.f32.gmra.mrb[0].mxu0 %v2060
      %v2381 = vpop.f32.mrb[0].mxu0
      %v2382 = vadd.f32 %v2103, %v2381
      %v2383 = vpop.f32.mrb[0].mxu0
      %2384 = vmatprep.mubr.f32.mxu0 0.0
      %2385 = vmatmul.mubr.f32.gmra.mrb[0].mxu0 %v2061
      %v2386 = vpop.f32.mrb[0].mxu0
      %v2387 = vadd.f32 %v2103, %v2386
      %v2388 = vpop.f32.mrb[0].mxu0
      %2389 = vmatprep.mubr.f32.mxu0 0.0
      %2390 = vmatmul.mubr.f32.gmra.mrb[0].mxu0 %v2062
      %v2391 = vpop.f32.mrb[0].mxu0
      %v2392 = vadd.f32 %v2103, %v2391
      %v2393 = vpop.f32.mrb[0].mxu0
      %2394 = vmatprep.mubr.f32.mxu0 0.0
      %2395 = vmatmul.mubr.f32.gmra.mrb[0].mxu0 %v2063
      %v2396 = vpop.f32.mrb[0].mxu0
      %v2397 = vadd.f32 %v2103, %v2396
      %v2398 = vpop.f32.mrb[0].mxu0
      %2399 = vmatprep.mubr.f32.mxu0 0.0
      %2400 = vmatmul.mubr.f32.gmra.mrb[0].mxu0 %v2064
      %v2401 = vpop.f32.mrb[0].mxu0
      %v2402 = vadd.f32 %v2103, %v2401
      %v2403 = vpop.f32.mrb[0].mxu0
      %2404 = vmatprep.mubr.f32.mxu0 0.0
      %2405 = vmatmul.mubr.f32.gmra.mrb[0].mxu0 %v2065
      %v2406 = vpop.f32.mrb[0].mxu0
      %v2407 = vadd.f32 %v2103, %v2406
      %v2408 = vpop.f32.mrb[0].mxu0
      %2409 = vmatprep.mubr.f32.mxu0 0.0
      %2410 = vmatmul.mubr.f32.gmra.mrb[0].mxu0 %v2066
      %v2411 = vpop.f32.mrb[0].mxu0
      %v2412 = vadd.f32 %v2103, %v2411
      %v2413 = vpop.f32.mrb[0].mxu0
      %2414 = vmatprep.mubr.f32.mxu0 0.0
      %2415 = vmatmul.mubr.f32.gmra.mrb[0].mxu0 %v2067
      %v2416 = vpop.f32.mrb[0].mxu0
      %v2417 = vadd.f32 %v2103, %v2416
      %v2418 = vpop.f32.mrb[0].mxu0
      %2419 = vmatprep.mubr.f32.mxu0 0.0
      %2420 = vmatmul.mubr.f32.gmra.mrb[0].mxu0 %v2068
      %v2421 = vpop.f32.mrb[0].mxu0
      %v2422 = vadd.f32 %v2103, %v2421
      %v2423 = vpop.f32.mrb[0].mxu0
      %2424 = vmatprep.mubr.f32.mxu0 0.0
      %2425 = vmatmul.mubr.f32.gmra.mrb[0].mxu0 %v2069
      %v2426 = vpop.f32.mrb[0].mxu0
      %v2427 = vadd.f32 %v2103, %v2426
      %v2428 = vpop.f32.mrb[0].mxu0
      %2429 = vmatprep.mubr.f32.mxu0 0.0
      %2430 = vmatmul.mubr.f32.gmra.mrb[0].mxu0 %v2070
      %v2431 = vpop.f32.mrb[0].mxu0
      %v2432 = vadd.f32 %v2103, %v2431
      %v2433 = vpop.f32.mrb[0].mxu0
      %2434 = vmatprep.mubr.f32.mxu0 0.0
      %2435 = vmatmul.mubr.f32.gmra.mrb[0].mxu0 %v2071
      %v2436 = vpop.f32.mrb[0].mxu0
      %v2437 = vadd.f32 %v2103, %v2436
      %v2438 = vpop.f32.mrb[0].mxu0
      %2439 = vmatprep.mubr.f32.mxu0 0.0
      %2440 = vmatmul.mubr.f32.gmra.mrb[0].mxu0 %v2072
      %v2441 = vpop.f32.mrb[0].mxu0
      %v2442 = vadd.f32 %v2103, %v2441
      %v2443 = vpop.f32.mrb[0].mxu0
      %2444 = vmatprep.mubr.f32.mxu0 0.0
      %2445 = vmatmul.mubr.f32.gmra.mrb[0].mxu0 %v2073
      %v2446 = vpop.f32.mrb[0].mxu0
      %v2447 = vadd.f32 %v2103, %v2446
      %v2448 = vpop.f32.mrb[0].mxu0
      %2449 = vmatprep.mubr.f32.mxu0 0.0
      %2450 = vmatmul.mubr.f32.gmra.mrb[0].mxu0 %v2074
      %v2451 = vpop.f32.mrb[0].mxu0
      %v2452 = vadd.f32 %v2103, %v2451
      %v2453 = vpop.f32.mrb[0].mxu0
      %2454 = vmatprep.mubr.f32.mxu0 0.0
      %2455 = vmatmul.mubr.f32.gmra.mrb[0].mxu0 %v2075
      %v2456 = vpop.f32.mrb[0].mxu0
      %v2457 = vadd.f32 %v2103, %v2456
      %v2458 = vpop.f32.mrb[0].mxu0
      %2459 = vmatprep.mubr.f32.mxu0 0.0
      %2460 = vmatmul.mubr.f32.gmra.mrb[0].mxu0 %v2076
      %v2461 = vpop.f32.mrb[0].mxu0
      %v2462 = vadd.f32 %v2103, %v2461
      %v2463 = vpop.f32.mrb[0].mxu0
      %2464 = vmatprep.mubr.f32.mxu0 0.0
      %2465 = vmatmul.mubr.f32.gmra.mrb[0].mxu0 %v2077
      %v2466 = vpop.f32.mrb[0].mxu0
      %v2467 = vadd.f32 %v2103, %v2466
      %v2468 = vpop.f32.mrb[0].mxu0
      %2469 = vmatprep.mubr.f32.mxu0 0.0
      %2470 = vmatmul.mubr.f32.gmra.mrb[0].mxu0 %v2078
      %v2471 = vpop.f32.mrb[0].mxu0
      %v2472 = vadd.f32 %v2103, %v2471
      %v2473 = vpop.f32.mrb[0].mxu0
      %2474 = vmatprep.mubr.f32.mxu0 0.0
      %2475 = vmatmul.mubr.f32.gmra.mrb[0].mxu0 %v2079
      %v2476 = vpop.f32.mrb[0].mxu0
      %v2477 = vadd.f32 %v2103, %v2476
      %v2478 = vpop.f32.mrb[0].mxu0
      %2479 = vmatprep.mubr.f32.mxu0 0.0
      %2480 = vmatmul.mubr.f32.gmra.mrb[0].mxu0 %v2080
      %v2481 = vpop.f32.mrb[0].mxu0
      %v2482 = vadd.f32 %v2103, %v2481
      %v2483 = vpop.f32.mrb[0].mxu0
      %2484 = vmatprep.mubr.f32.mxu0 0.0
      %2485 = vmatmul.mubr.f32.gmra.mrb[0].mxu0 %v2081
      %v2486 = vpop.f32.mrb[0].mxu0
      %v2487 = vadd.f32 %v2103, %v2486
      %v2488 = vpop.f32.mrb[0].mxu0
      %2489 = vdwg.mxu0
      %v2490 = vmax.f32 %v2172, 0.0
      %v2491 = vmax.f32 %v2177, 0.0
      %v2492 = vmax.f32 %v2182, 0.0
      %v2493 = vmax.f32 %v2187, 0.0
      %v2494 = vmax.f32 %v2192, 0.0
      %v2495 = vmax.f32 %v2197, 0.0
      %v2496 = vmax.f32 %v2202, 0.0
      %v2497 = vmax.f32 %v2207, 0.0
      %v2498 = vmax.f32 %v2212, 0.0
      %v2499 = vmax.f32 %v2217, 0.0
      %v2500 = vmax.f32 %v2222, 0.0
      %v2501 = vmax.f32 %v2227, 0.0
      %v2502 = vmax.f32 %v2232, 0.0
      %v2503 = vmax.f32 %v2237, 0.0
      %v2504 = vmax.f32 %v2242, 0.0
      %v2505 = vmax.f32 %v2247, 0.0
      %v2506 = vmax.f32 %v2252, 0.0
      %v2507 = vmax.f32 %v2257, 0.0
      %v2508 = vmax.f32 %v2262, 0.0
      %v2509 = vmax.f32 %v2267, 0.0
      %v2510 = vmax.f32 %v2272, 0.0
      %v2511 = vmax.f32 %v2277, 0.0
      %v2512 = vmax.f32 %v2282, 0.0
      %v2513 = vmax.f32 %v2287, 0.0
      %v2514 = vmax.f32 %v2292, 0.0
      %v2515 = vmax.f32 %v2297, 0.0
      %v2516 = vmax.f32 %v2302, 0.0
      %v2517 = vmax.f32 %v2307, 0.0
      %v2518 = vmax.f32 %v2312, 0.0
      %v2519 = vmax.f32 %v2317, 0.0
      %v2520 = vmax.f32 %v2322, 0.0
      %v2521 = vmax.f32 %v2327, 0.0
      %v2522 = vmax.f32 %v2332, 0.0
      %v2523 = vmax.f32 %v2337, 0.0
      %v2524 = vmax.f32 %v2342, 0.0
      %v2525 = vmax.f32 %v2347, 0.0
      %v2526 = vmax.f32 %v2352, 0.0
      %v2527 = vmax.f32 %v2357, 0.0
      %v2528 = vmax.f32 %v2362, 0.0
      %v2529 = vmax.f32 %v2367, 0.0
      %v2530 = vmax.f32 %v2372, 0.0
      %v2531 = vmax.f32 %v2377, 0.0
      %v2532 = vmax.f32 %v2382, 0.0
      %v2533 = vmax.f32 %v2387, 0.0
      %v2534 = vmax.f32 %v2392, 0.0
      %v2535 = vmax.f32 %v2397, 0.0
      %v2536 = vmax.f32 %v2402, 0.0
      %v2537 = vmax.f32 %v2407, 0.0
      %v2538 = vmax.f32 %v2412, 0.0
      %v2539 = vmax.f32 %v2417, 0.0
      %v2540 = vmax.f32 %v2422, 0.0
      %v2541 = vmax.f32 %v2427, 0.0
      %v2542 = vmax.f32 %v2432, 0.0
      %v2543 = vmax.f32 %v2437, 0.0
      %v2544 = vmax.f32 %v2442, 0.0
      %v2545 = vmax.f32 %v2447, 0.0
      %v2546 = vmax.f32 %v2452, 0.0
      %v2547 = vmax.f32 %v2457, 0.0
      %v2548 = vmax.f32 %v2462, 0.0
      %v2549 = vmax.f32 %v2467, 0.0
      %v2550 = vmax.f32 %v2472, 0.0
      %v2551 = vmax.f32 %v2477, 0.0
      %v2552 = vmax.f32 %v2482, 0.0
      %v2553 = vmax.f32 %v2487, 0.0
      %v2554 = vld [vmem:[%s9] sm:$0xff]
      %v2555 = vld [vmem:[%s9 + $0x8] sm:$0xff]
      %v2556 = vld [vmem:[%s9 + $0x10] sm:$0xff]
      %v2557 = vld [vmem:[%s9 + $0x18] sm:$0xff]
      %v2558 = vld [vmem:[%s9 + $0x20] sm:$0xff]
      %v2559 = vld [vmem:[%s9 + $0x28] sm:$0xff]
      %v2560 = vld [vmem:[%s9 + $0x30] sm:$0xff]
      %v2561 = vld [vmem:[%s9 + $0x38] sm:$0xff]
      %v2562 = vld [vmem:[%s9 + $0x40] sm:$0xff]
      %v2563 = vld [vmem:[%s9 + $0x48] sm:$0xff]
      %v2564 = vld [vmem:[%s9 + $0x50] sm:$0xff]
      %v2565 = vld [vmem:[%s9 + $0x58] sm:$0xff]
      %v2566 = vld [vmem:[%s9 + $0x60] sm:$0xff]
      %v2567 = vld [vmem:[%s9 + $0x68] sm:$0xff]
      %v2568 = vld [vmem:[%s9 + $0x70] sm:$0xff]
      %v2569 = vld [vmem:[%s9 + $0x78] sm:$0xff]
      %v2570 = vld [vmem:[%s10] sm:$0x1]
      %v2572 = vlaneseq
      %v2573 = vshrl.u32 %v2572, 7
      %v2574 = vsub.s32 0, %v2573
      %v2575 = vrot.slane %v2570, %v2574
      %2577 = vmatprep.subr.mxu0 0.0
      %2578 = vmatpush1.msra.mxu0 %v2554
      %2579 = vmatprep.subr.mxu0 0.0
      %2580 = vmatpush1.msra.mxu0 %v2555
      %2581 = vmatprep.subr.mxu0 0.0
      %2582 = vmatpush1.msra.mxu0 %v2556
      %2583 = vmatprep.subr.mxu0 0.0
      %2584 = vmatpush1.msra.mxu0 %v2557
      %2585 = vmatprep.subr.mxu0 0.0
      %2586 = vmatpush1.msra.mxu0 %v2558
      %2587 = vmatprep.subr.mxu0 0.0
      %2588 = vmatpush1.msra.mxu0 %v2559
      %2589 = vmatprep.subr.mxu0 0.0
      %2590 = vmatpush1.msra.mxu0 %v2560
      %2591 = vmatprep.subr.mxu0 0.0
      %2592 = vmatpush1.msra.mxu0 %v2561
      %2593 = vmatprep.subr.mxu0 0.0
      %2594 = vmatpush1.msra.mxu0 %v2562
      %2595 = vmatprep.subr.mxu0 0.0
      %2596 = vmatpush1.msra.mxu0 %v2563
      %2597 = vmatprep.subr.mxu0 0.0
      %2598 = vmatpush1.msra.mxu0 %v2564
      %2599 = vmatprep.subr.mxu0 0.0
      %2600 = vmatpush1.msra.mxu0 %v2565
      %2601 = vmatprep.subr.mxu0 0.0
      %2602 = vmatpush1.msra.mxu0 %v2566
      %2603 = vmatprep.subr.mxu0 0.0
      %2604 = vmatpush1.msra.mxu0 %v2567
      %2605 = vmatprep.subr.mxu0 0.0
      %2606 = vmatpush1.msra.mxu0 %v2568
      %2607 = vmatprep.subr.mxu0 0.0
      %2608 = vmatpush1.msra.mxu0 %v2569
      %2609 = vmatprep.subr.mxu0 0.0
      %2610 = vmatpush1.msra.mxu0 0.0
      %2611 = vmatprep.subr.mxu0 0.0
      %2612 = vmatpush1.msra.mxu0 0.0
      %2613 = vmatprep.subr.mxu0 0.0
      %2614 = vmatpush1.msra.mxu0 0.0
      %2615 = vmatprep.subr.mxu0 0.0
      %2616 = vmatpush1.msra.mxu0 0.0
      %2617 = vmatprep.subr.mxu0 0.0
      %2618 = vmatpush1.msra.mxu0 0.0
      %2619 = vmatprep.subr.mxu0 0.0
      %2620 = vmatpush1.msra.mxu0 0.0
      %2621 = vmatprep.subr.mxu0 0.0
      %2622 = vmatpush1.msra.mxu0 0.0
      %2623 = vmatprep.subr.mxu0 0.0
      %2624 = vmatpush1.msra.mxu0 0.0
      %2625 = vmatprep.subr.mxu0 0.0
      %2626 = vmatpush1.msra.mxu0 0.0
      %2627 = vmatprep.subr.mxu0 0.0
      %2628 = vmatpush1.msra.mxu0 0.0
      %2629 = vmatprep.subr.mxu0 0.0
      %2630 = vmatpush1.msra.mxu0 0.0
      %2631 = vmatprep.subr.mxu0 0.0
      %2632 = vmatpush1.msra.mxu0 0.0
      %2633 = vmatprep.subr.mxu0 0.0
      %2634 = vmatpush1.msra.mxu0 0.0
      %2635 = vmatprep.subr.mxu0 0.0
      %2636 = vmatpush1.msra.mxu0 0.0
      %2637 = vmatprep.subr.mxu0 0.0
      %2638 = vmatpush1.msra.mxu0 0.0
      %2639 = vmatprep.subr.mxu0 0.0
      %2640 = vmatpush1.msra.mxu0 0.0
      %2641 = vmatprep.mubr.f32.mxu0 0.0
      %2642 = vmatmul.mubr.f32.gmra.mrb[0].mxu0 %v2490
      %v2643 = vpop.f32.mrb[0].mxu0
      %v2644 = vadd.f32 %v2575, %v2643
      %v2645 = vpop.f32.mrb[0].mxu0
      %2646 = vmatprep.mubr.f32.mxu0 0.0
      %2647 = vmatmul.mubr.f32.gmra.mrb[0].mxu0 %v2491
      %v2648 = vpop.f32.mrb[0].mxu0
      %v2649 = vadd.f32 %v2575, %v2648
      %v2650 = vpop.f32.mrb[0].mxu0
      %2651 = vmatprep.mubr.f32.mxu0 0.0
      %2652 = vmatmul.mubr.f32.gmra.mrb[0].mxu0 %v2492
      %v2653 = vpop.f32.mrb[0].mxu0
      %v2654 = vadd.f32 %v2575, %v2653
      %v2655 = vpop.f32.mrb[0].mxu0
      %2656 = vmatprep.mubr.f32.mxu0 0.0
      %2657 = vmatmul.mubr.f32.gmra.mrb[0].mxu0 %v2493
      %v2658 = vpop.f32.mrb[0].mxu0
      %v2659 = vadd.f32 %v2575, %v2658
      %v2660 = vpop.f32.mrb[0].mxu0
      %2661 = vmatprep.mubr.f32.mxu0 0.0
      %2662 = vmatmul.mubr.f32.gmra.mrb[0].mxu0 %v2494
      %v2663 = vpop.f32.mrb[0].mxu0
      %v2664 = vadd.f32 %v2575, %v2663
      %v2665 = vpop.f32.mrb[0].mxu0
      %2666 = vmatprep.mubr.f32.mxu0 0.0
      %2667 = vmatmul.mubr.f32.gmra.mrb[0].mxu0 %v2495
      %v2668 = vpop.f32.mrb[0].mxu0
      %v2669 = vadd.f32 %v2575, %v2668
      %v2670 = vpop.f32.mrb[0].mxu0
      %2671 = vmatprep.mubr.f32.mxu0 0.0
      %2672 = vmatmul.mubr.f32.gmra.mrb[0].mxu0 %v2496
      %v2673 = vpop.f32.mrb[0].mxu0
      %v2674 = vadd.f32 %v2575, %v2673
      %v2675 = vpop.f32.mrb[0].mxu0
      %2676 = vmatprep.mubr.f32.mxu0 0.0
      %2677 = vmatmul.mubr.f32.gmra.mrb[0].mxu0 %v2497
      %v2678 = vpop.f32.mrb[0].mxu0
      %v2679 = vadd.f32 %v2575, %v2678
      %v2680 = vpop.f32.mrb[0].mxu0
      %2681 = vmatprep.mubr.f32.mxu0 0.0
      %2682 = vmatmul.mubr.f32.gmra.mrb[0].mxu0 %v2498
      %v2683 = vpop.f32.mrb[0].mxu0
      %v2684 = vadd.f32 %v2575, %v2683
      %v2685 = vpop.f32.mrb[0].mxu0
      %2686 = vmatprep.mubr.f32.mxu0 0.0
      %2687 = vmatmul.mubr.f32.gmra.mrb[0].mxu0 %v2499
      %v2688 = vpop.f32.mrb[0].mxu0
      %v2689 = vadd.f32 %v2575, %v2688
      %v2690 = vpop.f32.mrb[0].mxu0
      %2691 = vmatprep.mubr.f32.mxu0 0.0
      %2692 = vmatmul.mubr.f32.gmra.mrb[0].mxu0 %v2500
      %v2693 = vpop.f32.mrb[0].mxu0
      %v2694 = vadd.f32 %v2575, %v2693
      %v2695 = vpop.f32.mrb[0].mxu0
      %2696 = vmatprep.mubr.f32.mxu0 0.0
      %2697 = vmatmul.mubr.f32.gmra.mrb[0].mxu0 %v2501
      %v2698 = vpop.f32.mrb[0].mxu0
      %v2699 = vadd.f32 %v2575, %v2698
      %v2700 = vpop.f32.mrb[0].mxu0
      %2701 = vmatprep.mubr.f32.mxu0 0.0
      %2702 = vmatmul.mubr.f32.gmra.mrb[0].mxu0 %v2502
      %v2703 = vpop.f32.mrb[0].mxu0
      %v2704 = vadd.f32 %v2575, %v2703
      %v2705 = vpop.f32.mrb[0].mxu0
      %2706 = vmatprep.mubr.f32.mxu0 0.0
      %2707 = vmatmul.mubr.f32.gmra.mrb[0].mxu0 %v2503
      %v2708 = vpop.f32.mrb[0].mxu0
      %v2709 = vadd.f32 %v2575, %v2708
      %v2710 = vpop.f32.mrb[0].mxu0
      %2711 = vmatprep.mubr.f32.mxu0 0.0
      %2712 = vmatmul.mubr.f32.gmra.mrb[0].mxu0 %v2504
      %v2713 = vpop.f32.mrb[0].mxu0
      %v2714 = vadd.f32 %v2575, %v2713
      %v2715 = vpop.f32.mrb[0].mxu0
      %2716 = vmatprep.mubr.f32.mxu0 0.0
      %2717 = vmatmul.mubr.f32.gmra.mrb[0].mxu0 %v2505
      %v2718 = vpop.f32.mrb[0].mxu0
      %v2719 = vadd.f32 %v2575, %v2718
      %v2720 = vpop.f32.mrb[0].mxu0
      %2721 = vmatprep.mubr.f32.mxu0 0.0
      %2722 = vmatmul.mubr.f32.gmra.mrb[0].mxu0 %v2506
      %v2723 = vpop.f32.mrb[0].mxu0
      %v2724 = vadd.f32 %v2575, %v2723
      %v2725 = vpop.f32.mrb[0].mxu0
      %2726 = vmatprep.mubr.f32.mxu0 0.0
      %2727 = vmatmul.mubr.f32.gmra.mrb[0].mxu0 %v2507
      %v2728 = vpop.f32.mrb[0].mxu0
      %v2729 = vadd.f32 %v2575, %v2728
      %v2730 = vpop.f32.mrb[0].mxu0
      %2731 = vmatprep.mubr.f32.mxu0 0.0
      %2732 = vmatmul.mubr.f32.gmra.mrb[0].mxu0 %v2508
      %v2733 = vpop.f32.mrb[0].mxu0
      %v2734 = vadd.f32 %v2575, %v2733
      %v2735 = vpop.f32.mrb[0].mxu0
      %2736 = vmatprep.mubr.f32.mxu0 0.0
      %2737 = vmatmul.mubr.f32.gmra.mrb[0].mxu0 %v2509
      %v2738 = vpop.f32.mrb[0].mxu0
      %v2739 = vadd.f32 %v2575, %v2738
      %v2740 = vpop.f32.mrb[0].mxu0
      %2741 = vmatprep.mubr.f32.mxu0 0.0
      %2742 = vmatmul.mubr.f32.gmra.mrb[0].mxu0 %v2510
      %v2743 = vpop.f32.mrb[0].mxu0
      %v2744 = vadd.f32 %v2575, %v2743
      %v2745 = vpop.f32.mrb[0].mxu0
      %2746 = vmatprep.mubr.f32.mxu0 0.0
      %2747 = vmatmul.mubr.f32.gmra.mrb[0].mxu0 %v2511
      %v2748 = vpop.f32.mrb[0].mxu0
      %v2749 = vadd.f32 %v2575, %v2748
      %v2750 = vpop.f32.mrb[0].mxu0
      %2751 = vmatprep.mubr.f32.mxu0 0.0
      %2752 = vmatmul.mubr.f32.gmra.mrb[0].mxu0 %v2512
      %v2753 = vpop.f32.mrb[0].mxu0
      %v2754 = vadd.f32 %v2575, %v2753
      %v2755 = vpop.f32.mrb[0].mxu0
      %2756 = vmatprep.mubr.f32.mxu0 0.0
      %2757 = vmatmul.mubr.f32.gmra.mrb[0].mxu0 %v2513
      %v2758 = vpop.f32.mrb[0].mxu0
      %v2759 = vadd.f32 %v2575, %v2758
      %v2760 = vpop.f32.mrb[0].mxu0
      %2761 = vmatprep.mubr.f32.mxu0 0.0
      %2762 = vmatmul.mubr.f32.gmra.mrb[0].mxu0 %v2514
      %v2763 = vpop.f32.mrb[0].mxu0
      %v2764 = vadd.f32 %v2575, %v2763
      %v2765 = vpop.f32.mrb[0].mxu0
      %2766 = vmatprep.mubr.f32.mxu0 0.0
      %2767 = vmatmul.mubr.f32.gmra.mrb[0].mxu0 %v2515
      %v2768 = vpop.f32.mrb[0].mxu0
      %v2769 = vadd.f32 %v2575, %v2768
      %v2770 = vpop.f32.mrb[0].mxu0
      %2771 = vmatprep.mubr.f32.mxu0 0.0
      %2772 = vmatmul.mubr.f32.gmra.mrb[0].mxu0 %v2516
      %v2773 = vpop.f32.mrb[0].mxu0
      %v2774 = vadd.f32 %v2575, %v2773
      %v2775 = vpop.f32.mrb[0].mxu0
      %2776 = vmatprep.mubr.f32.mxu0 0.0
      %2777 = vmatmul.mubr.f32.gmra.mrb[0].mxu0 %v2517
      %v2778 = vpop.f32.mrb[0].mxu0
      %v2779 = vadd.f32 %v2575, %v2778
      %v2780 = vpop.f32.mrb[0].mxu0
      %2781 = vmatprep.mubr.f32.mxu0 0.0
      %2782 = vmatmul.mubr.f32.gmra.mrb[0].mxu0 %v2518
      %v2783 = vpop.f32.mrb[0].mxu0
      %v2784 = vadd.f32 %v2575, %v2783
      %v2785 = vpop.f32.mrb[0].mxu0
      %2786 = vmatprep.mubr.f32.mxu0 0.0
      %2787 = vmatmul.mubr.f32.gmra.mrb[0].mxu0 %v2519
      %v2788 = vpop.f32.mrb[0].mxu0
      %v2789 = vadd.f32 %v2575, %v2788
      %v2790 = vpop.f32.mrb[0].mxu0
      %2791 = vmatprep.mubr.f32.mxu0 0.0
      %2792 = vmatmul.mubr.f32.gmra.mrb[0].mxu0 %v2520
      %v2793 = vpop.f32.mrb[0].mxu0
      %v2794 = vadd.f32 %v2575, %v2793
      %v2795 = vpop.f32.mrb[0].mxu0
      %2796 = vmatprep.mubr.f32.mxu0 0.0
      %2797 = vmatmul.mubr.f32.gmra.mrb[0].mxu0 %v2521
      %v2798 = vpop.f32.mrb[0].mxu0
      %v2799 = vadd.f32 %v2575, %v2798
      %v2800 = vpop.f32.mrb[0].mxu0
      %2801 = vmatprep.mubr.f32.mxu0 0.0
      %2802 = vmatmul.mubr.f32.gmra.mrb[0].mxu0 %v2522
      %v2803 = vpop.f32.mrb[0].mxu0
      %v2804 = vadd.f32 %v2575, %v2803
      %v2805 = vpop.f32.mrb[0].mxu0
      %2806 = vmatprep.mubr.f32.mxu0 0.0
      %2807 = vmatmul.mubr.f32.gmra.mrb[0].mxu0 %v2523
      %v2808 = vpop.f32.mrb[0].mxu0
      %v2809 = vadd.f32 %v2575, %v2808
      %v2810 = vpop.f32.mrb[0].mxu0
      %2811 = vmatprep.mubr.f32.mxu0 0.0
      %2812 = vmatmul.mubr.f32.gmra.mrb[0].mxu0 %v2524
      %v2813 = vpop.f32.mrb[0].mxu0
      %v2814 = vadd.f32 %v2575, %v2813
      %v2815 = vpop.f32.mrb[0].mxu0
      %2816 = vmatprep.mubr.f32.mxu0 0.0
      %2817 = vmatmul.mubr.f32.gmra.mrb[0].mxu0 %v2525
      %v2818 = vpop.f32.mrb[0].mxu0
      %v2819 = vadd.f32 %v2575, %v2818
      %v2820 = vpop.f32.mrb[0].mxu0
      %2821 = vmatprep.mubr.f32.mxu0 0.0
      %2822 = vmatmul.mubr.f32.gmra.mrb[0].mxu0 %v2526
      %v2823 = vpop.f32.mrb[0].mxu0
      %v2824 = vadd.f32 %v2575, %v2823
      %v2825 = vpop.f32.mrb[0].mxu0
      %2826 = vmatprep.mubr.f32.mxu0 0.0
      %2827 = vmatmul.mubr.f32.gmra.mrb[0].mxu0 %v2527
      %v2828 = vpop.f32.mrb[0].mxu0
      %v2829 = vadd.f32 %v2575, %v2828
      %v2830 = vpop.f32.mrb[0].mxu0
      %2831 = vmatprep.mubr.f32.mxu0 0.0
      %2832 = vmatmul.mubr.f32.gmra.mrb[0].mxu0 %v2528
      %v2833 = vpop.f32.mrb[0].mxu0
      %v2834 = vadd.f32 %v2575, %v2833
      %v2835 = vpop.f32.mrb[0].mxu0
      %2836 = vmatprep.mubr.f32.mxu0 0.0
      %2837 = vmatmul.mubr.f32.gmra.mrb[0].mxu0 %v2529
      %v2838 = vpop.f32.mrb[0].mxu0
      %v2839 = vadd.f32 %v2575, %v2838
      %v2840 = vpop.f32.mrb[0].mxu0
      %2841 = vmatprep.mubr.f32.mxu0 0.0
      %2842 = vmatmul.mubr.f32.gmra.mrb[0].mxu0 %v2530
      %v2843 = vpop.f32.mrb[0].mxu0
      %v2844 = vadd.f32 %v2575, %v2843
      %v2845 = vpop.f32.mrb[0].mxu0
      %2846 = vmatprep.mubr.f32.mxu0 0.0
      %2847 = vmatmul.mubr.f32.gmra.mrb[0].mxu0 %v2531
      %v2848 = vpop.f32.mrb[0].mxu0
      %v2849 = vadd.f32 %v2575, %v2848
      %v2850 = vpop.f32.mrb[0].mxu0
      %2851 = vmatprep.mubr.f32.mxu0 0.0
      %2852 = vmatmul.mubr.f32.gmra.mrb[0].mxu0 %v2532
      %v2853 = vpop.f32.mrb[0].mxu0
      %v2854 = vadd.f32 %v2575, %v2853
      %v2855 = vpop.f32.mrb[0].mxu0
      %2856 = vmatprep.mubr.f32.mxu0 0.0
      %2857 = vmatmul.mubr.f32.gmra.mrb[0].mxu0 %v2533
      %v2858 = vpop.f32.mrb[0].mxu0
      %v2859 = vadd.f32 %v2575, %v2858
      %v2860 = vpop.f32.mrb[0].mxu0
      %2861 = vmatprep.mubr.f32.mxu0 0.0
      %2862 = vmatmul.mubr.f32.gmra.mrb[0].mxu0 %v2534
      %v2863 = vpop.f32.mrb[0].mxu0
      %v2864 = vadd.f32 %v2575, %v2863
      %v2865 = vpop.f32.mrb[0].mxu0
      %2866 = vmatprep.mubr.f32.mxu0 0.0
      %2867 = vmatmul.mubr.f32.gmra.mrb[0].mxu0 %v2535
      %v2868 = vpop.f32.mrb[0].mxu0
      %v2869 = vadd.f32 %v2575, %v2868
      %v2870 = vpop.f32.mrb[0].mxu0
      %2871 = vmatprep.mubr.f32.mxu0 0.0
      %2872 = vmatmul.mubr.f32.gmra.mrb[0].mxu0 %v2536
      %v2873 = vpop.f32.mrb[0].mxu0
      %v2874 = vadd.f32 %v2575, %v2873
      %v2875 = vpop.f32.mrb[0].mxu0
      %2876 = vmatprep.mubr.f32.mxu0 0.0
      %2877 = vmatmul.mubr.f32.gmra.mrb[0].mxu0 %v2537
      %v2878 = vpop.f32.mrb[0].mxu0
      %v2879 = vadd.f32 %v2575, %v2878
      %v2880 = vpop.f32.mrb[0].mxu0
      %2881 = vmatprep.mubr.f32.mxu0 0.0
      %2882 = vmatmul.mubr.f32.gmra.mrb[0].mxu0 %v2538
      %v2883 = vpop.f32.mrb[0].mxu0
      %v2884 = vadd.f32 %v2575, %v2883
      %v2885 = vpop.f32.mrb[0].mxu0
      %2886 = vmatprep.mubr.f32.mxu0 0.0
      %2887 = vmatmul.mubr.f32.gmra.mrb[0].mxu0 %v2539
      %v2888 = vpop.f32.mrb[0].mxu0
      %v2889 = vadd.f32 %v2575, %v2888
      %v2890 = vpop.f32.mrb[0].mxu0
      %2891 = vmatprep.mubr.f32.mxu0 0.0
      %2892 = vmatmul.mubr.f32.gmra.mrb[0].mxu0 %v2540
      %v2893 = vpop.f32.mrb[0].mxu0
      %v2894 = vadd.f32 %v2575, %v2893
      %v2895 = vpop.f32.mrb[0].mxu0
      %2896 = vmatprep.mubr.f32.mxu0 0.0
      %2897 = vmatmul.mubr.f32.gmra.mrb[0].mxu0 %v2541
      %v2898 = vpop.f32.mrb[0].mxu0
      %v2899 = vadd.f32 %v2575, %v2898
      %v2900 = vpop.f32.mrb[0].mxu0
      %2901 = vmatprep.mubr.f32.mxu0 0.0
      %2902 = vmatmul.mubr.f32.gmra.mrb[0].mxu0 %v2542
      %v2903 = vpop.f32.mrb[0].mxu0
      %v2904 = vadd.f32 %v2575, %v2903
      %v2905 = vpop.f32.mrb[0].mxu0
      %2906 = vmatprep.mubr.f32.mxu0 0.0
      %2907 = vmatmul.mubr.f32.gmra.mrb[0].mxu0 %v2543
      %v2908 = vpop.f32.mrb[0].mxu0
      %v2909 = vadd.f32 %v2575, %v2908
      %v2910 = vpop.f32.mrb[0].mxu0
      %2911 = vmatprep.mubr.f32.mxu0 0.0
      %2912 = vmatmul.mubr.f32.gmra.mrb[0].mxu0 %v2544
      %v2913 = vpop.f32.mrb[0].mxu0
      %v2914 = vadd.f32 %v2575, %v2913
      %v2915 = vpop.f32.mrb[0].mxu0
      %2916 = vmatprep.mubr.f32.mxu0 0.0
      %2917 = vmatmul.mubr.f32.gmra.mrb[0].mxu0 %v2545
      %v2918 = vpop.f32.mrb[0].mxu0
      %v2919 = vadd.f32 %v2575, %v2918
      %v2920 = vpop.f32.mrb[0].mxu0
      %2921 = vmatprep.mubr.f32.mxu0 0.0
      %2922 = vmatmul.mubr.f32.gmra.mrb[0].mxu0 %v2546
      %v2923 = vpop.f32.mrb[0].mxu0
      %v2924 = vadd.f32 %v2575, %v2923
      %v2925 = vpop.f32.mrb[0].mxu0
      %2926 = vmatprep.mubr.f32.mxu0 0.0
      %2927 = vmatmul.mubr.f32.gmra.mrb[0].mxu0 %v2547
      %v2928 = vpop.f32.mrb[0].mxu0
      %v2929 = vadd.f32 %v2575, %v2928
      %v2930 = vpop.f32.mrb[0].mxu0
      %2931 = vmatprep.mubr.f32.mxu0 0.0
      %2932 = vmatmul.mubr.f32.gmra.mrb[0].mxu0 %v2548
      %v2933 = vpop.f32.mrb[0].mxu0
      %v2934 = vadd.f32 %v2575, %v2933
      %v2935 = vpop.f32.mrb[0].mxu0
      %2936 = vmatprep.mubr.f32.mxu0 0.0
      %2937 = vmatmul.mubr.f32.gmra.mrb[0].mxu0 %v2549
      %v2938 = vpop.f32.mrb[0].mxu0
      %v2939 = vadd.f32 %v2575, %v2938
      %v2940 = vpop.f32.mrb[0].mxu0
      %2941 = vmatprep.mubr.f32.mxu0 0.0
      %2942 = vmatmul.mubr.f32.gmra.mrb[0].mxu0 %v2550
      %v2943 = vpop.f32.mrb[0].mxu0
      %v2944 = vadd.f32 %v2575, %v2943
      %v2945 = vpop.f32.mrb[0].mxu0
      %2946 = vmatprep.mubr.f32.mxu0 0.0
      %2947 = vmatmul.mubr.f32.gmra.mrb[0].mxu0 %v2551
      %v2948 = vpop.f32.mrb[0].mxu0
      %v2949 = vadd.f32 %v2575, %v2948
      %v2950 = vpop.f32.mrb[0].mxu0
      %2951 = vmatprep.mubr.f32.mxu0 0.0
      %2952 = vmatmul.mubr.f32.gmra.mrb[0].mxu0 %v2552
      %v2953 = vpop.f32.mrb[0].mxu0
      %v2954 = vadd.f32 %v2575, %v2953
      %v2955 = vpop.f32.mrb[0].mxu0
      %2956 = vmatprep.mubr.f32.mxu0 0.0
      %2957 = vmatmul.mubr.f32.gmra.mrb[0].mxu0 %v2553
      %v2958 = vpop.f32.mrb[0].mxu0
      %v2959 = vadd.f32 %v2575, %v2958
      %v2960 = vpop.f32.mrb[0].mxu0
      %2961 = vdwg.mxu0
      %2962 = vadd.xlane.f32.xlu0 %v2644
      %v2963 = vpop.xlane.xlu0 %2962
      %2964 = vadd.xlane.f32.xlu0 %v2649
      %v2965 = vpop.xlane.xlu0 %2964
      %2966 = vadd.xlane.f32.xlu0 %v2654
      %v2967 = vpop.xlane.xlu0 %2966
      %2968 = vadd.xlane.f32.xlu0 %v2659
      %v2969 = vpop.xlane.xlu0 %2968
      %2970 = vadd.xlane.f32.xlu0 %v2664
      %v2971 = vpop.xlane.xlu0 %2970
      %2972 = vadd.xlane.f32.xlu0 %v2669
      %v2973 = vpop.xlane.xlu0 %2972
      %2974 = vadd.xlane.f32.xlu0 %v2674
      %v2975 = vpop.xlane.xlu0 %2974
      %2976 = vadd.xlane.f32.xlu0 %v2679
      %v2977 = vpop.xlane.xlu0 %2976
      %2978 = vadd.xlane.f32.xlu0 %v2684
      %v2979 = vpop.xlane.xlu0 %2978
      %2980 = vadd.xlane.f32.xlu0 %v2689
      %v2981 = vpop.xlane.xlu0 %2980
      %2982 = vadd.xlane.f32.xlu0 %v2694
      %v2983 = vpop.xlane.xlu0 %2982
      %2984 = vadd.xlane.f32.xlu0 %v2699
      %v2985 = vpop.xlane.xlu0 %2984
      %2986 = vadd.xlane.f32.xlu0 %v2704
      %v2987 = vpop.xlane.xlu0 %2986
      %2988 = vadd.xlane.f32.xlu0 %v2709
      %v2989 = vpop.xlane.xlu0 %2988
      %2990 = vadd.xlane.f32.xlu0 %v2714
      %v2991 = vpop.xlane.xlu0 %2990
      %2992 = vadd.xlane.f32.xlu0 %v2719
      %v2993 = vpop.xlane.xlu0 %2992
      %2994 = vadd.xlane.f32.xlu0 %v2724
      %v2995 = vpop.xlane.xlu0 %2994
      %2996 = vadd.xlane.f32.xlu0 %v2729
      %v2997 = vpop.xlane.xlu0 %2996
      %2998 = vadd.xlane.f32.xlu0 %v2734
      %v2999 = vpop.xlane.xlu0 %2998
      %3000 = vadd.xlane.f32.xlu0 %v2739
      %v3001 = vpop.xlane.xlu0 %3000
      %3002 = vadd.xlane.f32.xlu0 %v2744
      %v3003 = vpop.xlane.xlu0 %3002
      %3004 = vadd.xlane.f32.xlu0 %v2749
      %v3005 = vpop.xlane.xlu0 %3004
      %3006 = vadd.xlane.f32.xlu0 %v2754
      %v3007 = vpop.xlane.xlu0 %3006
      %3008 = vadd.xlane.f32.xlu0 %v2759
      %v3009 = vpop.xlane.xlu0 %3008
      %3010 = vadd.xlane.f32.xlu0 %v2764
      %v3011 = vpop.xlane.xlu0 %3010
      %3012 = vadd.xlane.f32.xlu0 %v2769
      %v3013 = vpop.xlane.xlu0 %3012
      %3014 = vadd.xlane.f32.xlu0 %v2774
      %v3015 = vpop.xlane.xlu0 %3014
      %3016 = vadd.xlane.f32.xlu0 %v2779
      %v3017 = vpop.xlane.xlu0 %3016
      %3018 = vadd.xlane.f32.xlu0 %v2784
      %v3019 = vpop.xlane.xlu0 %3018
      %3020 = vadd.xlane.f32.xlu0 %v2789
      %v3021 = vpop.xlane.xlu0 %3020
      %3022 = vadd.xlane.f32.xlu0 %v2794
      %v3023 = vpop.xlane.xlu0 %3022
      %3024 = vadd.xlane.f32.xlu0 %v2799
      %v3025 = vpop.xlane.xlu0 %3024
      %3026 = vadd.xlane.f32.xlu0 %v2804
      %v3027 = vpop.xlane.xlu0 %3026
      %3028 = vadd.xlane.f32.xlu0 %v2809
      %v3029 = vpop.xlane.xlu0 %3028
      %3030 = vadd.xlane.f32.xlu0 %v2814
      %v3031 = vpop.xlane.xlu0 %3030
      %3032 = vadd.xlane.f32.xlu0 %v2819
      %v3033 = vpop.xlane.xlu0 %3032
      %3034 = vadd.xlane.f32.xlu0 %v2824
      %v3035 = vpop.xlane.xlu0 %3034
      %3036 = vadd.xlane.f32.xlu0 %v2829
      %v3037 = vpop.xlane.xlu0 %3036
      %3038 = vadd.xlane.f32.xlu0 %v2834
      %v3039 = vpop.xlane.xlu0 %3038
      %3040 = vadd.xlane.f32.xlu0 %v2839
      %v3041 = vpop.xlane.xlu0 %3040
      %3042 = vadd.xlane.f32.xlu0 %v2844
      %v3043 = vpop.xlane.xlu0 %3042
      %3044 = vadd.xlane.f32.xlu0 %v2849
      %v3045 = vpop.xlane.xlu0 %3044
      %3046 = vadd.xlane.f32.xlu0 %v2854
      %v3047 = vpop.xlane.xlu0 %3046
      %3048 = vadd.xlane.f32.xlu0 %v2859
      %v3049 = vpop.xlane.xlu0 %3048
      %3050 = vadd.xlane.f32.xlu0 %v2864
      %v3051 = vpop.xlane.xlu0 %3050
      %3052 = vadd.xlane.f32.xlu0 %v2869
      %v3053 = vpop.xlane.xlu0 %3052
      %3054 = vadd.xlane.f32.xlu0 %v2874
      %v3055 = vpop.xlane.xlu0 %3054
      %3056 = vadd.xlane.f32.xlu0 %v2879
      %v3057 = vpop.xlane.xlu0 %3056
      %3058 = vadd.xlane.f32.xlu0 %v2884
      %v3059 = vpop.xlane.xlu0 %3058
      %3060 = vadd.xlane.f32.xlu0 %v2889
      %v3061 = vpop.xlane.xlu0 %3060
      %3062 = vadd.xlane.f32.xlu0 %v2894
      %v3063 = vpop.xlane.xlu0 %3062
      %3064 = vadd.xlane.f32.xlu0 %v2899
      %v3065 = vpop.xlane.xlu0 %3064
      %3066 = vadd.xlane.f32.xlu0 %v2904
      %v3067 = vpop.xlane.xlu0 %3066
      %3068 = vadd.xlane.f32.xlu0 %v2909
      %v3069 = vpop.xlane.xlu0 %3068
      %3070 = vadd.xlane.f32.xlu0 %v2914
      %v3071 = vpop.xlane.xlu0 %3070
      %3072 = vadd.xlane.f32.xlu0 %v2919
      %v3073 = vpop.xlane.xlu0 %3072
      %3074 = vadd.xlane.f32.xlu0 %v2924
      %v3075 = vpop.xlane.xlu0 %3074
      %3076 = vadd.xlane.f32.xlu0 %v2929
      %v3077 = vpop.xlane.xlu0 %3076
      %3078 = vadd.xlane.f32.xlu0 %v2934
      %v3079 = vpop.xlane.xlu0 %3078
      %3080 = vadd.xlane.f32.xlu0 %v2939
      %v3081 = vpop.xlane.xlu0 %3080
      %3082 = vadd.xlane.f32.xlu0 %v2944
      %v3083 = vpop.xlane.xlu0 %3082
      %3084 = vadd.xlane.f32.xlu0 %v2949
      %v3085 = vpop.xlane.xlu0 %3084
      %3086 = vadd.xlane.f32.xlu0 %v2954
      %v3087 = vpop.xlane.xlu0 %3086
      %3088 = vadd.xlane.f32.xlu0 %v2959
      %v3089 = vpop.xlane.xlu0 %3088
      %v3090 = vrcp.pop 128.0
      %v3091 = vmul.f32 %v2963, %v3090
      %v3092 = vmul.f32 %v2965, %v3090
      %v3093 = vmul.f32 %v2967, %v3090
      %v3094 = vmul.f32 %v2969, %v3090
      %v3095 = vmul.f32 %v2971, %v3090
      %v3096 = vmul.f32 %v2973, %v3090
      %v3097 = vmul.f32 %v2975, %v3090
      %v3098 = vmul.f32 %v2977, %v3090
      %v3099 = vmul.f32 %v2979, %v3090
      %v3100 = vmul.f32 %v2981, %v3090
      %v3101 = vmul.f32 %v2983, %v3090
      %v3102 = vmul.f32 %v2985, %v3090
      %v3103 = vmul.f32 %v2987, %v3090
      %v3104 = vmul.f32 %v2989, %v3090
      %v3105 = vmul.f32 %v2991, %v3090
      %v3106 = vmul.f32 %v2993, %v3090
      %v3107 = vmul.f32 %v2995, %v3090
      %v3108 = vmul.f32 %v2997, %v3090
      %v3109 = vmul.f32 %v2999, %v3090
      %v3110 = vmul.f32 %v3001, %v3090
      %v3111 = vmul.f32 %v3003, %v3090
      %v3112 = vmul.f32 %v3005, %v3090
      %v3113 = vmul.f32 %v3007, %v3090
      %v3114 = vmul.f32 %v3009, %v3090
      %v3115 = vmul.f32 %v3011, %v3090
      %v3116 = vmul.f32 %v3013, %v3090
      %v3117 = vmul.f32 %v3015, %v3090
      %v3118 = vmul.f32 %v3017, %v3090
      %v3119 = vmul.f32 %v3019, %v3090
      %v3120 = vmul.f32 %v3021, %v3090
      %v3121 = vmul.f32 %v3023, %v3090
      %v3122 = vmul.f32 %v3025, %v3090
      %v3123 = vmul.f32 %v3027, %v3090
      %v3124 = vmul.f32 %v3029, %v3090
      %v3125 = vmul.f32 %v3031, %v3090
      %v3126 = vmul.f32 %v3033, %v3090
      %v3127 = vmul.f32 %v3035, %v3090
      %v3128 = vmul.f32 %v3037, %v3090
      %v3129 = vmul.f32 %v3039, %v3090
      %v3130 = vmul.f32 %v3041, %v3090
      %v3131 = vmul.f32 %v3043, %v3090
      %v3132 = vmul.f32 %v3045, %v3090
      %v3133 = vmul.f32 %v3047, %v3090
      %v3134 = vmul.f32 %v3049, %v3090
      %v3135 = vmul.f32 %v3051, %v3090
      %v3136 = vmul.f32 %v3053, %v3090
      %v3137 = vmul.f32 %v3055, %v3090
      %v3138 = vmul.f32 %v3057, %v3090
      %v3139 = vmul.f32 %v3059, %v3090
      %v3140 = vmul.f32 %v3061, %v3090
      %v3141 = vmul.f32 %v3063, %v3090
      %v3142 = vmul.f32 %v3065, %v3090
      %v3143 = vmul.f32 %v3067, %v3090
      %v3144 = vmul.f32 %v3069, %v3090
      %v3145 = vmul.f32 %v3071, %v3090
      %v3146 = vmul.f32 %v3073, %v3090
      %v3147 = vmul.f32 %v3075, %v3090
      %v3148 = vmul.f32 %v3077, %v3090
      %v3149 = vmul.f32 %v3079, %v3090
      %v3150 = vmul.f32 %v3081, %v3090
      %v3151 = vmul.f32 %v3083, %v3090
      %v3152 = vmul.f32 %v3085, %v3090
      %v3153 = vmul.f32 %v3087, %v3090
      %v3154 = vmul.f32 %v3089, %v3090
      %v3155 = vsub.f32 %v2644, %v3091
      %v3156 = vsub.f32 %v2649, %v3092
      %v3157 = vsub.f32 %v2654, %v3093
      %v3158 = vsub.f32 %v2659, %v3094
      %v3159 = vsub.f32 %v2664, %v3095
      %v3160 = vsub.f32 %v2669, %v3096
      %v3161 = vsub.f32 %v2674, %v3097
      %v3162 = vsub.f32 %v2679, %v3098
      %v3163 = vsub.f32 %v2684, %v3099
      %v3164 = vsub.f32 %v2689, %v3100
      %v3165 = vsub.f32 %v2694, %v3101
      %v3166 = vsub.f32 %v2699, %v3102
      %v3167 = vsub.f32 %v2704, %v3103
      %v3168 = vsub.f32 %v2709, %v3104
      %v3169 = vsub.f32 %v2714, %v3105
      %v3170 = vsub.f32 %v2719, %v3106
      %v3171 = vsub.f32 %v2724, %v3107
      %v3172 = vsub.f32 %v2729, %v3108
      %v3173 = vsub.f32 %v2734, %v3109
      %v3174 = vsub.f32 %v2739, %v3110
      %v3175 = vsub.f32 %v2744, %v3111
      %v3176 = vsub.f32 %v2749, %v3112
      %v3177 = vsub.f32 %v2754, %v3113
      %v3178 = vsub.f32 %v2759, %v3114
      %v3179 = vsub.f32 %v2764, %v3115
      %v3180 = vsub.f32 %v2769, %v3116
      %v3181 = vsub.f32 %v2774, %v3117
      %v3182 = vsub.f32 %v2779, %v3118
      %v3183 = vsub.f32 %v2784, %v3119
      %v3184 = vsub.f32 %v2789, %v3120
      %v3185 = vsub.f32 %v2794, %v3121
      %v3186 = vsub.f32 %v2799, %v3122
      %v3187 = vsub.f32 %v2804, %v3123
      %v3188 = vsub.f32 %v2809, %v3124
      %v3189 = vsub.f32 %v2814, %v3125
      %v3190 = vsub.f32 %v2819, %v3126
      %v3191 = vsub.f32 %v2824, %v3127
      %v3192 = vsub.f32 %v2829, %v3128
      %v3193 = vsub.f32 %v2834, %v3129
      %v3194 = vsub.f32 %v2839, %v3130
      %v3195 = vsub.f32 %v2844, %v3131
      %v3196 = vsub.f32 %v2849, %v3132
      %v3197 = vsub.f32 %v2854, %v3133
      %v3198 = vsub.f32 %v2859, %v3134
      %v3199 = vsub.f32 %v2864, %v3135
      %v3200 = vsub.f32 %v2869, %v3136
      %v3201 = vsub.f32 %v2874, %v3137
      %v3202 = vsub.f32 %v2879, %v3138
      %v3203 = vsub.f32 %v2884, %v3139
      %v3204 = vsub.f32 %v2889, %v3140
      %v3205 = vsub.f32 %v2894, %v3141
      %v3206 = vsub.f32 %v2899, %v3142
      %v3207 = vsub.f32 %v2904, %v3143
      %v3208 = vsub.f32 %v2909, %v3144
      %v3209 = vsub.f32 %v2914, %v3145
      %v3210 = vsub.f32 %v2919, %v3146
      %v3211 = vsub.f32 %v2924, %v3147
      %v3212 = vsub.f32 %v2929, %v3148
      %v3213 = vsub.f32 %v2934, %v3149
      %v3214 = vsub.f32 %v2939, %v3150
      %v3215 = vsub.f32 %v2944, %v3151
      %v3216 = vsub.f32 %v2949, %v3152
      %v3217 = vsub.f32 %v2954, %v3153
      %v3218 = vsub.f32 %v2959, %v3154
      %v3219 = vmul.f32 %v3155, %v3155
      %v3220 = vmul.f32 %v3156, %v3156
      %v3221 = vmul.f32 %v3157, %v3157
      %v3222 = vmul.f32 %v3158, %v3158
      %v3223 = vmul.f32 %v3159, %v3159
      %v3224 = vmul.f32 %v3160, %v3160
      %v3225 = vmul.f32 %v3161, %v3161
      %v3226 = vmul.f32 %v3162, %v3162
      %v3227 = vmul.f32 %v3163, %v3163
      %v3228 = vmul.f32 %v3164, %v3164
      %v3229 = vmul.f32 %v3165, %v3165
      %v3230 = vmul.f32 %v3166, %v3166
      %v3231 = vmul.f32 %v3167, %v3167
      %v3232 = vmul.f32 %v3168, %v3168
      %v3233 = vmul.f32 %v3169, %v3169
      %v3234 = vmul.f32 %v3170, %v3170
      %v3235 = vmul.f32 %v3171, %v3171
      %v3236 = vmul.f32 %v3172, %v3172
      %v3237 = vmul.f32 %v3173, %v3173
      %v3238 = vmul.f32 %v3174, %v3174
      %v3239 = vmul.f32 %v3175, %v3175
      %v3240 = vmul.f32 %v3176, %v3176
      %v3241 = vmul.f32 %v3177, %v3177
      %v3242 = vmul.f32 %v3178, %v3178
      %v3243 = vmul.f32 %v3179, %v3179
      %v3244 = vmul.f32 %v3180, %v3180
      %v3245 = vmul.f32 %v3181, %v3181
      %v3246 = vmul.f32 %v3182, %v3182
      %v3247 = vmul.f32 %v3183, %v3183
      %v3248 = vmul.f32 %v3184, %v3184
      %v3249 = vmul.f32 %v3185, %v3185
      %v3250 = vmul.f32 %v3186, %v3186
      %v3251 = vmul.f32 %v3187, %v3187
      %v3252 = vmul.f32 %v3188, %v3188
      %v3253 = vmul.f32 %v3189, %v3189
      %v3254 = vmul.f32 %v3190, %v3190
      %v3255 = vmul.f32 %v3191, %v3191
      %v3256 = vmul.f32 %v3192, %v3192
      %v3257 = vmul.f32 %v3193, %v3193
      %v3258 = vmul.f32 %v3194, %v3194
      %v3259 = vmul.f32 %v3195, %v3195
      %v3260 = vmul.f32 %v3196, %v3196
      %v3261 = vmul.f32 %v3197, %v3197
      %v3262 = vmul.f32 %v3198, %v3198
      %v3263 = vmul.f32 %v3199, %v3199
      %v3264 = vmul.f32 %v3200, %v3200
      %v3265 = vmul.f32 %v3201, %v3201
      %v3266 = vmul.f32 %v3202, %v3202
      %v3267 = vmul.f32 %v3203, %v3203
      %v3268 = vmul.f32 %v3204, %v3204
      %v3269 = vmul.f32 %v3205, %v3205
      %v3270 = vmul.f32 %v3206, %v3206
      %v3271 = vmul.f32 %v3207, %v3207
      %v3272 = vmul.f32 %v3208, %v3208
      %v3273 = vmul.f32 %v3209, %v3209
      %v3274 = vmul.f32 %v3210, %v3210
      %v3275 = vmul.f32 %v3211, %v3211
      %v3276 = vmul.f32 %v3212, %v3212
      %v3277 = vmul.f32 %v3213, %v3213
      %v3278 = vmul.f32 %v3214, %v3214
      %v3279 = vmul.f32 %v3215, %v3215
      %v3280 = vmul.f32 %v3216, %v3216
      %v3281 = vmul.f32 %v3217, %v3217
      %v3282 = vmul.f32 %v3218, %v3218
      %3283 = vadd.xlane.f32.xlu0 %v3219
      %v3284 = vpop.xlane.xlu0 %3283
      %3285 = vadd.xlane.f32.xlu0 %v3220
      %v3286 = vpop.xlane.xlu0 %3285
      %3287 = vadd.xlane.f32.xlu0 %v3221
      %v3288 = vpop.xlane.xlu0 %3287
      %3289 = vadd.xlane.f32.xlu0 %v3222
      %v3290 = vpop.xlane.xlu0 %3289
      %3291 = vadd.xlane.f32.xlu0 %v3223
      %v3292 = vpop.xlane.xlu0 %3291
      %3293 = vadd.xlane.f32.xlu0 %v3224
      %v3294 = vpop.xlane.xlu0 %3293
      %3295 = vadd.xlane.f32.xlu0 %v3225
      %v3296 = vpop.xlane.xlu0 %3295
      %3297 = vadd.xlane.f32.xlu0 %v3226
      %v3298 = vpop.xlane.xlu0 %3297
      %3299 = vadd.xlane.f32.xlu0 %v3227
      %v3300 = vpop.xlane.xlu0 %3299
      %3301 = vadd.xlane.f32.xlu0 %v3228
      %v3302 = vpop.xlane.xlu0 %3301
      %3303 = vadd.xlane.f32.xlu0 %v3229
      %v3304 = vpop.xlane.xlu0 %3303
      %3305 = vadd.xlane.f32.xlu0 %v3230
      %v3306 = vpop.xlane.xlu0 %3305
      %3307 = vadd.xlane.f32.xlu0 %v3231
      %v3308 = vpop.xlane.xlu0 %3307
      %3309 = vadd.xlane.f32.xlu0 %v3232
      %v3310 = vpop.xlane.xlu0 %3309
      %3311 = vadd.xlane.f32.xlu0 %v3233
      %v3312 = vpop.xlane.xlu0 %3311
      %3313 = vadd.xlane.f32.xlu0 %v3234
      %v3314 = vpop.xlane.xlu0 %3313
      %3315 = vadd.xlane.f32.xlu0 %v3235
      %v3316 = vpop.xlane.xlu0 %3315
      %3317 = vadd.xlane.f32.xlu0 %v3236
      %v3318 = vpop.xlane.xlu0 %3317
      %3319 = vadd.xlane.f32.xlu0 %v3237
      %v3320 = vpop.xlane.xlu0 %3319
      %3321 = vadd.xlane.f32.xlu0 %v3238
      %v3322 = vpop.xlane.xlu0 %3321
      %3323 = vadd.xlane.f32.xlu0 %v3239
      %v3324 = vpop.xlane.xlu0 %3323
      %3325 = vadd.xlane.f32.xlu0 %v3240
      %v3326 = vpop.xlane.xlu0 %3325
      %3327 = vadd.xlane.f32.xlu0 %v3241
      %v3328 = vpop.xlane.xlu0 %3327
      %3329 = vadd.xlane.f32.xlu0 %v3242
      %v3330 = vpop.xlane.xlu0 %3329
      %3331 = vadd.xlane.f32.xlu0 %v3243
      %v3332 = vpop.xlane.xlu0 %3331
      %3333 = vadd.xlane.f32.xlu0 %v3244
      %v3334 = vpop.xlane.xlu0 %3333
      %3335 = vadd.xlane.f32.xlu0 %v3245
      %v3336 = vpop.xlane.xlu0 %3335
      %3337 = vadd.xlane.f32.xlu0 %v3246
      %v3338 = vpop.xlane.xlu0 %3337
      %3339 = vadd.xlane.f32.xlu0 %v3247
      %v3340 = vpop.xlane.xlu0 %3339
      %3341 = vadd.xlane.f32.xlu0 %v3248
      %v3342 = vpop.xlane.xlu0 %3341
      %3343 = vadd.xlane.f32.xlu0 %v3249
      %v3344 = vpop.xlane.xlu0 %3343
      %3345 = vadd.xlane.f32.xlu0 %v3250
      %v3346 = vpop.xlane.xlu0 %3345
      %3347 = vadd.xlane.f32.xlu0 %v3251
      %v3348 = vpop.xlane.xlu0 %3347
      %3349 = vadd.xlane.f32.xlu0 %v3252
      %v3350 = vpop.xlane.xlu0 %3349
      %3351 = vadd.xlane.f32.xlu0 %v3253
      %v3352 = vpop.xlane.xlu0 %3351
      %3353 = vadd.xlane.f32.xlu0 %v3254
      %v3354 = vpop.xlane.xlu0 %3353
      %3355 = vadd.xlane.f32.xlu0 %v3255
      %v3356 = vpop.xlane.xlu0 %3355
      %3357 = vadd.xlane.f32.xlu0 %v3256
      %v3358 = vpop.xlane.xlu0 %3357
      %3359 = vadd.xlane.f32.xlu0 %v3257
      %v3360 = vpop.xlane.xlu0 %3359
      %3361 = vadd.xlane.f32.xlu0 %v3258
      %v3362 = vpop.xlane.xlu0 %3361
      %3363 = vadd.xlane.f32.xlu0 %v3259
      %v3364 = vpop.xlane.xlu0 %3363
      %3365 = vadd.xlane.f32.xlu0 %v3260
      %v3366 = vpop.xlane.xlu0 %3365
      %3367 = vadd.xlane.f32.xlu0 %v3261
      %v3368 = vpop.xlane.xlu0 %3367
      %3369 = vadd.xlane.f32.xlu0 %v3262
      %v3370 = vpop.xlane.xlu0 %3369
      %3371 = vadd.xlane.f32.xlu0 %v3263
      %v3372 = vpop.xlane.xlu0 %3371
      %3373 = vadd.xlane.f32.xlu0 %v3264
      %v3374 = vpop.xlane.xlu0 %3373
      %3375 = vadd.xlane.f32.xlu0 %v3265
      %v3376 = vpop.xlane.xlu0 %3375
      %3377 = vadd.xlane.f32.xlu0 %v3266
      %v3378 = vpop.xlane.xlu0 %3377
      %3379 = vadd.xlane.f32.xlu0 %v3267
      %v3380 = vpop.xlane.xlu0 %3379
      %3381 = vadd.xlane.f32.xlu0 %v3268
      %v3382 = vpop.xlane.xlu0 %3381
      %3383 = vadd.xlane.f32.xlu0 %v3269
      %v3384 = vpop.xlane.xlu0 %3383
      %3385 = vadd.xlane.f32.xlu0 %v3270
      %v3386 = vpop.xlane.xlu0 %3385
      %3387 = vadd.xlane.f32.xlu0 %v3271
      %v3388 = vpop.xlane.xlu0 %3387
      %3389 = vadd.xlane.f32.xlu0 %v3272
      %v3390 = vpop.xlane.xlu0 %3389
      %3391 = vadd.xlane.f32.xlu0 %v3273
      %v3392 = vpop.xlane.xlu0 %3391
      %3393 = vadd.xlane.f32.xlu0 %v3274
      %v3394 = vpop.xlane.xlu0 %3393
      %3395 = vadd.xlane.f32.xlu0 %v3275
      %v3396 = vpop.xlane.xlu0 %3395
      %3397 = vadd.xlane.f32.xlu0 %v3276
      %v3398 = vpop.xlane.xlu0 %3397
      %3399 = vadd.xlane.f32.xlu0 %v3277
      %v3400 = vpop.xlane.xlu0 %3399
      %3401 = vadd.xlane.f32.xlu0 %v3278
      %v3402 = vpop.xlane.xlu0 %3401
      %3403 = vadd.xlane.f32.xlu0 %v3279
      %v3404 = vpop.xlane.xlu0 %3403
      %3405 = vadd.xlane.f32.xlu0 %v3280
      %v3406 = vpop.xlane.xlu0 %3405
      %3407 = vadd.xlane.f32.xlu0 %v3281
      %v3408 = vpop.xlane.xlu0 %3407
      %3409 = vadd.xlane.f32.xlu0 %v3282
      %v3410 = vpop.xlane.xlu0 %3409
      %v3411 = vmul.f32 %v3284, %v3090
      %v3412 = vmul.f32 %v3286, %v3090
      %v3413 = vmul.f32 %v3288, %v3090
      %v3414 = vmul.f32 %v3290, %v3090
      %v3415 = vmul.f32 %v3292, %v3090
      %v3416 = vmul.f32 %v3294, %v3090
      %v3417 = vmul.f32 %v3296, %v3090
      %v3418 = vmul.f32 %v3298, %v3090
      %v3419 = vmul.f32 %v3300, %v3090
      %v3420 = vmul.f32 %v3302, %v3090
      %v3421 = vmul.f32 %v3304, %v3090
      %v3422 = vmul.f32 %v3306, %v3090
      %v3423 = vmul.f32 %v3308, %v3090
      %v3424 = vmul.f32 %v3310, %v3090
      %v3425 = vmul.f32 %v3312, %v3090
      %v3426 = vmul.f32 %v3314, %v3090
      %v3427 = vmul.f32 %v3316, %v3090
      %v3428 = vmul.f32 %v3318, %v3090
      %v3429 = vmul.f32 %v3320, %v3090
      %v3430 = vmul.f32 %v3322, %v3090
      %v3431 = vmul.f32 %v3324, %v3090
      %v3432 = vmul.f32 %v3326, %v3090
      %v3433 = vmul.f32 %v3328, %v3090
      %v3434 = vmul.f32 %v3330, %v3090
      %v3435 = vmul.f32 %v3332, %v3090
      %v3436 = vmul.f32 %v3334, %v3090
      %v3437 = vmul.f32 %v3336, %v3090
      %v3438 = vmul.f32 %v3338, %v3090
      %v3439 = vmul.f32 %v3340, %v3090
      %v3440 = vmul.f32 %v3342, %v3090
      %v3441 = vmul.f32 %v3344, %v3090
      %v3442 = vmul.f32 %v3346, %v3090
      %v3443 = vmul.f32 %v3348, %v3090
      %v3444 = vmul.f32 %v3350, %v3090
      %v3445 = vmul.f32 %v3352, %v3090
      %v3446 = vmul.f32 %v3354, %v3090
      %v3447 = vmul.f32 %v3356, %v3090
      %v3448 = vmul.f32 %v3358, %v3090
      %v3449 = vmul.f32 %v3360, %v3090
      %v3450 = vmul.f32 %v3362, %v3090
      %v3451 = vmul.f32 %v3364, %v3090
      %v3452 = vmul.f32 %v3366, %v3090
      %v3453 = vmul.f32 %v3368, %v3090
      %v3454 = vmul.f32 %v3370, %v3090
      %v3455 = vmul.f32 %v3372, %v3090
      %v3456 = vmul.f32 %v3374, %v3090
      %v3457 = vmul.f32 %v3376, %v3090
      %v3458 = vmul.f32 %v3378, %v3090
      %v3459 = vmul.f32 %v3380, %v3090
      %v3460 = vmul.f32 %v3382, %v3090
      %v3461 = vmul.f32 %v3384, %v3090
      %v3462 = vmul.f32 %v3386, %v3090
      %v3463 = vmul.f32 %v3388, %v3090
      %v3464 = vmul.f32 %v3390, %v3090
      %v3465 = vmul.f32 %v3392, %v3090
      %v3466 = vmul.f32 %v3394, %v3090
      %v3467 = vmul.f32 %v3396, %v3090
      %v3468 = vmul.f32 %v3398, %v3090
      %v3469 = vmul.f32 %v3400, %v3090
      %v3470 = vmul.f32 %v3402, %v3090
      %v3471 = vmul.f32 %v3404, %v3090
      %v3472 = vmul.f32 %v3406, %v3090
      %v3473 = vmul.f32 %v3408, %v3090
      %v3474 = vmul.f32 %v3410, %v3090
      %v3475 = vadd.f32 %v3411, 1e-05
      %v3476 = vadd.f32 %v3412, 1e-05
      %v3477 = vadd.f32 %v3413, 1e-05
      %v3478 = vadd.f32 %v3414, 1e-05
      %v3479 = vadd.f32 %v3415, 1e-05
      %v3480 = vadd.f32 %v3416, 1e-05
      %v3481 = vadd.f32 %v3417, 1e-05
      %v3482 = vadd.f32 %v3418, 1e-05
      %v3483 = vadd.f32 %v3419, 1e-05
      %v3484 = vadd.f32 %v3420, 1e-05
      %v3485 = vadd.f32 %v3421, 1e-05
      %v3486 = vadd.f32 %v3422, 1e-05
      %v3487 = vadd.f32 %v3423, 1e-05
      %v3488 = vadd.f32 %v3424, 1e-05
      %v3489 = vadd.f32 %v3425, 1e-05
      %v3490 = vadd.f32 %v3426, 1e-05
      %v3491 = vadd.f32 %v3427, 1e-05
      %v3492 = vadd.f32 %v3428, 1e-05
      %v3493 = vadd.f32 %v3429, 1e-05
      %v3494 = vadd.f32 %v3430, 1e-05
      %v3495 = vadd.f32 %v3431, 1e-05
      %v3496 = vadd.f32 %v3432, 1e-05
      %v3497 = vadd.f32 %v3433, 1e-05
      %v3498 = vadd.f32 %v3434, 1e-05
      %v3499 = vadd.f32 %v3435, 1e-05
      %v3500 = vadd.f32 %v3436, 1e-05
      %v3501 = vadd.f32 %v3437, 1e-05
      %v3502 = vadd.f32 %v3438, 1e-05
      %v3503 = vadd.f32 %v3439, 1e-05
      %v3504 = vadd.f32 %v3440, 1e-05
      %v3505 = vadd.f32 %v3441, 1e-05
      %v3506 = vadd.f32 %v3442, 1e-05
      %v3507 = vadd.f32 %v3443, 1e-05
      %v3508 = vadd.f32 %v3444, 1e-05
      %v3509 = vadd.f32 %v3445, 1e-05
      %v3510 = vadd.f32 %v3446, 1e-05
      %v3511 = vadd.f32 %v3447, 1e-05
      %v3512 = vadd.f32 %v3448, 1e-05
      %v3513 = vadd.f32 %v3449, 1e-05
      %v3514 = vadd.f32 %v3450, 1e-05
      %v3515 = vadd.f32 %v3451, 1e-05
      %v3516 = vadd.f32 %v3452, 1e-05
      %v3517 = vadd.f32 %v3453, 1e-05
      %v3518 = vadd.f32 %v3454, 1e-05
      %v3519 = vadd.f32 %v3455, 1e-05
      %v3520 = vadd.f32 %v3456, 1e-05
      %v3521 = vadd.f32 %v3457, 1e-05
      %v3522 = vadd.f32 %v3458, 1e-05
      %v3523 = vadd.f32 %v3459, 1e-05
      %v3524 = vadd.f32 %v3460, 1e-05
      %v3525 = vadd.f32 %v3461, 1e-05
      %v3526 = vadd.f32 %v3462, 1e-05
      %v3527 = vadd.f32 %v3463, 1e-05
      %v3528 = vadd.f32 %v3464, 1e-05
      %v3529 = vadd.f32 %v3465, 1e-05
      %v3530 = vadd.f32 %v3466, 1e-05
      %v3531 = vadd.f32 %v3467, 1e-05
      %v3532 = vadd.f32 %v3468, 1e-05
      %v3533 = vadd.f32 %v3469, 1e-05
      %v3534 = vadd.f32 %v3470, 1e-05
      %v3535 = vadd.f32 %v3471, 1e-05
      %v3536 = vadd.f32 %v3472, 1e-05
      %v3537 = vadd.f32 %v3473, 1e-05
      %v3538 = vadd.f32 %v3474, 1e-05
      %v3539 = vrsqrt.pop %v3475
      %v3540 = vrsqrt.pop %v3476
      %v3541 = vrsqrt.pop %v3477
      %v3542 = vrsqrt.pop %v3478
      %v3543 = vrsqrt.pop %v3479
      %v3544 = vrsqrt.pop %v3480
      %v3545 = vrsqrt.pop %v3481
      %v3546 = vrsqrt.pop %v3482
      %v3547 = vrsqrt.pop %v3483
      %v3548 = vrsqrt.pop %v3484
      %v3549 = vrsqrt.pop %v3485
      %v3550 = vrsqrt.pop %v3486
      %v3551 = vrsqrt.pop %v3487
      %v3552 = vrsqrt.pop %v3488
      %v3553 = vrsqrt.pop %v3489
      %v3554 = vrsqrt.pop %v3490
      %v3555 = vrsqrt.pop %v3491
      %v3556 = vrsqrt.pop %v3492
      %v3557 = vrsqrt.pop %v3493
      %v3558 = vrsqrt.pop %v3494
      %v3559 = vrsqrt.pop %v3495
      %v3560 = vrsqrt.pop %v3496
      %v3561 = vrsqrt.pop %v3497
      %v3562 = vrsqrt.pop %v3498
      %v3563 = vrsqrt.pop %v3499
      %v3564 = vrsqrt.pop %v3500
      %v3565 = vrsqrt.pop %v3501
      %v3566 = vrsqrt.pop %v3502
      %v3567 = vrsqrt.pop %v3503
      %v3568 = vrsqrt.pop %v3504
      %v3569 = vrsqrt.pop %v3505
      %v3570 = vrsqrt.pop %v3506
      %v3571 = vrsqrt.pop %v3507
      %v3572 = vrsqrt.pop %v3508
      %v3573 = vrsqrt.pop %v3509
      %v3574 = vrsqrt.pop %v3510
      %v3575 = vrsqrt.pop %v3511
      %v3576 = vrsqrt.pop %v3512
      %v3577 = vrsqrt.pop %v3513
      %v3578 = vrsqrt.pop %v3514
      %v3579 = vrsqrt.pop %v3515
      %v3580 = vrsqrt.pop %v3516
      %v3581 = vrsqrt.pop %v3517
      %v3582 = vrsqrt.pop %v3518
      %v3583 = vrsqrt.pop %v3519
      %v3584 = vrsqrt.pop %v3520
      %v3585 = vrsqrt.pop %v3521
      %v3586 = vrsqrt.pop %v3522
      %v3587 = vrsqrt.pop %v3523
      %v3588 = vrsqrt.pop %v3524
      %v3589 = vrsqrt.pop %v3525
      %v3590 = vrsqrt.pop %v3526
      %v3591 = vrsqrt.pop %v3527
      %v3592 = vrsqrt.pop %v3528
      %v3593 = vrsqrt.pop %v3529
      %v3594 = vrsqrt.pop %v3530
      %v3595 = vrsqrt.pop %v3531
      %v3596 = vrsqrt.pop %v3532
      %v3597 = vrsqrt.pop %v3533
      %v3598 = vrsqrt.pop %v3534
      %v3599 = vrsqrt.pop %v3535
      %v3600 = vrsqrt.pop %v3536
      %v3601 = vrsqrt.pop %v3537
      %v3602 = vrsqrt.pop %v3538
      %v3603 = vmul.f32 %v3155, %v3539
      %v3604 = vmul.f32 %v3156, %v3540
      %v3605 = vmul.f32 %v3157, %v3541
      %v3606 = vmul.f32 %v3158, %v3542
      %v3607 = vmul.f32 %v3159, %v3543
      %v3608 = vmul.f32 %v3160, %v3544
      %v3609 = vmul.f32 %v3161, %v3545
      %v3610 = vmul.f32 %v3162, %v3546
      %v3611 = vmul.f32 %v3163, %v3547
      %v3612 = vmul.f32 %v3164, %v3548
      %v3613 = vmul.f32 %v3165, %v3549
      %v3614 = vmul.f32 %v3166, %v3550
      %v3615 = vmul.f32 %v3167, %v3551
      %v3616 = vmul.f32 %v3168, %v3552
      %v3617 = vmul.f32 %v3169, %v3553
      %v3618 = vmul.f32 %v3170, %v3554
      %v3619 = vmul.f32 %v3171, %v3555
      %v3620 = vmul.f32 %v3172, %v3556
      %v3621 = vmul.f32 %v3173, %v3557
      %v3622 = vmul.f32 %v3174, %v3558
      %v3623 = vmul.f32 %v3175, %v3559
      %v3624 = vmul.f32 %v3176, %v3560
      %v3625 = vmul.f32 %v3177, %v3561
      %v3626 = vmul.f32 %v3178, %v3562
      %v3627 = vmul.f32 %v3179, %v3563
      %v3628 = vmul.f32 %v3180, %v3564
      %v3629 = vmul.f32 %v3181, %v3565
      %v3630 = vmul.f32 %v3182, %v3566
      %v3631 = vmul.f32 %v3183, %v3567
      %v3632 = vmul.f32 %v3184, %v3568
      %v3633 = vmul.f32 %v3185, %v3569
      %v3634 = vmul.f32 %v3186, %v3570
      %v3635 = vmul.f32 %v3187, %v3571
      %v3636 = vmul.f32 %v3188, %v3572
      %v3637 = vmul.f32 %v3189, %v3573
      %v3638 = vmul.f32 %v3190, %v3574
      %v3639 = vmul.f32 %v3191, %v3575
      %v3640 = vmul.f32 %v3192, %v3576
      %v3641 = vmul.f32 %v3193, %v3577
      %v3642 = vmul.f32 %v3194, %v3578
      %v3643 = vmul.f32 %v3195, %v3579
      %v3644 = vmul.f32 %v3196, %v3580
      %v3645 = vmul.f32 %v3197, %v3581
      %v3646 = vmul.f32 %v3198, %v3582
      %v3647 = vmul.f32 %v3199, %v3583
      %v3648 = vmul.f32 %v3200, %v3584
      %v3649 = vmul.f32 %v3201, %v3585
      %v3650 = vmul.f32 %v3202, %v3586
      %v3651 = vmul.f32 %v3203, %v3587
      %v3652 = vmul.f32 %v3204, %v3588
      %v3653 = vmul.f32 %v3205, %v3589
      %v3654 = vmul.f32 %v3206, %v3590
      %v3655 = vmul.f32 %v3207, %v3591
      %v3656 = vmul.f32 %v3208, %v3592
      %v3657 = vmul.f32 %v3209, %v3593
      %v3658 = vmul.f32 %v3210, %v3594
      %v3659 = vmul.f32 %v3211, %v3595
      %v3660 = vmul.f32 %v3212, %v3596
      %v3661 = vmul.f32 %v3213, %v3597
      %v3662 = vmul.f32 %v3214, %v3598
      %v3663 = vmul.f32 %v3215, %v3599
      %v3664 = vmul.f32 %v3216, %v3600
      %v3665 = vmul.f32 %v3217, %v3601
      %v3666 = vmul.f32 %v3218, %v3602
      %v3667 = vld [vmem:[%s11] sm:$0x1]
      %v3669 = vlaneseq
      %v3670 = vshrl.u32 %v3669, 7
      %v3671 = vsub.s32 0, %v3670
      %v3672 = vrot.slane %v3667, %v3671
      %v3674 = vmul.f32 %v3603, %v3672
      %v3675 = vmul.f32 %v3604, %v3672
      %v3676 = vmul.f32 %v3605, %v3672
      %v3677 = vmul.f32 %v3606, %v3672
      %v3678 = vmul.f32 %v3607, %v3672
      %v3679 = vmul.f32 %v3608, %v3672
      %v3680 = vmul.f32 %v3609, %v3672
      %v3681 = vmul.f32 %v3610, %v3672
      %v3682 = vmul.f32 %v3611, %v3672
      %v3683 = vmul.f32 %v3612, %v3672
      %v3684 = vmul.f32 %v3613, %v3672
      %v3685 = vmul.f32 %v3614, %v3672
      %v3686 = vmul.f32 %v3615, %v3672
      %v3687 = vmul.f32 %v3616, %v3672
      %v3688 = vmul.f32 %v3617, %v3672
      %v3689 = vmul.f32 %v3618, %v3672
      %v3690 = vmul.f32 %v3619, %v3672
      %v3691 = vmul.f32 %v3620, %v3672
      %v3692 = vmul.f32 %v3621, %v3672
      %v3693 = vmul.f32 %v3622, %v3672
      %v3694 = vmul.f32 %v3623, %v3672
      %v3695 = vmul.f32 %v3624, %v3672
      %v3696 = vmul.f32 %v3625, %v3672
      %v3697 = vmul.f32 %v3626, %v3672
      %v3698 = vmul.f32 %v3627, %v3672
      %v3699 = vmul.f32 %v3628, %v3672
      %v3700 = vmul.f32 %v3629, %v3672
      %v3701 = vmul.f32 %v3630, %v3672
      %v3702 = vmul.f32 %v3631, %v3672
      %v3703 = vmul.f32 %v3632, %v3672
      %v3704 = vmul.f32 %v3633, %v3672
      %v3705 = vmul.f32 %v3634, %v3672
      %v3706 = vmul.f32 %v3635, %v3672
      %v3707 = vmul.f32 %v3636, %v3672
      %v3708 = vmul.f32 %v3637, %v3672
      %v3709 = vmul.f32 %v3638, %v3672
      %v3710 = vmul.f32 %v3639, %v3672
      %v3711 = vmul.f32 %v3640, %v3672
      %v3712 = vmul.f32 %v3641, %v3672
      %v3713 = vmul.f32 %v3642, %v3672
      %v3714 = vmul.f32 %v3643, %v3672
      %v3715 = vmul.f32 %v3644, %v3672
      %v3716 = vmul.f32 %v3645, %v3672
      %v3717 = vmul.f32 %v3646, %v3672
      %v3718 = vmul.f32 %v3647, %v3672
      %v3719 = vmul.f32 %v3648, %v3672
      %v3720 = vmul.f32 %v3649, %v3672
      %v3721 = vmul.f32 %v3650, %v3672
      %v3722 = vmul.f32 %v3651, %v3672
      %v3723 = vmul.f32 %v3652, %v3672
      %v3724 = vmul.f32 %v3653, %v3672
      %v3725 = vmul.f32 %v3654, %v3672
      %v3726 = vmul.f32 %v3655, %v3672
      %v3727 = vmul.f32 %v3656, %v3672
      %v3728 = vmul.f32 %v3657, %v3672
      %v3729 = vmul.f32 %v3658, %v3672
      %v3730 = vmul.f32 %v3659, %v3672
      %v3731 = vmul.f32 %v3660, %v3672
      %v3732 = vmul.f32 %v3661, %v3672
      %v3733 = vmul.f32 %v3662, %v3672
      %v3734 = vmul.f32 %v3663, %v3672
      %v3735 = vmul.f32 %v3664, %v3672
      %v3736 = vmul.f32 %v3665, %v3672
      %v3737 = vmul.f32 %v3666, %v3672
      %v3738 = vld [vmem:[%s12] sm:$0x1]
      %v3740 = vlaneseq
      %v3741 = vshrl.u32 %v3740, 7
      %v3742 = vsub.s32 0, %v3741
      %v3743 = vrot.slane %v3738, %v3742
      %v3745 = vadd.f32 %v3674, %v3743
      %v3746 = vadd.f32 %v3675, %v3743
      %v3747 = vadd.f32 %v3676, %v3743
      %v3748 = vadd.f32 %v3677, %v3743
      %v3749 = vadd.f32 %v3678, %v3743
      %v3750 = vadd.f32 %v3679, %v3743
      %v3751 = vadd.f32 %v3680, %v3743
      %v3752 = vadd.f32 %v3681, %v3743
      %v3753 = vadd.f32 %v3682, %v3743
      %v3754 = vadd.f32 %v3683, %v3743
      %v3755 = vadd.f32 %v3684, %v3743
      %v3756 = vadd.f32 %v3685, %v3743
      %v3757 = vadd.f32 %v3686, %v3743
      %v3758 = vadd.f32 %v3687, %v3743
      %v3759 = vadd.f32 %v3688, %v3743
      %v3760 = vadd.f32 %v3689, %v3743
      %v3761 = vadd.f32 %v3690, %v3743
      %v3762 = vadd.f32 %v3691, %v3743
      %v3763 = vadd.f32 %v3692, %v3743
      %v3764 = vadd.f32 %v3693, %v3743
      %v3765 = vadd.f32 %v3694, %v3743
      %v3766 = vadd.f32 %v3695, %v3743
      %v3767 = vadd.f32 %v3696, %v3743
      %v3768 = vadd.f32 %v3697, %v3743
      %v3769 = vadd.f32 %v3698, %v3743
      %v3770 = vadd.f32 %v3699, %v3743
      %v3771 = vadd.f32 %v3700, %v3743
      %v3772 = vadd.f32 %v3701, %v3743
      %v3773 = vadd.f32 %v3702, %v3743
      %v3774 = vadd.f32 %v3703, %v3743
      %v3775 = vadd.f32 %v3704, %v3743
      %v3776 = vadd.f32 %v3705, %v3743
      %v3777 = vadd.f32 %v3706, %v3743
      %v3778 = vadd.f32 %v3707, %v3743
      %v3779 = vadd.f32 %v3708, %v3743
      %v3780 = vadd.f32 %v3709, %v3743
      %v3781 = vadd.f32 %v3710, %v3743
      %v3782 = vadd.f32 %v3711, %v3743
      %v3783 = vadd.f32 %v3712, %v3743
      %v3784 = vadd.f32 %v3713, %v3743
      %v3785 = vadd.f32 %v3714, %v3743
      %v3786 = vadd.f32 %v3715, %v3743
      %v3787 = vadd.f32 %v3716, %v3743
      %v3788 = vadd.f32 %v3717, %v3743
      %v3789 = vadd.f32 %v3718, %v3743
      %v3790 = vadd.f32 %v3719, %v3743
      %v3791 = vadd.f32 %v3720, %v3743
      %v3792 = vadd.f32 %v3721, %v3743
      %v3793 = vadd.f32 %v3722, %v3743
      %v3794 = vadd.f32 %v3723, %v3743
      %v3795 = vadd.f32 %v3724, %v3743
      %v3796 = vadd.f32 %v3725, %v3743
      %v3797 = vadd.f32 %v3726, %v3743
      %v3798 = vadd.f32 %v3727, %v3743
      %v3799 = vadd.f32 %v3728, %v3743
      %v3800 = vadd.f32 %v3729, %v3743
      %v3801 = vadd.f32 %v3730, %v3743
      %v3802 = vadd.f32 %v3731, %v3743
      %v3803 = vadd.f32 %v3732, %v3743
      %v3804 = vadd.f32 %v3733, %v3743
      %v3805 = vadd.f32 %v3734, %v3743
      %v3806 = vadd.f32 %v3735, %v3743
      %v3807 = vadd.f32 %v3736, %v3743
      %v3808 = vadd.f32 %v3737, %v3743
      %v3809 = vadd.f32 %v3745, %v1418
      %v3810 = vadd.f32 %v3746, %v1419
      %v3811 = vadd.f32 %v3747, %v1420
      %v3812 = vadd.f32 %v3748, %v1421
      %v3813 = vadd.f32 %v3749, %v1422
      %v3814 = vadd.f32 %v3750, %v1423
      %v3815 = vadd.f32 %v3751, %v1424
      %v3816 = vadd.f32 %v3752, %v1425
      %v3817 = vadd.f32 %v3753, %v1426
      %v3818 = vadd.f32 %v3754, %v1427
      %v3819 = vadd.f32 %v3755, %v1428
      %v3820 = vadd.f32 %v3756, %v1429
      %v3821 = vadd.f32 %v3757, %v1430
      %v3822 = vadd.f32 %v3758, %v1431
      %v3823 = vadd.f32 %v3759, %v1432
      %v3824 = vadd.f32 %v3760, %v1433
      %v3825 = vadd.f32 %v3761, %v1434
      %v3826 = vadd.f32 %v3762, %v1435
      %v3827 = vadd.f32 %v3763, %v1436
      %v3828 = vadd.f32 %v3764, %v1437
      %v3829 = vadd.f32 %v3765, %v1438
      %v3830 = vadd.f32 %v3766, %v1439
      %v3831 = vadd.f32 %v3767, %v1440
      %v3832 = vadd.f32 %v3768, %v1441
      %v3833 = vadd.f32 %v3769, %v1442
      %v3834 = vadd.f32 %v3770, %v1443
      %v3835 = vadd.f32 %v3771, %v1444
      %v3836 = vadd.f32 %v3772, %v1445
      %v3837 = vadd.f32 %v3773, %v1446
      %v3838 = vadd.f32 %v3774, %v1447
      %v3839 = vadd.f32 %v3775, %v1448
      %v3840 = vadd.f32 %v3776, %v1449
      %v3841 = vadd.f32 %v3777, %v1450
      %v3842 = vadd.f32 %v3778, %v1451
      %v3843 = vadd.f32 %v3779, %v1452
      %v3844 = vadd.f32 %v3780, %v1453
      %v3845 = vadd.f32 %v3781, %v1454
      %v3846 = vadd.f32 %v3782, %v1455
      %v3847 = vadd.f32 %v3783, %v1456
      %v3848 = vadd.f32 %v3784, %v1457
      %v3849 = vadd.f32 %v3785, %v1458
      %v3850 = vadd.f32 %v3786, %v1459
      %v3851 = vadd.f32 %v3787, %v1460
      %v3852 = vadd.f32 %v3788, %v1461
      %v3853 = vadd.f32 %v3789, %v1462
      %v3854 = vadd.f32 %v3790, %v1463
      %v3855 = vadd.f32 %v3791, %v1464
      %v3856 = vadd.f32 %v3792, %v1465
      %v3857 = vadd.f32 %v3793, %v1466
      %v3858 = vadd.f32 %v3794, %v1467
      %v3859 = vadd.f32 %v3795, %v1468
      %v3860 = vadd.f32 %v3796, %v1469
      %v3861 = vadd.f32 %v3797, %v1470
      %v3862 = vadd.f32 %v3798, %v1471
      %v3863 = vadd.f32 %v3799, %v1472
      %v3864 = vadd.f32 %v3800, %v1473
      %v3865 = vadd.f32 %v3801, %v1474
      %v3866 = vadd.f32 %v3802, %v1475
      %v3867 = vadd.f32 %v3803, %v1476
      %v3868 = vadd.f32 %v3804, %v1477
      %v3869 = vadd.f32 %v3805, %v1478
      %v3870 = vadd.f32 %v3806, %v1479
      %v3871 = vadd.f32 %v3807, %v1480
      %v3872 = vadd.f32 %v3808, %v1481
      %3873 = vst [vmem:[%s486] sm:$0xff] %v3809
      %3874 = vst [vmem:[%s486 + $0x8] sm:$0xff] %v3810
      %3875 = vst [vmem:[%s486 + $0x10] sm:$0xff] %v3811
      %3876 = vst [vmem:[%s486 + $0x18] sm:$0xff] %v3812
      %3877 = vst [vmem:[%s486 + $0x20] sm:$0xff] %v3813
      %3878 = vst [vmem:[%s486 + $0x28] sm:$0xff] %v3814
      %3879 = vst [vmem:[%s486 + $0x30] sm:$0xff] %v3815
      %3880 = vst [vmem:[%s486 + $0x38] sm:$0xff] %v3816
      %3881 = vst [vmem:[%s486 + $0x40] sm:$0xff] %v3817
      %3882 = vst [vmem:[%s486 + $0x48] sm:$0xff] %v3818
      %3883 = vst [vmem:[%s486 + $0x50] sm:$0xff] %v3819
      %3884 = vst [vmem:[%s486 + $0x58] sm:$0xff] %v3820
      %3885 = vst [vmem:[%s486 + $0x60] sm:$0xff] %v3821
      %3886 = vst [vmem:[%s486 + $0x68] sm:$0xff] %v3822
      %3887 = vst [vmem:[%s486 + $0x70] sm:$0xff] %v3823
      %3888 = vst [vmem:[%s486 + $0x78] sm:$0xff] %v3824
      %3889 = vst [vmem:[%s486 + $0x80] sm:$0xff] %v3825
      %3890 = vst [vmem:[%s486 + $0x88] sm:$0xff] %v3826
      %3891 = vst [vmem:[%s486 + $0x90] sm:$0xff] %v3827
      %3892 = vst [vmem:[%s486 + $0x98] sm:$0xff] %v3828
      %3893 = vst [vmem:[%s486 + $0xa0] sm:$0xff] %v3829
      %3894 = vst [vmem:[%s486 + $0xa8] sm:$0xff] %v3830
      %3895 = vst [vmem:[%s486 + $0xb0] sm:$0xff] %v3831
      %3896 = vst [vmem:[%s486 + $0xb8] sm:$0xff] %v3832
      %3897 = vst [vmem:[%s486 + $0xc0] sm:$0xff] %v3833
      %3898 = vst [vmem:[%s486 + $0xc8] sm:$0xff] %v3834
      %3899 = vst [vmem:[%s486 + $0xd0] sm:$0xff] %v3835
      %3900 = vst [vmem:[%s486 + $0xd8] sm:$0xff] %v3836
      %3901 = vst [vmem:[%s486 + $0xe0] sm:$0xff] %v3837
      %3902 = vst [vmem:[%s486 + $0xe8] sm:$0xff] %v3838
      %3903 = vst [vmem:[%s486 + $0xf0] sm:$0xff] %v3839
      %3904 = vst [vmem:[%s486 + $0xf8] sm:$0xff] %v3840
      %3905 = vst [vmem:[%s486 + $0x100] sm:$0xff] %v3841
      %3906 = vst [vmem:[%s486 + $0x108] sm:$0xff] %v3842
      %3907 = vst [vmem:[%s486 + $0x110] sm:$0xff] %v3843
      %3908 = vst [vmem:[%s486 + $0x118] sm:$0xff] %v3844
      %3909 = vst [vmem:[%s486 + $0x120] sm:$0xff] %v3845
      %3910 = vst [vmem:[%s486 + $0x128] sm:$0xff] %v3846
      %3911 = vst [vmem:[%s486 + $0x130] sm:$0xff] %v3847
      %3912 = vst [vmem:[%s486 + $0x138] sm:$0xff] %v3848
      %3913 = vst [vmem:[%s486 + $0x140] sm:$0xff] %v3849
      %3914 = vst [vmem:[%s486 + $0x148] sm:$0xff] %v3850
      %3915 = vst [vmem:[%s486 + $0x150] sm:$0xff] %v3851
      %3916 = vst [vmem:[%s486 + $0x158] sm:$0xff] %v3852
      %3917 = vst [vmem:[%s486 + $0x160] sm:$0xff] %v3853
      %3918 = vst [vmem:[%s486 + $0x168] sm:$0xff] %v3854
      %3919 = vst [vmem:[%s486 + $0x170] sm:$0xff] %v3855
      %3920 = vst [vmem:[%s486 + $0x178] sm:$0xff] %v3856
      %3921 = vst [vmem:[%s486 + $0x180] sm:$0xff] %v3857
      %3922 = vst [vmem:[%s486 + $0x188] sm:$0xff] %v3858
      %3923 = vst [vmem:[%s486 + $0x190] sm:$0xff] %v3859
      %3924 = vst [vmem:[%s486 + $0x198] sm:$0xff] %v3860
      %3925 = vst [vmem:[%s486 + $0x1a0] sm:$0xff] %v3861
      %3926 = vst [vmem:[%s486 + $0x1a8] sm:$0xff] %v3862
      %3927 = vst [vmem:[%s486 + $0x1b0] sm:$0xff] %v3863
      %3928 = vst [vmem:[%s486 + $0x1b8] sm:$0xff] %v3864
      %3929 = vst [vmem:[%s486 + $0x1c0] sm:$0xff] %v3865
      %3930 = vst [vmem:[%s486 + $0x1c8] sm:$0xff] %v3866
      %3931 = vst [vmem:[%s486 + $0x1d0] sm:$0xff] %v3867
      %3932 = vst [vmem:[%s486 + $0x1d8] sm:$0xff] %v3868
      %3933 = vst [vmem:[%s486 + $0x1e0] sm:$0xff] %v3869
      %3934 = vst [vmem:[%s486 + $0x1e8] sm:$0xff] %v3870
      %3935 = vst [vmem:[%s486 + $0x1f0] sm:$0xff] %v3871
      %3936 = vst [vmem:[%s486 + $0x1f8] sm:$0xff] %v3872
      %s3937 = smul.u32 64, %s24
      %p3938 = scmp.lt.s32.totalorder %s3937, 127
      %s3939 = scalar_select %p3938, %s3937, 127
      %s3940 = smul.addr %s3939, 8
      %s3941 = scalar_lea.vmem %s13, %s3940
      // Predicated region
      $region73: #{graph_processor_forward.8} parent=71 // pred_check
        %p3942 = pneg %p330
      $region74: #{graph_processor_forward.8} parent=71 // pred_check_branch
        %3944 = sbr.rel (%p3942) target = $region76
      $region75: #{graph_processor_forward.8} parent=71 // pred_region
        %s3945 = smul.u32 64, %s24
      $region76: #{graph_processor_forward.8} parent=71 // pred_fallthru
        _
    $region72: #{graph_processor_forward.8} parent=5 // pred_fallthru
      _
    %p3946 = scmp.le.s32.totalorder 2, %s19
    // Predicated region
    $region77: #{graph_processor_forward.8} parent=5 // pred_check
      %p3947 = pneg %p3946
    $region78: #{graph_processor_forward.8} parent=5 // pred_check_branch
      %3949 = sbr.rel (%p3947) target = $region80
    $region79: #{graph_processor_forward.8} parent=5 // pred_region
      %s3950 = ssub.s32 %s19, 2
      // Predicated region
      $region81: #{graph_processor_forward.8} parent=79 // pred_check
        %p3951 = pneg %p336
      $region82: #{graph_processor_forward.8} parent=79 // pred_check_branch
        %3953 = sbr.rel (%p3951) target = $region84
      $region83: #{graph_processor_forward.8} parent=79 // pred_region
        %s3954 = smul.u32 64, %s25
        %p3955 = scmp.lt.s32.totalorder %s3954, 127
        %s3956 = scalar_select %p3955, %s3954, 127
        %s3957 = smul.addr %s3956, 8
        %s3958 = scalar_lea.vmem %s13, %s3957
      $region84: #{graph_processor_forward.8} parent=79 // pred_fallthru
        _
    $region80: #{graph_processor_forward.8} parent=5 // pred_fallthru
      _
  $region6: #{graph_processor_forward.8} parent=0 // loop_footer
    %s23 = sadd.s32 1, %s19
  $region7: #{graph_processor_forward.8} parent=0 // loop_footer_branch
    %18 = sbr.rel target = $region3
  $region8: #{graph_processor_forward.8} parent=0 // loop_exit
    _

// kernel: graph_processor_forward.15
$region0: #{graph_processor_forward.15}
  #allocation0 [shape = 'u32[]', space=smem, size = 0x4, offset = 0x4, fixed_abs, tag = 'smem constant byte address 0x4 - core index']
  #allocation1 [shape = 'u32[144,128]{1,0:T(1,128)}', space=vmem, size = 0x12000, scoped, tag = 'internal scratch']
  %s0 = inlined_call_operand.vmem [shape: f32[256,128], index: 0, kind: input, shape index: {}]
  %s1 = inlined_call_operand.vmem [shape: f32[256,128], index: 1, kind: input, shape index: {}]
  %s2 = inlined_call_operand.vmem [shape: f32[128,128], index: 2, kind: input, shape index: {}]
  %s3 = inlined_call_operand.vmem [shape: f32[128,128], index: 3, kind: input, shape index: {}]
  %s4 = inlined_call_operand.vmem [shape: f32[1,128], index: 4, kind: input, shape index: {}]
  %s5 = inlined_call_operand.vmem [shape: f32[128,128], index: 5, kind: input, shape index: {}]
  %s6 = inlined_call_operand.vmem [shape: f32[1,128], index: 6, kind: input, shape index: {}]
  %s7 = inlined_call_operand.vmem [shape: f32[128,128], index: 7, kind: input, shape index: {}]
  %s8 = inlined_call_operand.vmem [shape: f32[1,128], index: 8, kind: input, shape index: {}]
  %s9 = inlined_call_operand.vmem [shape: f32[1,128], index: 9, kind: input, shape index: {}]
  %s10 = inlined_call_operand.vmem [shape: f32[1,128], index: 10, kind: input, shape index: {}]
  %s11 = inlined_call_operand.hbm [shape: f32[256,128], index: 11, kind: output, shape index: {}]
  %s12 = sld [smem:[#allocation0]]
  $region77: #{graph_processor_forward.15} parent=0
    _
  %s14 = ssub.s32 1, %s12
  %s15 = scalar_select 0, %s14, %s12
  $region1: #{graph_processor_forward.15} parent=0
    #allocation2 [shape = 'u8[131072]{0}', space=vmem, size = 0x20000, scoped, tag = 'output window, operand 0']
    #allocation3 [shape = 's32[2]{0}', space=sflag, size = 0x8, scoped, tag = 'scoped memory for graph_processor_forward.15']
    %16 = vsyncpa [#allocation3], 0
    %s17 = scalar_lea.sflag [#allocation3], 1
    %18 = vsyncpa %s17, 0
    loop: start=0, step=1, limit=4
    $region2: #{graph_processor_forward.15} parent=1 // loop_pre_header
      _
    $region3: #{graph_processor_forward.15} parent=1 // loop_header
      %s20 = sphi 0, %s24
      %p21 = scmp.ge.s32.totalorder %s20, 4
      %s30 = sphi 0, %s32
      %s33 = sphi 0, %s30
      %s34 = sphi 0, %s33
      %s50 = sphi 0, %s34
      %s56 = sphi 0, %s58
      %s59 = sphi 0, %s56
      %s60 = sphi 0, %s59
      %s76 = sphi 0, %s60
      %s80 = sphi 0, %s80
      %s82 = sphi 0, %s80
      %s83 = sphi 0, %s82
      %s97 = sphi 0, %s83
      %s101 = sphi 0, %s101
      %s103 = sphi 0, %s101
      %s104 = sphi 0, %s103
      %s118 = sphi 0, %s104
      %s122 = sphi 0, %s122
      %s124 = sphi 0, %s122
      %s125 = sphi 0, %s124
      %s139 = sphi 0, %s125
      %s143 = sphi 0, %s143
      %s145 = sphi 0, %s143
      %s146 = sphi 0, %s145
      %s160 = sphi 0, %s146
      %s164 = sphi 0, %s164
      %s166 = sphi 0, %s164
      %s167 = sphi 0, %s166
      %s181 = sphi 0, %s167
      %s185 = sphi 0, %s185
      %s187 = sphi 0, %s185
      %s188 = sphi 0, %s187
      %s202 = sphi 0, %s188
      %s206 = sphi 0, %s206
      %s208 = sphi 0, %s206
      %s209 = sphi 0, %s208
      %s223 = sphi 0, %s209
      %s227 = sphi 0, %s227
      %s229 = sphi 0, %s227
      %s230 = sphi 0, %s229
      %s244 = sphi 0, %s230
      %s248 = sphi 0, %s248
      %s250 = sphi 0, %s248
      %s251 = sphi 0, %s250
      %s265 = sphi 0, %s251
      %s271 = sphi 0, %s273
      %s274 = sphi 0, %s271
      %s275 = sphi 0, %s274
      %s291 = sphi 0, %s275
    $region4: #{graph_processor_forward.15} parent=1 // loop_header_branch
      %23 = sbr.rel (%p21) target = $region8
    $region5: #{graph_processor_forward.15} parent=1 // loop_body
      %s25 = ssub.s32 %s20, 1
      %s26 = ssub.s32 %s20, 2
      %s27 = sadd.s32 %s20, 1
      %s28 = ssub.s32 %s20, %s27
      %p29 = scmp.eq.s32.totalorder %s28, 0
      %s31 = sadd.s32 %s30, 1
      %s32 = scalar_select %p29, %s30, %s31
      %p35 = pneg %p29
      %p36 = scmp.eq.s32.totalorder %s20, 1
      %p37 = por %p35, %p36
      %p38 = scmp.ne.s32.totalorder %s30, %s33
      %p39 = scmp.eq.s32.totalorder %s20, 0
      %p40 = por %p38, %p39
      %p41 = scmp.ne.s32.totalorder %s30, %s33
      %p42 = scmp.eq.s32.totalorder %s25, 1
      %p43 = por %p41, %p42
      %p44 = scmp.ne.s32.totalorder %s33, %s34
      %p45 = scmp.eq.s32.totalorder %s25, 0
      %p46 = por %p44, %p45
      %p47 = scmp.ne.s32.totalorder %s33, %s34
      %p48 = scmp.eq.s32.totalorder %s26, 1
      %p49 = por %p47, %p48
      %p51 = scmp.ne.s32.totalorder %s34, %s50
      %p52 = scmp.eq.s32.totalorder %s26, 0
      %p53 = por %p51, %p52
      %s54 = ssub.s32 %s20, %s27
      %p55 = scmp.eq.s32.totalorder %s54, 0
      %s57 = sadd.s32 %s56, 1
      %s58 = scalar_select %p55, %s56, %s57
      %p61 = pneg %p55
      %p62 = scmp.eq.s32.totalorder %s20, 1
      %p63 = por %p61, %p62
      %p64 = scmp.ne.s32.totalorder %s56, %s59
      %p65 = scmp.eq.s32.totalorder %s20, 0
      %p66 = por %p64, %p65
      %p67 = scmp.ne.s32.totalorder %s56, %s59
      %p68 = scmp.eq.s32.totalorder %s25, 1
      %p69 = por %p67, %p68
      %p70 = scmp.ne.s32.totalorder %s59, %s60
      %p71 = scmp.eq.s32.totalorder %s25, 0
      %p72 = por %p70, %p71
      %p73 = scmp.ne.s32.totalorder %s59, %s60
      %p74 = scmp.eq.s32.totalorder %s26, 1
      %p75 = por %p73, %p74
      %p77 = scmp.ne.s32.totalorder %s60, %s76
      %p78 = scmp.eq.s32.totalorder %s26, 0
      %p79 = por %p77, %p78
      %s81 = sadd.s32 %s80, 1
      %p84 = scmp.eq.s32.totalorder %s20, 1
      %p85 = scmp.ne.s32.totalorder %s80, %s82
      %p86 = scmp.eq.s32.totalorder %s20, 0
      %p87 = por %p85, %p86
      %p88 = scmp.ne.s32.totalorder %s80, %s82
      %p89 = scmp.eq.s32.totalorder %s25, 1
      %p90 = por %p88, %p89
      %p91 = scmp.ne.s32.totalorder %s82, %s83
      %p92 = scmp.eq.s32.totalorder %s25, 0
      %p93 = por %p91, %p92
      %p94 = scmp.ne.s32.totalorder %s82, %s83
      %p95 = scmp.eq.s32.totalorder %s26, 1
      %p96 = por %p94, %p95
      %p98 = scmp.ne.s32.totalorder %s83, %s97
      %p99 = scmp.eq.s32.totalorder %s26, 0
      %p100 = por %p98, %p99
      %s102 = sadd.s32 %s101, 1
      %p105 = scmp.eq.s32.totalorder %s20, 1
      %p106 = scmp.ne.s32.totalorder %s101, %s103
      %p107 = scmp.eq.s32.totalorder %s20, 0
      %p108 = por %p106, %p107
      %p109 = scmp.ne.s32.totalorder %s101, %s103
      %p110 = scmp.eq.s32.totalorder %s25, 1
      %p111 = por %p109, %p110
      %p112 = scmp.ne.s32.totalorder %s103, %s104
      %p113 = scmp.eq.s32.totalorder %s25, 0
      %p114 = por %p112, %p113
      %p115 = scmp.ne.s32.totalorder %s103, %s104
      %p116 = scmp.eq.s32.totalorder %s26, 1
      %p117 = por %p115, %p116
      %p119 = scmp.ne.s32.totalorder %s104, %s118
      %p120 = scmp.eq.s32.totalorder %s26, 0
      %p121 = por %p119, %p120
      %s123 = sadd.s32 %s122, 1
      %p126 = scmp.eq.s32.totalorder %s20, 1
      %p127 = scmp.ne.s32.totalorder %s122, %s124
      %p128 = scmp.eq.s32.totalorder %s20, 0
      %p129 = por %p127, %p128
      %p130 = scmp.ne.s32.totalorder %s122, %s124
      %p131 = scmp.eq.s32.totalorder %s25, 1
      %p132 = por %p130, %p131
      %p133 = scmp.ne.s32.totalorder %s124, %s125
      %p134 = scmp.eq.s32.totalorder %s25, 0
      %p135 = por %p133, %p134
      %p136 = scmp.ne.s32.totalorder %s124, %s125
      %p137 = scmp.eq.s32.totalorder %s26, 1
      %p138 = por %p136, %p137
      %p140 = scmp.ne.s32.totalorder %s125, %s139
      %p141 = scmp.eq.s32.totalorder %s26, 0
      %p142 = por %p140, %p141
      %s144 = sadd.s32 %s143, 1
      %p147 = scmp.eq.s32.totalorder %s20, 1
      %p148 = scmp.ne.s32.totalorder %s143, %s145
      %p149 = scmp.eq.s32.totalorder %s20, 0
      %p150 = por %p148, %p149
      %p151 = scmp.ne.s32.totalorder %s143, %s145
      %p152 = scmp.eq.s32.totalorder %s25, 1
      %p153 = por %p151, %p152
      %p154 = scmp.ne.s32.totalorder %s145, %s146
      %p155 = scmp.eq.s32.totalorder %s25, 0
      %p156 = por %p154, %p155
      %p157 = scmp.ne.s32.totalorder %s145, %s146
      %p158 = scmp.eq.s32.totalorder %s26, 1
      %p159 = por %p157, %p158
      %p161 = scmp.ne.s32.totalorder %s146, %s160
      %p162 = scmp.eq.s32.totalorder %s26, 0
      %p163 = por %p161, %p162
      %s165 = sadd.s32 %s164, 1
      %p168 = scmp.eq.s32.totalorder %s20, 1
      %p169 = scmp.ne.s32.totalorder %s164, %s166
      %p170 = scmp.eq.s32.totalorder %s20, 0
      %p171 = por %p169, %p170
      %p172 = scmp.ne.s32.totalorder %s164, %s166
      %p173 = scmp.eq.s32.totalorder %s25, 1
      %p174 = por %p172, %p173
      %p175 = scmp.ne.s32.totalorder %s166, %s167
      %p176 = scmp.eq.s32.totalorder %s25, 0
      %p177 = por %p175, %p176
      %p178 = scmp.ne.s32.totalorder %s166, %s167
      %p179 = scmp.eq.s32.totalorder %s26, 1
      %p180 = por %p178, %p179
      %p182 = scmp.ne.s32.totalorder %s167, %s181
      %p183 = scmp.eq.s32.totalorder %s26, 0
      %p184 = por %p182, %p183
      %s186 = sadd.s32 %s185, 1
      %p189 = scmp.eq.s32.totalorder %s20, 1
      %p190 = scmp.ne.s32.totalorder %s185, %s187
      %p191 = scmp.eq.s32.totalorder %s20, 0
      %p192 = por %p190, %p191
      %p193 = scmp.ne.s32.totalorder %s185, %s187
      %p194 = scmp.eq.s32.totalorder %s25, 1
      %p195 = por %p193, %p194
      %p196 = scmp.ne.s32.totalorder %s187, %s188
      %p197 = scmp.eq.s32.totalorder %s25, 0
      %p198 = por %p196, %p197
      %p199 = scmp.ne.s32.totalorder %s187, %s188
      %p200 = scmp.eq.s32.totalorder %s26, 1
      %p201 = por %p199, %p200
      %p203 = scmp.ne.s32.totalorder %s188, %s202
      %p204 = scmp.eq.s32.totalorder %s26, 0
      %p205 = por %p203, %p204
      %s207 = sadd.s32 %s206, 1
      %p210 = scmp.eq.s32.totalorder %s20, 1
      %p211 = scmp.ne.s32.totalorder %s206, %s208
      %p212 = scmp.eq.s32.totalorder %s20, 0
      %p213 = por %p211, %p212
      %p214 = scmp.ne.s32.totalorder %s206, %s208
      %p215 = scmp.eq.s32.totalorder %s25, 1
      %p216 = por %p214, %p215
      %p217 = scmp.ne.s32.totalorder %s208, %s209
      %p218 = scmp.eq.s32.totalorder %s25, 0
      %p219 = por %p217, %p218
      %p220 = scmp.ne.s32.totalorder %s208, %s209
      %p221 = scmp.eq.s32.totalorder %s26, 1
      %p222 = por %p220, %p221
      %p224 = scmp.ne.s32.totalorder %s209, %s223
      %p225 = scmp.eq.s32.totalorder %s26, 0
      %p226 = por %p224, %p225
      %s228 = sadd.s32 %s227, 1
      %p231 = scmp.eq.s32.totalorder %s20, 1
      %p232 = scmp.ne.s32.totalorder %s227, %s229
      %p233 = scmp.eq.s32.totalorder %s20, 0
      %p234 = por %p232, %p233
      %p235 = scmp.ne.s32.totalorder %s227, %s229
      %p236 = scmp.eq.s32.totalorder %s25, 1
      %p237 = por %p235, %p236
      %p238 = scmp.ne.s32.totalorder %s229, %s230
      %p239 = scmp.eq.s32.totalorder %s25, 0
      %p240 = por %p238, %p239
      %p241 = scmp.ne.s32.totalorder %s229, %s230
      %p242 = scmp.eq.s32.totalorder %s26, 1
      %p243 = por %p241, %p242
      %p245 = scmp.ne.s32.totalorder %s230, %s244
      %p246 = scmp.eq.s32.totalorder %s26, 0
      %p247 = por %p245, %p246
      %s249 = sadd.s32 %s248, 1
      %p252 = scmp.eq.s32.totalorder %s20, 1
      %p253 = scmp.ne.s32.totalorder %s248, %s250
      %p254 = scmp.eq.s32.totalorder %s20, 0
      %p255 = por %p253, %p254
      %p256 = scmp.ne.s32.totalorder %s248, %s250
      %p257 = scmp.eq.s32.totalorder %s25, 1
      %p258 = por %p256, %p257
      %p259 = scmp.ne.s32.totalorder %s250, %s251
      %p260 = scmp.eq.s32.totalorder %s25, 0
      %p261 = por %p259, %p260
      %p262 = scmp.ne.s32.totalorder %s250, %s251
      %p263 = scmp.eq.s32.totalorder %s26, 1
      %p264 = por %p262, %p263
      %p266 = scmp.ne.s32.totalorder %s251, %s265
      %p267 = scmp.eq.s32.totalorder %s26, 0
      %p268 = por %p266, %p267
      %s269 = ssub.s32 %s20, %s27
      %p270 = scmp.eq.s32.totalorder %s269, 0
      %s272 = sadd.s32 %s271, 1
      %s273 = scalar_select %p270, %s271, %s272
      %p276 = pneg %p270
      %p277 = scmp.eq.s32.totalorder %s20, 1
      %p278 = por %p276, %p277
      %p279 = scmp.ne.s32.totalorder %s271, %s274
      %p280 = scmp.eq.s32.totalorder %s20, 0
      %p281 = por %p279, %p280
      %p282 = scmp.ne.s32.totalorder %s271, %s274
      %p283 = scmp.eq.s32.totalorder %s25, 1
      %p284 = por %p282, %p283
      %p285 = scmp.ne.s32.totalorder %s274, %s275
      %p286 = scmp.eq.s32.totalorder %s25, 0
      %p287 = por %p285, %p286
      %p288 = scmp.ne.s32.totalorder %s274, %s275
      %p289 = scmp.eq.s32.totalorder %s26, 1
      %p290 = por %p288, %p289
      %p292 = scmp.ne.s32.totalorder %s275, %s291
      %p293 = scmp.eq.s32.totalorder %s26, 0
      %p294 = por %p292, %p293
      %p295 = scmp.le.s32.totalorder 1, %s20
      %p296 = scmp.lt.s32.totalorder %s20, 3
      %p297 = pnand %p295, %p296
      %p298 = pneg %p297
      // Predicated region
      $region9: #{graph_processor_forward.15} parent=5 // pred_check
        _
      $region10: #{graph_processor_forward.15} parent=5 // pred_check_branch
        %300 = sbr.rel (%p297) target = $region12
      $region11: #{graph_processor_forward.15} parent=5 // pred_region
        %s301 = ssub.s32 %s20, 1
        // Predicated region
        $region13: #{graph_processor_forward.15} parent=11 // pred_check
          %p302 = pneg %p93
        $region14: #{graph_processor_forward.15} parent=11 // pred_check_branch
          %304 = sbr.rel (%p302) target = $region16
        $region15: #{graph_processor_forward.15} parent=11 // pred_region
          _
        $region16: #{graph_processor_forward.15} parent=11 // pred_fallthru
          _
        // Predicated region
        $region17: #{graph_processor_forward.15} parent=11 // pred_check
          %p305 = pneg %p114
        $region18: #{graph_processor_forward.15} parent=11 // pred_check_branch
          %307 = sbr.rel (%p305) target = $region20
        $region19: #{graph_processor_forward.15} parent=11 // pred_region
          _
        $region20: #{graph_processor_forward.15} parent=11 // pred_fallthru
          _
        // Predicated region
        $region21: #{graph_processor_forward.15} parent=11 // pred_check
          %p308 = pneg %p135
        $region22: #{graph_processor_forward.15} parent=11 // pred_check_branch
          %310 = sbr.rel (%p308) target = $region24
        $region23: #{graph_processor_forward.15} parent=11 // pred_region
          _
        $region24: #{graph_processor_forward.15} parent=11 // pred_fallthru
          _
        // Predicated region
        $region25: #{graph_processor_forward.15} parent=11 // pred_check
          %p311 = pneg %p156
        $region26: #{graph_processor_forward.15} parent=11 // pred_check_branch
          %313 = sbr.rel (%p311) target = $region28
        $region27: #{graph_processor_forward.15} parent=11 // pred_region
          _
        $region28: #{graph_processor_forward.15} parent=11 // pred_fallthru
          _
        // Predicated region
        $region29: #{graph_processor_forward.15} parent=11 // pred_check
          %p314 = pneg %p177
        $region30: #{graph_processor_forward.15} parent=11 // pred_check_branch
          %316 = sbr.rel (%p314) target = $region32
        $region31: #{graph_processor_forward.15} parent=11 // pred_region
          _
        $region32: #{graph_processor_forward.15} parent=11 // pred_fallthru
          _
        // Predicated region
        $region33: #{graph_processor_forward.15} parent=11 // pred_check
          %p317 = pneg %p198
        $region34: #{graph_processor_forward.15} parent=11 // pred_check_branch
          %319 = sbr.rel (%p317) target = $region36
        $region35: #{graph_processor_forward.15} parent=11 // pred_region
          _
        $region36: #{graph_processor_forward.15} parent=11 // pred_fallthru
          _
        // Predicated region
        $region37: #{graph_processor_forward.15} parent=11 // pred_check
          %p320 = pneg %p219
        $region38: #{graph_processor_forward.15} parent=11 // pred_check_branch
          %322 = sbr.rel (%p320) target = $region40
        $region39: #{graph_processor_forward.15} parent=11 // pred_region
          _
        $region40: #{graph_processor_forward.15} parent=11 // pred_fallthru
          _
        // Predicated region
        $region41: #{graph_processor_forward.15} parent=11 // pred_check
          %p323 = pneg %p240
        $region42: #{graph_processor_forward.15} parent=11 // pred_check_branch
          %325 = sbr.rel (%p323) target = $region44
        $region43: #{graph_processor_forward.15} parent=11 // pred_region
          _
        $region44: #{graph_processor_forward.15} parent=11 // pred_fallthru
          _
        // Predicated region
        $region45: #{graph_processor_forward.15} parent=11 // pred_check
          %p326 = pneg %p261
        $region46: #{graph_processor_forward.15} parent=11 // pred_check_branch
          %328 = sbr.rel (%p326) target = $region48
        $region47: #{graph_processor_forward.15} parent=11 // pred_region
          _
        $region48: #{graph_processor_forward.15} parent=11 // pred_fallthru
          _
      $region12: #{graph_processor_forward.15} parent=5 // pred_fallthru
        _
      %p329 = scmp.lt.s32.totalorder %s20, 2
      // Predicated region
      $region49: #{graph_processor_forward.15} parent=5 // pred_check
        %p330 = pneg %p329
      $region50: #{graph_processor_forward.15} parent=5 // pred_check_branch
        %332 = sbr.rel (%p330) target = $region52
      $region51: #{graph_processor_forward.15} parent=5 // pred_region
        // Predicated region
        $region53: #{graph_processor_forward.15} parent=51 // pred_check
          %p333 = pneg %p40
        $region54: #{graph_processor_forward.15} parent=51 // pred_check_branch
          %335 = sbr.rel (%p333) target = $region56
        $region55: #{graph_processor_forward.15} parent=51 // pred_region
          %s336 = smul.u32 16, %s20
          %p337 = scmp.lt.s32.totalorder %s336, 31
          %s338 = scalar_select %p337, %s336, 31
          %s339 = smul.addr %s338, 8
          %s340 = scalar_lea.vmem %s0, %s339
          %s341 = smul.u32 16, %s20
        $region56: #{graph_processor_forward.15} parent=51 // pred_fallthru
          _
        // Predicated region
        $region57: #{graph_processor_forward.15} parent=51 // pred_check
          %p342 = pneg %p66
        $region58: #{graph_processor_forward.15} parent=51 // pred_check_branch
          %344 = sbr.rel (%p342) target = $region60
        $region59: #{graph_processor_forward.15} parent=51 // pred_region
          %s345 = smul.u32 16, %s20
          %p346 = scmp.lt.s32.totalorder %s345, 31
          %s347 = scalar_select %p346, %s345, 31
          %s348 = smul.addr %s347, 8
          %s349 = scalar_lea.vmem %s1, %s348
          %s350 = smul.u32 16, %s20
        $region60: #{graph_processor_forward.15} parent=51 // pred_fallthru
          _
      $region52: #{graph_processor_forward.15} parent=5 // pred_fallthru
        _
      %p351 = scmp.le.s32.totalorder 1, %s20
      %p352 = scmp.lt.s32.totalorder %s20, 3
      %p353 = pnand %p351, %p352
      %p354 = pneg %p353
      // Predicated region
      $region61: #{graph_processor_forward.15} parent=5 // pred_check
        _
      $region62: #{graph_processor_forward.15} parent=5 // pred_check_branch
        %356 = sbr.rel (%p353) target = $region64
      $region63: #{graph_processor_forward.15} parent=5 // pred_region
        %s357 = ssub.s32 %s20, 1
        %s358 = smul.u32 16, %s25
        %p359 = scmp.lt.s32.totalorder %s358, 31
        %s360 = scalar_select %p359, %s358, 31
        %s361 = smul.addr %s360, 8
        %s362 = scalar_lea.vmem %s0, %s361
        %p363 = pneg %p46
        %p364 = pneg %p43
        %s365 = smul.u32 16, %s25
        %p366 = scmp.lt.s32.totalorder %s365, 31
        %s367 = scalar_select %p366, %s365, 31
        %s368 = smul.addr %s367, 8
        %s369 = scalar_lea.vmem %s1, %s368
        %p370 = pneg %p72
        %p371 = pneg %p69
        %p372 = pneg %p93
        %p373 = pneg %p90
        %p374 = pneg %p114
        %p375 = pneg %p111
        %p376 = pneg %p135
        %p377 = pneg %p132
        %p378 = pneg %p156
        %p379 = pneg %p153
        %p380 = pneg %p177
        %p381 = pneg %p174
        %p382 = pneg %p198
        %p383 = pneg %p195
        %p384 = pneg %p219
        %p385 = pneg %p216
        %p386 = pneg %p240
        %p387 = pneg %p237
        %p388 = pneg %p261
        %p389 = pneg %p258
        %p390 = pneg %p287
        %p391 = pneg %p284
        %s392 = sand.u32 %s274, 1
        %s393 = scalar_lea.sflag [#allocation3], %s392
        %s394 = sand.u32 %s274, 1
        %s395 = smul.addr %s394, 128
        %s396 = scalar_lea.vmem [#allocation2], %s395
        %s397 = smul.u32 16, %s25
        %p398 = scmp.lt.s32.totalorder %s397, 31
        %s399 = scalar_select %p398, %s397, 31
        %s400 = smul.addr %s399, 8
        %s401 = scalar_lea.vmem %s0, %s400
        %s402 = smul.u32 16, %s25
        %s403 = smul.u32 16, %s25
        %p404 = scmp.lt.s32.totalorder %s403, 31
        %s405 = scalar_select %p404, %s403, 31
        %s406 = smul.addr %s405, 8
        %s407 = scalar_lea.vmem %s1, %s406
        %s408 = smul.u32 16, %s25
        %s409 = smul.u32 16, %s25
        %v410 = vld [vmem:[%s401] sm:$0xff]
        %v411 = vld [vmem:[%s401 + $0x8] sm:$0xff]
        %v412 = vld [vmem:[%s401 + $0x10] sm:$0xff]
        %v413 = vld [vmem:[%s401 + $0x18] sm:$0xff]
        %v414 = vld [vmem:[%s401 + $0x20] sm:$0xff]
        %v415 = vld [vmem:[%s401 + $0x28] sm:$0xff]
        %v416 = vld [vmem:[%s401 + $0x30] sm:$0xff]
        %v417 = vld [vmem:[%s401 + $0x38] sm:$0xff]
        %v418 = vld [vmem:[%s401 + $0x40] sm:$0xff]
        %v419 = vld [vmem:[%s401 + $0x48] sm:$0xff]
        %v420 = vld [vmem:[%s401 + $0x50] sm:$0xff]
        %v421 = vld [vmem:[%s401 + $0x58] sm:$0xff]
        %v422 = vld [vmem:[%s401 + $0x60] sm:$0xff]
        %v423 = vld [vmem:[%s401 + $0x68] sm:$0xff]
        %v424 = vld [vmem:[%s401 + $0x70] sm:$0xff]
        %v425 = vld [vmem:[%s401 + $0x78] sm:$0xff]
        %v426 = vld [vmem:[%s2] sm:$0xff]
        %v427 = vld [vmem:[%s2 + $0x8] sm:$0xff]
        %v428 = vld [vmem:[%s2 + $0x10] sm:$0xff]
        %v429 = vld [vmem:[%s2 + $0x18] sm:$0xff]
        %v430 = vld [vmem:[%s2 + $0x20] sm:$0xff]
        %v431 = vld [vmem:[%s2 + $0x28] sm:$0xff]
        %v432 = vld [vmem:[%s2 + $0x30] sm:$0xff]
        %v433 = vld [vmem:[%s2 + $0x38] sm:$0xff]
        %v434 = vld [vmem:[%s2 + $0x40] sm:$0xff]
        %v435 = vld [vmem:[%s2 + $0x48] sm:$0xff]
        %v436 = vld [vmem:[%s2 + $0x50] sm:$0xff]
        %v437 = vld [vmem:[%s2 + $0x58] sm:$0xff]
        %v438 = vld [vmem:[%s2 + $0x60] sm:$0xff]
        %v439 = vld [vmem:[%s2 + $0x68] sm:$0xff]
        %v440 = vld [vmem:[%s2 + $0x70] sm:$0xff]
        %v441 = vld [vmem:[%s2 + $0x78] sm:$0xff]
        %v442 = vld [vmem:[%s407] sm:$0xff]
        %v443 = vld [vmem:[%s407 + $0x8] sm:$0xff]
        %v444 = vld [vmem:[%s407 + $0x10] sm:$0xff]
        %v445 = vld [vmem:[%s407 + $0x18] sm:$0xff]
        %v446 = vld [vmem:[%s407 + $0x20] sm:$0xff]
        %v447 = vld [vmem:[%s407 + $0x28] sm:$0xff]
        %v448 = vld [vmem:[%s407 + $0x30] sm:$0xff]
        %v449 = vld [vmem:[%s407 + $0x38] sm:$0xff]
        %v450 = vld [vmem:[%s407 + $0x40] sm:$0xff]
        %v451 = vld [vmem:[%s407 + $0x48] sm:$0xff]
        %v452 = vld [vmem:[%s407 + $0x50] sm:$0xff]
        %v453 = vld [vmem:[%s407 + $0x58] sm:$0xff]
        %v454 = vld [vmem:[%s407 + $0x60] sm:$0xff]
        %v455 = vld [vmem:[%s407 + $0x68] sm:$0xff]
        %v456 = vld [vmem:[%s407 + $0x70] sm:$0xff]
        %v457 = vld [vmem:[%s407 + $0x78] sm:$0xff]
        %v458 = vld [vmem:[%s3] sm:$0xff]
        %v459 = vld [vmem:[%s3 + $0x8] sm:$0xff]
        %v460 = vld [vmem:[%s3 + $0x10] sm:$0xff]
        %v461 = vld [vmem:[%s3 + $0x18] sm:$0xff]
        %v462 = vld [vmem:[%s3 + $0x20] sm:$0xff]
        %v463 = vld [vmem:[%s3 + $0x28] sm:$0xff]
        %v464 = vld [vmem:[%s3 + $0x30] sm:$0xff]
        %v465 = vld [vmem:[%s3 + $0x38] sm:$0xff]
        %v466 = vld [vmem:[%s3 + $0x40] sm:$0xff]
        %v467 = vld [vmem:[%s3 + $0x48] sm:$0xff]
        %v468 = vld [vmem:[%s3 + $0x50] sm:$0xff]
        %v469 = vld [vmem:[%s3 + $0x58] sm:$0xff]
        %v470 = vld [vmem:[%s3 + $0x60] sm:$0xff]
        %v471 = vld [vmem:[%s3 + $0x68] sm:$0xff]
        %v472 = vld [vmem:[%s3 + $0x70] sm:$0xff]
        %v473 = vld [vmem:[%s3 + $0x78] sm:$0xff]
        %474 = vmatprep.subr.mxu0 0.0
        %475 = vmatpush1.msra.mxu0 %v458
        %476 = vmatprep.subr.mxu0 0.0
        %477 = vmatpush1.msra.mxu0 %v459
        %478 = vmatprep.subr.mxu0 0.0
        %479 = vmatpush1.msra.mxu0 %v460
        %480 = vmatprep.subr.mxu0 0.0
        %481 = vmatpush1.msra.mxu0 %v461
        %482 = vmatprep.subr.mxu0 0.0
        %483 = vmatpush1.msra.mxu0 %v462
        %484 = vmatprep.subr.mxu0 0.0
        %485 = vmatpush1.msra.mxu0 %v463
        %486 = vmatprep.subr.mxu0 0.0
        %487 = vmatpush1.msra.mxu0 %v464
        %488 = vmatprep.subr.mxu0 0.0
        %489 = vmatpush1.msra.mxu0 %v465
        %490 = vmatprep.subr.mxu0 0.0
        %491 = vmatpush1.msra.mxu0 %v466
        %492 = vmatprep.subr.mxu0 0.0
        %493 = vmatpush1.msra.mxu0 %v467
        %494 = vmatprep.subr.mxu0 0.0
        %495 = vmatpush1.msra.mxu0 %v468
        %496 = vmatprep.subr.mxu0 0.0
        %497 = vmatpush1.msra.mxu0 %v469
        %498 = vmatprep.subr.mxu0 0.0
        %499 = vmatpush1.msra.mxu0 %v470
        %500 = vmatprep.subr.mxu0 0.0
        %501 = vmatpush1.msra.mxu0 %v471
        %502 = vmatprep.subr.mxu0 0.0
        %503 = vmatpush1.msra.mxu0 %v472
        %504 = vmatprep.subr.mxu0 0.0
        %505 = vmatpush1.msra.mxu0 %v473
        %506 = vmatprep.subr.mxu0 0.0
        %507 = vmatpush1.msra.mxu0 0.0
        %508 = vmatprep.subr.mxu0 0.0
        %509 = vmatpush1.msra.mxu0 0.0
        %510 = vmatprep.subr.mxu0 0.0
        %511 = vmatpush1.msra.mxu0 0.0
        %512 = vmatprep.subr.mxu0 0.0
        %513 = vmatpush1.msra.mxu0 0.0
        %514 = vmatprep.subr.mxu0 0.0
        %515 = vmatpush1.msra.mxu0 0.0
        %516 = vmatprep.subr.mxu0 0.0
        %517 = vmatpush1.msra.mxu0 0.0
        %518 = vmatprep.subr.mxu0 0.0
        %519 = vmatpush1.msra.mxu0 0.0
        %520 = vmatprep.subr.mxu0 0.0
        %521 = vmatpush1.msra.mxu0 0.0
        %522 = vmatprep.subr.mxu0 0.0
        %523 = vmatpush1.msra.mxu0 0.0
        %524 = vmatprep.subr.mxu0 0.0
        %525 = vmatpush1.msra.mxu0 0.0
        %526 = vmatprep.subr.mxu0 0.0
        %527 = vmatpush1.msra.mxu0 0.0
        %528 = vmatprep.subr.mxu0 0.0
        %529 = vmatpush1.msra.mxu0 0.0
        %530 = vmatprep.subr.mxu0 0.0
        %531 = vmatpush1.msra.mxu0 0.0
        %532 = vmatprep.subr.mxu0 0.0
        %533 = vmatpush1.msra.mxu0 0.0
        %534 = vmatprep.subr.mxu0 0.0
        %535 = vmatpush1.msra.mxu0 0.0
        %536 = vmatprep.subr.mxu0 0.0
        %537 = vmatpush1.msra.mxu0 0.0
        %538 = vmatprep.mubr.f32.mxu0 0.0
        %539 = vmatmul.mubr.f32.gmra.mrb[0].mxu0 %v442
        %v540 = vpop.f32.mrb[0].mxu0
        %v541 = vadd.f32 0.0, %v540
        %v542 = vpop.f32.mrb[0].mxu0
        %543 = vmatprep.mubr.f32.mxu0 0.0
        %544 = vmatmul.mubr.f32.gmra.mrb[0].mxu0 %v443
        %v545 = vpop.f32.mrb[0].mxu0
        %v546 = vadd.f32 0.0, %v545
        %v547 = vpop.f32.mrb[0].mxu0
        %548 = vmatprep.mubr.f32.mxu0 0.0
        %549 = vmatmul.mubr.f32.gmra.mrb[0].mxu0 %v444
        %v550 = vpop.f32.mrb[0].mxu0
        %v551 = vadd.f32 0.0, %v550
        %v552 = vpop.f32.mrb[0].mxu0
        %553 = vmatprep.mubr.f32.mxu0 0.0
        %554 = vmatmul.mubr.f32.gmra.mrb[0].mxu0 %v445
        %v555 = vpop.f32.mrb[0].mxu0
        %v556 = vadd.f32 0.0, %v555
        %v557 = vpop.f32.mrb[0].mxu0
        %558 = vmatprep.mubr.f32.mxu0 0.0
        %559 = vmatmul.mubr.f32.gmra.mrb[0].mxu0 %v446
        %v560 = vpop.f32.mrb[0].mxu0
        %v561 = vadd.f32 0.0, %v560
        %v562 = vpop.f32.mrb[0].mxu0
        %563 = vmatprep.mubr.f32.mxu0 0.0
        %564 = vmatmul.mubr.f32.gmra.mrb[0].mxu0 %v447
        %v565 = vpop.f32.mrb[0].mxu0
        %v566 = vadd.f32 0.0, %v565
        %v567 = vpop.f32.mrb[0].mxu0
        %568 = vmatprep.mubr.f32.mxu0 0.0
        %569 = vmatmul.mubr.f32.gmra.mrb[0].mxu0 %v448
        %v570 = vpop.f32.mrb[0].mxu0
        %v571 = vadd.f32 0.0, %v570
        %v572 = vpop.f32.mrb[0].mxu0
        %573 = vmatprep.mubr.f32.mxu0 0.0
        %574 = vmatmul.mubr.f32.gmra.mrb[0].mxu0 %v449
        %v575 = vpop.f32.mrb[0].mxu0
        %v576 = vadd.f32 0.0, %v575
        %v577 = vpop.f32.mrb[0].mxu0
        %578 = vmatprep.mubr.f32.mxu0 0.0
        %579 = vmatmul.mubr.f32.gmra.mrb[0].mxu0 %v450
        %v580 = vpop.f32.mrb[0].mxu0
        %v581 = vadd.f32 0.0, %v580
        %v582 = vpop.f32.mrb[0].mxu0
        %583 = vmatprep.mubr.f32.mxu0 0.0
        %584 = vmatmul.mubr.f32.gmra.mrb[0].mxu0 %v451
        %v585 = vpop.f32.mrb[0].mxu0
        %v586 = vadd.f32 0.0, %v585
        %v587 = vpop.f32.mrb[0].mxu0
        %588 = vmatprep.mubr.f32.mxu0 0.0
        %589 = vmatmul.mubr.f32.gmra.mrb[0].mxu0 %v452
        %v590 = vpop.f32.mrb[0].mxu0
        %v591 = vadd.f32 0.0, %v590
        %v592 = vpop.f32.mrb[0].mxu0
        %593 = vmatprep.mubr.f32.mxu0 0.0
        %594 = vmatmul.mubr.f32.gmra.mrb[0].mxu0 %v453
        %v595 = vpop.f32.mrb[0].mxu0
        %v596 = vadd.f32 0.0, %v595
        %v597 = vpop.f32.mrb[0].mxu0
        %598 = vmatprep.mubr.f32.mxu0 0.0
        %599 = vmatmul.mubr.f32.gmra.mrb[0].mxu0 %v454
        %v600 = vpop.f32.mrb[0].mxu0
        %v601 = vadd.f32 0.0, %v600
        %v602 = vpop.f32.mrb[0].mxu0
        %603 = vmatprep.mubr.f32.mxu0 0.0
        %604 = vmatmul.mubr.f32.gmra.mrb[0].mxu0 %v455
        %v605 = vpop.f32.mrb[0].mxu0
        %v606 = vadd.f32 0.0, %v605
        %v607 = vpop.f32.mrb[0].mxu0
        %608 = vmatprep.mubr.f32.mxu0 0.0
        %609 = vmatmul.mubr.f32.gmra.mrb[0].mxu0 %v456
        %v610 = vpop.f32.mrb[0].mxu0
        %v611 = vadd.f32 0.0, %v610
        %v612 = vpop.f32.mrb[0].mxu0
        %613 = vmatprep.mubr.f32.mxu0 0.0
        %614 = vmatmul.mubr.f32.gmra.mrb[0].mxu0 %v457
        %v615 = vpop.f32.mrb[0].mxu0
        %v616 = vadd.f32 0.0, %v615
        %v617 = vpop.f32.mrb[0].mxu0
        %618 = vdwg.mxu0
        %619 = vmatprep.subr.mxu0 0.0
        %620 = vmatpush1.msra.mxu0 %v426
        %621 = vmatprep.subr.mxu0 0.0
        %622 = vmatpush1.msra.mxu0 %v427
        %623 = vmatprep.subr.mxu0 0.0
        %624 = vmatpush1.msra.mxu0 %v428
        %625 = vmatprep.subr.mxu0 0.0
        %626 = vmatpush1.msra.mxu0 %v429
        %627 = vmatprep.subr.mxu0 0.0
        %628 = vmatpush1.msra.mxu0 %v430
        %629 = vmatprep.subr.mxu0 0.0
        %630 = vmatpush1.msra.mxu0 %v431
        %631 = vmatprep.subr.mxu0 0.0
        %632 = vmatpush1.msra.mxu0 %v432
        %633 = vmatprep.subr.mxu0 0.0
        %634 = vmatpush1.msra.mxu0 %v433
        %635 = vmatprep.subr.mxu0 0.0
        %636 = vmatpush1.msra.mxu0 %v434
        %637 = vmatprep.subr.mxu0 0.0
        %638 = vmatpush1.msra.mxu0 %v435
        %639 = vmatprep.subr.mxu0 0.0
        %640 = vmatpush1.msra.mxu0 %v436
        %641 = vmatprep.subr.mxu0 0.0
        %642 = vmatpush1.msra.mxu0 %v437
        %643 = vmatprep.subr.mxu0 0.0
        %644 = vmatpush1.msra.mxu0 %v438
        %645 = vmatprep.subr.mxu0 0.0
        %646 = vmatpush1.msra.mxu0 %v439
        %647 = vmatprep.subr.mxu0 0.0
        %648 = vmatpush1.msra.mxu0 %v440
        %649 = vmatprep.subr.mxu0 0.0
        %650 = vmatpush1.msra.mxu0 %v441
        %651 = vmatprep.subr.mxu0 0.0
        %652 = vmatpush1.msra.mxu0 0.0
        %653 = vmatprep.subr.mxu0 0.0
        %654 = vmatpush1.msra.mxu0 0.0
        %655 = vmatprep.subr.mxu0 0.0
        %656 = vmatpush1.msra.mxu0 0.0
        %657 = vmatprep.subr.mxu0 0.0
        %658 = vmatpush1.msra.mxu0 0.0
        %659 = vmatprep.subr.mxu0 0.0
        %660 = vmatpush1.msra.mxu0 0.0
        %661 = vmatprep.subr.mxu0 0.0
        %662 = vmatpush1.msra.mxu0 0.0
        %663 = vmatprep.subr.mxu0 0.0
        %664 = vmatpush1.msra.mxu0 0.0
        %665 = vmatprep.subr.mxu0 0.0
        %666 = vmatpush1.msra.mxu0 0.0
        %667 = vmatprep.subr.mxu0 0.0
        %668 = vmatpush1.msra.mxu0 0.0
        %669 = vmatprep.subr.mxu0 0.0
        %670 = vmatpush1.msra.mxu0 0.0
        %671 = vmatprep.subr.mxu0 0.0
        %672 = vmatpush1.msra.mxu0 0.0
        %673 = vmatprep.subr.mxu0 0.0
        %674 = vmatpush1.msra.mxu0 0.0
        %675 = vmatprep.subr.mxu0 0.0
        %676 = vmatpush1.msra.mxu0 0.0
        %677 = vmatprep.subr.mxu0 0.0
        %678 = vmatpush1.msra.mxu0 0.0
        %679 = vmatprep.subr.mxu0 0.0
        %680 = vmatpush1.msra.mxu0 0.0
        %681 = vmatprep.subr.mxu0 0.0
        %682 = vmatpush1.msra.mxu0 0.0
        %683 = vmatprep.mubr.f32.mxu0 0.0
        %684 = vmatmul.mubr.f32.gmra.mrb[0].mxu0 %v410
        %v685 = vpop.f32.mrb[0].mxu0
        %v686 = vadd.f32 %v541, %v685
        %v687 = vpop.f32.mrb[0].mxu0
        %688 = vmatprep.mubr.f32.mxu0 0.0
        %689 = vmatmul.mubr.f32.gmra.mrb[0].mxu0 %v411
        %v690 = vpop.f32.mrb[0].mxu0
        %v691 = vadd.f32 %v546, %v690
        %v692 = vpop.f32.mrb[0].mxu0
        %693 = vmatprep.mubr.f32.mxu0 0.0
        %694 = vmatmul.mubr.f32.gmra.mrb[0].mxu0 %v412
        %v695 = vpop.f32.mrb[0].mxu0
        %v696 = vadd.f32 %v551, %v695
        %v697 = vpop.f32.mrb[0].mxu0
        %698 = vmatprep.mubr.f32.mxu0 0.0
        %699 = vmatmul.mubr.f32.gmra.mrb[0].mxu0 %v413
        %v700 = vpop.f32.mrb[0].mxu0
        %v701 = vadd.f32 %v556, %v700
        %v702 = vpop.f32.mrb[0].mxu0
        %703 = vmatprep.mubr.f32.mxu0 0.0
        %704 = vmatmul.mubr.f32.gmra.mrb[0].mxu0 %v414
        %v705 = vpop.f32.mrb[0].mxu0
        %v706 = vadd.f32 %v561, %v705
        %v707 = vpop.f32.mrb[0].mxu0
        %708 = vmatprep.mubr.f32.mxu0 0.0
        %709 = vmatmul.mubr.f32.gmra.mrb[0].mxu0 %v415
        %v710 = vpop.f32.mrb[0].mxu0
        %v711 = vadd.f32 %v566, %v710
        %v712 = vpop.f32.mrb[0].mxu0
        %713 = vmatprep.mubr.f32.mxu0 0.0
        %714 = vmatmul.mubr.f32.gmra.mrb[0].mxu0 %v416
        %v715 = vpop.f32.mrb[0].mxu0
        %v716 = vadd.f32 %v571, %v715
        %v717 = vpop.f32.mrb[0].mxu0
        %718 = vmatprep.mubr.f32.mxu0 0.0
        %719 = vmatmul.mubr.f32.gmra.mrb[0].mxu0 %v417
        %v720 = vpop.f32.mrb[0].mxu0
        %v721 = vadd.f32 %v576, %v720
        %v722 = vpop.f32.mrb[0].mxu0
        %723 = vmatprep.mubr.f32.mxu0 0.0
        %724 = vmatmul.mubr.f32.gmra.mrb[0].mxu0 %v418
        %v725 = vpop.f32.mrb[0].mxu0
        %v726 = vadd.f32 %v581, %v725
        %v727 = vpop.f32.mrb[0].mxu0
        %728 = vmatprep.mubr.f32.mxu0 0.0
        %729 = vmatmul.mubr.f32.gmra.mrb[0].mxu0 %v419
        %v730 = vpop.f32.mrb[0].mxu0
        %v731 = vadd.f32 %v586, %v730
        %v732 = vpop.f32.mrb[0].mxu0
        %733 = vmatprep.mubr.f32.mxu0 0.0
        %734 = vmatmul.mubr.f32.gmra.mrb[0].mxu0 %v420
        %v735 = vpop.f32.mrb[0].mxu0
        %v736 = vadd.f32 %v591, %v735
        %v737 = vpop.f32.mrb[0].mxu0
        %738 = vmatprep.mubr.f32.mxu0 0.0
        %739 = vmatmul.mubr.f32.gmra.mrb[0].mxu0 %v421
        %v740 = vpop.f32.mrb[0].mxu0
        %v741 = vadd.f32 %v596, %v740
        %v742 = vpop.f32.mrb[0].mxu0
        %743 = vmatprep.mubr.f32.mxu0 0.0
        %744 = vmatmul.mubr.f32.gmra.mrb[0].mxu0 %v422
        %v745 = vpop.f32.mrb[0].mxu0
        %v746 = vadd.f32 %v601, %v745
        %v747 = vpop.f32.mrb[0].mxu0
        %748 = vmatprep.mubr.f32.mxu0 0.0
        %749 = vmatmul.mubr.f32.gmra.mrb[0].mxu0 %v423
        %v750 = vpop.f32.mrb[0].mxu0
        %v751 = vadd.f32 %v606, %v750
        %v752 = vpop.f32.mrb[0].mxu0
        %753 = vmatprep.mubr.f32.mxu0 0.0
        %754 = vmatmul.mubr.f32.gmra.mrb[0].mxu0 %v424
        %v755 = vpop.f32.mrb[0].mxu0
        %v756 = vadd.f32 %v611, %v755
        %v757 = vpop.f32.mrb[0].mxu0
        %758 = vmatprep.mubr.f32.mxu0 0.0
        %759 = vmatmul.mubr.f32.gmra.mrb[0].mxu0 %v425
        %v760 = vpop.f32.mrb[0].mxu0
        %v761 = vadd.f32 %v616, %v760
        %v762 = vpop.f32.mrb[0].mxu0
        %763 = vdwg.mxu0
        %v764 = vld [vmem:[%s4] sm:$0x1]
        %v766 = vlaneseq
        %v767 = vshrl.u32 %v766, 7
        %v768 = vsub.s32 0, %v767
        %v769 = vrot.slane %v764, %v768
        %v771 = vadd.f32 %v686, %v769
        %v772 = vadd.f32 %v691, %v769
        %v773 = vadd.f32 %v696, %v769
        %v774 = vadd.f32 %v701, %v769
        %v775 = vadd.f32 %v706, %v769
        %v776 = vadd.f32 %v711, %v769
        %v777 = vadd.f32 %v716, %v769
        %v778 = vadd.f32 %v721, %v769
        %v779 = vadd.f32 %v726, %v769
        %v780 = vadd.f32 %v731, %v769
        %v781 = vadd.f32 %v736, %v769
        %v782 = vadd.f32 %v741, %v769
        %v783 = vadd.f32 %v746, %v769
        %v784 = vadd.f32 %v751, %v769
        %v785 = vadd.f32 %v756, %v769
        %v786 = vadd.f32 %v761, %v769
        %v787 = vmax.f32 %v771, 0.0
        %v788 = vmax.f32 %v772, 0.0
        %v789 = vmax.f32 %v773, 0.0
        %v790 = vmax.f32 %v774, 0.0
        %v791 = vmax.f32 %v775, 0.0
        %v792 = vmax.f32 %v776, 0.0
        %v793 = vmax.f32 %v777, 0.0
        %v794 = vmax.f32 %v778, 0.0
        %v795 = vmax.f32 %v779, 0.0
        %v796 = vmax.f32 %v780, 0.0
        %v797 = vmax.f32 %v781, 0.0
        %v798 = vmax.f32 %v782, 0.0
        %v799 = vmax.f32 %v783, 0.0
        %v800 = vmax.f32 %v784, 0.0
        %v801 = vmax.f32 %v785, 0.0
        %v802 = vmax.f32 %v786, 0.0
        %v803 = vld [vmem:[%s5] sm:$0xff]
        %v804 = vld [vmem:[%s5 + $0x8] sm:$0xff]
        %v805 = vld [vmem:[%s5 + $0x10] sm:$0xff]
        %v806 = vld [vmem:[%s5 + $0x18] sm:$0xff]
        %v807 = vld [vmem:[%s5 + $0x20] sm:$0xff]
        %v808 = vld [vmem:[%s5 + $0x28] sm:$0xff]
        %v809 = vld [vmem:[%s5 + $0x30] sm:$0xff]
        %v810 = vld [vmem:[%s5 + $0x38] sm:$0xff]
        %v811 = vld [vmem:[%s5 + $0x40] sm:$0xff]
        %v812 = vld [vmem:[%s5 + $0x48] sm:$0xff]
        %v813 = vld [vmem:[%s5 + $0x50] sm:$0xff]
        %v814 = vld [vmem:[%s5 + $0x58] sm:$0xff]
        %v815 = vld [vmem:[%s5 + $0x60] sm:$0xff]
        %v816 = vld [vmem:[%s5 + $0x68] sm:$0xff]
        %v817 = vld [vmem:[%s5 + $0x70] sm:$0xff]
        %v818 = vld [vmem:[%s5 + $0x78] sm:$0xff]
        %v819 = vld [vmem:[%s6] sm:$0x1]
        %v821 = vlaneseq
        %v822 = vshrl.u32 %v821, 7
        %v823 = vsub.s32 0, %v822
        %v824 = vrot.slane %v819, %v823
        %826 = vmatprep.subr.mxu0 0.0
        %827 = vmatpush1.msra.mxu0 %v803
        %828 = vmatprep.subr.mxu0 0.0
        %829 = vmatpush1.msra.mxu0 %v804
        %830 = vmatprep.subr.mxu0 0.0
        %831 = vmatpush1.msra.mxu0 %v805
        %832 = vmatprep.subr.mxu0 0.0
        %833 = vmatpush1.msra.mxu0 %v806
        %834 = vmatprep.subr.mxu0 0.0
        %835 = vmatpush1.msra.mxu0 %v807
        %836 = vmatprep.subr.mxu0 0.0
        %837 = vmatpush1.msra.mxu0 %v808
        %838 = vmatprep.subr.mxu0 0.0
        %839 = vmatpush1.msra.mxu0 %v809
        %840 = vmatprep.subr.mxu0 0.0
        %841 = vmatpush1.msra.mxu0 %v810
        %842 = vmatprep.subr.mxu0 0.0
        %843 = vmatpush1.msra.mxu0 %v811
        %844 = vmatprep.subr.mxu0 0.0
        %845 = vmatpush1.msra.mxu0 %v812
        %846 = vmatprep.subr.mxu0 0.0
        %847 = vmatpush1.msra.mxu0 %v813
        %848 = vmatprep.subr.mxu0 0.0
        %849 = vmatpush1.msra.mxu0 %v814
        %850 = vmatprep.subr.mxu0 0.0
        %851 = vmatpush1.msra.mxu0 %v815
        %852 = vmatprep.subr.mxu0 0.0
        %853 = vmatpush1.msra.mxu0 %v816
        %854 = vmatprep.subr.mxu0 0.0
        %855 = vmatpush1.msra.mxu0 %v817
        %856 = vmatprep.subr.mxu0 0.0
        %857 = vmatpush1.msra.mxu0 %v818
        %858 = vmatprep.subr.mxu0 0.0
        %859 = vmatpush1.msra.mxu0 0.0
        %860 = vmatprep.subr.mxu0 0.0
        %861 = vmatpush1.msra.mxu0 0.0
        %862 = vmatprep.subr.mxu0 0.0
        %863 = vmatpush1.msra.mxu0 0.0
        %864 = vmatprep.subr.mxu0 0.0
        %865 = vmatpush1.msra.mxu0 0.0
        %866 = vmatprep.subr.mxu0 0.0
        %867 = vmatpush1.msra.mxu0 0.0
        %868 = vmatprep.subr.mxu0 0.0
        %869 = vmatpush1.msra.mxu0 0.0
        %870 = vmatprep.subr.mxu0 0.0
        %871 = vmatpush1.msra.mxu0 0.0
        %872 = vmatprep.subr.mxu0 0.0
        %873 = vmatpush1.msra.mxu0 0.0
        %874 = vmatprep.subr.mxu0 0.0
        %875 = vmatpush1.msra.mxu0 0.0
        %876 = vmatprep.subr.mxu0 0.0
        %877 = vmatpush1.msra.mxu0 0.0
        %878 = vmatprep.subr.mxu0 0.0
        %879 = vmatpush1.msra.mxu0 0.0
        %880 = vmatprep.subr.mxu0 0.0
        %881 = vmatpush1.msra.mxu0 0.0
        %882 = vmatprep.subr.mxu0 0.0
        %883 = vmatpush1.msra.mxu0 0.0
        %884 = vmatprep.subr.mxu0 0.0
        %885 = vmatpush1.msra.mxu0 0.0
        %886 = vmatprep.subr.mxu0 0.0
        %887 = vmatpush1.msra.mxu0 0.0
        %888 = vmatprep.subr.mxu0 0.0
        %889 = vmatpush1.msra.mxu0 0.0
        %890 = vmatprep.mubr.f32.mxu0 0.0
        %891 = vmatmul.mubr.f32.gmra.mrb[0].mxu0 %v787
        %v892 = vpop.f32.mrb[0].mxu0
        %v893 = vadd.f32 %v824, %v892
        %v894 = vpop.f32.mrb[0].mxu0
        %895 = vmatprep.mubr.f32.mxu0 0.0
        %896 = vmatmul.mubr.f32.gmra.mrb[0].mxu0 %v788
        %v897 = vpop.f32.mrb[0].mxu0
        %v898 = vadd.f32 %v824, %v897
        %v899 = vpop.f32.mrb[0].mxu0
        %900 = vmatprep.mubr.f32.mxu0 0.0
        %901 = vmatmul.mubr.f32.gmra.mrb[0].mxu0 %v789
        %v902 = vpop.f32.mrb[0].mxu0
        %v903 = vadd.f32 %v824, %v902
        %v904 = vpop.f32.mrb[0].mxu0
        %905 = vmatprep.mubr.f32.mxu0 0.0
        %906 = vmatmul.mubr.f32.gmra.mrb[0].mxu0 %v790
        %v907 = vpop.f32.mrb[0].mxu0
        %v908 = vadd.f32 %v824, %v907
        %v909 = vpop.f32.mrb[0].mxu0
        %910 = vmatprep.mubr.f32.mxu0 0.0
        %911 = vmatmul.mubr.f32.gmra.mrb[0].mxu0 %v791
        %v912 = vpop.f32.mrb[0].mxu0
        %v913 = vadd.f32 %v824, %v912
        %v914 = vpop.f32.mrb[0].mxu0
        %915 = vmatprep.mubr.f32.mxu0 0.0
        %916 = vmatmul.mubr.f32.gmra.mrb[0].mxu0 %v792
        %v917 = vpop.f32.mrb[0].mxu0
        %v918 = vadd.f32 %v824, %v917
        %v919 = vpop.f32.mrb[0].mxu0
        %920 = vmatprep.mubr.f32.mxu0 0.0
        %921 = vmatmul.mubr.f32.gmra.mrb[0].mxu0 %v793
        %v922 = vpop.f32.mrb[0].mxu0
        %v923 = vadd.f32 %v824, %v922
        %v924 = vpop.f32.mrb[0].mxu0
        %925 = vmatprep.mubr.f32.mxu0 0.0
        %926 = vmatmul.mubr.f32.gmra.mrb[0].mxu0 %v794
        %v927 = vpop.f32.mrb[0].mxu0
        %v928 = vadd.f32 %v824, %v927
        %v929 = vpop.f32.mrb[0].mxu0
        %930 = vmatprep.mubr.f32.mxu0 0.0
        %931 = vmatmul.mubr.f32.gmra.mrb[0].mxu0 %v795
        %v932 = vpop.f32.mrb[0].mxu0
        %v933 = vadd.f32 %v824, %v932
        %v934 = vpop.f32.mrb[0].mxu0
        %935 = vmatprep.mubr.f32.mxu0 0.0
        %936 = vmatmul.mubr.f32.gmra.mrb[0].mxu0 %v796
        %v937 = vpop.f32.mrb[0].mxu0
        %v938 = vadd.f32 %v824, %v937
        %v939 = vpop.f32.mrb[0].mxu0
        %940 = vmatprep.mubr.f32.mxu0 0.0
        %941 = vmatmul.mubr.f32.gmra.mrb[0].mxu0 %v797
        %v942 = vpop.f32.mrb[0].mxu0
        %v943 = vadd.f32 %v824, %v942
        %v944 = vpop.f32.mrb[0].mxu0
        %945 = vmatprep.mubr.f32.mxu0 0.0
        %946 = vmatmul.mubr.f32.gmra.mrb[0].mxu0 %v798
        %v947 = vpop.f32.mrb[0].mxu0
        %v948 = vadd.f32 %v824, %v947
        %v949 = vpop.f32.mrb[0].mxu0
        %950 = vmatprep.mubr.f32.mxu0 0.0
        %951 = vmatmul.mubr.f32.gmra.mrb[0].mxu0 %v799
        %v952 = vpop.f32.mrb[0].mxu0
        %v953 = vadd.f32 %v824, %v952
        %v954 = vpop.f32.mrb[0].mxu0
        %955 = vmatprep.mubr.f32.mxu0 0.0
        %956 = vmatmul.mubr.f32.gmra.mrb[0].mxu0 %v800
        %v957 = vpop.f32.mrb[0].mxu0
        %v958 = vadd.f32 %v824, %v957
        %v959 = vpop.f32.mrb[0].mxu0
        %960 = vmatprep.mubr.f32.mxu0 0.0
        %961 = vmatmul.mubr.f32.gmra.mrb[0].mxu0 %v801
        %v962 = vpop.f32.mrb[0].mxu0
        %v963 = vadd.f32 %v824, %v962
        %v964 = vpop.f32.mrb[0].mxu0
        %965 = vmatprep.mubr.f32.mxu0 0.0
        %966 = vmatmul.mubr.f32.gmra.mrb[0].mxu0 %v802
        %v967 = vpop.f32.mrb[0].mxu0
        %v968 = vadd.f32 %v824, %v967
        %v969 = vpop.f32.mrb[0].mxu0
        %970 = vdwg.mxu0
        %v971 = vmax.f32 %v893, 0.0
        %v972 = vmax.f32 %v898, 0.0
        %v973 = vmax.f32 %v903, 0.0
        %v974 = vmax.f32 %v908, 0.0
        %v975 = vmax.f32 %v913, 0.0
        %v976 = vmax.f32 %v918, 0.0
        %v977 = vmax.f32 %v923, 0.0
        %v978 = vmax.f32 %v928, 0.0
        %v979 = vmax.f32 %v933, 0.0
        %v980 = vmax.f32 %v938, 0.0
        %v981 = vmax.f32 %v943, 0.0
        %v982 = vmax.f32 %v948, 0.0
        %v983 = vmax.f32 %v953, 0.0
        %v984 = vmax.f32 %v958, 0.0
        %v985 = vmax.f32 %v963, 0.0
        %v986 = vmax.f32 %v968, 0.0
        %v987 = vld [vmem:[%s7] sm:$0xff]
        %v988 = vld [vmem:[%s7 + $0x8] sm:$0xff]
        %v989 = vld [vmem:[%s7 + $0x10] sm:$0xff]
        %v990 = vld [vmem:[%s7 + $0x18] sm:$0xff]
        %v991 = vld [vmem:[%s7 + $0x20] sm:$0xff]
        %v992 = vld [vmem:[%s7 + $0x28] sm:$0xff]
        %v993 = vld [vmem:[%s7 + $0x30] sm:$0xff]
        %v994 = vld [vmem:[%s7 + $0x38] sm:$0xff]
        %v995 = vld [vmem:[%s7 + $0x40] sm:$0xff]
        %v996 = vld [vmem:[%s7 + $0x48] sm:$0xff]
        %v997 = vld [vmem:[%s7 + $0x50] sm:$0xff]
        %v998 = vld [vmem:[%s7 + $0x58] sm:$0xff]
        %v999 = vld [vmem:[%s7 + $0x60] sm:$0xff]
        %v1000 = vld [vmem:[%s7 + $0x68] sm:$0xff]
        %v1001 = vld [vmem:[%s7 + $0x70] sm:$0xff]
        %v1002 = vld [vmem:[%s7 + $0x78] sm:$0xff]
        %v1003 = vld [vmem:[%s8] sm:$0x1]
        %v1005 = vlaneseq
        %v1006 = vshrl.u32 %v1005, 7
        %v1007 = vsub.s32 0, %v1006
        %v1008 = vrot.slane %v1003, %v1007
        %1010 = vmatprep.subr.mxu0 0.0
        %1011 = vmatpush1.msra.mxu0 %v987
        %1012 = vmatprep.subr.mxu0 0.0
        %1013 = vmatpush1.msra.mxu0 %v988
        %1014 = vmatprep.subr.mxu0 0.0
        %1015 = vmatpush1.msra.mxu0 %v989
        %1016 = vmatprep.subr.mxu0 0.0
        %1017 = vmatpush1.msra.mxu0 %v990
        %1018 = vmatprep.subr.mxu0 0.0
        %1019 = vmatpush1.msra.mxu0 %v991
        %1020 = vmatprep.subr.mxu0 0.0
        %1021 = vmatpush1.msra.mxu0 %v992
        %1022 = vmatprep.subr.mxu0 0.0
        %1023 = vmatpush1.msra.mxu0 %v993
        %1024 = vmatprep.subr.mxu0 0.0
        %1025 = vmatpush1.msra.mxu0 %v994
        %1026 = vmatprep.subr.mxu0 0.0
        %1027 = vmatpush1.msra.mxu0 %v995
        %1028 = vmatprep.subr.mxu0 0.0
        %1029 = vmatpush1.msra.mxu0 %v996
        %1030 = vmatprep.subr.mxu0 0.0
        %1031 = vmatpush1.msra.mxu0 %v997
        %1032 = vmatprep.subr.mxu0 0.0
        %1033 = vmatpush1.msra.mxu0 %v998
        %1034 = vmatprep.subr.mxu0 0.0
        %1035 = vmatpush1.msra.mxu0 %v999
        %1036 = vmatprep.subr.mxu0 0.0
        %1037 = vmatpush1.msra.mxu0 %v1000
        %1038 = vmatprep.subr.mxu0 0.0
        %1039 = vmatpush1.msra.mxu0 %v1001
        %1040 = vmatprep.subr.mxu0 0.0
        %1041 = vmatpush1.msra.mxu0 %v1002
        %1042 = vmatprep.subr.mxu0 0.0
        %1043 = vmatpush1.msra.mxu0 0.0
        %1044 = vmatprep.subr.mxu0 0.0
        %1045 = vmatpush1.msra.mxu0 0.0
        %1046 = vmatprep.subr.mxu0 0.0
        %1047 = vmatpush1.msra.mxu0 0.0
        %1048 = vmatprep.subr.mxu0 0.0
        %1049 = vmatpush1.msra.mxu0 0.0
        %1050 = vmatprep.subr.mxu0 0.0
        %1051 = vmatpush1.msra.mxu0 0.0
        %1052 = vmatprep.subr.mxu0 0.0
        %1053 = vmatpush1.msra.mxu0 0.0
        %1054 = vmatprep.subr.mxu0 0.0
        %1055 = vmatpush1.msra.mxu0 0.0
        %1056 = vmatprep.subr.mxu0 0.0
        %1057 = vmatpush1.msra.mxu0 0.0
        %1058 = vmatprep.subr.mxu0 0.0
        %1059 = vmatpush1.msra.mxu0 0.0
        %1060 = vmatprep.subr.mxu0 0.0
        %1061 = vmatpush1.msra.mxu0 0.0
        %1062 = vmatprep.subr.mxu0 0.0
        %1063 = vmatpush1.msra.mxu0 0.0
        %1064 = vmatprep.subr.mxu0 0.0
        %1065 = vmatpush1.msra.mxu0 0.0
        %1066 = vmatprep.subr.mxu0 0.0
        %1067 = vmatpush1.msra.mxu0 0.0
        %1068 = vmatprep.subr.mxu0 0.0
        %1069 = vmatpush1.msra.mxu0 0.0
        %1070 = vmatprep.subr.mxu0 0.0
        %1071 = vmatpush1.msra.mxu0 0.0
        %1072 = vmatprep.subr.mxu0 0.0
        %1073 = vmatpush1.msra.mxu0 0.0
        %1074 = vmatprep.mubr.f32.mxu0 0.0
        %1075 = vmatmul.mubr.f32.gmra.mrb[0].mxu0 %v971
        %v1076 = vpop.f32.mrb[0].mxu0
        %v1077 = vadd.f32 %v1008, %v1076
        %v1078 = vpop.f32.mrb[0].mxu0
        %1079 = vmatprep.mubr.f32.mxu0 0.0
        %1080 = vmatmul.mubr.f32.gmra.mrb[0].mxu0 %v972
        %v1081 = vpop.f32.mrb[0].mxu0
        %v1082 = vadd.f32 %v1008, %v1081
        %v1083 = vpop.f32.mrb[0].mxu0
        %1084 = vmatprep.mubr.f32.mxu0 0.0
        %1085 = vmatmul.mubr.f32.gmra.mrb[0].mxu0 %v973
        %v1086 = vpop.f32.mrb[0].mxu0
        %v1087 = vadd.f32 %v1008, %v1086
        %v1088 = vpop.f32.mrb[0].mxu0
        %1089 = vmatprep.mubr.f32.mxu0 0.0
        %1090 = vmatmul.mubr.f32.gmra.mrb[0].mxu0 %v974
        %v1091 = vpop.f32.mrb[0].mxu0
        %v1092 = vadd.f32 %v1008, %v1091
        %v1093 = vpop.f32.mrb[0].mxu0
        %1094 = vmatprep.mubr.f32.mxu0 0.0
        %1095 = vmatmul.mubr.f32.gmra.mrb[0].mxu0 %v975
        %v1096 = vpop.f32.mrb[0].mxu0
        %v1097 = vadd.f32 %v1008, %v1096
        %v1098 = vpop.f32.mrb[0].mxu0
        %1099 = vmatprep.mubr.f32.mxu0 0.0
        %1100 = vmatmul.mubr.f32.gmra.mrb[0].mxu0 %v976
        %v1101 = vpop.f32.mrb[0].mxu0
        %v1102 = vadd.f32 %v1008, %v1101
        %v1103 = vpop.f32.mrb[0].mxu0
        %1104 = vmatprep.mubr.f32.mxu0 0.0
        %1105 = vmatmul.mubr.f32.gmra.mrb[0].mxu0 %v977
        %v1106 = vpop.f32.mrb[0].mxu0
        %v1107 = vadd.f32 %v1008, %v1106
        %v1108 = vpop.f32.mrb[0].mxu0
        %1109 = vmatprep.mubr.f32.mxu0 0.0
        %1110 = vmatmul.mubr.f32.gmra.mrb[0].mxu0 %v978
        %v1111 = vpop.f32.mrb[0].mxu0
        %v1112 = vadd.f32 %v1008, %v1111
        %v1113 = vpop.f32.mrb[0].mxu0
        %1114 = vmatprep.mubr.f32.mxu0 0.0
        %1115 = vmatmul.mubr.f32.gmra.mrb[0].mxu0 %v979
        %v1116 = vpop.f32.mrb[0].mxu0
        %v1117 = vadd.f32 %v1008, %v1116
        %v1118 = vpop.f32.mrb[0].mxu0
        %1119 = vmatprep.mubr.f32.mxu0 0.0
        %1120 = vmatmul.mubr.f32.gmra.mrb[0].mxu0 %v980
        %v1121 = vpop.f32.mrb[0].mxu0
        %v1122 = vadd.f32 %v1008, %v1121
        %v1123 = vpop.f32.mrb[0].mxu0
        %1124 = vmatprep.mubr.f32.mxu0 0.0
        %1125 = vmatmul.mubr.f32.gmra.mrb[0].mxu0 %v981
        %v1126 = vpop.f32.mrb[0].mxu0
        %v1127 = vadd.f32 %v1008, %v1126
        %v1128 = vpop.f32.mrb[0].mxu0
        %1129 = vmatprep.mubr.f32.mxu0 0.0
        %1130 = vmatmul.mubr.f32.gmra.mrb[0].mxu0 %v982
        %v1131 = vpop.f32.mrb[0].mxu0
        %v1132 = vadd.f32 %v1008, %v1131
        %v1133 = vpop.f32.mrb[0].mxu0
        %1134 = vmatprep.mubr.f32.mxu0 0.0
        %1135 = vmatmul.mubr.f32.gmra.mrb[0].mxu0 %v983
        %v1136 = vpop.f32.mrb[0].mxu0
        %v1137 = vadd.f32 %v1008, %v1136
        %v1138 = vpop.f32.mrb[0].mxu0
        %1139 = vmatprep.mubr.f32.mxu0 0.0
        %1140 = vmatmul.mubr.f32.gmra.mrb[0].mxu0 %v984
        %v1141 = vpop.f32.mrb[0].mxu0
        %v1142 = vadd.f32 %v1008, %v1141
        %v1143 = vpop.f32.mrb[0].mxu0
        %1144 = vmatprep.mubr.f32.mxu0 0.0
        %1145 = vmatmul.mubr.f32.gmra.mrb[0].mxu0 %v985
        %v1146 = vpop.f32.mrb[0].mxu0
        %v1147 = vadd.f32 %v1008, %v1146
        %v1148 = vpop.f32.mrb[0].mxu0
        %1149 = vmatprep.mubr.f32.mxu0 0.0
        %1150 = vmatmul.mubr.f32.gmra.mrb[0].mxu0 %v986
        %v1151 = vpop.f32.mrb[0].mxu0
        %v1152 = vadd.f32 %v1008, %v1151
        %v1153 = vpop.f32.mrb[0].mxu0
        %1154 = vdwg.mxu0
        %1155 = vadd.xlane.f32.xlu0 %v1077
        %v1156 = vpop.xlane.xlu0 %1155
        %1157 = vadd.xlane.f32.xlu0 %v1082
        %v1158 = vpop.xlane.xlu0 %1157
        %1159 = vadd.xlane.f32.xlu0 %v1087
        %v1160 = vpop.xlane.xlu0 %1159
        %1161 = vadd.xlane.f32.xlu0 %v1092
        %v1162 = vpop.xlane.xlu0 %1161
        %1163 = vadd.xlane.f32.xlu0 %v1097
        %v1164 = vpop.xlane.xlu0 %1163
        %1165 = vadd.xlane.f32.xlu0 %v1102
        %v1166 = vpop.xlane.xlu0 %1165
        %1167 = vadd.xlane.f32.xlu0 %v1107
        %v1168 = vpop.xlane.xlu0 %1167
        %1169 = vadd.xlane.f32.xlu0 %v1112
        %v1170 = vpop.xlane.xlu0 %1169
        %1171 = vadd.xlane.f32.xlu0 %v1117
        %v1172 = vpop.xlane.xlu0 %1171
        %1173 = vadd.xlane.f32.xlu0 %v1122
        %v1174 = vpop.xlane.xlu0 %1173
        %1175 = vadd.xlane.f32.xlu0 %v1127
        %v1176 = vpop.xlane.xlu0 %1175
        %1177 = vadd.xlane.f32.xlu0 %v1132
        %v1178 = vpop.xlane.xlu0 %1177
        %1179 = vadd.xlane.f32.xlu0 %v1137
        %v1180 = vpop.xlane.xlu0 %1179
        %1181 = vadd.xlane.f32.xlu0 %v1142
        %v1182 = vpop.xlane.xlu0 %1181
        %1183 = vadd.xlane.f32.xlu0 %v1147
        %v1184 = vpop.xlane.xlu0 %1183
        %1185 = vadd.xlane.f32.xlu0 %v1152
        %v1186 = vpop.xlane.xlu0 %1185
        %v1187 = vrcp.pop 128.0
        %v1188 = vmul.f32 %v1156, %v1187
        %v1189 = vmul.f32 %v1158, %v1187
        %v1190 = vmul.f32 %v1160, %v1187
        %v1191 = vmul.f32 %v1162, %v1187
        %v1192 = vmul.f32 %v1164, %v1187
        %v1193 = vmul.f32 %v1166, %v1187
        %v1194 = vmul.f32 %v1168, %v1187
        %v1195 = vmul.f32 %v1170, %v1187
        %v1196 = vmul.f32 %v1172, %v1187
        %v1197 = vmul.f32 %v1174, %v1187
        %v1198 = vmul.f32 %v1176, %v1187
        %v1199 = vmul.f32 %v1178, %v1187
        %v1200 = vmul.f32 %v1180, %v1187
        %v1201 = vmul.f32 %v1182, %v1187
        %v1202 = vmul.f32 %v1184, %v1187
        %v1203 = vmul.f32 %v1186, %v1187
        %v1204 = vsub.f32 %v1077, %v1188
        %v1205 = vsub.f32 %v1082, %v1189
        %v1206 = vsub.f32 %v1087, %v1190
        %v1207 = vsub.f32 %v1092, %v1191
        %v1208 = vsub.f32 %v1097, %v1192
        %v1209 = vsub.f32 %v1102, %v1193
        %v1210 = vsub.f32 %v1107, %v1194
        %v1211 = vsub.f32 %v1112, %v1195
        %v1212 = vsub.f32 %v1117, %v1196
        %v1213 = vsub.f32 %v1122, %v1197
        %v1214 = vsub.f32 %v1127, %v1198
        %v1215 = vsub.f32 %v1132, %v1199
        %v1216 = vsub.f32 %v1137, %v1200
        %v1217 = vsub.f32 %v1142, %v1201
        %v1218 = vsub.f32 %v1147, %v1202
        %v1219 = vsub.f32 %v1152, %v1203
        %v1220 = vmul.f32 %v1204, %v1204
        %v1221 = vmul.f32 %v1205, %v1205
        %v1222 = vmul.f32 %v1206, %v1206
        %v1223 = vmul.f32 %v1207, %v1207
        %v1224 = vmul.f32 %v1208, %v1208
        %v1225 = vmul.f32 %v1209, %v1209
        %v1226 = vmul.f32 %v1210, %v1210
        %v1227 = vmul.f32 %v1211, %v1211
        %v1228 = vmul.f32 %v1212, %v1212
        %v1229 = vmul.f32 %v1213, %v1213
        %v1230 = vmul.f32 %v1214, %v1214
        %v1231 = vmul.f32 %v1215, %v1215
        %v1232 = vmul.f32 %v1216, %v1216
        %v1233 = vmul.f32 %v1217, %v1217
        %v1234 = vmul.f32 %v1218, %v1218
        %v1235 = vmul.f32 %v1219, %v1219
        %1236 = vadd.xlane.f32.xlu0 %v1220
        %v1237 = vpop.xlane.xlu0 %1236
        %1238 = vadd.xlane.f32.xlu0 %v1221
        %v1239 = vpop.xlane.xlu0 %1238
        %1240 = vadd.xlane.f32.xlu0 %v1222
        %v1241 = vpop.xlane.xlu0 %1240
        %1242 = vadd.xlane.f32.xlu0 %v1223
        %v1243 = vpop.xlane.xlu0 %1242
        %1244 = vadd.xlane.f32.xlu0 %v1224
        %v1245 = vpop.xlane.xlu0 %1244
        %1246 = vadd.xlane.f32.xlu0 %v1225
        %v1247 = vpop.xlane.xlu0 %1246
        %1248 = vadd.xlane.f32.xlu0 %v1226
        %v1249 = vpop.xlane.xlu0 %1248
        %1250 = vadd.xlane.f32.xlu0 %v1227
        %v1251 = vpop.xlane.xlu0 %1250
        %1252 = vadd.xlane.f32.xlu0 %v1228
        %v1253 = vpop.xlane.xlu0 %1252
        %1254 = vadd.xlane.f32.xlu0 %v1229
        %v1255 = vpop.xlane.xlu0 %1254
        %1256 = vadd.xlane.f32.xlu0 %v1230
        %v1257 = vpop.xlane.xlu0 %1256
        %1258 = vadd.xlane.f32.xlu0 %v1231
        %v1259 = vpop.xlane.xlu0 %1258
        %1260 = vadd.xlane.f32.xlu0 %v1232
        %v1261 = vpop.xlane.xlu0 %1260
        %1262 = vadd.xlane.f32.xlu0 %v1233
        %v1263 = vpop.xlane.xlu0 %1262
        %1264 = vadd.xlane.f32.xlu0 %v1234
        %v1265 = vpop.xlane.xlu0 %1264
        %1266 = vadd.xlane.f32.xlu0 %v1235
        %v1267 = vpop.xlane.xlu0 %1266
        %v1268 = vmul.f32 %v1237, %v1187
        %v1269 = vmul.f32 %v1239, %v1187
        %v1270 = vmul.f32 %v1241, %v1187
        %v1271 = vmul.f32 %v1243, %v1187
        %v1272 = vmul.f32 %v1245, %v1187
        %v1273 = vmul.f32 %v1247, %v1187
        %v1274 = vmul.f32 %v1249, %v1187
        %v1275 = vmul.f32 %v1251, %v1187
        %v1276 = vmul.f32 %v1253, %v1187
        %v1277 = vmul.f32 %v1255, %v1187
        %v1278 = vmul.f32 %v1257, %v1187
        %v1279 = vmul.f32 %v1259, %v1187
        %v1280 = vmul.f32 %v1261, %v1187
        %v1281 = vmul.f32 %v1263, %v1187
        %v1282 = vmul.f32 %v1265, %v1187
        %v1283 = vmul.f32 %v1267, %v1187
        %v1284 = vadd.f32 %v1268, 1e-05
        %v1285 = vadd.f32 %v1269, 1e-05
        %v1286 = vadd.f32 %v1270, 1e-05
        %v1287 = vadd.f32 %v1271, 1e-05
        %v1288 = vadd.f32 %v1272, 1e-05
        %v1289 = vadd.f32 %v1273, 1e-05
        %v1290 = vadd.f32 %v1274, 1e-05
        %v1291 = vadd.f32 %v1275, 1e-05
        %v1292 = vadd.f32 %v1276, 1e-05
        %v1293 = vadd.f32 %v1277, 1e-05
        %v1294 = vadd.f32 %v1278, 1e-05
        %v1295 = vadd.f32 %v1279, 1e-05
        %v1296 = vadd.f32 %v1280, 1e-05
        %v1297 = vadd.f32 %v1281, 1e-05
        %v1298 = vadd.f32 %v1282, 1e-05
        %v1299 = vadd.f32 %v1283, 1e-05
        %v1300 = vrsqrt.pop %v1284
        %v1301 = vrsqrt.pop %v1285
        %v1302 = vrsqrt.pop %v1286
        %v1303 = vrsqrt.pop %v1287
        %v1304 = vrsqrt.pop %v1288
        %v1305 = vrsqrt.pop %v1289
        %v1306 = vrsqrt.pop %v1290
        %v1307 = vrsqrt.pop %v1291
        %v1308 = vrsqrt.pop %v1292
        %v1309 = vrsqrt.pop %v1293
        %v1310 = vrsqrt.pop %v1294
        %v1311 = vrsqrt.pop %v1295
        %v1312 = vrsqrt.pop %v1296
        %v1313 = vrsqrt.pop %v1297
        %v1314 = vrsqrt.pop %v1298
        %v1315 = vrsqrt.pop %v1299
        %v1316 = vmul.f32 %v1204, %v1300
        %v1317 = vmul.f32 %v1205, %v1301
        %v1318 = vmul.f32 %v1206, %v1302
        %v1319 = vmul.f32 %v1207, %v1303
        %v1320 = vmul.f32 %v1208, %v1304
        %v1321 = vmul.f32 %v1209, %v1305
        %v1322 = vmul.f32 %v1210, %v1306
        %v1323 = vmul.f32 %v1211, %v1307
        %v1324 = vmul.f32 %v1212, %v1308
        %v1325 = vmul.f32 %v1213, %v1309
        %v1326 = vmul.f32 %v1214, %v1310
        %v1327 = vmul.f32 %v1215, %v1311
        %v1328 = vmul.f32 %v1216, %v1312
        %v1329 = vmul.f32 %v1217, %v1313
        %v1330 = vmul.f32 %v1218, %v1314
        %v1331 = vmul.f32 %v1219, %v1315
        %v1332 = vld [vmem:[%s9] sm:$0x1]
        %v1334 = vlaneseq
        %v1335 = vshrl.u32 %v1334, 7
        %v1336 = vsub.s32 0, %v1335
        %v1337 = vrot.slane %v1332, %v1336
        %v1339 = vmul.f32 %v1316, %v1337
        %v1340 = vmul.f32 %v1317, %v1337
        %v1341 = vmul.f32 %v1318, %v1337
        %v1342 = vmul.f32 %v1319, %v1337
        %v1343 = vmul.f32 %v1320, %v1337
        %v1344 = vmul.f32 %v1321, %v1337
        %v1345 = vmul.f32 %v1322, %v1337
        %v1346 = vmul.f32 %v1323, %v1337
        %v1347 = vmul.f32 %v1324, %v1337
        %v1348 = vmul.f32 %v1325, %v1337
        %v1349 = vmul.f32 %v1326, %v1337
        %v1350 = vmul.f32 %v1327, %v1337
        %v1351 = vmul.f32 %v1328, %v1337
        %v1352 = vmul.f32 %v1329, %v1337
        %v1353 = vmul.f32 %v1330, %v1337
        %v1354 = vmul.f32 %v1331, %v1337
        %v1355 = vld [vmem:[%s10] sm:$0x1]
        %v1357 = vlaneseq
        %v1358 = vshrl.u32 %v1357, 7
        %v1359 = vsub.s32 0, %v1358
        %v1360 = vrot.slane %v1355, %v1359
        %v1362 = vadd.f32 %v1339, %v1360
        %v1363 = vadd.f32 %v1340, %v1360
        %v1364 = vadd.f32 %v1341, %v1360
        %v1365 = vadd.f32 %v1342, %v1360
        %v1366 = vadd.f32 %v1343, %v1360
        %v1367 = vadd.f32 %v1344, %v1360
        %v1368 = vadd.f32 %v1345, %v1360
        %v1369 = vadd.f32 %v1346, %v1360
        %v1370 = vadd.f32 %v1347, %v1360
        %v1371 = vadd.f32 %v1348, %v1360
        %v1372 = vadd.f32 %v1349, %v1360
        %v1373 = vadd.f32 %v1350, %v1360
        %v1374 = vadd.f32 %v1351, %v1360
        %v1375 = vadd.f32 %v1352, %v1360
        %v1376 = vadd.f32 %v1353, %v1360
        %v1377 = vadd.f32 %v1354, %v1360
        %v1378 = vadd.f32 %v1362, %v442
        %v1379 = vadd.f32 %v1363, %v443
        %v1380 = vadd.f32 %v1364, %v444
        %v1381 = vadd.f32 %v1365, %v445
        %v1382 = vadd.f32 %v1366, %v446
        %v1383 = vadd.f32 %v1367, %v447
        %v1384 = vadd.f32 %v1368, %v448
        %v1385 = vadd.f32 %v1369, %v449
        %v1386 = vadd.f32 %v1370, %v450
        %v1387 = vadd.f32 %v1371, %v451
        %v1388 = vadd.f32 %v1372, %v452
        %v1389 = vadd.f32 %v1373, %v453
        %v1390 = vadd.f32 %v1374, %v454
        %v1391 = vadd.f32 %v1375, %v455
        %v1392 = vadd.f32 %v1376, %v456
        %v1393 = vadd.f32 %v1377, %v457
        %1394 = vst [vmem:[%s396] sm:$0xff] %v1378
        %1395 = vst [vmem:[%s396 + $0x8] sm:$0xff] %v1379
        %1396 = vst [vmem:[%s396 + $0x10] sm:$0xff] %v1380
        %1397 = vst [vmem:[%s396 + $0x18] sm:$0xff] %v1381
        %1398 = vst [vmem:[%s396 + $0x20] sm:$0xff] %v1382
        %1399 = vst [vmem:[%s396 + $0x28] sm:$0xff] %v1383
        %1400 = vst [vmem:[%s396 + $0x30] sm:$0xff] %v1384
        %1401 = vst [vmem:[%s396 + $0x38] sm:$0xff] %v1385
        %1402 = vst [vmem:[%s396 + $0x40] sm:$0xff] %v1386
        %1403 = vst [vmem:[%s396 + $0x48] sm:$0xff] %v1387
        %1404 = vst [vmem:[%s396 + $0x50] sm:$0xff] %v1388
        %1405 = vst [vmem:[%s396 + $0x58] sm:$0xff] %v1389
        %1406 = vst [vmem:[%s396 + $0x60] sm:$0xff] %v1390
        %1407 = vst [vmem:[%s396 + $0x68] sm:$0xff] %v1391
        %1408 = vst [vmem:[%s396 + $0x70] sm:$0xff] %v1392
        %1409 = vst [vmem:[%s396 + $0x78] sm:$0xff] %v1393
        %s1410 = sand.u32 %s274, 1
        %s1411 = scalar_lea.sflag [#allocation3], %s1410
        %s1412 = sand.u32 %s274, 1
        %s1413 = smul.addr %s1412, 128
        %s1414 = scalar_lea.vmem [#allocation2], %s1413
        // Predicated region
        $region65: #{graph_processor_forward.15} parent=63 // pred_check
          %p1415 = pneg %p284
        $region66: #{graph_processor_forward.15} parent=63 // pred_check_branch
          %1417 = sbr.rel (%p1415) target = $region68
        $region67: #{graph_processor_forward.15} parent=63 // pred_region
          %s1418 = smul.u32 16, %s25
          %s1420 = ssub.s32 2048, 2048
          %1421 = vsyncadd %s1411, %s1420
          %s1422 = smul.addr %s1418, 128
          %s1423 = scalar_lea.hbm %s11, %s1422
          %s1424 = sshll.u32 %s1414, 4
          %s1425 = int_to_ptr.vmem [resolvable:$true] %s1424
          %1430 = dma.vmem_to_hbm [thread:$0]  %s1425, 2048, %s1423, %s1411, 128, 128, 8
        $region68: #{graph_processor_forward.15} parent=63 // pred_fallthru
          _
      $region64: #{graph_processor_forward.15} parent=5 // pred_fallthru
        _
      %p1431 = scmp.le.s32.totalorder 2, %s20
      // Predicated region
      $region69: #{graph_processor_forward.15} parent=5 // pred_check
        %p1432 = pneg %p1431
      $region70: #{graph_processor_forward.15} parent=5 // pred_check_branch
        %1434 = sbr.rel (%p1432) target = $region72
      $region71: #{graph_processor_forward.15} parent=5 // pred_region
        %s1435 = ssub.s32 %s20, 2
        // Predicated region
        $region73: #{graph_processor_forward.15} parent=71 // pred_check
          %p1436 = pneg %p290
        $region74: #{graph_processor_forward.15} parent=71 // pred_check_branch
          %1438 = sbr.rel (%p1436) target = $region76
        $region75: #{graph_processor_forward.15} parent=71 // pred_region
          %s1439 = sand.u32 %s275, 1
          %s1440 = scalar_lea.sflag [#allocation3], %s1439
          %s1441 = sand.u32 %s275, 1
          %s1442 = smul.addr %s1441, 128
          %s1443 = scalar_lea.vmem [#allocation2], %s1442
          %1444 = dma.done %s1440, 2048
        $region76: #{graph_processor_forward.15} parent=71 // pred_fallthru
          _
      $region72: #{graph_processor_forward.15} parent=5 // pred_fallthru
        _
    $region6: #{graph_processor_forward.15} parent=1 // loop_footer
      %s24 = sadd.s32 1, %s20
    $region7: #{graph_processor_forward.15} parent=1 // loop_footer_branch
      %19 = sbr.rel target = $region3
    $region8: #{graph_processor_forward.15} parent=1 // loop_exit
      _
    %1445 = vsyncpa [#allocation3], 1
    %s1446 = scalar_lea.sflag [#allocation3], 1
    %1447 = vsyncpa %s1446, 1

</llo_original>
